<compile_context>
chip_gen: v6e
topology: v6e:2x2x1
jax: 0.10.0
libtpu: 0.0.40
codegen_flags: <defaults>
</compile_context>

<pallas_src>
import numpy as np
import jax
import jax.numpy as jnp
from jax import lax
from jax.experimental import pallas as pl
from jax.experimental.pallas import tpu as pltpu

EPS = 1e-5
C_PAD = 128                                     # lane-dense channel padding
TAPS = [(kh, kw) for kh in range(3) for kw in range(3)]


def _round_up(x, m):
    return ((x + m - 1) // m) * m


# ----------------------------------------------------------------------------
# Static geometry planning (host-side python ints only)
# ----------------------------------------------------------------------------
def make_plan(H, W, layer_cfg):
    """layer_cfg: list of (cin, cout, stride) for every RepVGG block."""
    layers = []
    h, w = H, W
    m_off = 0
    for (cin, cout, s) in layer_cfg:
        if s == 2:
            assert h % 2 == 0 and w % 2 == 0
            ho, wo = h // 2, w // 2
        else:
            ho, wo = h, w
        pitch = wo + 2                          # row pitch of this layer's flat output
        Q = (ho - 1) * pitch + wo               # number of computed output rows
        layers.append(dict(cin=cin, cout=cout, stride=s, Hin=h, Win=w,
                           Ho=ho, Wo=wo, pitch=pitch, Q=Q, m_off=m_off,
                           p_idx=None, s_idx=None))
        m_off += Q
        h, w = ho, wo
    mask_rows = _round_up(m_off, 8)

    # padded-flat output buffers for all but the last layer
    f_allocs = []
    for li in range(len(layers) - 1):
        L = layers[li]
        f_allocs.append(_round_up((L['Ho'] + 2) * L['pitch'], 8))

    # polyphase-plane buffers + tiny space-to-depth matrices for stride-2 layers
    p_allocs, s_shapes = [], []
    for li in range(1, len(layers)):
        L = layers[li]
        if L['stride'] == 2:
            idx = len(p_allocs)
            L['p_idx'] = idx
            L['s_idx'] = idx
            p_allocs.append(_round_up((L['Ho'] + 2) * L['pitch'], 8))
            wp_prev = layers[li - 1]['pitch']
            ph_stride = _round_up(L['pitch'], 8)
            s_shapes.append((4 * ph_stride, 2 * wp_prev))

    q0 = layers[0]['Q']
    return dict(layers=layers, f_allocs=f_allocs, p_allocs=p_allocs,
                s_shapes=s_shapes, mask_rows=mask_rows,
                q0_pad=_round_up(q0, 8), H=H, W=W)


# ----------------------------------------------------------------------------
# Constant tensors derived from the plan (row-validity mask, S2D matrices)
# ----------------------------------------------------------------------------
def build_constants(plan):
    layers = plan['layers']

    # per-row validity mask: (flat index % pitch) < Wo, stacked over layers
    rows = []
    for L in layers:
        q = np.arange(L['Q'])
        m = ((q % L['pitch']) < L['Wo']).astype(np.float32)
        rows.append(np.repeat(m[:, None], C_PAD, axis=1))
    m_all = np.concatenate(rows, axis=0)
    m_all = np.pad(m_all, ((0, plan['mask_rows'] - m_all.shape[0]), (0, 0)))

    # tiny 0/1 space-to-depth matrices: 2 adjacent padded rows of the producer's
    # flat buffer -> one row of each of the 4 polyphase planes of the consumer.
    s_list = []
    for li in range(1, len(layers)):
        L = layers[li]
        if L['stride'] != 2:
            continue
        wph = L['pitch']
        ph_stride = _round_up(wph, 8)
        wp_prev = layers[li - 1]['pitch']
        S = np.zeros((4 * ph_stride, 2 * wp_prev), np.float32)
        for a in range(2):
            for b in range(2):
                ph = a * 2 + b
                for v in range(wph):
                    col = 2 * v + b
                    if col < wp_prev:
                        S[ph * ph_stride + v, a * wp_prev + col] = 1.0
        s_list.append(jnp.asarray(S, jnp.bfloat16))
    return jnp.asarray(m_all, jnp.bfloat16), s_list


# ----------------------------------------------------------------------------
# The fused Pallas kernel
# ----------------------------------------------------------------------------
def make_kernel(plan):
    layers = plan['layers']
    nL = len(layers)
    nS = len(plan['s_shapes'])
    nF = len(plan['f_allocs'])
    inv_pool = 1.0 / float(layers[-1]['Ho'] * layers[-1]['Wo'])

    def kernel(*refs):
        xp_ref, w0_ref, w_ref, b_ref, m_ref = refs[0:5]
        s_refs = refs[5:5 + nS]
        hw_ref = refs[5 + nS]
        hb_ref = refs[6 + nS]
        out_ref = refs[7 + nS]
        f_refs = refs[8 + nS:8 + nS + nF]
        p_refs = refs[8 + nS + nF:]

        y = None
        for li, L in enumerate(layers):
            Q, wp, Ho = L['Q'], L['pitch'], L['Ho']

            if li == 0:
                # layer 0: host-side im2col (27 real lanes) -> ONE MXU matmul
                acc = jnp.dot(xp_ref[0, pl.ds(0, Q), :], w0_ref[...],
                              preferred_element_type=jnp.float32)
            else:
                # 3x3 conv == 9 x (contiguous slice -> bf16 matmul, f32 acc)
                acc = jnp.zeros((Q, C_PAD), jnp.float32)
                if L['stride'] == 2:
                    pref = p_refs[L['p_idx']]
                    for t, (kh, kw) in enumerate(TAPS):
                        ph = (kh % 2) * 2 + (kw % 2)
                        off = (kh // 2) * wp + (kw // 2)
                        a = pref[ph, pl.ds(off, Q), :].astype(jnp.bfloat16)
                        acc = acc + jnp.dot(a, w_ref[li - 1, t],
                                            preferred_element_type=jnp.float32)
                else:
                    fin = f_refs[li - 1]
                    wp_in = layers[li - 1]['pitch']
                    for t, (kh, kw) in enumerate(TAPS):
                        off = kh * wp_in + kw
                        a = fin[pl.ds(off, Q), :].astype(jnp.bfloat16)
                        acc = acc + jnp.dot(a, w_ref[li - 1, t],
                                            preferred_element_type=jnp.float32)

            # bias + ReLU (/div folded into weights); zero wrap-around junk rows
            y = jnp.maximum(acc + b_ref[li], 0.0)
            y = y * m_ref[pl.ds(L['m_off'], Q), :].astype(jnp.float32)

            if li < nL - 1:
                # padded-flat writeback: zero only the border rows, store the
                # interior slab (junk rows inside it are already masked to 0).
                f = f_refs[li]
                f[pl.ds(0, wp + 1), :] = jnp.zeros((wp + 1, C_PAD), f.dtype)
                f[pl.ds(wp + 1, Q), :] = y.astype(f.dtype)
                f[pl.ds(wp + 1 + Q, wp + 1), :] = jnp.zeros((wp + 1, C_PAD),
                                                            f.dtype)

                nxt = layers[li + 1]
                if nxt['stride'] == 2:
                    # space-to-depth into the next layer's 4 polyphase planes:
                    # one tiny constant 0/1 matmul per pair of padded rows.
                    pref = p_refs[nxt['p_idx']]
                    S = s_refs[nxt['s_idx']][...]
                    wph = nxt['pitch']
                    ph_stride = _round_up(wph, 8)
                    for j in range((Ho + 2) // 2):
                        rows2 = f[pl.ds(j * 2 * wp, 2 * wp), :]
                        res = jnp.dot(S, rows2.astype(jnp.bfloat16),
                                      preferred_element_type=jnp.float32)
                        for ph in range(4):
                            pref[ph, pl.ds(j * wph, wph), :] = (
                                res[ph * ph_stride:ph * ph_stride + wph, :]
                                .astype(pref.dtype))

        # global average pool + linear head (classes padded to 128 lanes)
        pooled = jnp.sum(y, axis=0, keepdims=True) * inv_pool
        logits = jnp.dot(pooled.astype(jnp.bfloat16), hw_ref[...],
                         preferred_element_type=jnp.float32) + hb_ref[...]
        out_ref[0] = jnp.broadcast_to(logits, (8, C_PAD))

    return kernel


def build_pallas_fn(plan, batch):
    nL = len(plan['layers'])
    q0_pad = plan['q0_pad']
    in_specs = [
        pl.BlockSpec((1, q0_pad, C_PAD), lambda n: (n, 0, 0)),          # x im2col
        pl.BlockSpec((C_PAD, C_PAD), lambda n: (0, 0)),                 # w0 packed
        pl.BlockSpec((nL - 1, 9, C_PAD, C_PAD), lambda n: (0, 0, 0, 0)),  # taps 1..
        pl.BlockSpec((nL, 1, C_PAD), lambda n: (0, 0, 0)),              # biases
        pl.BlockSpec((plan['mask_rows'], C_PAD), lambda n: (0, 0)),     # row mask
    ]
    for shp in plan['s_shapes']:
        in_specs.append(pl.BlockSpec(shp, lambda n: (0, 0)))            # S2D mats
    in_specs += [
        pl.BlockSpec((C_PAD, C_PAD), lambda n: (0, 0)),                 # head W
        pl.BlockSpec((1, C_PAD), lambda n: (0, 0)),                     # head b
    ]
    scratch = [pltpu.VMEM((r, C_PAD), jnp.float32) for r in plan['f_allocs']]
    scratch += [pltpu.VMEM((4, r, C_PAD), jnp.float32) for r in plan['p_allocs']]

    return pl.pallas_call(
        make_kernel(plan),
        out_shape=jax.ShapeDtypeStruct((batch, 8, C_PAD), jnp.float32),
        grid_spec=pltpu.PrefetchScalarGridSpec(
            num_scalar_prefetch=0,
            grid=(batch,),
            in_specs=in_specs,
            out_specs=pl.BlockSpec((1, 8, C_PAD), lambda n: (n, 0, 0)),
            scratch_shapes=scratch,
        ),
        compiler_params=pltpu.CompilerParams(
            dimension_semantics=("parallel",),
            vmem_limit_bytes=32 * 1024 * 1024,
        ),
    )


# ----------------------------------------------------------------------------
# Parameter construction / RepVGG branch fusion (plain JAX, done ONCE)
# ----------------------------------------------------------------------------
def gaussian_mask_type2(sigma, weight, KH=3, KW=3):
    """create_gaussian_mask, mask_type=2, circle=True, noise=False,
    normalization=True, offset=[] (exactly the conv_bn configuration)."""
    gx = jnp.linspace(-(KW - 1) / 2.0, (KW - 1) / 2.0, KW)
    gy = jnp.linspace(-(KH - 1) / 2.0, (KH - 1) / 2.0, KH)
    grid_x, grid_y = jnp.meshgrid(gx, gy, indexing="xy")        # (KH, KW)
    b = jax.nn.softmax(weight).reshape(KH * KW, 1, 1)
    i = jnp.array([-1, -1, -1, 0, 0, 0, 1, 1, 1], jnp.float32).reshape(9, 1, 1)
    o = jnp.array([-1, 0, 1, -1, 0, 1, -1, 0, 1], jnp.float32).reshape(9, 1, 1)
    s = sigma.reshape(9, 1, 1)
    g = jnp.exp(-0.5 * ((grid_x - i) ** 2 + (grid_y - o) ** 2) / s ** 2) * b
    g = g.sum(axis=0)
    return g / g.max()


def make_conv_bn_params(key, cin, cout):
    k = jax.random.split(key, 7)
    return dict(
        w=jax.random.normal(k[0], (cout, cin, 3, 3), jnp.float32) * 0.1,
        gamma=1.0 + 0.1 * jax.random.normal(k[1], (cout,), jnp.float32),
        beta=0.1 * jax.random.normal(k[2], (cout,), jnp.float32),
        rmean=0.1 * jax.random.normal(k[3], (cout,), jnp.float32),
        rvar=1.0 + 0.1 * jax.random.uniform(k[4], (cout,), jnp.float32),
        # asymmetric sigma / mask-weights so the gaussian-mask path is exercised
        sigma=5.0 + 0.5 * jax.random.normal(k[5], (9,), jnp.float32),
        mw=1.0 / 9.0 + 0.05 * jax.random.normal(k[6], (9,), jnp.float32),
    )


def make_block_params(key, cin, cout, stride):
    ks = jax.random.split(key, 3)
    has_id = (cin == cout) and (stride == 1)
    idbn = None
    if has_id:
        k = jax.random.split(ks[2], 4)
        idbn = dict(
            gamma=1.0 + 0.1 * jax.random.normal(k[0], (cin,), jnp.float32),
            beta=0.1 * jax.random.normal(k[1], (cin,), jnp.float32),
            rmean=0.1 * jax.random.normal(k[2], (cin,), jnp.float32),
            rvar=1.0 + 0.1 * jax.random.uniform(k[3], (cin,), jnp.float32),
        )
    return dict(dense=make_conv_bn_params(ks[0], cin, cout),
                dense2=make_conv_bn_params(ks[1], cin, cout),
                idbn=idbn, cin=cin, cout=cout, stride=stride,
                div=3.0 if has_id else 2.0)


def make_repvgg_params(key, num_blocks, num_classes, width_multiplier):
    in_planes = min(64, int(64 * width_multiplier[0]))
    plan = [(3, in_planes, 2)]                                   # stage0
    cur = in_planes
    stage_planes = [int(64 * width_multiplier[0]), int(128 * width_multiplier[1]),
                    int(256 * width_multiplier[2]), int(512 * width_multiplier[3])]
    for planes, nb in zip(stage_planes, num_blocks):
        for st in [2] + [1] * (nb - 1):
            plan.append((cur, planes, st))
            cur = planes
    keys = jax.random.split(key, len(plan) + 1)
    blocks = [make_block_params(k, ci, co, st)
              for k, (ci, co, st) in zip(keys[:-1], plan)]
    kl1, kl2 = jax.random.split(keys[-1])
    lin_w = jax.random.normal(kl1, (num_classes, cur), jnp.float32) * 0.05
    lin_b = 0.05 * jax.random.normal(kl2, (num_classes,), jnp.float32)
    return dict(blocks=blocks, lin_w=lin_w, lin_b=lin_b)


def fuse_branch(p):
    """masked conv weight + eval-mode BN fold -> (W[Co,Ci,3,3], b[Co])."""
    mask = gaussian_mask_type2(p["sigma"], p["mw"])
    wm = p["w"] * mask[None, None, :, :]
    scale = p["gamma"] / jnp.sqrt(p["rvar"] + EPS)
    return wm * scale[:, None, None, None], p["beta"] - p["rmean"] * scale


def fuse_block(bp):
    w1, b1 = fuse_branch(bp['dense'])
    w2, b2 = fuse_branch(bp['dense2'])
    w_tot, b_tot = w1 + w2, b1 + b2
    if bp['idbn'] is not None:
        idp = bp['idbn']
        scale = idp['gamma'] / jnp.sqrt(idp['rvar'] + EPS)
        wid = jnp.zeros((bp['cout'], bp['cin'], 3, 3), jnp.float32).at[
            jnp.arange(bp['cout']), jnp.arange(bp['cin']), 1, 1].set(scale)
        w_tot = w_tot + wid
        b_tot = b_tot + (idp['beta'] - idp['rmean'] * scale)
    return w_tot / bp['div'], b_tot / bp['div']


def fuse_and_pack(params, plan):
    """Fold every block (branches + BN + /div) into effective conv weights,
    packed lane-dense for the kernel. Done once, outside the forward pass."""
    blocks = params['blocks']

    # layer 0: im2col-packed single (128,128) weight (27 real K rows)
    w0_eff, b0_eff = fuse_block(blocks[0])
    ci0, co0 = blocks[0]['cin'], blocks[0]['cout']
    w0_tap = jnp.transpose(w0_eff, (2, 3, 1, 0)).reshape(9 * ci0, co0)
    w0 = jnp.zeros((C_PAD, C_PAD), jnp.float32).at[:9 * ci0, :co0].set(w0_tap)

    Ws = []
    Bs = [jnp.zeros((1, C_PAD), jnp.float32).at[0, :co0].set(b0_eff)]
    for bp in blocks[1:]:
        w_eff, b_eff = fuse_block(bp)
        ci, co = bp['cin'], bp['cout']
        w_tap = jnp.transpose(w_eff, (2, 3, 1, 0)).reshape(9, ci, co)
        Ws.append(jnp.zeros((9, C_PAD, C_PAD), jnp.float32)
                  .at[:, :ci, :co].set(w_tap))
        Bs.append(jnp.zeros((1, C_PAD), jnp.float32).at[0, :co].set(b_eff))

    lin_w, lin_b = params['lin_w'], params['lin_b']
    nc, cf = lin_w.shape
    hw = jnp.zeros((C_PAD, C_PAD), jnp.float32).at[:cf, :nc].set(lin_w.T)
    hb = jnp.zeros((1, C_PAD), jnp.float32).at[0, :nc].set(lin_b)
    m_all, s_list = build_constants(plan)
    return dict(w0=w0.astype(jnp.bfloat16), w=jnp.stack(Ws).astype(jnp.bfloat16),
                b=jnp.stack(Bs), hw=hw.astype(jnp.bfloat16), hb=hb,
                m=m_all, s_list=s_list)


# ----------------------------------------------------------------------------
# Forward pass (host glue: layer-0 im2col in bf16, then one pallas_call)
# ----------------------------------------------------------------------------
def build_forward(plan, num_classes, batch):
    pallas_fn = build_pallas_fn(plan, batch)
    L0 = plan['layers'][0]
    Ho0, Wo0, wp0, Q0 = L0['Ho'], L0['Wo'], L0['pitch'], L0['Q']
    q0_pad = plan['q0_pad']

    def forward(x_nchw, packed):
        x = jnp.transpose(x_nchw, (0, 2, 3, 1)).astype(jnp.float32)   # NHWC
        n, _, _, cin = x.shape
        xp = jnp.pad(x, ((0, 0), (1, 1), (1, 1), (0, 0)))
        # host-side im2col of layer 0 only: lane = (kh*3+kw)*cin + ch
        pats = []
        for kh in range(3):
            for kw in range(3):
                pats.append(xp[:, kh:kh + 2 * Ho0 - 1:2,
                               kw:kw + 2 * Wo0 - 1:2, :])
        patches = jnp.concatenate(pats, axis=-1)                      # (N,Ho,Wo,27)
        flat = jnp.zeros((n, Ho0, wp0, 9 * cin), jnp.float32)
        flat = flat.at[:, :, :Wo0, :].set(patches)
        flat = flat.reshape(n, Ho0 * wp0, 9 * cin)[:, :Q0, :]
        flat = jnp.pad(flat, ((0, 0), (0, q0_pad - Q0), (0, C_PAD - 9 * cin)))
        x_in = flat.astype(jnp.bfloat16)
        out = pallas_fn(x_in, packed['w0'], packed['w'], packed['b'],
                        packed['m'], *packed['s_list'],
                        packed['hw'], packed['hb'])
        return out[:, 0, :num_classes]

    return jax.jit(forward)


# ----------------------------------------------------------------------------
# Pure-JAX reference (branch-by-branch, eval-mode BN) for numerical validation
# ----------------------------------------------------------------------------
def _conv_bn_eval(x, p, stride):
    mask = gaussian_mask_type2(p['sigma'], p['mw'])
    w = p['w'] * mask[None, None, :, :]
    y = lax.conv_general_dilated(x, w, (stride, stride), ((1, 1), (1, 1)),
                                 dimension_numbers=('NCHW', 'OIHW', 'NCHW'),
                                 precision=lax.Precision.HIGHEST)
    scale = p['gamma'] / jnp.sqrt(p['rvar'] + EPS)
    shift = p['beta'] - p['rmean'] * scale
    return y * scale[None, :, None, None] + shift[None, :, None, None]


def reference_forward(x, params):
    out = x
    for bp in params['blocks']:
        y = (_conv_bn_eval(out, bp['dense'], bp['stride'])
             + _conv_bn_eval(out, bp['dense2'], bp['stride']))
        if bp['idbn'] is not None:
            idp = bp['idbn']
            scale = idp['gamma'] / jnp.sqrt(idp['rvar'] + EPS)
            shift = idp['beta'] - idp['rmean'] * scale
            y = y + out * scale[None, :, None, None] + shift[None, :, None, None]
        out = jax.nn.relu(y / bp['div'])
    pooled = jnp.mean(out, axis=(2, 3))
    return jnp.dot(pooled, params['lin_w'].T,
                   precision=lax.Precision.HIGHEST) + params['lin_b']


# ----------------------------------------------------------------------------
if __name__ == "__main__":
    key = jax.random.PRNGKey(0)
    kx, kp = jax.random.split(key)

    num_blocks = [2, 1, 1, 1]
    width = [0.25, 0.25, 0.25, 0.25]
    num_classes = 10
    N, H, W = 2, 32, 32

    params = make_repvgg_params(kp, num_blocks, num_classes, width)
    layer_cfg = [(bp['cin'], bp['cout'], bp['stride']) for bp in params['blocks']]
    plan = make_plan(H, W, layer_cfg)
    packed = fuse_and_pack(params, plan)          # done once, outside forward
    forward = build_forward(plan, num_classes, N)

    x = jax.random.normal(kx, (N, 3, H, W), jnp.float32)
    out = jax.block_until_ready(forward(x, packed))
    assert out.shape == (N, num_classes) and out.dtype == jnp.float32

    ref = jax.block_until_ready(reference_forward(x, params))
    out_np = np.asarray(out)
    ref_np = np.asarray(ref)
    err = float(np.max(np.abs(out_np - ref_np)))
    scale = float(np.max(np.abs(ref_np))) + 1e-6
    assert err <= 0.1 * max(1.0, scale), (
        f"kernel/reference mismatch: max|err|={err:.4f}, ref scale={scale:.4f}")
    print("KERNEL_OK")
</pallas_src>

<mosaic_0001>
module attributes {stable_mosaic.version = 11 : i64} {
  func.func @kernel(%arg0: i32, %arg1: memref<1x288x128xbf16, #tpu.memory_space<vmem>>, %arg2: memref<128x128xbf16, #tpu.memory_space<vmem>>, %arg3: memref<5x9x128x128xbf16, #tpu.memory_space<vmem>>, %arg4: memref<6x1x128xf32, #tpu.memory_space<vmem>>, %arg5: memref<472x128xbf16, #tpu.memory_space<vmem>>, %arg6: memref<64x36xbf16, #tpu.memory_space<vmem>>, %arg7: memref<32x20xbf16, #tpu.memory_space<vmem>>, %arg8: memref<32x12xbf16, #tpu.memory_space<vmem>>, %arg9: memref<32x8xbf16, #tpu.memory_space<vmem>>, %arg10: memref<128x128xbf16, #tpu.memory_space<vmem>>, %arg11: memref<1x128xf32, #tpu.memory_space<vmem>>, %arg12: memref<1x8x128xf32, #tpu.memory_space<vmem>>, %arg13: memref<328x128xf32, #tpu.memory_space<vmem>>, %arg14: memref<104x128xf32, #tpu.memory_space<vmem>>, %arg15: memref<104x128xf32, #tpu.memory_space<vmem>>, %arg16: memref<40x128xf32, #tpu.memory_space<vmem>>, %arg17: memref<16x128xf32, #tpu.memory_space<vmem>>, %arg18: memref<4x104x128xf32, #tpu.memory_space<vmem>>, %arg19: memref<4x40x128xf32, #tpu.memory_space<vmem>>, %arg20: memref<4x16x128xf32, #tpu.memory_space<vmem>>, %arg21: memref<4x16x128xf32, #tpu.memory_space<vmem>>) attributes {dimension_semantics = [#tpu.dimension_semantics<parallel>], iteration_bounds = array<i64: 2>, scalar_prefetch = 0 : i64, scratch_operands = 9 : i64, tpu.core_type = #tpu.core_type<tc>, window_params = [{transform_indices = @transform_0, window_bounds = array<i64: 1, 288, 128>}, {pipeline_mode = #tpu.pipeline_mode<synchronous>, transform_indices = @transform_1, window_bounds = array<i64: 128, 128>}, {pipeline_mode = #tpu.pipeline_mode<synchronous>, transform_indices = @transform_2, window_bounds = array<i64: 5, 9, 128, 128>}, {pipeline_mode = #tpu.pipeline_mode<synchronous>, transform_indices = @transform_3, window_bounds = array<i64: 6, 1, 128>}, {pipeline_mode = #tpu.pipeline_mode<synchronous>, transform_indices = @transform_4, window_bounds = array<i64: 472, 128>}, {pipeline_mode = #tpu.pipeline_mode<synchronous>, transform_indices = @transform_5, window_bounds = array<i64: 64, 36>}, {pipeline_mode = #tpu.pipeline_mode<synchronous>, transform_indices = @transform_6, window_bounds = array<i64: 32, 20>}, {pipeline_mode = #tpu.pipeline_mode<synchronous>, transform_indices = @transform_7, window_bounds = array<i64: 32, 12>}, {pipeline_mode = #tpu.pipeline_mode<synchronous>, transform_indices = @transform_8, window_bounds = array<i64: 32, 8>}, {pipeline_mode = #tpu.pipeline_mode<synchronous>, transform_indices = @transform_9, window_bounds = array<i64: 128, 128>}, {pipeline_mode = #tpu.pipeline_mode<synchronous>, transform_indices = @transform_10, window_bounds = array<i64: 1, 128>}, {transform_indices = @transform_11, window_bounds = array<i64: 1, 8, 128>}]} {
    %c0 = arith.constant 0 : index
    %c0_0 = arith.constant 0 : index
    %c0_1 = arith.constant 0 : index
    %0 = vector.load %arg1[%c0, %c0_0, %c0_1] : memref<1x288x128xbf16, #tpu.memory_space<vmem>>, vector<1x286x128xbf16>
    %1 = vector.shape_cast %0 : vector<1x286x128xbf16> to vector<286x128xbf16>
    %c0_2 = arith.constant 0 : index
    %c0_3 = arith.constant 0 : index
    %2 = vector.load %arg2[%c0_2, %c0_3] : memref<128x128xbf16, #tpu.memory_space<vmem>>, vector<128x128xbf16>
    %cst = arith.constant dense<0.000000e+00> : vector<286x128xf32>
    %3 = tpu.matmul %1, %2, %cst {dimension_numbers = #tpu.dot_dimension_numbers<[1], [0], [0], [1], [0, 0, 1, 1], [], []>} : vector<286x128xbf16>, vector<128x128xbf16>, vector<286x128xf32> -> vector<286x128xf32>
    %c0_4 = arith.constant 0 : index
    %c0_5 = arith.constant 0 : index
    %c0_6 = arith.constant 0 : index
    %4 = vector.load %arg4[%c0_4, %c0_5, %c0_6] : memref<6x1x128xf32, #tpu.memory_space<vmem>>, vector<1x1x128xf32>
    %5 = vector.shape_cast %4 : vector<1x1x128xf32> to vector<1x128xf32>
    %6 = vector.broadcast %5 : vector<1x128xf32> to vector<286x128xf32>
    %7 = arith.addf %3, %6 : vector<286x128xf32>
    %cst_7 = arith.constant 0.000000e+00 : f32
    %8 = vector.broadcast %cst_7 : f32 to vector<286x128xf32>
    %9 = arith.maximumf %7, %8 : vector<286x128xf32>
    %c0_8 = arith.constant 0 : index
    %c0_9 = arith.constant 0 : index
    %10 = vector.load %arg5[%c0_8, %c0_9] : memref<472x128xbf16, #tpu.memory_space<vmem>>, vector<286x128xbf16>
    %11 = arith.extf %10 : vector<286x128xbf16> to vector<286x128xf32>
    %12 = arith.mulf %9, %11 : vector<286x128xf32>
    %cst_10 = arith.constant 0.000000e+00 : f32
    %13 = vector.broadcast %cst_10 : f32 to vector<19x128xf32>
    %c0_11 = arith.constant 0 : index
    %c0_12 = arith.constant 0 : index
    %14 = vector.load %arg13[%c0_11, %c0_12] : memref<328x128xf32, #tpu.memory_space<vmem>>, vector<19x128xf32>
    tpu.vector_store %arg13[%c0_11, %c0_12], %13 {strides = array<i32>} : memref<328x128xf32, #tpu.memory_space<vmem>>, vector<19x128xf32>,
    %c19 = arith.constant 19 : index
    %c0_13 = arith.constant 0 : index
    %15 = vector.load %arg13[%c19, %c0_13] : memref<328x128xf32, #tpu.memory_space<vmem>>, vector<286x128xf32>
    tpu.vector_store %arg13[%c19, %c0_13], %12 {strides = array<i32>} : memref<328x128xf32, #tpu.memory_space<vmem>>, vector<286x128xf32>,
    %cst_14 = arith.constant 0.000000e+00 : f32
    %16 = vector.broadcast %cst_14 : f32 to vector<19x128xf32>
    %c305 = arith.constant 305 : index
    %c0_15 = arith.constant 0 : index
    %17 = vector.load %arg13[%c305, %c0_15] : memref<328x128xf32, #tpu.memory_space<vmem>>, vector<19x128xf32>
    tpu.vector_store %arg13[%c305, %c0_15], %16 {strides = array<i32>} : memref<328x128xf32, #tpu.memory_space<vmem>>, vector<19x128xf32>,
    %c0_16 = arith.constant 0 : index
    %c0_17 = arith.constant 0 : index
    %18 = vector.load %arg6[%c0_16, %c0_17] : memref<64x36xbf16, #tpu.memory_space<vmem>>, vector<64x36xbf16>
    %c0_18 = arith.constant 0 : index
    %c0_19 = arith.constant 0 : index
    %19 = vector.load %arg13[%c0_18, %c0_19] : memref<328x128xf32, #tpu.memory_space<vmem>>, vector<36x128xf32>
    %20 = arith.truncf %19 : vector<36x128xf32> to vector<36x128xbf16>
    %cst_20 = arith.constant dense<0.000000e+00> : vector<64x128xf32>
    %21 = tpu.matmul %18, %20, %cst_20 {dimension_numbers = #tpu.dot_dimension_numbers<[1], [0], [0], [1], [0, 0, 1, 1], [], []>} : vector<64x36xbf16>, vector<36x128xbf16>, vector<64x128xf32> -> vector<64x128xf32>
    %22 = vector.extract_strided_slice %21 {offsets = [0, 0], sizes = [10, 128], strides = [1, 1]} : vector<64x128xf32> to vector<10x128xf32>
    %c0_21 = arith.constant 0 : index
    %c0_22 = arith.constant 0 : index
    %c0_23 = arith.constant 0 : index
    %23 = vector.load %arg18[%c0_21, %c0_22, %c0_23] : memref<4x104x128xf32, #tpu.memory_space<vmem>>, vector<1x10x128xf32>
    %24 = vector.shape_cast %23 : vector<1x10x128xf32> to vector<10x128xf32>
    %25 = vector.shape_cast %22 : vector<10x128xf32> to vector<1x10x128xf32>
    tpu.vector_store %arg18[%c0_21, %c0_22, %c0_23], %25 {strides = array<i32>} : memref<4x104x128xf32, #tpu.memory_space<vmem>>, vector<1x10x128xf32>,
    %26 = vector.extract_strided_slice %21 {offsets = [16, 0], sizes = [10, 128], strides = [1, 1]} : vector<64x128xf32> to vector<10x128xf32>
    %c1 = arith.constant 1 : index
    %c0_24 = arith.constant 0 : index
    %c0_25 = arith.constant 0 : index
    %27 = vector.load %arg18[%c1, %c0_24, %c0_25] : memref<4x104x128xf32, #tpu.memory_space<vmem>>, vector<1x10x128xf32>
    %28 = vector.shape_cast %27 : vector<1x10x128xf32> to vector<10x128xf32>
    %29 = vector.shape_cast %26 : vector<10x128xf32> to vector<1x10x128xf32>
    tpu.vector_store %arg18[%c1, %c0_24, %c0_25], %29 {strides = array<i32>} : memref<4x104x128xf32, #tpu.memory_space<vmem>>, vector<1x10x128xf32>,
    %30 = vector.extract_strided_slice %21 {offsets = [32, 0], sizes = [10, 128], strides = [1, 1]} : vector<64x128xf32> to vector<10x128xf32>
    %c2 = arith.constant 2 : index
    %c0_26 = arith.constant 0 : index
    %c0_27 = arith.constant 0 : index
    %31 = vector.load %arg18[%c2, %c0_26, %c0_27] : memref<4x104x128xf32, #tpu.memory_space<vmem>>, vector<1x10x128xf32>
    %32 = vector.shape_cast %31 : vector<1x10x128xf32> to vector<10x128xf32>
    %33 = vector.shape_cast %30 : vector<10x128xf32> to vector<1x10x128xf32>
    tpu.vector_store %arg18[%c2, %c0_26, %c0_27], %33 {strides = array<i32>} : memref<4x104x128xf32, #tpu.memory_space<vmem>>, vector<1x10x128xf32>,
    %34 = vector.extract_strided_slice %21 {offsets = [48, 0], sizes = [10, 128], strides = [1, 1]} : vector<64x128xf32> to vector<10x128xf32>
    %c3 = arith.constant 3 : index
    %c0_28 = arith.constant 0 : index
    %c0_29 = arith.constant 0 : index
    %35 = vector.load %arg18[%c3, %c0_28, %c0_29] : memref<4x104x128xf32, #tpu.memory_space<vmem>>, vector<1x10x128xf32>
    %36 = vector.shape_cast %35 : vector<1x10x128xf32> to vector<10x128xf32>
    %37 = vector.shape_cast %34 : vector<10x128xf32> to vector<1x10x128xf32>
    tpu.vector_store %arg18[%c3, %c0_28, %c0_29], %37 {strides = array<i32>} : memref<4x104x128xf32, #tpu.memory_space<vmem>>, vector<1x10x128xf32>,
    %c36 = arith.constant 36 : index
    %c0_30 = arith.constant 0 : index
    %38 = vector.load %arg13[%c36, %c0_30] : memref<328x128xf32, #tpu.memory_space<vmem>>, vector<36x128xf32>
    %39 = arith.truncf %38 : vector<36x128xf32> to vector<36x128xbf16>
    %cst_31 = arith.constant dense<0.000000e+00> : vector<64x128xf32>
    %40 = tpu.matmul %18, %39, %cst_31 {dimension_numbers = #tpu.dot_dimension_numbers<[1], [0], [0], [1], [0, 0, 1, 1], [], []>} : vector<64x36xbf16>, vector<36x128xbf16>, vector<64x128xf32> -> vector<64x128xf32>
    %41 = vector.extract_strided_slice %40 {offsets = [0, 0], sizes = [10, 128], strides = [1, 1]} : vector<64x128xf32> to vector<10x128xf32>
    %c0_32 = arith.constant 0 : index
    %c10 = arith.constant 10 : index
    %c0_33 = arith.constant 0 : index
    %42 = vector.load %arg18[%c0_32, %c10, %c0_33] : memref<4x104x128xf32, #tpu.memory_space<vmem>>, vector<1x10x128xf32>
    %43 = vector.shape_cast %42 : vector<1x10x128xf32> to vector<10x128xf32>
    %44 = vector.shape_cast %41 : vector<10x128xf32> to vector<1x10x128xf32>
    tpu.vector_store %arg18[%c0_32, %c10, %c0_33], %44 {strides = array<i32>} : memref<4x104x128xf32, #tpu.memory_space<vmem>>, vector<1x10x128xf32>,
    %45 = vector.extract_strided_slice %40 {offsets = [16, 0], sizes = [10, 128], strides = [1, 1]} : vector<64x128xf32> to vector<10x128xf32>
    %c1_34 = arith.constant 1 : index
    %c10_35 = arith.constant 10 : index
    %c0_36 = arith.constant 0 : index
    %46 = vector.load %arg18[%c1_34, %c10_35, %c0_36] : memref<4x104x128xf32, #tpu.memory_space<vmem>>, vector<1x10x128xf32>
    %47 = vector.shape_cast %46 : vector<1x10x128xf32> to vector<10x128xf32>
    %48 = vector.shape_cast %45 : vector<10x128xf32> to vector<1x10x128xf32>
    tpu.vector_store %arg18[%c1_34, %c10_35, %c0_36], %48 {strides = array<i32>} : memref<4x104x128xf32, #tpu.memory_space<vmem>>, vector<1x10x128xf32>,
    %49 = vector.extract_strided_slice %40 {offsets = [32, 0], sizes = [10, 128], strides = [1, 1]} : vector<64x128xf32> to vector<10x128xf32>
    %c2_37 = arith.constant 2 : index
    %c10_38 = arith.constant 10 : index
    %c0_39 = arith.constant 0 : index
    %50 = vector.load %arg18[%c2_37, %c10_38, %c0_39] : memref<4x104x128xf32, #tpu.memory_space<vmem>>, vector<1x10x128xf32>
    %51 = vector.shape_cast %50 : vector<1x10x128xf32> to vector<10x128xf32>
    %52 = vector.shape_cast %49 : vector<10x128xf32> to vector<1x10x128xf32>
    tpu.vector_store %arg18[%c2_37, %c10_38, %c0_39], %52 {strides = array<i32>} : memref<4x104x128xf32, #tpu.memory_space<vmem>>, vector<1x10x128xf32>,
    %53 = vector.extract_strided_slice %40 {offsets = [48, 0], sizes = [10, 128], strides = [1, 1]} : vector<64x128xf32> to vector<10x128xf32>
    %c3_40 = arith.constant 3 : index
    %c10_41 = arith.constant 10 : index
    %c0_42 = arith.constant 0 : index
    %54 = vector.load %arg18[%c3_40, %c10_41, %c0_42] : memref<4x104x128xf32, #tpu.memory_space<vmem>>, vector<1x10x128xf32>
    %55 = vector.shape_cast %54 : vector<1x10x128xf32> to vector<10x128xf32>
    %56 = vector.shape_cast %53 : vector<10x128xf32> to vector<1x10x128xf32>
    tpu.vector_store %arg18[%c3_40, %c10_41, %c0_42], %56 {strides = array<i32>} : memref<4x104x128xf32, #tpu.memory_space<vmem>>, vector<1x10x128xf32>,
    %c72 = arith.constant 72 : index
    %c0_43 = arith.constant 0 : index
    %57 = vector.load %arg13[%c72, %c0_43] : memref<328x128xf32, #tpu.memory_space<vmem>>, vector<36x128xf32>
    %58 = arith.truncf %57 : vector<36x128xf32> to vector<36x128xbf16>
    %cst_44 = arith.constant dense<0.000000e+00> : vector<64x128xf32>
    %59 = tpu.matmul %18, %58, %cst_44 {dimension_numbers = #tpu.dot_dimension_numbers<[1], [0], [0], [1], [0, 0, 1, 1], [], []>} : vector<64x36xbf16>, vector<36x128xbf16>, vector<64x128xf32> -> vector<64x128xf32>
    %60 = vector.extract_strided_slice %59 {offsets = [0, 0], sizes = [10, 128], strides = [1, 1]} : vector<64x128xf32> to vector<10x128xf32>
    %c0_45 = arith.constant 0 : index
    %c20 = arith.constant 20 : index
    %c0_46 = arith.constant 0 : index
    %61 = vector.load %arg18[%c0_45, %c20, %c0_46] : memref<4x104x128xf32, #tpu.memory_space<vmem>>, vector<1x10x128xf32>
    %62 = vector.shape_cast %61 : vector<1x10x128xf32> to vector<10x128xf32>
    %63 = vector.shape_cast %60 : vector<10x128xf32> to vector<1x10x128xf32>
    tpu.vector_store %arg18[%c0_45, %c20, %c0_46], %63 {strides = array<i32>} : memref<4x104x128xf32, #tpu.memory_space<vmem>>, vector<1x10x128xf32>,
    %64 = vector.extract_strided_slice %59 {offsets = [16, 0], sizes = [10, 128], strides = [1, 1]} : vector<64x128xf32> to vector<10x128xf32>
    %c1_47 = arith.constant 1 : index
    %c20_48 = arith.constant 20 : index
    %c0_49 = arith.constant 0 : index
    %65 = vector.load %arg18[%c1_47, %c20_48, %c0_49] : memref<4x104x128xf32, #tpu.memory_space<vmem>>, vector<1x10x128xf32>
    %66 = vector.shape_cast %65 : vector<1x10x128xf32> to vector<10x128xf32>
    %67 = vector.shape_cast %64 : vector<10x128xf32> to vector<1x10x128xf32>
    tpu.vector_store %arg18[%c1_47, %c20_48, %c0_49], %67 {strides = array<i32>} : memref<4x104x128xf32, #tpu.memory_space<vmem>>, vector<1x10x128xf32>,
    %68 = vector.extract_strided_slice %59 {offsets = [32, 0], sizes = [10, 128], strides = [1, 1]} : vector<64x128xf32> to vector<10x128xf32>
    %c2_50 = arith.constant 2 : index
    %c20_51 = arith.constant 20 : index
    %c0_52 = arith.constant 0 : index
    %69 = vector.load %arg18[%c2_50, %c20_51, %c0_52] : memref<4x104x128xf32, #tpu.memory_space<vmem>>, vector<1x10x128xf32>
    %70 = vector.shape_cast %69 : vector<1x10x128xf32> to vector<10x128xf32>
    %71 = vector.shape_cast %68 : vector<10x128xf32> to vector<1x10x128xf32>
    tpu.vector_store %arg18[%c2_50, %c20_51, %c0_52], %71 {strides = array<i32>} : memref<4x104x128xf32, #tpu.memory_space<vmem>>, vector<1x10x128xf32>,
    %72 = vector.extract_strided_slice %59 {offsets = [48, 0], sizes = [10, 128], strides = [1, 1]} : vector<64x128xf32> to vector<10x128xf32>
    %c3_53 = arith.constant 3 : index
    %c20_54 = arith.constant 20 : index
    %c0_55 = arith.constant 0 : index
    %73 = vector.load %arg18[%c3_53, %c20_54, %c0_55] : memref<4x104x128xf32, #tpu.memory_space<vmem>>, vector<1x10x128xf32>
    %74 = vector.shape_cast %73 : vector<1x10x128xf32> to vector<10x128xf32>
    %75 = vector.shape_cast %72 : vector<10x128xf32> to vector<1x10x128xf32>
    tpu.vector_store %arg18[%c3_53, %c20_54, %c0_55], %75 {strides = array<i32>} : memref<4x104x128xf32, #tpu.memory_space<vmem>>, vector<1x10x128xf32>,
    %c108 = arith.constant 108 : index
    %c0_56 = arith.constant 0 : index
    %76 = vector.load %arg13[%c108, %c0_56] : memref<328x128xf32, #tpu.memory_space<vmem>>, vector<36x128xf32>
    %77 = arith.truncf %76 : vector<36x128xf32> to vector<36x128xbf16>
    %cst_57 = arith.constant dense<0.000000e+00> : vector<64x128xf32>
    %78 = tpu.matmul %18, %77, %cst_57 {dimension_numbers = #tpu.dot_dimension_numbers<[1], [0], [0], [1], [0, 0, 1, 1], [], []>} : vector<64x36xbf16>, vector<36x128xbf16>, vector<64x128xf32> -> vector<64x128xf32>
    %79 = vector.extract_strided_slice %78 {offsets = [0, 0], sizes = [10, 128], strides = [1, 1]} : vector<64x128xf32> to vector<10x128xf32>
    %c0_58 = arith.constant 0 : index
    %c30 = arith.constant 30 : index
    %c0_59 = arith.constant 0 : index
    %80 = vector.load %arg18[%c0_58, %c30, %c0_59] : memref<4x104x128xf32, #tpu.memory_space<vmem>>, vector<1x10x128xf32>
    %81 = vector.shape_cast %80 : vector<1x10x128xf32> to vector<10x128xf32>
    %82 = vector.shape_cast %79 : vector<10x128xf32> to vector<1x10x128xf32>
    tpu.vector_store %arg18[%c0_58, %c30, %c0_59], %82 {strides = array<i32>} : memref<4x104x128xf32, #tpu.memory_space<vmem>>, vector<1x10x128xf32>,
    %83 = vector.extract_strided_slice %78 {offsets = [16, 0], sizes = [10, 128], strides = [1, 1]} : vector<64x128xf32> to vector<10x128xf32>
    %c1_60 = arith.constant 1 : index
    %c30_61 = arith.constant 30 : index
    %c0_62 = arith.constant 0 : index
    %84 = vector.load %arg18[%c1_60, %c30_61, %c0_62] : memref<4x104x128xf32, #tpu.memory_space<vmem>>, vector<1x10x128xf32>
    %85 = vector.shape_cast %84 : vector<1x10x128xf32> to vector<10x128xf32>
    %86 = vector.shape_cast %83 : vector<10x128xf32> to vector<1x10x128xf32>
    tpu.vector_store %arg18[%c1_60, %c30_61, %c0_62], %86 {strides = array<i32>} : memref<4x104x128xf32, #tpu.memory_space<vmem>>, vector<1x10x128xf32>,
    %87 = vector.extract_strided_slice %78 {offsets = [32, 0], sizes = [10, 128], strides = [1, 1]} : vector<64x128xf32> to vector<10x128xf32>
    %c2_63 = arith.constant 2 : index
    %c30_64 = arith.constant 30 : index
    %c0_65 = arith.constant 0 : index
    %88 = vector.load %arg18[%c2_63, %c30_64, %c0_65] : memref<4x104x128xf32, #tpu.memory_space<vmem>>, vector<1x10x128xf32>
    %89 = vector.shape_cast %88 : vector<1x10x128xf32> to vector<10x128xf32>
    %90 = vector.shape_cast %87 : vector<10x128xf32> to vector<1x10x128xf32>
    tpu.vector_store %arg18[%c2_63, %c30_64, %c0_65], %90 {strides = array<i32>} : memref<4x104x128xf32, #tpu.memory_space<vmem>>, vector<1x10x128xf32>,
    %91 = vector.extract_strided_slice %78 {offsets = [48, 0], sizes = [10, 128], strides = [1, 1]} : vector<64x128xf32> to vector<10x128xf32>
    %c3_66 = arith.constant 3 : index
    %c30_67 = arith.constant 30 : index
    %c0_68 = arith.constant 0 : index
    %92 = vector.load %arg18[%c3_66, %c30_67, %c0_68] : memref<4x104x128xf32, #tpu.memory_space<vmem>>, vector<1x10x128xf32>
    %93 = vector.shape_cast %92 : vector<1x10x128xf32> to vector<10x128xf32>
    %94 = vector.shape_cast %91 : vector<10x128xf32> to vector<1x10x128xf32>
    tpu.vector_store %arg18[%c3_66, %c30_67, %c0_68], %94 {strides = array<i32>} : memref<4x104x128xf32, #tpu.memory_space<vmem>>, vector<1x10x128xf32>,
    %c144 = arith.constant 144 : index
    %c0_69 = arith.constant 0 : index
    %95 = vector.load %arg13[%c144, %c0_69] : memref<328x128xf32, #tpu.memory_space<vmem>>, vector<36x128xf32>
    %96 = arith.truncf %95 : vector<36x128xf32> to vector<36x128xbf16>
    %cst_70 = arith.constant dense<0.000000e+00> : vector<64x128xf32>
    %97 = tpu.matmul %18, %96, %cst_70 {dimension_numbers = #tpu.dot_dimension_numbers<[1], [0], [0], [1], [0, 0, 1, 1], [], []>} : vector<64x36xbf16>, vector<36x128xbf16>, vector<64x128xf32> -> vector<64x128xf32>
    %98 = vector.extract_strided_slice %97 {offsets = [0, 0], sizes = [10, 128], strides = [1, 1]} : vector<64x128xf32> to vector<10x128xf32>
    %c0_71 = arith.constant 0 : index
    %c40 = arith.constant 40 : index
    %c0_72 = arith.constant 0 : index
    %99 = vector.load %arg18[%c0_71, %c40, %c0_72] : memref<4x104x128xf32, #tpu.memory_space<vmem>>, vector<1x10x128xf32>
    %100 = vector.shape_cast %99 : vector<1x10x128xf32> to vector<10x128xf32>
    %101 = vector.shape_cast %98 : vector<10x128xf32> to vector<1x10x128xf32>
    tpu.vector_store %arg18[%c0_71, %c40, %c0_72], %101 {strides = array<i32>} : memref<4x104x128xf32, #tpu.memory_space<vmem>>, vector<1x10x128xf32>,
    %102 = vector.extract_strided_slice %97 {offsets = [16, 0], sizes = [10, 128], strides = [1, 1]} : vector<64x128xf32> to vector<10x128xf32>
    %c1_73 = arith.constant 1 : index
    %c40_74 = arith.constant 40 : index
    %c0_75 = arith.constant 0 : index
    %103 = vector.load %arg18[%c1_73, %c40_74, %c0_75] : memref<4x104x128xf32, #tpu.memory_space<vmem>>, vector<1x10x128xf32>
    %104 = vector.shape_cast %103 : vector<1x10x128xf32> to vector<10x128xf32>
    %105 = vector.shape_cast %102 : vector<10x128xf32> to vector<1x10x128xf32>
    tpu.vector_store %arg18[%c1_73, %c40_74, %c0_75], %105 {strides = array<i32>} : memref<4x104x128xf32, #tpu.memory_space<vmem>>, vector<1x10x128xf32>,
    %106 = vector.extract_strided_slice %97 {offsets = [32, 0], sizes = [10, 128], strides = [1, 1]} : vector<64x128xf32> to vector<10x128xf32>
    %c2_76 = arith.constant 2 : index
    %c40_77 = arith.constant 40 : index
    %c0_78 = arith.constant 0 : index
    %107 = vector.load %arg18[%c2_76, %c40_77, %c0_78] : memref<4x104x128xf32, #tpu.memory_space<vmem>>, vector<1x10x128xf32>
    %108 = vector.shape_cast %107 : vector<1x10x128xf32> to vector<10x128xf32>
    %109 = vector.shape_cast %106 : vector<10x128xf32> to vector<1x10x128xf32>
    tpu.vector_store %arg18[%c2_76, %c40_77, %c0_78], %109 {strides = array<i32>} : memref<4x104x128xf32, #tpu.memory_space<vmem>>, vector<1x10x128xf32>,
    %110 = vector.extract_strided_slice %97 {offsets = [48, 0], sizes = [10, 128], strides = [1, 1]} : vector<64x128xf32> to vector<10x128xf32>
    %c3_79 = arith.constant 3 : index
    %c40_80 = arith.constant 40 : index
    %c0_81 = arith.constant 0 : index
    %111 = vector.load %arg18[%c3_79, %c40_80, %c0_81] : memref<4x104x128xf32, #tpu.memory_space<vmem>>, vector<1x10x128xf32>
    %112 = vector.shape_cast %111 : vector<1x10x128xf32> to vector<10x128xf32>
    %113 = vector.shape_cast %110 : vector<10x128xf32> to vector<1x10x128xf32>
    tpu.vector_store %arg18[%c3_79, %c40_80, %c0_81], %113 {strides = array<i32>} : memref<4x104x128xf32, #tpu.memory_space<vmem>>, vector<1x10x128xf32>,
    %c180 = arith.constant 180 : index
    %c0_82 = arith.constant 0 : index
    %114 = vector.load %arg13[%c180, %c0_82] : memref<328x128xf32, #tpu.memory_space<vmem>>, vector<36x128xf32>
    %115 = arith.truncf %114 : vector<36x128xf32> to vector<36x128xbf16>
    %cst_83 = arith.constant dense<0.000000e+00> : vector<64x128xf32>
    %116 = tpu.matmul %18, %115, %cst_83 {dimension_numbers = #tpu.dot_dimension_numbers<[1], [0], [0], [1], [0, 0, 1, 1], [], []>} : vector<64x36xbf16>, vector<36x128xbf16>, vector<64x128xf32> -> vector<64x128xf32>
    %117 = vector.extract_strided_slice %116 {offsets = [0, 0], sizes = [10, 128], strides = [1, 1]} : vector<64x128xf32> to vector<10x128xf32>
    %c0_84 = arith.constant 0 : index
    %c50 = arith.constant 50 : index
    %c0_85 = arith.constant 0 : index
    %118 = vector.load %arg18[%c0_84, %c50, %c0_85] : memref<4x104x128xf32, #tpu.memory_space<vmem>>, vector<1x10x128xf32>
    %119 = vector.shape_cast %118 : vector<1x10x128xf32> to vector<10x128xf32>
    %120 = vector.shape_cast %117 : vector<10x128xf32> to vector<1x10x128xf32>
    tpu.vector_store %arg18[%c0_84, %c50, %c0_85], %120 {strides = array<i32>} : memref<4x104x128xf32, #tpu.memory_space<vmem>>, vector<1x10x128xf32>,
    %121 = vector.extract_strided_slice %116 {offsets = [16, 0], sizes = [10, 128], strides = [1, 1]} : vector<64x128xf32> to vector<10x128xf32>
    %c1_86 = arith.constant 1 : index
    %c50_87 = arith.constant 50 : index
    %c0_88 = arith.constant 0 : index
    %122 = vector.load %arg18[%c1_86, %c50_87, %c0_88] : memref<4x104x128xf32, #tpu.memory_space<vmem>>, vector<1x10x128xf32>
    %123 = vector.shape_cast %122 : vector<1x10x128xf32> to vector<10x128xf32>
    %124 = vector.shape_cast %121 : vector<10x128xf32> to vector<1x10x128xf32>
    tpu.vector_store %arg18[%c1_86, %c50_87, %c0_88], %124 {strides = array<i32>} : memref<4x104x128xf32, #tpu.memory_space<vmem>>, vector<1x10x128xf32>,
    %125 = vector.extract_strided_slice %116 {offsets = [32, 0], sizes = [10, 128], strides = [1, 1]} : vector<64x128xf32> to vector<10x128xf32>
    %c2_89 = arith.constant 2 : index
    %c50_90 = arith.constant 50 : index
    %c0_91 = arith.constant 0 : index
    %126 = vector.load %arg18[%c2_89, %c50_90, %c0_91] : memref<4x104x128xf32, #tpu.memory_space<vmem>>, vector<1x10x128xf32>
    %127 = vector.shape_cast %126 : vector<1x10x128xf32> to vector<10x128xf32>
    %128 = vector.shape_cast %125 : vector<10x128xf32> to vector<1x10x128xf32>
    tpu.vector_store %arg18[%c2_89, %c50_90, %c0_91], %128 {strides = array<i32>} : memref<4x104x128xf32, #tpu.memory_space<vmem>>, vector<1x10x128xf32>,
    %129 = vector.extract_strided_slice %116 {offsets = [48, 0], sizes = [10, 128], strides = [1, 1]} : vector<64x128xf32> to vector<10x128xf32>
    %c3_92 = arith.constant 3 : index
    %c50_93 = arith.constant 50 : index
    %c0_94 = arith.constant 0 : index
    %130 = vector.load %arg18[%c3_92, %c50_93, %c0_94] : memref<4x104x128xf32, #tpu.memory_space<vmem>>, vector<1x10x128xf32>
    %131 = vector.shape_cast %130 : vector<1x10x128xf32> to vector<10x128xf32>
    %132 = vector.shape_cast %129 : vector<10x128xf32> to vector<1x10x128xf32>
    tpu.vector_store %arg18[%c3_92, %c50_93, %c0_94], %132 {strides = array<i32>} : memref<4x104x128xf32, #tpu.memory_space<vmem>>, vector<1x10x128xf32>,
    %c216 = arith.constant 216 : index
    %c0_95 = arith.constant 0 : index
    %133 = vector.load %arg13[%c216, %c0_95] : memref<328x128xf32, #tpu.memory_space<vmem>>, vector<36x128xf32>
    %134 = arith.truncf %133 : vector<36x128xf32> to vector<36x128xbf16>
    %cst_96 = arith.constant dense<0.000000e+00> : vector<64x128xf32>
    %135 = tpu.matmul %18, %134, %cst_96 {dimension_numbers = #tpu.dot_dimension_numbers<[1], [0], [0], [1], [0, 0, 1, 1], [], []>} : vector<64x36xbf16>, vector<36x128xbf16>, vector<64x128xf32> -> vector<64x128xf32>
    %136 = vector.extract_strided_slice %135 {offsets = [0, 0], sizes = [10, 128], strides = [1, 1]} : vector<64x128xf32> to vector<10x128xf32>
    %c0_97 = arith.constant 0 : index
    %c60 = arith.constant 60 : index
    %c0_98 = arith.constant 0 : index
    %137 = vector.load %arg18[%c0_97, %c60, %c0_98] : memref<4x104x128xf32, #tpu.memory_space<vmem>>, vector<1x10x128xf32>
    %138 = vector.shape_cast %137 : vector<1x10x128xf32> to vector<10x128xf32>
    %139 = vector.shape_cast %136 : vector<10x128xf32> to vector<1x10x128xf32>
    tpu.vector_store %arg18[%c0_97, %c60, %c0_98], %139 {strides = array<i32>} : memref<4x104x128xf32, #tpu.memory_space<vmem>>, vector<1x10x128xf32>,
    %140 = vector.extract_strided_slice %135 {offsets = [16, 0], sizes = [10, 128], strides = [1, 1]} : vector<64x128xf32> to vector<10x128xf32>
    %c1_99 = arith.constant 1 : index
    %c60_100 = arith.constant 60 : index
    %c0_101 = arith.constant 0 : index
    %141 = vector.load %arg18[%c1_99, %c60_100, %c0_101] : memref<4x104x128xf32, #tpu.memory_space<vmem>>, vector<1x10x128xf32>
    %142 = vector.shape_cast %141 : vector<1x10x128xf32> to vector<10x128xf32>
    %143 = vector.shape_cast %140 : vector<10x128xf32> to vector<1x10x128xf32>
    tpu.vector_store %arg18[%c1_99, %c60_100, %c0_101], %143 {strides = array<i32>} : memref<4x104x128xf32, #tpu.memory_space<vmem>>, vector<1x10x128xf32>,
    %144 = vector.extract_strided_slice %135 {offsets = [32, 0], sizes = [10, 128], strides = [1, 1]} : vector<64x128xf32> to vector<10x128xf32>
    %c2_102 = arith.constant 2 : index
    %c60_103 = arith.constant 60 : index
    %c0_104 = arith.constant 0 : index
    %145 = vector.load %arg18[%c2_102, %c60_103, %c0_104] : memref<4x104x128xf32, #tpu.memory_space<vmem>>, vector<1x10x128xf32>
    %146 = vector.shape_cast %145 : vector<1x10x128xf32> to vector<10x128xf32>
    %147 = vector.shape_cast %144 : vector<10x128xf32> to vector<1x10x128xf32>
    tpu.vector_store %arg18[%c2_102, %c60_103, %c0_104], %147 {strides = array<i32>} : memref<4x104x128xf32, #tpu.memory_space<vmem>>, vector<1x10x128xf32>,
    %148 = vector.extract_strided_slice %135 {offsets = [48, 0], sizes = [10, 128], strides = [1, 1]} : vector<64x128xf32> to vector<10x128xf32>
    %c3_105 = arith.constant 3 : index
    %c60_106 = arith.constant 60 : index
    %c0_107 = arith.constant 0 : index
    %149 = vector.load %arg18[%c3_105, %c60_106, %c0_107] : memref<4x104x128xf32, #tpu.memory_space<vmem>>, vector<1x10x128xf32>
    %150 = vector.shape_cast %149 : vector<1x10x128xf32> to vector<10x128xf32>
    %151 = vector.shape_cast %148 : vector<10x128xf32> to vector<1x10x128xf32>
    tpu.vector_store %arg18[%c3_105, %c60_106, %c0_107], %151 {strides = array<i32>} : memref<4x104x128xf32, #tpu.memory_space<vmem>>, vector<1x10x128xf32>,
    %c252 = arith.constant 252 : index
    %c0_108 = arith.constant 0 : index
    %152 = vector.load %arg13[%c252, %c0_108] : memref<328x128xf32, #tpu.memory_space<vmem>>, vector<36x128xf32>
    %153 = arith.truncf %152 : vector<36x128xf32> to vector<36x128xbf16>
    %cst_109 = arith.constant dense<0.000000e+00> : vector<64x128xf32>
    %154 = tpu.matmul %18, %153, %cst_109 {dimension_numbers = #tpu.dot_dimension_numbers<[1], [0], [0], [1], [0, 0, 1, 1], [], []>} : vector<64x36xbf16>, vector<36x128xbf16>, vector<64x128xf32> -> vector<64x128xf32>
    %155 = vector.extract_strided_slice %154 {offsets = [0, 0], sizes = [10, 128], strides = [1, 1]} : vector<64x128xf32> to vector<10x128xf32>
    %c0_110 = arith.constant 0 : index
    %c70 = arith.constant 70 : index
    %c0_111 = arith.constant 0 : index
    %156 = vector.load %arg18[%c0_110, %c70, %c0_111] : memref<4x104x128xf32, #tpu.memory_space<vmem>>, vector<1x10x128xf32>
    %157 = vector.shape_cast %156 : vector<1x10x128xf32> to vector<10x128xf32>
    %158 = vector.shape_cast %155 : vector<10x128xf32> to vector<1x10x128xf32>
    tpu.vector_store %arg18[%c0_110, %c70, %c0_111], %158 {strides = array<i32>} : memref<4x104x128xf32, #tpu.memory_space<vmem>>, vector<1x10x128xf32>,
    %159 = vector.extract_strided_slice %154 {offsets = [16, 0], sizes = [10, 128], strides = [1, 1]} : vector<64x128xf32> to vector<10x128xf32>
    %c1_112 = arith.constant 1 : index
    %c70_113 = arith.constant 70 : index
    %c0_114 = arith.constant 0 : index
    %160 = vector.load %arg18[%c1_112, %c70_113, %c0_114] : memref<4x104x128xf32, #tpu.memory_space<vmem>>, vector<1x10x128xf32>
    %161 = vector.shape_cast %160 : vector<1x10x128xf32> to vector<10x128xf32>
    %162 = vector.shape_cast %159 : vector<10x128xf32> to vector<1x10x128xf32>
    tpu.vector_store %arg18[%c1_112, %c70_113, %c0_114], %162 {strides = array<i32>} : memref<4x104x128xf32, #tpu.memory_space<vmem>>, vector<1x10x128xf32>,
    %163 = vector.extract_strided_slice %154 {offsets = [32, 0], sizes = [10, 128], strides = [1, 1]} : vector<64x128xf32> to vector<10x128xf32>
    %c2_115 = arith.constant 2 : index
    %c70_116 = arith.constant 70 : index
    %c0_117 = arith.constant 0 : index
    %164 = vector.load %arg18[%c2_115, %c70_116, %c0_117] : memref<4x104x128xf32, #tpu.memory_space<vmem>>, vector<1x10x128xf32>
    %165 = vector.shape_cast %164 : vector<1x10x128xf32> to vector<10x128xf32>
    %166 = vector.shape_cast %163 : vector<10x128xf32> to vector<1x10x128xf32>
    tpu.vector_store %arg18[%c2_115, %c70_116, %c0_117], %166 {strides = array<i32>} : memref<4x104x128xf32, #tpu.memory_space<vmem>>, vector<1x10x128xf32>,
    %167 = vector.extract_strided_slice %154 {offsets = [48, 0], sizes = [10, 128], strides = [1, 1]} : vector<64x128xf32> to vector<10x128xf32>
    %c3_118 = arith.constant 3 : index
    %c70_119 = arith.constant 70 : index
    %c0_120 = arith.constant 0 : index
    %168 = vector.load %arg18[%c3_118, %c70_119, %c0_120] : memref<4x104x128xf32, #tpu.memory_space<vmem>>, vector<1x10x128xf32>
    %169 = vector.shape_cast %168 : vector<1x10x128xf32> to vector<10x128xf32>
    %170 = vector.shape_cast %167 : vector<10x128xf32> to vector<1x10x128xf32>
    tpu.vector_store %arg18[%c3_118, %c70_119, %c0_120], %170 {strides = array<i32>} : memref<4x104x128xf32, #tpu.memory_space<vmem>>, vector<1x10x128xf32>,
    %c288 = arith.constant 288 : index
    %c0_121 = arith.constant 0 : index
    %171 = vector.load %arg13[%c288, %c0_121] : memref<328x128xf32, #tpu.memory_space<vmem>>, vector<36x128xf32>
    %172 = arith.truncf %171 : vector<36x128xf32> to vector<36x128xbf16>
    %cst_122 = arith.constant dense<0.000000e+00> : vector<64x128xf32>
    %173 = tpu.matmul %18, %172, %cst_122 {dimension_numbers = #tpu.dot_dimension_numbers<[1], [0], [0], [1], [0, 0, 1, 1], [], []>} : vector<64x36xbf16>, vector<36x128xbf16>, vector<64x128xf32> -> vector<64x128xf32>
    %174 = vector.extract_strided_slice %173 {offsets = [0, 0], sizes = [10, 128], strides = [1, 1]} : vector<64x128xf32> to vector<10x128xf32>
    %c0_123 = arith.constant 0 : index
    %c80 = arith.constant 80 : index
    %c0_124 = arith.constant 0 : index
    %175 = vector.load %arg18[%c0_123, %c80, %c0_124] : memref<4x104x128xf32, #tpu.memory_space<vmem>>, vector<1x10x128xf32>
    %176 = vector.shape_cast %175 : vector<1x10x128xf32> to vector<10x128xf32>
    %177 = vector.shape_cast %174 : vector<10x128xf32> to vector<1x10x128xf32>
    tpu.vector_store %arg18[%c0_123, %c80, %c0_124], %177 {strides = array<i32>} : memref<4x104x128xf32, #tpu.memory_space<vmem>>, vector<1x10x128xf32>,
    %178 = vector.extract_strided_slice %173 {offsets = [16, 0], sizes = [10, 128], strides = [1, 1]} : vector<64x128xf32> to vector<10x128xf32>
    %c1_125 = arith.constant 1 : index
    %c80_126 = arith.constant 80 : index
    %c0_127 = arith.constant 0 : index
    %179 = vector.load %arg18[%c1_125, %c80_126, %c0_127] : memref<4x104x128xf32, #tpu.memory_space<vmem>>, vector<1x10x128xf32>
    %180 = vector.shape_cast %179 : vector<1x10x128xf32> to vector<10x128xf32>
    %181 = vector.shape_cast %178 : vector<10x128xf32> to vector<1x10x128xf32>
    tpu.vector_store %arg18[%c1_125, %c80_126, %c0_127], %181 {strides = array<i32>} : memref<4x104x128xf32, #tpu.memory_space<vmem>>, vector<1x10x128xf32>,
    %182 = vector.extract_strided_slice %173 {offsets = [32, 0], sizes = [10, 128], strides = [1, 1]} : vector<64x128xf32> to vector<10x128xf32>
    %c2_128 = arith.constant 2 : index
    %c80_129 = arith.constant 80 : index
    %c0_130 = arith.constant 0 : index
    %183 = vector.load %arg18[%c2_128, %c80_129, %c0_130] : memref<4x104x128xf32, #tpu.memory_space<vmem>>, vector<1x10x128xf32>
    %184 = vector.shape_cast %183 : vector<1x10x128xf32> to vector<10x128xf32>
    %185 = vector.shape_cast %182 : vector<10x128xf32> to vector<1x10x128xf32>
    tpu.vector_store %arg18[%c2_128, %c80_129, %c0_130], %185 {strides = array<i32>} : memref<4x104x128xf32, #tpu.memory_space<vmem>>, vector<1x10x128xf32>,
    %186 = vector.extract_strided_slice %173 {offsets = [48, 0], sizes = [10, 128], strides = [1, 1]} : vector<64x128xf32> to vector<10x128xf32>
    %c3_131 = arith.constant 3 : index
    %c80_132 = arith.constant 80 : index
    %c0_133 = arith.constant 0 : index
    %187 = vector.load %arg18[%c3_131, %c80_132, %c0_133] : memref<4x104x128xf32, #tpu.memory_space<vmem>>, vector<1x10x128xf32>
    %188 = vector.shape_cast %187 : vector<1x10x128xf32> to vector<10x128xf32>
    %189 = vector.shape_cast %186 : vector<10x128xf32> to vector<1x10x128xf32>
    tpu.vector_store %arg18[%c3_131, %c80_132, %c0_133], %189 {strides = array<i32>} : memref<4x104x128xf32, #tpu.memory_space<vmem>>, vector<1x10x128xf32>,
    %cst_134 = arith.constant 0.000000e+00 : f32
    %190 = vector.broadcast %cst_134 : f32 to vector<78x128xf32>
    %c0_135 = arith.constant 0 : index
    %c0_136 = arith.constant 0 : index
    %c0_137 = arith.constant 0 : index
    %191 = vector.load %arg18[%c0_135, %c0_136, %c0_137] : memref<4x104x128xf32, #tpu.memory_space<vmem>>, vector<1x78x128xf32>
    %192 = vector.shape_cast %191 : vector<1x78x128xf32> to vector<78x128xf32>
    %193 = arith.truncf %192 : vector<78x128xf32> to vector<78x128xbf16>
    %c0_138 = arith.constant 0 : index
    %c0_139 = arith.constant 0 : index
    %c0_140 = arith.constant 0 : index
    %c0_141 = arith.constant 0 : index
    %194 = vector.load %arg3[%c0_138, %c0_139, %c0_140, %c0_141] : memref<5x9x128x128xbf16, #tpu.memory_space<vmem>>, vector<1x1x128x128xbf16>
    %195 = vector.shape_cast %194 : vector<1x1x128x128xbf16> to vector<128x128xbf16>
    %cst_142 = arith.constant dense<0.000000e+00> : vector<78x128xf32>
    %196 = tpu.matmul %193, %195, %cst_142 {dimension_numbers = #tpu.dot_dimension_numbers<[1], [0], [0], [1], [0, 0, 1, 1], [], []>} : vector<78x128xbf16>, vector<128x128xbf16>, vector<78x128xf32> -> vector<78x128xf32>
    %197 = arith.addf %190, %196 : vector<78x128xf32>
    %c1_143 = arith.constant 1 : index
    %c0_144 = arith.constant 0 : index
    %c0_145 = arith.constant 0 : index
    %198 = vector.load %arg18[%c1_143, %c0_144, %c0_145] : memref<4x104x128xf32, #tpu.memory_space<vmem>>, vector<1x78x128xf32>
    %199 = vector.shape_cast %198 : vector<1x78x128xf32> to vector<78x128xf32>
    %200 = arith.truncf %199 : vector<78x128xf32> to vector<78x128xbf16>
    %c0_146 = arith.constant 0 : index
    %c1_147 = arith.constant 1 : index
    %c0_148 = arith.constant 0 : index
    %c0_149 = arith.constant 0 : index
    %201 = vector.load %arg3[%c0_146, %c1_147, %c0_148, %c0_149] : memref<5x9x128x128xbf16, #tpu.memory_space<vmem>>, vector<1x1x128x128xbf16>
    %202 = vector.shape_cast %201 : vector<1x1x128x128xbf16> to vector<128x128xbf16>
    %cst_150 = arith.constant dense<0.000000e+00> : vector<78x128xf32>
    %203 = tpu.matmul %200, %202, %cst_150 {dimension_numbers = #tpu.dot_dimension_numbers<[1], [0], [0], [1], [0, 0, 1, 1], [], []>} : vector<78x128xbf16>, vector<128x128xbf16>, vector<78x128xf32> -> vector<78x128xf32>
    %204 = arith.addf %197, %203 : vector<78x128xf32>
    %c0_151 = arith.constant 0 : index
    %c1_152 = arith.constant 1 : index
    %c0_153 = arith.constant 0 : index
    %205 = vector.load %arg18[%c0_151, %c1_152, %c0_153] : memref<4x104x128xf32, #tpu.memory_space<vmem>>, vector<1x78x128xf32>
    %206 = vector.shape_cast %205 : vector<1x78x128xf32> to vector<78x128xf32>
    %207 = arith.truncf %206 : vector<78x128xf32> to vector<78x128xbf16>
    %c0_154 = arith.constant 0 : index
    %c2_155 = arith.constant 2 : index
    %c0_156 = arith.constant 0 : index
    %c0_157 = arith.constant 0 : index
    %208 = vector.load %arg3[%c0_154, %c2_155, %c0_156, %c0_157] : memref<5x9x128x128xbf16, #tpu.memory_space<vmem>>, vector<1x1x128x128xbf16>
    %209 = vector.shape_cast %208 : vector<1x1x128x128xbf16> to vector<128x128xbf16>
    %cst_158 = arith.constant dense<0.000000e+00> : vector<78x128xf32>
    %210 = tpu.matmul %207, %209, %cst_158 {dimension_numbers = #tpu.dot_dimension_numbers<[1], [0], [0], [1], [0, 0, 1, 1], [], []>} : vector<78x128xbf16>, vector<128x128xbf16>, vector<78x128xf32> -> vector<78x128xf32>
    %211 = arith.addf %204, %210 : vector<78x128xf32>
    %c2_159 = arith.constant 2 : index
    %c0_160 = arith.constant 0 : index
    %c0_161 = arith.constant 0 : index
    %212 = vector.load %arg18[%c2_159, %c0_160, %c0_161] : memref<4x104x128xf32, #tpu.memory_space<vmem>>, vector<1x78x128xf32>
    %213 = vector.shape_cast %212 : vector<1x78x128xf32> to vector<78x128xf32>
    %214 = arith.truncf %213 : vector<78x128xf32> to vector<78x128xbf16>
    %c0_162 = arith.constant 0 : index
    %c3_163 = arith.constant 3 : index
    %c0_164 = arith.constant 0 : index
    %c0_165 = arith.constant 0 : index
    %215 = vector.load %arg3[%c0_162, %c3_163, %c0_164, %c0_165] : memref<5x9x128x128xbf16, #tpu.memory_space<vmem>>, vector<1x1x128x128xbf16>
    %216 = vector.shape_cast %215 : vector<1x1x128x128xbf16> to vector<128x128xbf16>
    %cst_166 = arith.constant dense<0.000000e+00> : vector<78x128xf32>
    %217 = tpu.matmul %214, %216, %cst_166 {dimension_numbers = #tpu.dot_dimension_numbers<[1], [0], [0], [1], [0, 0, 1, 1], [], []>} : vector<78x128xbf16>, vector<128x128xbf16>, vector<78x128xf32> -> vector<78x128xf32>
    %218 = arith.addf %211, %217 : vector<78x128xf32>
    %c3_167 = arith.constant 3 : index
    %c0_168 = arith.constant 0 : index
    %c0_169 = arith.constant 0 : index
    %219 = vector.load %arg18[%c3_167, %c0_168, %c0_169] : memref<4x104x128xf32, #tpu.memory_space<vmem>>, vector<1x78x128xf32>
    %220 = vector.shape_cast %219 : vector<1x78x128xf32> to vector<78x128xf32>
    %221 = arith.truncf %220 : vector<78x128xf32> to vector<78x128xbf16>
    %c0_170 = arith.constant 0 : index
    %c4 = arith.constant 4 : index
    %c0_171 = arith.constant 0 : index
    %c0_172 = arith.constant 0 : index
    %222 = vector.load %arg3[%c0_170, %c4, %c0_171, %c0_172] : memref<5x9x128x128xbf16, #tpu.memory_space<vmem>>, vector<1x1x128x128xbf16>
    %223 = vector.shape_cast %222 : vector<1x1x128x128xbf16> to vector<128x128xbf16>
    %cst_173 = arith.constant dense<0.000000e+00> : vector<78x128xf32>
    %224 = tpu.matmul %221, %223, %cst_173 {dimension_numbers = #tpu.dot_dimension_numbers<[1], [0], [0], [1], [0, 0, 1, 1], [], []>} : vector<78x128xbf16>, vector<128x128xbf16>, vector<78x128xf32> -> vector<78x128xf32>
    %225 = arith.addf %218, %224 : vector<78x128xf32>
    %c2_174 = arith.constant 2 : index
    %c1_175 = arith.constant 1 : index
    %c0_176 = arith.constant 0 : index
    %226 = vector.load %arg18[%c2_174, %c1_175, %c0_176] : memref<4x104x128xf32, #tpu.memory_space<vmem>>, vector<1x78x128xf32>
    %227 = vector.shape_cast %226 : vector<1x78x128xf32> to vector<78x128xf32>
    %228 = arith.truncf %227 : vector<78x128xf32> to vector<78x128xbf16>
    %c0_177 = arith.constant 0 : index
    %c5 = arith.constant 5 : index
    %c0_178 = arith.constant 0 : index
    %c0_179 = arith.constant 0 : index
    %229 = vector.load %arg3[%c0_177, %c5, %c0_178, %c0_179] : memref<5x9x128x128xbf16, #tpu.memory_space<vmem>>, vector<1x1x128x128xbf16>
    %230 = vector.shape_cast %229 : vector<1x1x128x128xbf16> to vector<128x128xbf16>
    %cst_180 = arith.constant dense<0.000000e+00> : vector<78x128xf32>
    %231 = tpu.matmul %228, %230, %cst_180 {dimension_numbers = #tpu.dot_dimension_numbers<[1], [0], [0], [1], [0, 0, 1, 1], [], []>} : vector<78x128xbf16>, vector<128x128xbf16>, vector<78x128xf32> -> vector<78x128xf32>
    %232 = arith.addf %225, %231 : vector<78x128xf32>
    %c0_181 = arith.constant 0 : index
    %c10_182 = arith.constant 10 : index
    %c0_183 = arith.constant 0 : index
    %233 = vector.load %arg18[%c0_181, %c10_182, %c0_183] : memref<4x104x128xf32, #tpu.memory_space<vmem>>, vector<1x78x128xf32>
    %234 = vector.shape_cast %233 : vector<1x78x128xf32> to vector<78x128xf32>
    %235 = arith.truncf %234 : vector<78x128xf32> to vector<78x128xbf16>
    %c0_184 = arith.constant 0 : index
    %c6 = arith.constant 6 : index
    %c0_185 = arith.constant 0 : index
    %c0_186 = arith.constant 0 : index
    %236 = vector.load %arg3[%c0_184, %c6, %c0_185, %c0_186] : memref<5x9x128x128xbf16, #tpu.memory_space<vmem>>, vector<1x1x128x128xbf16>
    %237 = vector.shape_cast %236 : vector<1x1x128x128xbf16> to vector<128x128xbf16>
    %cst_187 = arith.constant dense<0.000000e+00> : vector<78x128xf32>
    %238 = tpu.matmul %235, %237, %cst_187 {dimension_numbers = #tpu.dot_dimension_numbers<[1], [0], [0], [1], [0, 0, 1, 1], [], []>} : vector<78x128xbf16>, vector<128x128xbf16>, vector<78x128xf32> -> vector<78x128xf32>
    %239 = arith.addf %232, %238 : vector<78x128xf32>
    %c1_188 = arith.constant 1 : index
    %c10_189 = arith.constant 10 : index
    %c0_190 = arith.constant 0 : index
    %240 = vector.load %arg18[%c1_188, %c10_189, %c0_190] : memref<4x104x128xf32, #tpu.memory_space<vmem>>, vector<1x78x128xf32>
    %241 = vector.shape_cast %240 : vector<1x78x128xf32> to vector<78x128xf32>
    %242 = arith.truncf %241 : vector<78x128xf32> to vector<78x128xbf16>
    %c0_191 = arith.constant 0 : index
    %c7 = arith.constant 7 : index
    %c0_192 = arith.constant 0 : index
    %c0_193 = arith.constant 0 : index
    %243 = vector.load %arg3[%c0_191, %c7, %c0_192, %c0_193] : memref<5x9x128x128xbf16, #tpu.memory_space<vmem>>, vector<1x1x128x128xbf16>
    %244 = vector.shape_cast %243 : vector<1x1x128x128xbf16> to vector<128x128xbf16>
    %cst_194 = arith.constant dense<0.000000e+00> : vector<78x128xf32>
    %245 = tpu.matmul %242, %244, %cst_194 {dimension_numbers = #tpu.dot_dimension_numbers<[1], [0], [0], [1], [0, 0, 1, 1], [], []>} : vector<78x128xbf16>, vector<128x128xbf16>, vector<78x128xf32> -> vector<78x128xf32>
    %246 = arith.addf %239, %245 : vector<78x128xf32>
    %c0_195 = arith.constant 0 : index
    %c11 = arith.constant 11 : index
    %c0_196 = arith.constant 0 : index
    %247 = vector.load %arg18[%c0_195, %c11, %c0_196] : memref<4x104x128xf32, #tpu.memory_space<vmem>>, vector<1x78x128xf32>
    %248 = vector.shape_cast %247 : vector<1x78x128xf32> to vector<78x128xf32>
    %249 = arith.truncf %248 : vector<78x128xf32> to vector<78x128xbf16>
    %c0_197 = arith.constant 0 : index
    %c8 = arith.constant 8 : index
    %c0_198 = arith.constant 0 : index
    %c0_199 = arith.constant 0 : index
    %250 = vector.load %arg3[%c0_197, %c8, %c0_198, %c0_199] : memref<5x9x128x128xbf16, #tpu.memory_space<vmem>>, vector<1x1x128x128xbf16>
    %251 = vector.shape_cast %250 : vector<1x1x128x128xbf16> to vector<128x128xbf16>
    %cst_200 = arith.constant dense<0.000000e+00> : vector<78x128xf32>
    %252 = tpu.matmul %249, %251, %cst_200 {dimension_numbers = #tpu.dot_dimension_numbers<[1], [0], [0], [1], [0, 0, 1, 1], [], []>} : vector<78x128xbf16>, vector<128x128xbf16>, vector<78x128xf32> -> vector<78x128xf32>
    %253 = arith.addf %246, %252 : vector<78x128xf32>
    %c1_201 = arith.constant 1 : index
    %c0_202 = arith.constant 0 : index
    %c0_203 = arith.constant 0 : index
    %254 = vector.load %arg4[%c1_201, %c0_202, %c0_203] : memref<6x1x128xf32, #tpu.memory_space<vmem>>, vector<1x1x128xf32>
    %255 = vector.shape_cast %254 : vector<1x1x128xf32> to vector<1x128xf32>
    %256 = vector.broadcast %255 : vector<1x128xf32> to vector<78x128xf32>
    %257 = arith.addf %253, %256 : vector<78x128xf32>
    %cst_204 = arith.constant 0.000000e+00 : f32
    %258 = vector.broadcast %cst_204 : f32 to vector<78x128xf32>
    %259 = arith.maximumf %257, %258 : vector<78x128xf32>
    %c286 = arith.constant 286 : index
    %c0_205 = arith.constant 0 : index
    %260 = vector.load %arg5[%c286, %c0_205] : memref<472x128xbf16, #tpu.memory_space<vmem>>, vector<78x128xbf16>
    %261 = arith.extf %260 : vector<78x128xbf16> to vector<78x128xf32>
    %262 = arith.mulf %259, %261 : vector<78x128xf32>
    %cst_206 = arith.constant 0.000000e+00 : f32
    %263 = vector.broadcast %cst_206 : f32 to vector<11x128xf32>
    %c0_207 = arith.constant 0 : index
    %c0_208 = arith.constant 0 : index
    %264 = vector.load %arg14[%c0_207, %c0_208] : memref<104x128xf32, #tpu.memory_space<vmem>>, vector<11x128xf32>
    tpu.vector_store %arg14[%c0_207, %c0_208], %263 {strides = array<i32>} : memref<104x128xf32, #tpu.memory_space<vmem>>, vector<11x128xf32>,
    %c11_209 = arith.constant 11 : index
    %c0_210 = arith.constant 0 : index
    %265 = vector.load %arg14[%c11_209, %c0_210] : memref<104x128xf32, #tpu.memory_space<vmem>>, vector<78x128xf32>
    tpu.vector_store %arg14[%c11_209, %c0_210], %262 {strides = array<i32>} : memref<104x128xf32, #tpu.memory_space<vmem>>, vector<78x128xf32>,
    %cst_211 = arith.constant 0.000000e+00 : f32
    %266 = vector.broadcast %cst_211 : f32 to vector<11x128xf32>
    %c89 = arith.constant 89 : index
    %c0_212 = arith.constant 0 : index
    %267 = vector.load %arg14[%c89, %c0_212] : memref<104x128xf32, #tpu.memory_space<vmem>>, vector<11x128xf32>
    tpu.vector_store %arg14[%c89, %c0_212], %266 {strides = array<i32>} : memref<104x128xf32, #tpu.memory_space<vmem>>, vector<11x128xf32>,
    %cst_213 = arith.constant 0.000000e+00 : f32
    %268 = vector.broadcast %cst_213 : f32 to vector<78x128xf32>
    %c0_214 = arith.constant 0 : index
    %c0_215 = arith.constant 0 : index
    %269 = vector.load %arg14[%c0_214, %c0_215] : memref<104x128xf32, #tpu.memory_space<vmem>>, vector<78x128xf32>
    %270 = arith.truncf %269 : vector<78x128xf32> to vector<78x128xbf16>
    %c1_216 = arith.constant 1 : index
    %c0_217 = arith.constant 0 : index
    %c0_218 = arith.constant 0 : index
    %c0_219 = arith.constant 0 : index
    %271 = vector.load %arg3[%c1_216, %c0_217, %c0_218, %c0_219] : memref<5x9x128x128xbf16, #tpu.memory_space<vmem>>, vector<1x1x128x128xbf16>
    %272 = vector.shape_cast %271 : vector<1x1x128x128xbf16> to vector<128x128xbf16>
    %cst_220 = arith.constant dense<0.000000e+00> : vector<78x128xf32>
    %273 = tpu.matmul %270, %272, %cst_220 {dimension_numbers = #tpu.dot_dimension_numbers<[1], [0], [0], [1], [0, 0, 1, 1], [], []>} : vector<78x128xbf16>, vector<128x128xbf16>, vector<78x128xf32> -> vector<78x128xf32>
    %274 = arith.addf %268, %273 : vector<78x128xf32>
    %c1_221 = arith.constant 1 : index
    %c0_222 = arith.constant 0 : index
    %275 = vector.load %arg14[%c1_221, %c0_222] : memref<104x128xf32, #tpu.memory_space<vmem>>, vector<78x128xf32>
    %276 = arith.truncf %275 : vector<78x128xf32> to vector<78x128xbf16>
    %c1_223 = arith.constant 1 : index
    %c1_224 = arith.constant 1 : index
    %c0_225 = arith.constant 0 : index
    %c0_226 = arith.constant 0 : index
    %277 = vector.load %arg3[%c1_223, %c1_224, %c0_225, %c0_226] : memref<5x9x128x128xbf16, #tpu.memory_space<vmem>>, vector<1x1x128x128xbf16>
    %278 = vector.shape_cast %277 : vector<1x1x128x128xbf16> to vector<128x128xbf16>
    %cst_227 = arith.constant dense<0.000000e+00> : vector<78x128xf32>
    %279 = tpu.matmul %276, %278, %cst_227 {dimension_numbers = #tpu.dot_dimension_numbers<[1], [0], [0], [1], [0, 0, 1, 1], [], []>} : vector<78x128xbf16>, vector<128x128xbf16>, vector<78x128xf32> -> vector<78x128xf32>
    %280 = arith.addf %274, %279 : vector<78x128xf32>
    %c2_228 = arith.constant 2 : index
    %c0_229 = arith.constant 0 : index
    %281 = vector.load %arg14[%c2_228, %c0_229] : memref<104x128xf32, #tpu.memory_space<vmem>>, vector<78x128xf32>
    %282 = arith.truncf %281 : vector<78x128xf32> to vector<78x128xbf16>
    %c1_230 = arith.constant 1 : index
    %c2_231 = arith.constant 2 : index
    %c0_232 = arith.constant 0 : index
    %c0_233 = arith.constant 0 : index
    %283 = vector.load %arg3[%c1_230, %c2_231, %c0_232, %c0_233] : memref<5x9x128x128xbf16, #tpu.memory_space<vmem>>, vector<1x1x128x128xbf16>
    %284 = vector.shape_cast %283 : vector<1x1x128x128xbf16> to vector<128x128xbf16>
    %cst_234 = arith.constant dense<0.000000e+00> : vector<78x128xf32>
    %285 = tpu.matmul %282, %284, %cst_234 {dimension_numbers = #tpu.dot_dimension_numbers<[1], [0], [0], [1], [0, 0, 1, 1], [], []>} : vector<78x128xbf16>, vector<128x128xbf16>, vector<78x128xf32> -> vector<78x128xf32>
    %286 = arith.addf %280, %285 : vector<78x128xf32>
    %c10_235 = arith.constant 10 : index
    %c0_236 = arith.constant 0 : index
    %287 = vector.load %arg14[%c10_235, %c0_236] : memref<104x128xf32, #tpu.memory_space<vmem>>, vector<78x128xf32>
    %288 = arith.truncf %287 : vector<78x128xf32> to vector<78x128xbf16>
    %c1_237 = arith.constant 1 : index
    %c3_238 = arith.constant 3 : index
    %c0_239 = arith.constant 0 : index
    %c0_240 = arith.constant 0 : index
    %289 = vector.load %arg3[%c1_237, %c3_238, %c0_239, %c0_240] : memref<5x9x128x128xbf16, #tpu.memory_space<vmem>>, vector<1x1x128x128xbf16>
    %290 = vector.shape_cast %289 : vector<1x1x128x128xbf16> to vector<128x128xbf16>
    %cst_241 = arith.constant dense<0.000000e+00> : vector<78x128xf32>
    %291 = tpu.matmul %288, %290, %cst_241 {dimension_numbers = #tpu.dot_dimension_numbers<[1], [0], [0], [1], [0, 0, 1, 1], [], []>} : vector<78x128xbf16>, vector<128x128xbf16>, vector<78x128xf32> -> vector<78x128xf32>
    %292 = arith.addf %286, %291 : vector<78x128xf32>
    %c11_242 = arith.constant 11 : index
    %c0_243 = arith.constant 0 : index
    %293 = vector.load %arg14[%c11_242, %c0_243] : memref<104x128xf32, #tpu.memory_space<vmem>>, vector<78x128xf32>
    %294 = arith.truncf %293 : vector<78x128xf32> to vector<78x128xbf16>
    %c1_244 = arith.constant 1 : index
    %c4_245 = arith.constant 4 : index
    %c0_246 = arith.constant 0 : index
    %c0_247 = arith.constant 0 : index
    %295 = vector.load %arg3[%c1_244, %c4_245, %c0_246, %c0_247] : memref<5x9x128x128xbf16, #tpu.memory_space<vmem>>, vector<1x1x128x128xbf16>
    %296 = vector.shape_cast %295 : vector<1x1x128x128xbf16> to vector<128x128xbf16>
    %cst_248 = arith.constant dense<0.000000e+00> : vector<78x128xf32>
    %297 = tpu.matmul %294, %296, %cst_248 {dimension_numbers = #tpu.dot_dimension_numbers<[1], [0], [0], [1], [0, 0, 1, 1], [], []>} : vector<78x128xbf16>, vector<128x128xbf16>, vector<78x128xf32> -> vector<78x128xf32>
    %298 = arith.addf %292, %297 : vector<78x128xf32>
    %c12 = arith.constant 12 : index
    %c0_249 = arith.constant 0 : index
    %299 = vector.load %arg14[%c12, %c0_249] : memref<104x128xf32, #tpu.memory_space<vmem>>, vector<78x128xf32>
    %300 = arith.truncf %299 : vector<78x128xf32> to vector<78x128xbf16>
    %c1_250 = arith.constant 1 : index
    %c5_251 = arith.constant 5 : index
    %c0_252 = arith.constant 0 : index
    %c0_253 = arith.constant 0 : index
    %301 = vector.load %arg3[%c1_250, %c5_251, %c0_252, %c0_253] : memref<5x9x128x128xbf16, #tpu.memory_space<vmem>>, vector<1x1x128x128xbf16>
    %302 = vector.shape_cast %301 : vector<1x1x128x128xbf16> to vector<128x128xbf16>
    %cst_254 = arith.constant dense<0.000000e+00> : vector<78x128xf32>
    %303 = tpu.matmul %300, %302, %cst_254 {dimension_numbers = #tpu.dot_dimension_numbers<[1], [0], [0], [1], [0, 0, 1, 1], [], []>} : vector<78x128xbf16>, vector<128x128xbf16>, vector<78x128xf32> -> vector<78x128xf32>
    %304 = arith.addf %298, %303 : vector<78x128xf32>
    %c20_255 = arith.constant 20 : index
    %c0_256 = arith.constant 0 : index
    %305 = vector.load %arg14[%c20_255, %c0_256] : memref<104x128xf32, #tpu.memory_space<vmem>>, vector<78x128xf32>
    %306 = arith.truncf %305 : vector<78x128xf32> to vector<78x128xbf16>
    %c1_257 = arith.constant 1 : index
    %c6_258 = arith.constant 6 : index
    %c0_259 = arith.constant 0 : index
    %c0_260 = arith.constant 0 : index
    %307 = vector.load %arg3[%c1_257, %c6_258, %c0_259, %c0_260] : memref<5x9x128x128xbf16, #tpu.memory_space<vmem>>, vector<1x1x128x128xbf16>
    %308 = vector.shape_cast %307 : vector<1x1x128x128xbf16> to vector<128x128xbf16>
    %cst_261 = arith.constant dense<0.000000e+00> : vector<78x128xf32>
    %309 = tpu.matmul %306, %308, %cst_261 {dimension_numbers = #tpu.dot_dimension_numbers<[1], [0], [0], [1], [0, 0, 1, 1], [], []>} : vector<78x128xbf16>, vector<128x128xbf16>, vector<78x128xf32> -> vector<78x128xf32>
    %310 = arith.addf %304, %309 : vector<78x128xf32>
    %c21 = arith.constant 21 : index
    %c0_262 = arith.constant 0 : index
    %311 = vector.load %arg14[%c21, %c0_262] : memref<104x128xf32, #tpu.memory_space<vmem>>, vector<78x128xf32>
    %312 = arith.truncf %311 : vector<78x128xf32> to vector<78x128xbf16>
    %c1_263 = arith.constant 1 : index
    %c7_264 = arith.constant 7 : index
    %c0_265 = arith.constant 0 : index
    %c0_266 = arith.constant 0 : index
    %313 = vector.load %arg3[%c1_263, %c7_264, %c0_265, %c0_266] : memref<5x9x128x128xbf16, #tpu.memory_space<vmem>>, vector<1x1x128x128xbf16>
    %314 = vector.shape_cast %313 : vector<1x1x128x128xbf16> to vector<128x128xbf16>
    %cst_267 = arith.constant dense<0.000000e+00> : vector<78x128xf32>
    %315 = tpu.matmul %312, %314, %cst_267 {dimension_numbers = #tpu.dot_dimension_numbers<[1], [0], [0], [1], [0, 0, 1, 1], [], []>} : vector<78x128xbf16>, vector<128x128xbf16>, vector<78x128xf32> -> vector<78x128xf32>
    %316 = arith.addf %310, %315 : vector<78x128xf32>
    %c22 = arith.constant 22 : index
    %c0_268 = arith.constant 0 : index
    %317 = vector.load %arg14[%c22, %c0_268] : memref<104x128xf32, #tpu.memory_space<vmem>>, vector<78x128xf32>
    %318 = arith.truncf %317 : vector<78x128xf32> to vector<78x128xbf16>
    %c1_269 = arith.constant 1 : index
    %c8_270 = arith.constant 8 : index
    %c0_271 = arith.constant 0 : index
    %c0_272 = arith.constant 0 : index
    %319 = vector.load %arg3[%c1_269, %c8_270, %c0_271, %c0_272] : memref<5x9x128x128xbf16, #tpu.memory_space<vmem>>, vector<1x1x128x128xbf16>
    %320 = vector.shape_cast %319 : vector<1x1x128x128xbf16> to vector<128x128xbf16>
    %cst_273 = arith.constant dense<0.000000e+00> : vector<78x128xf32>
    %321 = tpu.matmul %318, %320, %cst_273 {dimension_numbers = #tpu.dot_dimension_numbers<[1], [0], [0], [1], [0, 0, 1, 1], [], []>} : vector<78x128xbf16>, vector<128x128xbf16>, vector<78x128xf32> -> vector<78x128xf32>
    %322 = arith.addf %316, %321 : vector<78x128xf32>
    %c2_274 = arith.constant 2 : index
    %c0_275 = arith.constant 0 : index
    %c0_276 = arith.constant 0 : index
    %323 = vector.load %arg4[%c2_274, %c0_275, %c0_276] : memref<6x1x128xf32, #tpu.memory_space<vmem>>, vector<1x1x128xf32>
    %324 = vector.shape_cast %323 : vector<1x1x128xf32> to vector<1x128xf32>
    %325 = vector.broadcast %324 : vector<1x128xf32> to vector<78x128xf32>
    %326 = arith.addf %322, %325 : vector<78x128xf32>
    %cst_277 = arith.constant 0.000000e+00 : f32
    %327 = vector.broadcast %cst_277 : f32 to vector<78x128xf32>
    %328 = arith.maximumf %326, %327 : vector<78x128xf32>
    %c364 = arith.constant 364 : index
    %c0_278 = arith.constant 0 : index
    %329 = vector.load %arg5[%c364, %c0_278] : memref<472x128xbf16, #tpu.memory_space<vmem>>, vector<78x128xbf16>
    %330 = arith.extf %329 : vector<78x128xbf16> to vector<78x128xf32>
    %331 = arith.mulf %328, %330 : vector<78x128xf32>
    %cst_279 = arith.constant 0.000000e+00 : f32
    %332 = vector.broadcast %cst_279 : f32 to vector<11x128xf32>
    %c0_280 = arith.constant 0 : index
    %c0_281 = arith.constant 0 : index
    %333 = vector.load %arg15[%c0_280, %c0_281] : memref<104x128xf32, #tpu.memory_space<vmem>>, vector<11x128xf32>
    tpu.vector_store %arg15[%c0_280, %c0_281], %332 {strides = array<i32>} : memref<104x128xf32, #tpu.memory_space<vmem>>, vector<11x128xf32>,
    %c11_282 = arith.constant 11 : index
    %c0_283 = arith.constant 0 : index
    %334 = vector.load %arg15[%c11_282, %c0_283] : memref<104x128xf32, #tpu.memory_space<vmem>>, vector<78x128xf32>
    tpu.vector_store %arg15[%c11_282, %c0_283], %331 {strides = array<i32>} : memref<104x128xf32, #tpu.memory_space<vmem>>, vector<78x128xf32>,
    %cst_284 = arith.constant 0.000000e+00 : f32
    %335 = vector.broadcast %cst_284 : f32 to vector<11x128xf32>
    %c89_285 = arith.constant 89 : index
    %c0_286 = arith.constant 0 : index
    %336 = vector.load %arg15[%c89_285, %c0_286] : memref<104x128xf32, #tpu.memory_space<vmem>>, vector<11x128xf32>
    tpu.vector_store %arg15[%c89_285, %c0_286], %335 {strides = array<i32>} : memref<104x128xf32, #tpu.memory_space<vmem>>, vector<11x128xf32>,
    %c0_287 = arith.constant 0 : index
    %c0_288 = arith.constant 0 : index
    %337 = vector.load %arg7[%c0_287, %c0_288] : memref<32x20xbf16, #tpu.memory_space<vmem>>, vector<32x20xbf16>
    %c0_289 = arith.constant 0 : index
    %c0_290 = arith.constant 0 : index
    %338 = vector.load %arg15[%c0_289, %c0_290] : memref<104x128xf32, #tpu.memory_space<vmem>>, vector<20x128xf32>
    %339 = arith.truncf %338 : vector<20x128xf32> to vector<20x128xbf16>
    %cst_291 = arith.constant dense<0.000000e+00> : vector<32x128xf32>
    %340 = tpu.matmul %337, %339, %cst_291 {dimension_numbers = #tpu.dot_dimension_numbers<[1], [0], [0], [1], [0, 0, 1, 1], [], []>} : vector<32x20xbf16>, vector<20x128xbf16>, vector<32x128xf32> -> vector<32x128xf32>
    %341 = vector.extract_strided_slice %340 {offsets = [0, 0], sizes = [6, 128], strides = [1, 1]} : vector<32x128xf32> to vector<6x128xf32>
    %c0_292 = arith.constant 0 : index
    %c0_293 = arith.constant 0 : index
    %c0_294 = arith.constant 0 : index
    %342 = vector.load %arg19[%c0_292, %c0_293, %c0_294] : memref<4x40x128xf32, #tpu.memory_space<vmem>>, vector<1x6x128xf32>
    %343 = vector.shape_cast %342 : vector<1x6x128xf32> to vector<6x128xf32>
    %344 = vector.shape_cast %341 : vector<6x128xf32> to vector<1x6x128xf32>
    tpu.vector_store %arg19[%c0_292, %c0_293, %c0_294], %344 {strides = array<i32>} : memref<4x40x128xf32, #tpu.memory_space<vmem>>, vector<1x6x128xf32>,
    %345 = vector.extract_strided_slice %340 {offsets = [8, 0], sizes = [6, 128], strides = [1, 1]} : vector<32x128xf32> to vector<6x128xf32>
    %c1_295 = arith.constant 1 : index
    %c0_296 = arith.constant 0 : index
    %c0_297 = arith.constant 0 : index
    %346 = vector.load %arg19[%c1_295, %c0_296, %c0_297] : memref<4x40x128xf32, #tpu.memory_space<vmem>>, vector<1x6x128xf32>
    %347 = vector.shape_cast %346 : vector<1x6x128xf32> to vector<6x128xf32>
    %348 = vector.shape_cast %345 : vector<6x128xf32> to vector<1x6x128xf32>
    tpu.vector_store %arg19[%c1_295, %c0_296, %c0_297], %348 {strides = array<i32>} : memref<4x40x128xf32, #tpu.memory_space<vmem>>, vector<1x6x128xf32>,
    %349 = vector.extract_strided_slice %340 {offsets = [16, 0], sizes = [6, 128], strides = [1, 1]} : vector<32x128xf32> to vector<6x128xf32>
    %c2_298 = arith.constant 2 : index
    %c0_299 = arith.constant 0 : index
    %c0_300 = arith.constant 0 : index
    %350 = vector.load %arg19[%c2_298, %c0_299, %c0_300] : memref<4x40x128xf32, #tpu.memory_space<vmem>>, vector<1x6x128xf32>
    %351 = vector.shape_cast %350 : vector<1x6x128xf32> to vector<6x128xf32>
    %352 = vector.shape_cast %349 : vector<6x128xf32> to vector<1x6x128xf32>
    tpu.vector_store %arg19[%c2_298, %c0_299, %c0_300], %352 {strides = array<i32>} : memref<4x40x128xf32, #tpu.memory_space<vmem>>, vector<1x6x128xf32>,
    %353 = vector.extract_strided_slice %340 {offsets = [24, 0], sizes = [6, 128], strides = [1, 1]} : vector<32x128xf32> to vector<6x128xf32>
    %c3_301 = arith.constant 3 : index
    %c0_302 = arith.constant 0 : index
    %c0_303 = arith.constant 0 : index
    %354 = vector.load %arg19[%c3_301, %c0_302, %c0_303] : memref<4x40x128xf32, #tpu.memory_space<vmem>>, vector<1x6x128xf32>
    %355 = vector.shape_cast %354 : vector<1x6x128xf32> to vector<6x128xf32>
    %356 = vector.shape_cast %353 : vector<6x128xf32> to vector<1x6x128xf32>
    tpu.vector_store %arg19[%c3_301, %c0_302, %c0_303], %356 {strides = array<i32>} : memref<4x40x128xf32, #tpu.memory_space<vmem>>, vector<1x6x128xf32>,
    %c20_304 = arith.constant 20 : index
    %c0_305 = arith.constant 0 : index
    %357 = vector.load %arg15[%c20_304, %c0_305] : memref<104x128xf32, #tpu.memory_space<vmem>>, vector<20x128xf32>
    %358 = arith.truncf %357 : vector<20x128xf32> to vector<20x128xbf16>
    %cst_306 = arith.constant dense<0.000000e+00> : vector<32x128xf32>
    %359 = tpu.matmul %337, %358, %cst_306 {dimension_numbers = #tpu.dot_dimension_numbers<[1], [0], [0], [1], [0, 0, 1, 1], [], []>} : vector<32x20xbf16>, vector<20x128xbf16>, vector<32x128xf32> -> vector<32x128xf32>
    %360 = vector.extract_strided_slice %359 {offsets = [0, 0], sizes = [6, 128], strides = [1, 1]} : vector<32x128xf32> to vector<6x128xf32>
    %c0_307 = arith.constant 0 : index
    %c6_308 = arith.constant 6 : index
    %c0_309 = arith.constant 0 : index
    %361 = vector.load %arg19[%c0_307, %c6_308, %c0_309] : memref<4x40x128xf32, #tpu.memory_space<vmem>>, vector<1x6x128xf32>
    %362 = vector.shape_cast %361 : vector<1x6x128xf32> to vector<6x128xf32>
    %363 = vector.shape_cast %360 : vector<6x128xf32> to vector<1x6x128xf32>
    tpu.vector_store %arg19[%c0_307, %c6_308, %c0_309], %363 {strides = array<i32>} : memref<4x40x128xf32, #tpu.memory_space<vmem>>, vector<1x6x128xf32>,
    %364 = vector.extract_strided_slice %359 {offsets = [8, 0], sizes = [6, 128], strides = [1, 1]} : vector<32x128xf32> to vector<6x128xf32>
    %c1_310 = arith.constant 1 : index
    %c6_311 = arith.constant 6 : index
    %c0_312 = arith.constant 0 : index
    %365 = vector.load %arg19[%c1_310, %c6_311, %c0_312] : memref<4x40x128xf32, #tpu.memory_space<vmem>>, vector<1x6x128xf32>
    %366 = vector.shape_cast %365 : vector<1x6x128xf32> to vector<6x128xf32>
    %367 = vector.shape_cast %364 : vector<6x128xf32> to vector<1x6x128xf32>
    tpu.vector_store %arg19[%c1_310, %c6_311, %c0_312], %367 {strides = array<i32>} : memref<4x40x128xf32, #tpu.memory_space<vmem>>, vector<1x6x128xf32>,
    %368 = vector.extract_strided_slice %359 {offsets = [16, 0], sizes = [6, 128], strides = [1, 1]} : vector<32x128xf32> to vector<6x128xf32>
    %c2_313 = arith.constant 2 : index
    %c6_314 = arith.constant 6 : index
    %c0_315 = arith.constant 0 : index
    %369 = vector.load %arg19[%c2_313, %c6_314, %c0_315] : memref<4x40x128xf32, #tpu.memory_space<vmem>>, vector<1x6x128xf32>
    %370 = vector.shape_cast %369 : vector<1x6x128xf32> to vector<6x128xf32>
    %371 = vector.shape_cast %368 : vector<6x128xf32> to vector<1x6x128xf32>
    tpu.vector_store %arg19[%c2_313, %c6_314, %c0_315], %371 {strides = array<i32>} : memref<4x40x128xf32, #tpu.memory_space<vmem>>, vector<1x6x128xf32>,
    %372 = vector.extract_strided_slice %359 {offsets = [24, 0], sizes = [6, 128], strides = [1, 1]} : vector<32x128xf32> to vector<6x128xf32>
    %c3_316 = arith.constant 3 : index
    %c6_317 = arith.constant 6 : index
    %c0_318 = arith.constant 0 : index
    %373 = vector.load %arg19[%c3_316, %c6_317, %c0_318] : memref<4x40x128xf32, #tpu.memory_space<vmem>>, vector<1x6x128xf32>
    %374 = vector.shape_cast %373 : vector<1x6x128xf32> to vector<6x128xf32>
    %375 = vector.shape_cast %372 : vector<6x128xf32> to vector<1x6x128xf32>
    tpu.vector_store %arg19[%c3_316, %c6_317, %c0_318], %375 {strides = array<i32>} : memref<4x40x128xf32, #tpu.memory_space<vmem>>, vector<1x6x128xf32>,
    %c40_319 = arith.constant 40 : index
    %c0_320 = arith.constant 0 : index
    %376 = vector.load %arg15[%c40_319, %c0_320] : memref<104x128xf32, #tpu.memory_space<vmem>>, vector<20x128xf32>
    %377 = arith.truncf %376 : vector<20x128xf32> to vector<20x128xbf16>
    %cst_321 = arith.constant dense<0.000000e+00> : vector<32x128xf32>
    %378 = tpu.matmul %337, %377, %cst_321 {dimension_numbers = #tpu.dot_dimension_numbers<[1], [0], [0], [1], [0, 0, 1, 1], [], []>} : vector<32x20xbf16>, vector<20x128xbf16>, vector<32x128xf32> -> vector<32x128xf32>
    %379 = vector.extract_strided_slice %378 {offsets = [0, 0], sizes = [6, 128], strides = [1, 1]} : vector<32x128xf32> to vector<6x128xf32>
    %c0_322 = arith.constant 0 : index
    %c12_323 = arith.constant 12 : index
    %c0_324 = arith.constant 0 : index
    %380 = vector.load %arg19[%c0_322, %c12_323, %c0_324] : memref<4x40x128xf32, #tpu.memory_space<vmem>>, vector<1x6x128xf32>
    %381 = vector.shape_cast %380 : vector<1x6x128xf32> to vector<6x128xf32>
    %382 = vector.shape_cast %379 : vector<6x128xf32> to vector<1x6x128xf32>
    tpu.vector_store %arg19[%c0_322, %c12_323, %c0_324], %382 {strides = array<i32>} : memref<4x40x128xf32, #tpu.memory_space<vmem>>, vector<1x6x128xf32>,
    %383 = vector.extract_strided_slice %378 {offsets = [8, 0], sizes = [6, 128], strides = [1, 1]} : vector<32x128xf32> to vector<6x128xf32>
    %c1_325 = arith.constant 1 : index
    %c12_326 = arith.constant 12 : index
    %c0_327 = arith.constant 0 : index
    %384 = vector.load %arg19[%c1_325, %c12_326, %c0_327] : memref<4x40x128xf32, #tpu.memory_space<vmem>>, vector<1x6x128xf32>
    %385 = vector.shape_cast %384 : vector<1x6x128xf32> to vector<6x128xf32>
    %386 = vector.shape_cast %383 : vector<6x128xf32> to vector<1x6x128xf32>
    tpu.vector_store %arg19[%c1_325, %c12_326, %c0_327], %386 {strides = array<i32>} : memref<4x40x128xf32, #tpu.memory_space<vmem>>, vector<1x6x128xf32>,
    %387 = vector.extract_strided_slice %378 {offsets = [16, 0], sizes = [6, 128], strides = [1, 1]} : vector<32x128xf32> to vector<6x128xf32>
    %c2_328 = arith.constant 2 : index
    %c12_329 = arith.constant 12 : index
    %c0_330 = arith.constant 0 : index
    %388 = vector.load %arg19[%c2_328, %c12_329, %c0_330] : memref<4x40x128xf32, #tpu.memory_space<vmem>>, vector<1x6x128xf32>
    %389 = vector.shape_cast %388 : vector<1x6x128xf32> to vector<6x128xf32>
    %390 = vector.shape_cast %387 : vector<6x128xf32> to vector<1x6x128xf32>
    tpu.vector_store %arg19[%c2_328, %c12_329, %c0_330], %390 {strides = array<i32>} : memref<4x40x128xf32, #tpu.memory_space<vmem>>, vector<1x6x128xf32>,
    %391 = vector.extract_strided_slice %378 {offsets = [24, 0], sizes = [6, 128], strides = [1, 1]} : vector<32x128xf32> to vector<6x128xf32>
    %c3_331 = arith.constant 3 : index
    %c12_332 = arith.constant 12 : index
    %c0_333 = arith.constant 0 : index
    %392 = vector.load %arg19[%c3_331, %c12_332, %c0_333] : memref<4x40x128xf32, #tpu.memory_space<vmem>>, vector<1x6x128xf32>
    %393 = vector.shape_cast %392 : vector<1x6x128xf32> to vector<6x128xf32>
    %394 = vector.shape_cast %391 : vector<6x128xf32> to vector<1x6x128xf32>
    tpu.vector_store %arg19[%c3_331, %c12_332, %c0_333], %394 {strides = array<i32>} : memref<4x40x128xf32, #tpu.memory_space<vmem>>, vector<1x6x128xf32>,
    %c60_334 = arith.constant 60 : index
    %c0_335 = arith.constant 0 : index
    %395 = vector.load %arg15[%c60_334, %c0_335] : memref<104x128xf32, #tpu.memory_space<vmem>>, vector<20x128xf32>
    %396 = arith.truncf %395 : vector<20x128xf32> to vector<20x128xbf16>
    %cst_336 = arith.constant dense<0.000000e+00> : vector<32x128xf32>
    %397 = tpu.matmul %337, %396, %cst_336 {dimension_numbers = #tpu.dot_dimension_numbers<[1], [0], [0], [1], [0, 0, 1, 1], [], []>} : vector<32x20xbf16>, vector<20x128xbf16>, vector<32x128xf32> -> vector<32x128xf32>
    %398 = vector.extract_strided_slice %397 {offsets = [0, 0], sizes = [6, 128], strides = [1, 1]} : vector<32x128xf32> to vector<6x128xf32>
    %c0_337 = arith.constant 0 : index
    %c18 = arith.constant 18 : index
    %c0_338 = arith.constant 0 : index
    %399 = vector.load %arg19[%c0_337, %c18, %c0_338] : memref<4x40x128xf32, #tpu.memory_space<vmem>>, vector<1x6x128xf32>
    %400 = vector.shape_cast %399 : vector<1x6x128xf32> to vector<6x128xf32>
    %401 = vector.shape_cast %398 : vector<6x128xf32> to vector<1x6x128xf32>
    tpu.vector_store %arg19[%c0_337, %c18, %c0_338], %401 {strides = array<i32>} : memref<4x40x128xf32, #tpu.memory_space<vmem>>, vector<1x6x128xf32>,
    %402 = vector.extract_strided_slice %397 {offsets = [8, 0], sizes = [6, 128], strides = [1, 1]} : vector<32x128xf32> to vector<6x128xf32>
    %c1_339 = arith.constant 1 : index
    %c18_340 = arith.constant 18 : index
    %c0_341 = arith.constant 0 : index
    %403 = vector.load %arg19[%c1_339, %c18_340, %c0_341] : memref<4x40x128xf32, #tpu.memory_space<vmem>>, vector<1x6x128xf32>
    %404 = vector.shape_cast %403 : vector<1x6x128xf32> to vector<6x128xf32>
    %405 = vector.shape_cast %402 : vector<6x128xf32> to vector<1x6x128xf32>
    tpu.vector_store %arg19[%c1_339, %c18_340, %c0_341], %405 {strides = array<i32>} : memref<4x40x128xf32, #tpu.memory_space<vmem>>, vector<1x6x128xf32>,
    %406 = vector.extract_strided_slice %397 {offsets = [16, 0], sizes = [6, 128], strides = [1, 1]} : vector<32x128xf32> to vector<6x128xf32>
    %c2_342 = arith.constant 2 : index
    %c18_343 = arith.constant 18 : index
    %c0_344 = arith.constant 0 : index
    %407 = vector.load %arg19[%c2_342, %c18_343, %c0_344] : memref<4x40x128xf32, #tpu.memory_space<vmem>>, vector<1x6x128xf32>
    %408 = vector.shape_cast %407 : vector<1x6x128xf32> to vector<6x128xf32>
    %409 = vector.shape_cast %406 : vector<6x128xf32> to vector<1x6x128xf32>
    tpu.vector_store %arg19[%c2_342, %c18_343, %c0_344], %409 {strides = array<i32>} : memref<4x40x128xf32, #tpu.memory_space<vmem>>, vector<1x6x128xf32>,
    %410 = vector.extract_strided_slice %397 {offsets = [24, 0], sizes = [6, 128], strides = [1, 1]} : vector<32x128xf32> to vector<6x128xf32>
    %c3_345 = arith.constant 3 : index
    %c18_346 = arith.constant 18 : index
    %c0_347 = arith.constant 0 : index
    %411 = vector.load %arg19[%c3_345, %c18_346, %c0_347] : memref<4x40x128xf32, #tpu.memory_space<vmem>>, vector<1x6x128xf32>
    %412 = vector.shape_cast %411 : vector<1x6x128xf32> to vector<6x128xf32>
    %413 = vector.shape_cast %410 : vector<6x128xf32> to vector<1x6x128xf32>
    tpu.vector_store %arg19[%c3_345, %c18_346, %c0_347], %413 {strides = array<i32>} : memref<4x40x128xf32, #tpu.memory_space<vmem>>, vector<1x6x128xf32>,
    %c80_348 = arith.constant 80 : index
    %c0_349 = arith.constant 0 : index
    %414 = vector.load %arg15[%c80_348, %c0_349] : memref<104x128xf32, #tpu.memory_space<vmem>>, vector<20x128xf32>
    %415 = arith.truncf %414 : vector<20x128xf32> to vector<20x128xbf16>
    %cst_350 = arith.constant dense<0.000000e+00> : vector<32x128xf32>
    %416 = tpu.matmul %337, %415, %cst_350 {dimension_numbers = #tpu.dot_dimension_numbers<[1], [0], [0], [1], [0, 0, 1, 1], [], []>} : vector<32x20xbf16>, vector<20x128xbf16>, vector<32x128xf32> -> vector<32x128xf32>
    %417 = vector.extract_strided_slice %416 {offsets = [0, 0], sizes = [6, 128], strides = [1, 1]} : vector<32x128xf32> to vector<6x128xf32>
    %c0_351 = arith.constant 0 : index
    %c24 = arith.constant 24 : index
    %c0_352 = arith.constant 0 : index
    %418 = vector.load %arg19[%c0_351, %c24, %c0_352] : memref<4x40x128xf32, #tpu.memory_space<vmem>>, vector<1x6x128xf32>
    %419 = vector.shape_cast %418 : vector<1x6x128xf32> to vector<6x128xf32>
    %420 = vector.shape_cast %417 : vector<6x128xf32> to vector<1x6x128xf32>
    tpu.vector_store %arg19[%c0_351, %c24, %c0_352], %420 {strides = array<i32>} : memref<4x40x128xf32, #tpu.memory_space<vmem>>, vector<1x6x128xf32>,
    %421 = vector.extract_strided_slice %416 {offsets = [8, 0], sizes = [6, 128], strides = [1, 1]} : vector<32x128xf32> to vector<6x128xf32>
    %c1_353 = arith.constant 1 : index
    %c24_354 = arith.constant 24 : index
    %c0_355 = arith.constant 0 : index
    %422 = vector.load %arg19[%c1_353, %c24_354, %c0_355] : memref<4x40x128xf32, #tpu.memory_space<vmem>>, vector<1x6x128xf32>
    %423 = vector.shape_cast %422 : vector<1x6x128xf32> to vector<6x128xf32>
    %424 = vector.shape_cast %421 : vector<6x128xf32> to vector<1x6x128xf32>
    tpu.vector_store %arg19[%c1_353, %c24_354, %c0_355], %424 {strides = array<i32>} : memref<4x40x128xf32, #tpu.memory_space<vmem>>, vector<1x6x128xf32>,
    %425 = vector.extract_strided_slice %416 {offsets = [16, 0], sizes = [6, 128], strides = [1, 1]} : vector<32x128xf32> to vector<6x128xf32>
    %c2_356 = arith.constant 2 : index
    %c24_357 = arith.constant 24 : index
    %c0_358 = arith.constant 0 : index
    %426 = vector.load %arg19[%c2_356, %c24_357, %c0_358] : memref<4x40x128xf32, #tpu.memory_space<vmem>>, vector<1x6x128xf32>
    %427 = vector.shape_cast %426 : vector<1x6x128xf32> to vector<6x128xf32>
    %428 = vector.shape_cast %425 : vector<6x128xf32> to vector<1x6x128xf32>
    tpu.vector_store %arg19[%c2_356, %c24_357, %c0_358], %428 {strides = array<i32>} : memref<4x40x128xf32, #tpu.memory_space<vmem>>, vector<1x6x128xf32>,
    %429 = vector.extract_strided_slice %416 {offsets = [24, 0], sizes = [6, 128], strides = [1, 1]} : vector<32x128xf32> to vector<6x128xf32>
    %c3_359 = arith.constant 3 : index
    %c24_360 = arith.constant 24 : index
    %c0_361 = arith.constant 0 : index
    %430 = vector.load %arg19[%c3_359, %c24_360, %c0_361] : memref<4x40x128xf32, #tpu.memory_space<vmem>>, vector<1x6x128xf32>
    %431 = vector.shape_cast %430 : vector<1x6x128xf32> to vector<6x128xf32>
    %432 = vector.shape_cast %429 : vector<6x128xf32> to vector<1x6x128xf32>
    tpu.vector_store %arg19[%c3_359, %c24_360, %c0_361], %432 {strides = array<i32>} : memref<4x40x128xf32, #tpu.memory_space<vmem>>, vector<1x6x128xf32>,
    %cst_362 = arith.constant 0.000000e+00 : f32
    %433 = vector.broadcast %cst_362 : f32 to vector<22x128xf32>
    %c0_363 = arith.constant 0 : index
    %c0_364 = arith.constant 0 : index
    %c0_365 = arith.constant 0 : index
    %434 = vector.load %arg19[%c0_363, %c0_364, %c0_365] : memref<4x40x128xf32, #tpu.memory_space<vmem>>, vector<1x22x128xf32>
    %435 = vector.shape_cast %434 : vector<1x22x128xf32> to vector<22x128xf32>
    %436 = arith.truncf %435 : vector<22x128xf32> to vector<22x128xbf16>
    %c2_366 = arith.constant 2 : index
    %c0_367 = arith.constant 0 : index
    %c0_368 = arith.constant 0 : index
    %c0_369 = arith.constant 0 : index
    %437 = vector.load %arg3[%c2_366, %c0_367, %c0_368, %c0_369] : memref<5x9x128x128xbf16, #tpu.memory_space<vmem>>, vector<1x1x128x128xbf16>
    %438 = vector.shape_cast %437 : vector<1x1x128x128xbf16> to vector<128x128xbf16>
    %cst_370 = arith.constant dense<0.000000e+00> : vector<22x128xf32>
    %439 = tpu.matmul %436, %438, %cst_370 {dimension_numbers = #tpu.dot_dimension_numbers<[1], [0], [0], [1], [0, 0, 1, 1], [], []>} : vector<22x128xbf16>, vector<128x128xbf16>, vector<22x128xf32> -> vector<22x128xf32>
    %440 = arith.addf %433, %439 : vector<22x128xf32>
    %c1_371 = arith.constant 1 : index
    %c0_372 = arith.constant 0 : index
    %c0_373 = arith.constant 0 : index
    %441 = vector.load %arg19[%c1_371, %c0_372, %c0_373] : memref<4x40x128xf32, #tpu.memory_space<vmem>>, vector<1x22x128xf32>
    %442 = vector.shape_cast %441 : vector<1x22x128xf32> to vector<22x128xf32>
    %443 = arith.truncf %442 : vector<22x128xf32> to vector<22x128xbf16>
    %c2_374 = arith.constant 2 : index
    %c1_375 = arith.constant 1 : index
    %c0_376 = arith.constant 0 : index
    %c0_377 = arith.constant 0 : index
    %444 = vector.load %arg3[%c2_374, %c1_375, %c0_376, %c0_377] : memref<5x9x128x128xbf16, #tpu.memory_space<vmem>>, vector<1x1x128x128xbf16>
    %445 = vector.shape_cast %444 : vector<1x1x128x128xbf16> to vector<128x128xbf16>
    %cst_378 = arith.constant dense<0.000000e+00> : vector<22x128xf32>
    %446 = tpu.matmul %443, %445, %cst_378 {dimension_numbers = #tpu.dot_dimension_numbers<[1], [0], [0], [1], [0, 0, 1, 1], [], []>} : vector<22x128xbf16>, vector<128x128xbf16>, vector<22x128xf32> -> vector<22x128xf32>
    %447 = arith.addf %440, %446 : vector<22x128xf32>
    %c0_379 = arith.constant 0 : index
    %c1_380 = arith.constant 1 : index
    %c0_381 = arith.constant 0 : index
    %448 = vector.load %arg19[%c0_379, %c1_380, %c0_381] : memref<4x40x128xf32, #tpu.memory_space<vmem>>, vector<1x22x128xf32>
    %449 = vector.shape_cast %448 : vector<1x22x128xf32> to vector<22x128xf32>
    %450 = arith.truncf %449 : vector<22x128xf32> to vector<22x128xbf16>
    %c2_382 = arith.constant 2 : index
    %c2_383 = arith.constant 2 : index
    %c0_384 = arith.constant 0 : index
    %c0_385 = arith.constant 0 : index
    %451 = vector.load %arg3[%c2_382, %c2_383, %c0_384, %c0_385] : memref<5x9x128x128xbf16, #tpu.memory_space<vmem>>, vector<1x1x128x128xbf16>
    %452 = vector.shape_cast %451 : vector<1x1x128x128xbf16> to vector<128x128xbf16>
    %cst_386 = arith.constant dense<0.000000e+00> : vector<22x128xf32>
    %453 = tpu.matmul %450, %452, %cst_386 {dimension_numbers = #tpu.dot_dimension_numbers<[1], [0], [0], [1], [0, 0, 1, 1], [], []>} : vector<22x128xbf16>, vector<128x128xbf16>, vector<22x128xf32> -> vector<22x128xf32>
    %454 = arith.addf %447, %453 : vector<22x128xf32>
    %c2_387 = arith.constant 2 : index
    %c0_388 = arith.constant 0 : index
    %c0_389 = arith.constant 0 : index
    %455 = vector.load %arg19[%c2_387, %c0_388, %c0_389] : memref<4x40x128xf32, #tpu.memory_space<vmem>>, vector<1x22x128xf32>
    %456 = vector.shape_cast %455 : vector<1x22x128xf32> to vector<22x128xf32>
    %457 = arith.truncf %456 : vector<22x128xf32> to vector<22x128xbf16>
    %c2_390 = arith.constant 2 : index
    %c3_391 = arith.constant 3 : index
    %c0_392 = arith.constant 0 : index
    %c0_393 = arith.constant 0 : index
    %458 = vector.load %arg3[%c2_390, %c3_391, %c0_392, %c0_393] : memref<5x9x128x128xbf16, #tpu.memory_space<vmem>>, vector<1x1x128x128xbf16>
    %459 = vector.shape_cast %458 : vector<1x1x128x128xbf16> to vector<128x128xbf16>
    %cst_394 = arith.constant dense<0.000000e+00> : vector<22x128xf32>
    %460 = tpu.matmul %457, %459, %cst_394 {dimension_numbers = #tpu.dot_dimension_numbers<[1], [0], [0], [1], [0, 0, 1, 1], [], []>} : vector<22x128xbf16>, vector<128x128xbf16>, vector<22x128xf32> -> vector<22x128xf32>
    %461 = arith.addf %454, %460 : vector<22x128xf32>
    %c3_395 = arith.constant 3 : index
    %c0_396 = arith.constant 0 : index
    %c0_397 = arith.constant 0 : index
    %462 = vector.load %arg19[%c3_395, %c0_396, %c0_397] : memref<4x40x128xf32, #tpu.memory_space<vmem>>, vector<1x22x128xf32>
    %463 = vector.shape_cast %462 : vector<1x22x128xf32> to vector<22x128xf32>
    %464 = arith.truncf %463 : vector<22x128xf32> to vector<22x128xbf16>
    %c2_398 = arith.constant 2 : index
    %c4_399 = arith.constant 4 : index
    %c0_400 = arith.constant 0 : index
    %c0_401 = arith.constant 0 : index
    %465 = vector.load %arg3[%c2_398, %c4_399, %c0_400, %c0_401] : memref<5x9x128x128xbf16, #tpu.memory_space<vmem>>, vector<1x1x128x128xbf16>
    %466 = vector.shape_cast %465 : vector<1x1x128x128xbf16> to vector<128x128xbf16>
    %cst_402 = arith.constant dense<0.000000e+00> : vector<22x128xf32>
    %467 = tpu.matmul %464, %466, %cst_402 {dimension_numbers = #tpu.dot_dimension_numbers<[1], [0], [0], [1], [0, 0, 1, 1], [], []>} : vector<22x128xbf16>, vector<128x128xbf16>, vector<22x128xf32> -> vector<22x128xf32>
    %468 = arith.addf %461, %467 : vector<22x128xf32>
    %c2_403 = arith.constant 2 : index
    %c1_404 = arith.constant 1 : index
    %c0_405 = arith.constant 0 : index
    %469 = vector.load %arg19[%c2_403, %c1_404, %c0_405] : memref<4x40x128xf32, #tpu.memory_space<vmem>>, vector<1x22x128xf32>
    %470 = vector.shape_cast %469 : vector<1x22x128xf32> to vector<22x128xf32>
    %471 = arith.truncf %470 : vector<22x128xf32> to vector<22x128xbf16>
    %c2_406 = arith.constant 2 : index
    %c5_407 = arith.constant 5 : index
    %c0_408 = arith.constant 0 : index
    %c0_409 = arith.constant 0 : index
    %472 = vector.load %arg3[%c2_406, %c5_407, %c0_408, %c0_409] : memref<5x9x128x128xbf16, #tpu.memory_space<vmem>>, vector<1x1x128x128xbf16>
    %473 = vector.shape_cast %472 : vector<1x1x128x128xbf16> to vector<128x128xbf16>
    %cst_410 = arith.constant dense<0.000000e+00> : vector<22x128xf32>
    %474 = tpu.matmul %471, %473, %cst_410 {dimension_numbers = #tpu.dot_dimension_numbers<[1], [0], [0], [1], [0, 0, 1, 1], [], []>} : vector<22x128xbf16>, vector<128x128xbf16>, vector<22x128xf32> -> vector<22x128xf32>
    %475 = arith.addf %468, %474 : vector<22x128xf32>
    %c0_411 = arith.constant 0 : index
    %c6_412 = arith.constant 6 : index
    %c0_413 = arith.constant 0 : index
    %476 = vector.load %arg19[%c0_411, %c6_412, %c0_413] : memref<4x40x128xf32, #tpu.memory_space<vmem>>, vector<1x22x128xf32>
    %477 = vector.shape_cast %476 : vector<1x22x128xf32> to vector<22x128xf32>
    %478 = arith.truncf %477 : vector<22x128xf32> to vector<22x128xbf16>
    %c2_414 = arith.constant 2 : index
    %c6_415 = arith.constant 6 : index
    %c0_416 = arith.constant 0 : index
    %c0_417 = arith.constant 0 : index
    %479 = vector.load %arg3[%c2_414, %c6_415, %c0_416, %c0_417] : memref<5x9x128x128xbf16, #tpu.memory_space<vmem>>, vector<1x1x128x128xbf16>
    %480 = vector.shape_cast %479 : vector<1x1x128x128xbf16> to vector<128x128xbf16>
    %cst_418 = arith.constant dense<0.000000e+00> : vector<22x128xf32>
    %481 = tpu.matmul %478, %480, %cst_418 {dimension_numbers = #tpu.dot_dimension_numbers<[1], [0], [0], [1], [0, 0, 1, 1], [], []>} : vector<22x128xbf16>, vector<128x128xbf16>, vector<22x128xf32> -> vector<22x128xf32>
    %482 = arith.addf %475, %481 : vector<22x128xf32>
    %c1_419 = arith.constant 1 : index
    %c6_420 = arith.constant 6 : index
    %c0_421 = arith.constant 0 : index
    %483 = vector.load %arg19[%c1_419, %c6_420, %c0_421] : memref<4x40x128xf32, #tpu.memory_space<vmem>>, vector<1x22x128xf32>
    %484 = vector.shape_cast %483 : vector<1x22x128xf32> to vector<22x128xf32>
    %485 = arith.truncf %484 : vector<22x128xf32> to vector<22x128xbf16>
    %c2_422 = arith.constant 2 : index
    %c7_423 = arith.constant 7 : index
    %c0_424 = arith.constant 0 : index
    %c0_425 = arith.constant 0 : index
    %486 = vector.load %arg3[%c2_422, %c7_423, %c0_424, %c0_425] : memref<5x9x128x128xbf16, #tpu.memory_space<vmem>>, vector<1x1x128x128xbf16>
    %487 = vector.shape_cast %486 : vector<1x1x128x128xbf16> to vector<128x128xbf16>
    %cst_426 = arith.constant dense<0.000000e+00> : vector<22x128xf32>
    %488 = tpu.matmul %485, %487, %cst_426 {dimension_numbers = #tpu.dot_dimension_numbers<[1], [0], [0], [1], [0, 0, 1, 1], [], []>} : vector<22x128xbf16>, vector<128x128xbf16>, vector<22x128xf32> -> vector<22x128xf32>
    %489 = arith.addf %482, %488 : vector<22x128xf32>
    %c0_427 = arith.constant 0 : index
    %c7_428 = arith.constant 7 : index
    %c0_429 = arith.constant 0 : index
    %490 = vector.load %arg19[%c0_427, %c7_428, %c0_429] : memref<4x40x128xf32, #tpu.memory_space<vmem>>, vector<1x22x128xf32>
    %491 = vector.shape_cast %490 : vector<1x22x128xf32> to vector<22x128xf32>
    %492 = arith.truncf %491 : vector<22x128xf32> to vector<22x128xbf16>
    %c2_430 = arith.constant 2 : index
    %c8_431 = arith.constant 8 : index
    %c0_432 = arith.constant 0 : index
    %c0_433 = arith.constant 0 : index
    %493 = vector.load %arg3[%c2_430, %c8_431, %c0_432, %c0_433] : memref<5x9x128x128xbf16, #tpu.memory_space<vmem>>, vector<1x1x128x128xbf16>
    %494 = vector.shape_cast %493 : vector<1x1x128x128xbf16> to vector<128x128xbf16>
    %cst_434 = arith.constant dense<0.000000e+00> : vector<22x128xf32>
    %495 = tpu.matmul %492, %494, %cst_434 {dimension_numbers = #tpu.dot_dimension_numbers<[1], [0], [0], [1], [0, 0, 1, 1], [], []>} : vector<22x128xbf16>, vector<128x128xbf16>, vector<22x128xf32> -> vector<22x128xf32>
    %496 = arith.addf %489, %495 : vector<22x128xf32>
    %c3_435 = arith.constant 3 : index
    %c0_436 = arith.constant 0 : index
    %c0_437 = arith.constant 0 : index
    %497 = vector.load %arg4[%c3_435, %c0_436, %c0_437] : memref<6x1x128xf32, #tpu.memory_space<vmem>>, vector<1x1x128xf32>
    %498 = vector.shape_cast %497 : vector<1x1x128xf32> to vector<1x128xf32>
    %499 = vector.broadcast %498 : vector<1x128xf32> to vector<22x128xf32>
    %500 = arith.addf %496, %499 : vector<22x128xf32>
    %cst_438 = arith.constant 0.000000e+00 : f32
    %501 = vector.broadcast %cst_438 : f32 to vector<22x128xf32>
    %502 = arith.maximumf %500, %501 : vector<22x128xf32>
    %c442 = arith.constant 442 : index
    %c0_439 = arith.constant 0 : index
    %503 = vector.load %arg5[%c442, %c0_439] : memref<472x128xbf16, #tpu.memory_space<vmem>>, vector<22x128xbf16>
    %504 = arith.extf %503 : vector<22x128xbf16> to vector<22x128xf32>
    %505 = arith.mulf %502, %504 : vector<22x128xf32>
    %cst_440 = arith.constant 0.000000e+00 : f32
    %506 = vector.broadcast %cst_440 : f32 to vector<7x128xf32>
    %c0_441 = arith.constant 0 : index
    %c0_442 = arith.constant 0 : index
    %507 = vector.load %arg16[%c0_441, %c0_442] : memref<40x128xf32, #tpu.memory_space<vmem>>, vector<7x128xf32>
    tpu.vector_store %arg16[%c0_441, %c0_442], %506 {strides = array<i32>} : memref<40x128xf32, #tpu.memory_space<vmem>>, vector<7x128xf32>,
    %c7_443 = arith.constant 7 : index
    %c0_444 = arith.constant 0 : index
    %508 = vector.load %arg16[%c7_443, %c0_444] : memref<40x128xf32, #tpu.memory_space<vmem>>, vector<22x128xf32>
    tpu.vector_store %arg16[%c7_443, %c0_444], %505 {strides = array<i32>} : memref<40x128xf32, #tpu.memory_space<vmem>>, vector<22x128xf32>,
    %cst_445 = arith.constant 0.000000e+00 : f32
    %509 = vector.broadcast %cst_445 : f32 to vector<7x128xf32>
    %c29 = arith.constant 29 : index
    %c0_446 = arith.constant 0 : index
    %510 = vector.load %arg16[%c29, %c0_446] : memref<40x128xf32, #tpu.memory_space<vmem>>, vector<7x128xf32>
    tpu.vector_store %arg16[%c29, %c0_446], %509 {strides = array<i32>} : memref<40x128xf32, #tpu.memory_space<vmem>>, vector<7x128xf32>,
    %c0_447 = arith.constant 0 : index
    %c0_448 = arith.constant 0 : index
    %511 = vector.load %arg8[%c0_447, %c0_448] : memref<32x12xbf16, #tpu.memory_space<vmem>>, vector<32x12xbf16>
    %c0_449 = arith.constant 0 : index
    %c0_450 = arith.constant 0 : index
    %512 = vector.load %arg16[%c0_449, %c0_450] : memref<40x128xf32, #tpu.memory_space<vmem>>, vector<12x128xf32>
    %513 = arith.truncf %512 : vector<12x128xf32> to vector<12x128xbf16>
    %cst_451 = arith.constant dense<0.000000e+00> : vector<32x128xf32>
    %514 = tpu.matmul %511, %513, %cst_451 {dimension_numbers = #tpu.dot_dimension_numbers<[1], [0], [0], [1], [0, 0, 1, 1], [], []>} : vector<32x12xbf16>, vector<12x128xbf16>, vector<32x128xf32> -> vector<32x128xf32>
    %515 = vector.extract_strided_slice %514 {offsets = [0, 0], sizes = [4, 128], strides = [1, 1]} : vector<32x128xf32> to vector<4x128xf32>
    %c0_452 = arith.constant 0 : index
    %c0_453 = arith.constant 0 : index
    %c0_454 = arith.constant 0 : index
    %516 = vector.load %arg20[%c0_452, %c0_453, %c0_454] : memref<4x16x128xf32, #tpu.memory_space<vmem>>, vector<1x4x128xf32>
    %517 = vector.shape_cast %516 : vector<1x4x128xf32> to vector<4x128xf32>
    %518 = vector.shape_cast %515 : vector<4x128xf32> to vector<1x4x128xf32>
    tpu.vector_store %arg20[%c0_452, %c0_453, %c0_454], %518 {strides = array<i32>} : memref<4x16x128xf32, #tpu.memory_space<vmem>>, vector<1x4x128xf32>,
    %519 = vector.extract_strided_slice %514 {offsets = [8, 0], sizes = [4, 128], strides = [1, 1]} : vector<32x128xf32> to vector<4x128xf32>
    %c1_455 = arith.constant 1 : index
    %c0_456 = arith.constant 0 : index
    %c0_457 = arith.constant 0 : index
    %520 = vector.load %arg20[%c1_455, %c0_456, %c0_457] : memref<4x16x128xf32, #tpu.memory_space<vmem>>, vector<1x4x128xf32>
    %521 = vector.shape_cast %520 : vector<1x4x128xf32> to vector<4x128xf32>
    %522 = vector.shape_cast %519 : vector<4x128xf32> to vector<1x4x128xf32>
    tpu.vector_store %arg20[%c1_455, %c0_456, %c0_457], %522 {strides = array<i32>} : memref<4x16x128xf32, #tpu.memory_space<vmem>>, vector<1x4x128xf32>,
    %523 = vector.extract_strided_slice %514 {offsets = [16, 0], sizes = [4, 128], strides = [1, 1]} : vector<32x128xf32> to vector<4x128xf32>
    %c2_458 = arith.constant 2 : index
    %c0_459 = arith.constant 0 : index
    %c0_460 = arith.constant 0 : index
    %524 = vector.load %arg20[%c2_458, %c0_459, %c0_460] : memref<4x16x128xf32, #tpu.memory_space<vmem>>, vector<1x4x128xf32>
    %525 = vector.shape_cast %524 : vector<1x4x128xf32> to vector<4x128xf32>
    %526 = vector.shape_cast %523 : vector<4x128xf32> to vector<1x4x128xf32>
    tpu.vector_store %arg20[%c2_458, %c0_459, %c0_460], %526 {strides = array<i32>} : memref<4x16x128xf32, #tpu.memory_space<vmem>>, vector<1x4x128xf32>,
    %527 = vector.extract_strided_slice %514 {offsets = [24, 0], sizes = [4, 128], strides = [1, 1]} : vector<32x128xf32> to vector<4x128xf32>
    %c3_461 = arith.constant 3 : index
    %c0_462 = arith.constant 0 : index
    %c0_463 = arith.constant 0 : index
    %528 = vector.load %arg20[%c3_461, %c0_462, %c0_463] : memref<4x16x128xf32, #tpu.memory_space<vmem>>, vector<1x4x128xf32>
    %529 = vector.shape_cast %528 : vector<1x4x128xf32> to vector<4x128xf32>
    %530 = vector.shape_cast %527 : vector<4x128xf32> to vector<1x4x128xf32>
    tpu.vector_store %arg20[%c3_461, %c0_462, %c0_463], %530 {strides = array<i32>} : memref<4x16x128xf32, #tpu.memory_space<vmem>>, vector<1x4x128xf32>,
    %c12_464 = arith.constant 12 : index
    %c0_465 = arith.constant 0 : index
    %531 = vector.load %arg16[%c12_464, %c0_465] : memref<40x128xf32, #tpu.memory_space<vmem>>, vector<12x128xf32>
    %532 = arith.truncf %531 : vector<12x128xf32> to vector<12x128xbf16>
    %cst_466 = arith.constant dense<0.000000e+00> : vector<32x128xf32>
    %533 = tpu.matmul %511, %532, %cst_466 {dimension_numbers = #tpu.dot_dimension_numbers<[1], [0], [0], [1], [0, 0, 1, 1], [], []>} : vector<32x12xbf16>, vector<12x128xbf16>, vector<32x128xf32> -> vector<32x128xf32>
    %534 = vector.extract_strided_slice %533 {offsets = [0, 0], sizes = [4, 128], strides = [1, 1]} : vector<32x128xf32> to vector<4x128xf32>
    %c0_467 = arith.constant 0 : index
    %c4_468 = arith.constant 4 : index
    %c0_469 = arith.constant 0 : index
    %535 = vector.load %arg20[%c0_467, %c4_468, %c0_469] : memref<4x16x128xf32, #tpu.memory_space<vmem>>, vector<1x4x128xf32>
    %536 = vector.shape_cast %535 : vector<1x4x128xf32> to vector<4x128xf32>
    %537 = vector.shape_cast %534 : vector<4x128xf32> to vector<1x4x128xf32>
    tpu.vector_store %arg20[%c0_467, %c4_468, %c0_469], %537 {strides = array<i32>} : memref<4x16x128xf32, #tpu.memory_space<vmem>>, vector<1x4x128xf32>,
    %538 = vector.extract_strided_slice %533 {offsets = [8, 0], sizes = [4, 128], strides = [1, 1]} : vector<32x128xf32> to vector<4x128xf32>
    %c1_470 = arith.constant 1 : index
    %c4_471 = arith.constant 4 : index
    %c0_472 = arith.constant 0 : index
    %539 = vector.load %arg20[%c1_470, %c4_471, %c0_472] : memref<4x16x128xf32, #tpu.memory_space<vmem>>, vector<1x4x128xf32>
    %540 = vector.shape_cast %539 : vector<1x4x128xf32> to vector<4x128xf32>
    %541 = vector.shape_cast %538 : vector<4x128xf32> to vector<1x4x128xf32>
    tpu.vector_store %arg20[%c1_470, %c4_471, %c0_472], %541 {strides = array<i32>} : memref<4x16x128xf32, #tpu.memory_space<vmem>>, vector<1x4x128xf32>,
    %542 = vector.extract_strided_slice %533 {offsets = [16, 0], sizes = [4, 128], strides = [1, 1]} : vector<32x128xf32> to vector<4x128xf32>
    %c2_473 = arith.constant 2 : index
    %c4_474 = arith.constant 4 : index
    %c0_475 = arith.constant 0 : index
    %543 = vector.load %arg20[%c2_473, %c4_474, %c0_475] : memref<4x16x128xf32, #tpu.memory_space<vmem>>, vector<1x4x128xf32>
    %544 = vector.shape_cast %543 : vector<1x4x128xf32> to vector<4x128xf32>
    %545 = vector.shape_cast %542 : vector<4x128xf32> to vector<1x4x128xf32>
    tpu.vector_store %arg20[%c2_473, %c4_474, %c0_475], %545 {strides = array<i32>} : memref<4x16x128xf32, #tpu.memory_space<vmem>>, vector<1x4x128xf32>,
    %546 = vector.extract_strided_slice %533 {offsets = [24, 0], sizes = [4, 128], strides = [1, 1]} : vector<32x128xf32> to vector<4x128xf32>
    %c3_476 = arith.constant 3 : index
    %c4_477 = arith.constant 4 : index
    %c0_478 = arith.constant 0 : index
    %547 = vector.load %arg20[%c3_476, %c4_477, %c0_478] : memref<4x16x128xf32, #tpu.memory_space<vmem>>, vector<1x4x128xf32>
    %548 = vector.shape_cast %547 : vector<1x4x128xf32> to vector<4x128xf32>
    %549 = vector.shape_cast %546 : vector<4x128xf32> to vector<1x4x128xf32>
    tpu.vector_store %arg20[%c3_476, %c4_477, %c0_478], %549 {strides = array<i32>} : memref<4x16x128xf32, #tpu.memory_space<vmem>>, vector<1x4x128xf32>,
    %c24_479 = arith.constant 24 : index
    %c0_480 = arith.constant 0 : index
    %550 = vector.load %arg16[%c24_479, %c0_480] : memref<40x128xf32, #tpu.memory_space<vmem>>, vector<12x128xf32>
    %551 = arith.truncf %550 : vector<12x128xf32> to vector<12x128xbf16>
    %cst_481 = arith.constant dense<0.000000e+00> : vector<32x128xf32>
    %552 = tpu.matmul %511, %551, %cst_481 {dimension_numbers = #tpu.dot_dimension_numbers<[1], [0], [0], [1], [0, 0, 1, 1], [], []>} : vector<32x12xbf16>, vector<12x128xbf16>, vector<32x128xf32> -> vector<32x128xf32>
    %553 = vector.extract_strided_slice %552 {offsets = [0, 0], sizes = [4, 128], strides = [1, 1]} : vector<32x128xf32> to vector<4x128xf32>
    %c0_482 = arith.constant 0 : index
    %c8_483 = arith.constant 8 : index
    %c0_484 = arith.constant 0 : index
    %554 = vector.load %arg20[%c0_482, %c8_483, %c0_484] : memref<4x16x128xf32, #tpu.memory_space<vmem>>, vector<1x4x128xf32>
    %555 = vector.shape_cast %554 : vector<1x4x128xf32> to vector<4x128xf32>
    %556 = vector.shape_cast %553 : vector<4x128xf32> to vector<1x4x128xf32>
    tpu.vector_store %arg20[%c0_482, %c8_483, %c0_484], %556 {strides = array<i32>} : memref<4x16x128xf32, #tpu.memory_space<vmem>>, vector<1x4x128xf32>,
    %557 = vector.extract_strided_slice %552 {offsets = [8, 0], sizes = [4, 128], strides = [1, 1]} : vector<32x128xf32> to vector<4x128xf32>
    %c1_485 = arith.constant 1 : index
    %c8_486 = arith.constant 8 : index
    %c0_487 = arith.constant 0 : index
    %558 = vector.load %arg20[%c1_485, %c8_486, %c0_487] : memref<4x16x128xf32, #tpu.memory_space<vmem>>, vector<1x4x128xf32>
    %559 = vector.shape_cast %558 : vector<1x4x128xf32> to vector<4x128xf32>
    %560 = vector.shape_cast %557 : vector<4x128xf32> to vector<1x4x128xf32>
    tpu.vector_store %arg20[%c1_485, %c8_486, %c0_487], %560 {strides = array<i32>} : memref<4x16x128xf32, #tpu.memory_space<vmem>>, vector<1x4x128xf32>,
    %561 = vector.extract_strided_slice %552 {offsets = [16, 0], sizes = [4, 128], strides = [1, 1]} : vector<32x128xf32> to vector<4x128xf32>
    %c2_488 = arith.constant 2 : index
    %c8_489 = arith.constant 8 : index
    %c0_490 = arith.constant 0 : index
    %562 = vector.load %arg20[%c2_488, %c8_489, %c0_490] : memref<4x16x128xf32, #tpu.memory_space<vmem>>, vector<1x4x128xf32>
    %563 = vector.shape_cast %562 : vector<1x4x128xf32> to vector<4x128xf32>
    %564 = vector.shape_cast %561 : vector<4x128xf32> to vector<1x4x128xf32>
    tpu.vector_store %arg20[%c2_488, %c8_489, %c0_490], %564 {strides = array<i32>} : memref<4x16x128xf32, #tpu.memory_space<vmem>>, vector<1x4x128xf32>,
    %565 = vector.extract_strided_slice %552 {offsets = [24, 0], sizes = [4, 128], strides = [1, 1]} : vector<32x128xf32> to vector<4x128xf32>
    %c3_491 = arith.constant 3 : index
    %c8_492 = arith.constant 8 : index
    %c0_493 = arith.constant 0 : index
    %566 = vector.load %arg20[%c3_491, %c8_492, %c0_493] : memref<4x16x128xf32, #tpu.memory_space<vmem>>, vector<1x4x128xf32>
    %567 = vector.shape_cast %566 : vector<1x4x128xf32> to vector<4x128xf32>
    %568 = vector.shape_cast %565 : vector<4x128xf32> to vector<1x4x128xf32>
    tpu.vector_store %arg20[%c3_491, %c8_492, %c0_493], %568 {strides = array<i32>} : memref<4x16x128xf32, #tpu.memory_space<vmem>>, vector<1x4x128xf32>,
    %cst_494 = arith.constant 0.000000e+00 : f32
    %569 = vector.broadcast %cst_494 : f32 to vector<6x128xf32>
    %c0_495 = arith.constant 0 : index
    %c0_496 = arith.constant 0 : index
    %c0_497 = arith.constant 0 : index
    %570 = vector.load %arg20[%c0_495, %c0_496, %c0_497] : memref<4x16x128xf32, #tpu.memory_space<vmem>>, vector<1x6x128xf32>
    %571 = vector.shape_cast %570 : vector<1x6x128xf32> to vector<6x128xf32>
    %572 = arith.truncf %571 : vector<6x128xf32> to vector<6x128xbf16>
    %c3_498 = arith.constant 3 : index
    %c0_499 = arith.constant 0 : index
    %c0_500 = arith.constant 0 : index
    %c0_501 = arith.constant 0 : index
    %573 = vector.load %arg3[%c3_498, %c0_499, %c0_500, %c0_501] : memref<5x9x128x128xbf16, #tpu.memory_space<vmem>>, vector<1x1x128x128xbf16>
    %574 = vector.shape_cast %573 : vector<1x1x128x128xbf16> to vector<128x128xbf16>
    %cst_502 = arith.constant dense<0.000000e+00> : vector<6x128xf32>
    %575 = tpu.matmul %572, %574, %cst_502 {dimension_numbers = #tpu.dot_dimension_numbers<[1], [0], [0], [1], [0, 0, 1, 1], [], []>} : vector<6x128xbf16>, vector<128x128xbf16>, vector<6x128xf32> -> vector<6x128xf32>
    %576 = arith.addf %569, %575 : vector<6x128xf32>
    %c1_503 = arith.constant 1 : index
    %c0_504 = arith.constant 0 : index
    %c0_505 = arith.constant 0 : index
    %577 = vector.load %arg20[%c1_503, %c0_504, %c0_505] : memref<4x16x128xf32, #tpu.memory_space<vmem>>, vector<1x6x128xf32>
    %578 = vector.shape_cast %577 : vector<1x6x128xf32> to vector<6x128xf32>
    %579 = arith.truncf %578 : vector<6x128xf32> to vector<6x128xbf16>
    %c3_506 = arith.constant 3 : index
    %c1_507 = arith.constant 1 : index
    %c0_508 = arith.constant 0 : index
    %c0_509 = arith.constant 0 : index
    %580 = vector.load %arg3[%c3_506, %c1_507, %c0_508, %c0_509] : memref<5x9x128x128xbf16, #tpu.memory_space<vmem>>, vector<1x1x128x128xbf16>
    %581 = vector.shape_cast %580 : vector<1x1x128x128xbf16> to vector<128x128xbf16>
    %cst_510 = arith.constant dense<0.000000e+00> : vector<6x128xf32>
    %582 = tpu.matmul %579, %581, %cst_510 {dimension_numbers = #tpu.dot_dimension_numbers<[1], [0], [0], [1], [0, 0, 1, 1], [], []>} : vector<6x128xbf16>, vector<128x128xbf16>, vector<6x128xf32> -> vector<6x128xf32>
    %583 = arith.addf %576, %582 : vector<6x128xf32>
    %c0_511 = arith.constant 0 : index
    %c1_512 = arith.constant 1 : index
    %c0_513 = arith.constant 0 : index
    %584 = vector.load %arg20[%c0_511, %c1_512, %c0_513] : memref<4x16x128xf32, #tpu.memory_space<vmem>>, vector<1x6x128xf32>
    %585 = vector.shape_cast %584 : vector<1x6x128xf32> to vector<6x128xf32>
    %586 = arith.truncf %585 : vector<6x128xf32> to vector<6x128xbf16>
    %c3_514 = arith.constant 3 : index
    %c2_515 = arith.constant 2 : index
    %c0_516 = arith.constant 0 : index
    %c0_517 = arith.constant 0 : index
    %587 = vector.load %arg3[%c3_514, %c2_515, %c0_516, %c0_517] : memref<5x9x128x128xbf16, #tpu.memory_space<vmem>>, vector<1x1x128x128xbf16>
    %588 = vector.shape_cast %587 : vector<1x1x128x128xbf16> to vector<128x128xbf16>
    %cst_518 = arith.constant dense<0.000000e+00> : vector<6x128xf32>
    %589 = tpu.matmul %586, %588, %cst_518 {dimension_numbers = #tpu.dot_dimension_numbers<[1], [0], [0], [1], [0, 0, 1, 1], [], []>} : vector<6x128xbf16>, vector<128x128xbf16>, vector<6x128xf32> -> vector<6x128xf32>
    %590 = arith.addf %583, %589 : vector<6x128xf32>
    %c2_519 = arith.constant 2 : index
    %c0_520 = arith.constant 0 : index
    %c0_521 = arith.constant 0 : index
    %591 = vector.load %arg20[%c2_519, %c0_520, %c0_521] : memref<4x16x128xf32, #tpu.memory_space<vmem>>, vector<1x6x128xf32>
    %592 = vector.shape_cast %591 : vector<1x6x128xf32> to vector<6x128xf32>
    %593 = arith.truncf %592 : vector<6x128xf32> to vector<6x128xbf16>
    %c3_522 = arith.constant 3 : index
    %c3_523 = arith.constant 3 : index
    %c0_524 = arith.constant 0 : index
    %c0_525 = arith.constant 0 : index
    %594 = vector.load %arg3[%c3_522, %c3_523, %c0_524, %c0_525] : memref<5x9x128x128xbf16, #tpu.memory_space<vmem>>, vector<1x1x128x128xbf16>
    %595 = vector.shape_cast %594 : vector<1x1x128x128xbf16> to vector<128x128xbf16>
    %cst_526 = arith.constant dense<0.000000e+00> : vector<6x128xf32>
    %596 = tpu.matmul %593, %595, %cst_526 {dimension_numbers = #tpu.dot_dimension_numbers<[1], [0], [0], [1], [0, 0, 1, 1], [], []>} : vector<6x128xbf16>, vector<128x128xbf16>, vector<6x128xf32> -> vector<6x128xf32>
    %597 = arith.addf %590, %596 : vector<6x128xf32>
    %c3_527 = arith.constant 3 : index
    %c0_528 = arith.constant 0 : index
    %c0_529 = arith.constant 0 : index
    %598 = vector.load %arg20[%c3_527, %c0_528, %c0_529] : memref<4x16x128xf32, #tpu.memory_space<vmem>>, vector<1x6x128xf32>
    %599 = vector.shape_cast %598 : vector<1x6x128xf32> to vector<6x128xf32>
    %600 = arith.truncf %599 : vector<6x128xf32> to vector<6x128xbf16>
    %c3_530 = arith.constant 3 : index
    %c4_531 = arith.constant 4 : index
    %c0_532 = arith.constant 0 : index
    %c0_533 = arith.constant 0 : index
    %601 = vector.load %arg3[%c3_530, %c4_531, %c0_532, %c0_533] : memref<5x9x128x128xbf16, #tpu.memory_space<vmem>>, vector<1x1x128x128xbf16>
    %602 = vector.shape_cast %601 : vector<1x1x128x128xbf16> to vector<128x128xbf16>
    %cst_534 = arith.constant dense<0.000000e+00> : vector<6x128xf32>
    %603 = tpu.matmul %600, %602, %cst_534 {dimension_numbers = #tpu.dot_dimension_numbers<[1], [0], [0], [1], [0, 0, 1, 1], [], []>} : vector<6x128xbf16>, vector<128x128xbf16>, vector<6x128xf32> -> vector<6x128xf32>
    %604 = arith.addf %597, %603 : vector<6x128xf32>
    %c2_535 = arith.constant 2 : index
    %c1_536 = arith.constant 1 : index
    %c0_537 = arith.constant 0 : index
    %605 = vector.load %arg20[%c2_535, %c1_536, %c0_537] : memref<4x16x128xf32, #tpu.memory_space<vmem>>, vector<1x6x128xf32>
    %606 = vector.shape_cast %605 : vector<1x6x128xf32> to vector<6x128xf32>
    %607 = arith.truncf %606 : vector<6x128xf32> to vector<6x128xbf16>
    %c3_538 = arith.constant 3 : index
    %c5_539 = arith.constant 5 : index
    %c0_540 = arith.constant 0 : index
    %c0_541 = arith.constant 0 : index
    %608 = vector.load %arg3[%c3_538, %c5_539, %c0_540, %c0_541] : memref<5x9x128x128xbf16, #tpu.memory_space<vmem>>, vector<1x1x128x128xbf16>
    %609 = vector.shape_cast %608 : vector<1x1x128x128xbf16> to vector<128x128xbf16>
    %cst_542 = arith.constant dense<0.000000e+00> : vector<6x128xf32>
    %610 = tpu.matmul %607, %609, %cst_542 {dimension_numbers = #tpu.dot_dimension_numbers<[1], [0], [0], [1], [0, 0, 1, 1], [], []>} : vector<6x128xbf16>, vector<128x128xbf16>, vector<6x128xf32> -> vector<6x128xf32>
    %611 = arith.addf %604, %610 : vector<6x128xf32>
    %c0_543 = arith.constant 0 : index
    %c4_544 = arith.constant 4 : index
    %c0_545 = arith.constant 0 : index
    %612 = vector.load %arg20[%c0_543, %c4_544, %c0_545] : memref<4x16x128xf32, #tpu.memory_space<vmem>>, vector<1x6x128xf32>
    %613 = vector.shape_cast %612 : vector<1x6x128xf32> to vector<6x128xf32>
    %614 = arith.truncf %613 : vector<6x128xf32> to vector<6x128xbf16>
    %c3_546 = arith.constant 3 : index
    %c6_547 = arith.constant 6 : index
    %c0_548 = arith.constant 0 : index
    %c0_549 = arith.constant 0 : index
    %615 = vector.load %arg3[%c3_546, %c6_547, %c0_548, %c0_549] : memref<5x9x128x128xbf16, #tpu.memory_space<vmem>>, vector<1x1x128x128xbf16>
    %616 = vector.shape_cast %615 : vector<1x1x128x128xbf16> to vector<128x128xbf16>
    %cst_550 = arith.constant dense<0.000000e+00> : vector<6x128xf32>
    %617 = tpu.matmul %614, %616, %cst_550 {dimension_numbers = #tpu.dot_dimension_numbers<[1], [0], [0], [1], [0, 0, 1, 1], [], []>} : vector<6x128xbf16>, vector<128x128xbf16>, vector<6x128xf32> -> vector<6x128xf32>
    %618 = arith.addf %611, %617 : vector<6x128xf32>
    %c1_551 = arith.constant 1 : index
    %c4_552 = arith.constant 4 : index
    %c0_553 = arith.constant 0 : index
    %619 = vector.load %arg20[%c1_551, %c4_552, %c0_553] : memref<4x16x128xf32, #tpu.memory_space<vmem>>, vector<1x6x128xf32>
    %620 = vector.shape_cast %619 : vector<1x6x128xf32> to vector<6x128xf32>
    %621 = arith.truncf %620 : vector<6x128xf32> to vector<6x128xbf16>
    %c3_554 = arith.constant 3 : index
    %c7_555 = arith.constant 7 : index
    %c0_556 = arith.constant 0 : index
    %c0_557 = arith.constant 0 : index
    %622 = vector.load %arg3[%c3_554, %c7_555, %c0_556, %c0_557] : memref<5x9x128x128xbf16, #tpu.memory_space<vmem>>, vector<1x1x128x128xbf16>
    %623 = vector.shape_cast %622 : vector<1x1x128x128xbf16> to vector<128x128xbf16>
    %cst_558 = arith.constant dense<0.000000e+00> : vector<6x128xf32>
    %624 = tpu.matmul %621, %623, %cst_558 {dimension_numbers = #tpu.dot_dimension_numbers<[1], [0], [0], [1], [0, 0, 1, 1], [], []>} : vector<6x128xbf16>, vector<128x128xbf16>, vector<6x128xf32> -> vector<6x128xf32>
    %625 = arith.addf %618, %624 : vector<6x128xf32>
    %c0_559 = arith.constant 0 : index
    %c5_560 = arith.constant 5 : index
    %c0_561 = arith.constant 0 : index
    %626 = vector.load %arg20[%c0_559, %c5_560, %c0_561] : memref<4x16x128xf32, #tpu.memory_space<vmem>>, vector<1x6x128xf32>
    %627 = vector.shape_cast %626 : vector<1x6x128xf32> to vector<6x128xf32>
    %628 = arith.truncf %627 : vector<6x128xf32> to vector<6x128xbf16>
    %c3_562 = arith.constant 3 : index
    %c8_563 = arith.constant 8 : index
    %c0_564 = arith.constant 0 : index
    %c0_565 = arith.constant 0 : index
    %629 = vector.load %arg3[%c3_562, %c8_563, %c0_564, %c0_565] : memref<5x9x128x128xbf16, #tpu.memory_space<vmem>>, vector<1x1x128x128xbf16>
    %630 = vector.shape_cast %629 : vector<1x1x128x128xbf16> to vector<128x128xbf16>
    %cst_566 = arith.constant dense<0.000000e+00> : vector<6x128xf32>
    %631 = tpu.matmul %628, %630, %cst_566 {dimension_numbers = #tpu.dot_dimension_numbers<[1], [0], [0], [1], [0, 0, 1, 1], [], []>} : vector<6x128xbf16>, vector<128x128xbf16>, vector<6x128xf32> -> vector<6x128xf32>
    %632 = arith.addf %625, %631 : vector<6x128xf32>
    %c4_567 = arith.constant 4 : index
    %c0_568 = arith.constant 0 : index
    %c0_569 = arith.constant 0 : index
    %633 = vector.load %arg4[%c4_567, %c0_568, %c0_569] : memref<6x1x128xf32, #tpu.memory_space<vmem>>, vector<1x1x128xf32>
    %634 = vector.shape_cast %633 : vector<1x1x128xf32> to vector<1x128xf32>
    %635 = vector.broadcast %634 : vector<1x128xf32> to vector<6x128xf32>
    %636 = arith.addf %632, %635 : vector<6x128xf32>
    %cst_570 = arith.constant 0.000000e+00 : f32
    %637 = vector.broadcast %cst_570 : f32 to vector<6x128xf32>
    %638 = arith.maximumf %636, %637 : vector<6x128xf32>
    %c464 = arith.constant 464 : index
    %c0_571 = arith.constant 0 : index
    %639 = vector.load %arg5[%c464, %c0_571] : memref<472x128xbf16, #tpu.memory_space<vmem>>, vector<6x128xbf16>
    %640 = arith.extf %639 : vector<6x128xbf16> to vector<6x128xf32>
    %641 = arith.mulf %638, %640 : vector<6x128xf32>
    %cst_572 = arith.constant 0.000000e+00 : f32
    %642 = vector.broadcast %cst_572 : f32 to vector<5x128xf32>
    %c0_573 = arith.constant 0 : index
    %c0_574 = arith.constant 0 : index
    %643 = vector.load %arg17[%c0_573, %c0_574] : memref<16x128xf32, #tpu.memory_space<vmem>>, vector<5x128xf32>
    tpu.vector_store %arg17[%c0_573, %c0_574], %642 {strides = array<i32>} : memref<16x128xf32, #tpu.memory_space<vmem>>, vector<5x128xf32>,
    %c5_575 = arith.constant 5 : index
    %c0_576 = arith.constant 0 : index
    %644 = vector.load %arg17[%c5_575, %c0_576] : memref<16x128xf32, #tpu.memory_space<vmem>>, vector<6x128xf32>
    tpu.vector_store %arg17[%c5_575, %c0_576], %641 {strides = array<i32>} : memref<16x128xf32, #tpu.memory_space<vmem>>, vector<6x128xf32>,
    %cst_577 = arith.constant 0.000000e+00 : f32
    %645 = vector.broadcast %cst_577 : f32 to vector<5x128xf32>
    %c11_578 = arith.constant 11 : index
    %c0_579 = arith.constant 0 : index
    %646 = vector.load %arg17[%c11_578, %c0_579] : memref<16x128xf32, #tpu.memory_space<vmem>>, vector<5x128xf32>
    tpu.vector_store %arg17[%c11_578, %c0_579], %645 {strides = array<i32>} : memref<16x128xf32, #tpu.memory_space<vmem>>, vector<5x128xf32>,
    %c0_580 = arith.constant 0 : index
    %c0_581 = arith.constant 0 : index
    %647 = vector.load %arg9[%c0_580, %c0_581] : memref<32x8xbf16, #tpu.memory_space<vmem>>, vector<32x8xbf16>
    %c0_582 = arith.constant 0 : index
    %c0_583 = arith.constant 0 : index
    %648 = vector.load %arg17[%c0_582, %c0_583] : memref<16x128xf32, #tpu.memory_space<vmem>>, vector<8x128xf32>
    %649 = arith.truncf %648 : vector<8x128xf32> to vector<8x128xbf16>
    %cst_584 = arith.constant dense<0.000000e+00> : vector<32x128xf32>
    %650 = tpu.matmul %647, %649, %cst_584 {dimension_numbers = #tpu.dot_dimension_numbers<[1], [0], [0], [1], [0, 0, 1, 1], [], []>} : vector<32x8xbf16>, vector<8x128xbf16>, vector<32x128xf32> -> vector<32x128xf32>
    %651 = vector.extract_strided_slice %650 {offsets = [0, 0], sizes = [3, 128], strides = [1, 1]} : vector<32x128xf32> to vector<3x128xf32>
    %c0_585 = arith.constant 0 : index
    %c0_586 = arith.constant 0 : index
    %c0_587 = arith.constant 0 : index
    %652 = vector.load %arg21[%c0_585, %c0_586, %c0_587] : memref<4x16x128xf32, #tpu.memory_space<vmem>>, vector<1x3x128xf32>
    %653 = vector.shape_cast %652 : vector<1x3x128xf32> to vector<3x128xf32>
    %654 = vector.shape_cast %651 : vector<3x128xf32> to vector<1x3x128xf32>
    tpu.vector_store %arg21[%c0_585, %c0_586, %c0_587], %654 {strides = array<i32>} : memref<4x16x128xf32, #tpu.memory_space<vmem>>, vector<1x3x128xf32>,
    %655 = vector.extract_strided_slice %650 {offsets = [8, 0], sizes = [3, 128], strides = [1, 1]} : vector<32x128xf32> to vector<3x128xf32>
    %c1_588 = arith.constant 1 : index
    %c0_589 = arith.constant 0 : index
    %c0_590 = arith.constant 0 : index
    %656 = vector.load %arg21[%c1_588, %c0_589, %c0_590] : memref<4x16x128xf32, #tpu.memory_space<vmem>>, vector<1x3x128xf32>
    %657 = vector.shape_cast %656 : vector<1x3x128xf32> to vector<3x128xf32>
    %658 = vector.shape_cast %655 : vector<3x128xf32> to vector<1x3x128xf32>
    tpu.vector_store %arg21[%c1_588, %c0_589, %c0_590], %658 {strides = array<i32>} : memref<4x16x128xf32, #tpu.memory_space<vmem>>, vector<1x3x128xf32>,
    %659 = vector.extract_strided_slice %650 {offsets = [16, 0], sizes = [3, 128], strides = [1, 1]} : vector<32x128xf32> to vector<3x128xf32>
    %c2_591 = arith.constant 2 : index
    %c0_592 = arith.constant 0 : index
    %c0_593 = arith.constant 0 : index
    %660 = vector.load %arg21[%c2_591, %c0_592, %c0_593] : memref<4x16x128xf32, #tpu.memory_space<vmem>>, vector<1x3x128xf32>
    %661 = vector.shape_cast %660 : vector<1x3x128xf32> to vector<3x128xf32>
    %662 = vector.shape_cast %659 : vector<3x128xf32> to vector<1x3x128xf32>
    tpu.vector_store %arg21[%c2_591, %c0_592, %c0_593], %662 {strides = array<i32>} : memref<4x16x128xf32, #tpu.memory_space<vmem>>, vector<1x3x128xf32>,
    %663 = vector.extract_strided_slice %650 {offsets = [24, 0], sizes = [3, 128], strides = [1, 1]} : vector<32x128xf32> to vector<3x128xf32>
    %c3_594 = arith.constant 3 : index
    %c0_595 = arith.constant 0 : index
    %c0_596 = arith.constant 0 : index
    %664 = vector.load %arg21[%c3_594, %c0_595, %c0_596] : memref<4x16x128xf32, #tpu.memory_space<vmem>>, vector<1x3x128xf32>
    %665 = vector.shape_cast %664 : vector<1x3x128xf32> to vector<3x128xf32>
    %666 = vector.shape_cast %663 : vector<3x128xf32> to vector<1x3x128xf32>
    tpu.vector_store %arg21[%c3_594, %c0_595, %c0_596], %666 {strides = array<i32>} : memref<4x16x128xf32, #tpu.memory_space<vmem>>, vector<1x3x128xf32>,
    %c8_597 = arith.constant 8 : index
    %c0_598 = arith.constant 0 : index
    %667 = vector.load %arg17[%c8_597, %c0_598] : memref<16x128xf32, #tpu.memory_space<vmem>>, vector<8x128xf32>
    %668 = arith.truncf %667 : vector<8x128xf32> to vector<8x128xbf16>
    %cst_599 = arith.constant dense<0.000000e+00> : vector<32x128xf32>
    %669 = tpu.matmul %647, %668, %cst_599 {dimension_numbers = #tpu.dot_dimension_numbers<[1], [0], [0], [1], [0, 0, 1, 1], [], []>} : vector<32x8xbf16>, vector<8x128xbf16>, vector<32x128xf32> -> vector<32x128xf32>
    %670 = vector.extract_strided_slice %669 {offsets = [0, 0], sizes = [3, 128], strides = [1, 1]} : vector<32x128xf32> to vector<3x128xf32>
    %c0_600 = arith.constant 0 : index
    %c3_601 = arith.constant 3 : index
    %c0_602 = arith.constant 0 : index
    %671 = vector.load %arg21[%c0_600, %c3_601, %c0_602] : memref<4x16x128xf32, #tpu.memory_space<vmem>>, vector<1x3x128xf32>
    %672 = vector.shape_cast %671 : vector<1x3x128xf32> to vector<3x128xf32>
    %673 = vector.shape_cast %670 : vector<3x128xf32> to vector<1x3x128xf32>
    tpu.vector_store %arg21[%c0_600, %c3_601, %c0_602], %673 {strides = array<i32>} : memref<4x16x128xf32, #tpu.memory_space<vmem>>, vector<1x3x128xf32>,
    %674 = vector.extract_strided_slice %669 {offsets = [8, 0], sizes = [3, 128], strides = [1, 1]} : vector<32x128xf32> to vector<3x128xf32>
    %c1_603 = arith.constant 1 : index
    %c3_604 = arith.constant 3 : index
    %c0_605 = arith.constant 0 : index
    %675 = vector.load %arg21[%c1_603, %c3_604, %c0_605] : memref<4x16x128xf32, #tpu.memory_space<vmem>>, vector<1x3x128xf32>
    %676 = vector.shape_cast %675 : vector<1x3x128xf32> to vector<3x128xf32>
    %677 = vector.shape_cast %674 : vector<3x128xf32> to vector<1x3x128xf32>
    tpu.vector_store %arg21[%c1_603, %c3_604, %c0_605], %677 {strides = array<i32>} : memref<4x16x128xf32, #tpu.memory_space<vmem>>, vector<1x3x128xf32>,
    %678 = vector.extract_strided_slice %669 {offsets = [16, 0], sizes = [3, 128], strides = [1, 1]} : vector<32x128xf32> to vector<3x128xf32>
    %c2_606 = arith.constant 2 : index
    %c3_607 = arith.constant 3 : index
    %c0_608 = arith.constant 0 : index
    %679 = vector.load %arg21[%c2_606, %c3_607, %c0_608] : memref<4x16x128xf32, #tpu.memory_space<vmem>>, vector<1x3x128xf32>
    %680 = vector.shape_cast %679 : vector<1x3x128xf32> to vector<3x128xf32>
    %681 = vector.shape_cast %678 : vector<3x128xf32> to vector<1x3x128xf32>
    tpu.vector_store %arg21[%c2_606, %c3_607, %c0_608], %681 {strides = array<i32>} : memref<4x16x128xf32, #tpu.memory_space<vmem>>, vector<1x3x128xf32>,
    %682 = vector.extract_strided_slice %669 {offsets = [24, 0], sizes = [3, 128], strides = [1, 1]} : vector<32x128xf32> to vector<3x128xf32>
    %c3_609 = arith.constant 3 : index
    %c3_610 = arith.constant 3 : index
    %c0_611 = arith.constant 0 : index
    %683 = vector.load %arg21[%c3_609, %c3_610, %c0_611] : memref<4x16x128xf32, #tpu.memory_space<vmem>>, vector<1x3x128xf32>
    %684 = vector.shape_cast %683 : vector<1x3x128xf32> to vector<3x128xf32>
    %685 = vector.shape_cast %682 : vector<3x128xf32> to vector<1x3x128xf32>
    tpu.vector_store %arg21[%c3_609, %c3_610, %c0_611], %685 {strides = array<i32>} : memref<4x16x128xf32, #tpu.memory_space<vmem>>, vector<1x3x128xf32>,
    %cst_612 = arith.constant 0.000000e+00 : f32
    %686 = vector.broadcast %cst_612 : f32 to vector<1x128xf32>
    %c0_613 = arith.constant 0 : index
    %c0_614 = arith.constant 0 : index
    %c0_615 = arith.constant 0 : index
    %687 = vector.load %arg21[%c0_613, %c0_614, %c0_615] : memref<4x16x128xf32, #tpu.memory_space<vmem>>, vector<1x1x128xf32>
    %688 = vector.shape_cast %687 : vector<1x1x128xf32> to vector<1x128xf32>
    %689 = arith.truncf %688 : vector<1x128xf32> to vector<1x128xbf16>
    %c4_616 = arith.constant 4 : index
    %c0_617 = arith.constant 0 : index
    %c0_618 = arith.constant 0 : index
    %c0_619 = arith.constant 0 : index
    %690 = vector.load %arg3[%c4_616, %c0_617, %c0_618, %c0_619] : memref<5x9x128x128xbf16, #tpu.memory_space<vmem>>, vector<1x1x128x128xbf16>
    %691 = vector.shape_cast %690 : vector<1x1x128x128xbf16> to vector<128x128xbf16>
    %cst_620 = arith.constant dense<0.000000e+00> : vector<1x128xf32>
    %692 = tpu.matmul %689, %691, %cst_620 {dimension_numbers = #tpu.dot_dimension_numbers<[1], [0], [0], [1], [0, 0, 1, 1], [], []>} : vector<1x128xbf16>, vector<128x128xbf16>, vector<1x128xf32> -> vector<1x128xf32>
    %693 = arith.addf %686, %692 : vector<1x128xf32>
    %c1_621 = arith.constant 1 : index
    %c0_622 = arith.constant 0 : index
    %c0_623 = arith.constant 0 : index
    %694 = vector.load %arg21[%c1_621, %c0_622, %c0_623] : memref<4x16x128xf32, #tpu.memory_space<vmem>>, vector<1x1x128xf32>
    %695 = vector.shape_cast %694 : vector<1x1x128xf32> to vector<1x128xf32>
    %696 = arith.truncf %695 : vector<1x128xf32> to vector<1x128xbf16>
    %c4_624 = arith.constant 4 : index
    %c1_625 = arith.constant 1 : index
    %c0_626 = arith.constant 0 : index
    %c0_627 = arith.constant 0 : index
    %697 = vector.load %arg3[%c4_624, %c1_625, %c0_626, %c0_627] : memref<5x9x128x128xbf16, #tpu.memory_space<vmem>>, vector<1x1x128x128xbf16>
    %698 = vector.shape_cast %697 : vector<1x1x128x128xbf16> to vector<128x128xbf16>
    %cst_628 = arith.constant dense<0.000000e+00> : vector<1x128xf32>
    %699 = tpu.matmul %696, %698, %cst_628 {dimension_numbers = #tpu.dot_dimension_numbers<[1], [0], [0], [1], [0, 0, 1, 1], [], []>} : vector<1x128xbf16>, vector<128x128xbf16>, vector<1x128xf32> -> vector<1x128xf32>
    %700 = arith.addf %693, %699 : vector<1x128xf32>
    %c0_629 = arith.constant 0 : index
    %c1_630 = arith.constant 1 : index
    %c0_631 = arith.constant 0 : index
    %701 = vector.load %arg21[%c0_629, %c1_630, %c0_631] : memref<4x16x128xf32, #tpu.memory_space<vmem>>, vector<1x1x128xf32>
    %702 = vector.shape_cast %701 : vector<1x1x128xf32> to vector<1x128xf32>
    %703 = arith.truncf %702 : vector<1x128xf32> to vector<1x128xbf16>
    %c4_632 = arith.constant 4 : index
    %c2_633 = arith.constant 2 : index
    %c0_634 = arith.constant 0 : index
    %c0_635 = arith.constant 0 : index
    %704 = vector.load %arg3[%c4_632, %c2_633, %c0_634, %c0_635] : memref<5x9x128x128xbf16, #tpu.memory_space<vmem>>, vector<1x1x128x128xbf16>
    %705 = vector.shape_cast %704 : vector<1x1x128x128xbf16> to vector<128x128xbf16>
    %cst_636 = arith.constant dense<0.000000e+00> : vector<1x128xf32>
    %706 = tpu.matmul %703, %705, %cst_636 {dimension_numbers = #tpu.dot_dimension_numbers<[1], [0], [0], [1], [0, 0, 1, 1], [], []>} : vector<1x128xbf16>, vector<128x128xbf16>, vector<1x128xf32> -> vector<1x128xf32>
    %707 = arith.addf %700, %706 : vector<1x128xf32>
    %c2_637 = arith.constant 2 : index
    %c0_638 = arith.constant 0 : index
    %c0_639 = arith.constant 0 : index
    %708 = vector.load %arg21[%c2_637, %c0_638, %c0_639] : memref<4x16x128xf32, #tpu.memory_space<vmem>>, vector<1x1x128xf32>
    %709 = vector.shape_cast %708 : vector<1x1x128xf32> to vector<1x128xf32>
    %710 = arith.truncf %709 : vector<1x128xf32> to vector<1x128xbf16>
    %c4_640 = arith.constant 4 : index
    %c3_641 = arith.constant 3 : index
    %c0_642 = arith.constant 0 : index
    %c0_643 = arith.constant 0 : index
    %711 = vector.load %arg3[%c4_640, %c3_641, %c0_642, %c0_643] : memref<5x9x128x128xbf16, #tpu.memory_space<vmem>>, vector<1x1x128x128xbf16>
    %712 = vector.shape_cast %711 : vector<1x1x128x128xbf16> to vector<128x128xbf16>
    %cst_644 = arith.constant dense<0.000000e+00> : vector<1x128xf32>
    %713 = tpu.matmul %710, %712, %cst_644 {dimension_numbers = #tpu.dot_dimension_numbers<[1], [0], [0], [1], [0, 0, 1, 1], [], []>} : vector<1x128xbf16>, vector<128x128xbf16>, vector<1x128xf32> -> vector<1x128xf32>
    %714 = arith.addf %707, %713 : vector<1x128xf32>
    %c3_645 = arith.constant 3 : index
    %c0_646 = arith.constant 0 : index
    %c0_647 = arith.constant 0 : index
    %715 = vector.load %arg21[%c3_645, %c0_646, %c0_647] : memref<4x16x128xf32, #tpu.memory_space<vmem>>, vector<1x1x128xf32>
    %716 = vector.shape_cast %715 : vector<1x1x128xf32> to vector<1x128xf32>
    %717 = arith.truncf %716 : vector<1x128xf32> to vector<1x128xbf16>
    %c4_648 = arith.constant 4 : index
    %c4_649 = arith.constant 4 : index
    %c0_650 = arith.constant 0 : index
    %c0_651 = arith.constant 0 : index
    %718 = vector.load %arg3[%c4_648, %c4_649, %c0_650, %c0_651] : memref<5x9x128x128xbf16, #tpu.memory_space<vmem>>, vector<1x1x128x128xbf16>
    %719 = vector.shape_cast %718 : vector<1x1x128x128xbf16> to vector<128x128xbf16>
    %cst_652 = arith.constant dense<0.000000e+00> : vector<1x128xf32>
    %720 = tpu.matmul %717, %719, %cst_652 {dimension_numbers = #tpu.dot_dimension_numbers<[1], [0], [0], [1], [0, 0, 1, 1], [], []>} : vector<1x128xbf16>, vector<128x128xbf16>, vector<1x128xf32> -> vector<1x128xf32>
    %721 = arith.addf %714, %720 : vector<1x128xf32>
    %c2_653 = arith.constant 2 : index
    %c1_654 = arith.constant 1 : index
    %c0_655 = arith.constant 0 : index
    %722 = vector.load %arg21[%c2_653, %c1_654, %c0_655] : memref<4x16x128xf32, #tpu.memory_space<vmem>>, vector<1x1x128xf32>
    %723 = vector.shape_cast %722 : vector<1x1x128xf32> to vector<1x128xf32>
    %724 = arith.truncf %723 : vector<1x128xf32> to vector<1x128xbf16>
    %c4_656 = arith.constant 4 : index
    %c5_657 = arith.constant 5 : index
    %c0_658 = arith.constant 0 : index
    %c0_659 = arith.constant 0 : index
    %725 = vector.load %arg3[%c4_656, %c5_657, %c0_658, %c0_659] : memref<5x9x128x128xbf16, #tpu.memory_space<vmem>>, vector<1x1x128x128xbf16>
    %726 = vector.shape_cast %725 : vector<1x1x128x128xbf16> to vector<128x128xbf16>
    %cst_660 = arith.constant dense<0.000000e+00> : vector<1x128xf32>
    %727 = tpu.matmul %724, %726, %cst_660 {dimension_numbers = #tpu.dot_dimension_numbers<[1], [0], [0], [1], [0, 0, 1, 1], [], []>} : vector<1x128xbf16>, vector<128x128xbf16>, vector<1x128xf32> -> vector<1x128xf32>
    %728 = arith.addf %721, %727 : vector<1x128xf32>
    %c0_661 = arith.constant 0 : index
    %c3_662 = arith.constant 3 : index
    %c0_663 = arith.constant 0 : index
    %729 = vector.load %arg21[%c0_661, %c3_662, %c0_663] : memref<4x16x128xf32, #tpu.memory_space<vmem>>, vector<1x1x128xf32>
    %730 = vector.shape_cast %729 : vector<1x1x128xf32> to vector<1x128xf32>
    %731 = arith.truncf %730 : vector<1x128xf32> to vector<1x128xbf16>
    %c4_664 = arith.constant 4 : index
    %c6_665 = arith.constant 6 : index
    %c0_666 = arith.constant 0 : index
    %c0_667 = arith.constant 0 : index
    %732 = vector.load %arg3[%c4_664, %c6_665, %c0_666, %c0_667] : memref<5x9x128x128xbf16, #tpu.memory_space<vmem>>, vector<1x1x128x128xbf16>
    %733 = vector.shape_cast %732 : vector<1x1x128x128xbf16> to vector<128x128xbf16>
    %cst_668 = arith.constant dense<0.000000e+00> : vector<1x128xf32>
    %734 = tpu.matmul %731, %733, %cst_668 {dimension_numbers = #tpu.dot_dimension_numbers<[1], [0], [0], [1], [0, 0, 1, 1], [], []>} : vector<1x128xbf16>, vector<128x128xbf16>, vector<1x128xf32> -> vector<1x128xf32>
    %735 = arith.addf %728, %734 : vector<1x128xf32>
    %c1_669 = arith.constant 1 : index
    %c3_670 = arith.constant 3 : index
    %c0_671 = arith.constant 0 : index
    %736 = vector.load %arg21[%c1_669, %c3_670, %c0_671] : memref<4x16x128xf32, #tpu.memory_space<vmem>>, vector<1x1x128xf32>
    %737 = vector.shape_cast %736 : vector<1x1x128xf32> to vector<1x128xf32>
    %738 = arith.truncf %737 : vector<1x128xf32> to vector<1x128xbf16>
    %c4_672 = arith.constant 4 : index
    %c7_673 = arith.constant 7 : index
    %c0_674 = arith.constant 0 : index
    %c0_675 = arith.constant 0 : index
    %739 = vector.load %arg3[%c4_672, %c7_673, %c0_674, %c0_675] : memref<5x9x128x128xbf16, #tpu.memory_space<vmem>>, vector<1x1x128x128xbf16>
    %740 = vector.shape_cast %739 : vector<1x1x128x128xbf16> to vector<128x128xbf16>
    %cst_676 = arith.constant dense<0.000000e+00> : vector<1x128xf32>
    %741 = tpu.matmul %738, %740, %cst_676 {dimension_numbers = #tpu.dot_dimension_numbers<[1], [0], [0], [1], [0, 0, 1, 1], [], []>} : vector<1x128xbf16>, vector<128x128xbf16>, vector<1x128xf32> -> vector<1x128xf32>
    %742 = arith.addf %735, %741 : vector<1x128xf32>
    %c0_677 = arith.constant 0 : index
    %c4_678 = arith.constant 4 : index
    %c0_679 = arith.constant 0 : index
    %743 = vector.load %arg21[%c0_677, %c4_678, %c0_679] : memref<4x16x128xf32, #tpu.memory_space<vmem>>, vector<1x1x128xf32>
    %744 = vector.shape_cast %743 : vector<1x1x128xf32> to vector<1x128xf32>
    %745 = arith.truncf %744 : vector<1x128xf32> to vector<1x128xbf16>
    %c4_680 = arith.constant 4 : index
    %c8_681 = arith.constant 8 : index
    %c0_682 = arith.constant 0 : index
    %c0_683 = arith.constant 0 : index
    %746 = vector.load %arg3[%c4_680, %c8_681, %c0_682, %c0_683] : memref<5x9x128x128xbf16, #tpu.memory_space<vmem>>, vector<1x1x128x128xbf16>
    %747 = vector.shape_cast %746 : vector<1x1x128x128xbf16> to vector<128x128xbf16>
    %cst_684 = arith.constant dense<0.000000e+00> : vector<1x128xf32>
    %748 = tpu.matmul %745, %747, %cst_684 {dimension_numbers = #tpu.dot_dimension_numbers<[1], [0], [0], [1], [0, 0, 1, 1], [], []>} : vector<1x128xbf16>, vector<128x128xbf16>, vector<1x128xf32> -> vector<1x128xf32>
    %749 = arith.addf %742, %748 : vector<1x128xf32>
    %c5_685 = arith.constant 5 : index
    %c0_686 = arith.constant 0 : index
    %c0_687 = arith.constant 0 : index
    %750 = vector.load %arg4[%c5_685, %c0_686, %c0_687] : memref<6x1x128xf32, #tpu.memory_space<vmem>>, vector<1x1x128xf32>
    %751 = vector.shape_cast %750 : vector<1x1x128xf32> to vector<1x128xf32>
    %752 = arith.addf %749, %751 : vector<1x128xf32>
    %cst_688 = arith.constant 0.000000e+00 : f32
    %753 = vector.broadcast %cst_688 : f32 to vector<1x128xf32>
    %754 = arith.maximumf %752, %753 : vector<1x128xf32>
    %c470 = arith.constant 470 : index
    %c0_689 = arith.constant 0 : index
    %755 = vector.load %arg5[%c470, %c0_689] : memref<472x128xbf16, #tpu.memory_space<vmem>>, vector<1x128xbf16>
    %756 = arith.extf %755 : vector<1x128xbf16> to vector<1x128xf32>
    %757 = arith.mulf %754, %756 : vector<1x128xf32>
    %cst_690 = arith.constant dense<0.000000e+00> : vector<128xf32>
    %758 = vector.multi_reduction <add>, %757, %cst_690 [0] : vector<1x128xf32> to vector<128xf32>
    %759 = vector.shape_cast %758 : vector<128xf32> to vector<1x128xf32>
    %cst_691 = arith.constant 1.000000e+00 : f32
    %760 = vector.broadcast %cst_691 : f32 to vector<1x128xf32>
    %761 = arith.mulf %759, %760 : vector<1x128xf32>
    %762 = arith.truncf %761 : vector<1x128xf32> to vector<1x128xbf16>
    %c0_692 = arith.constant 0 : index
    %c0_693 = arith.constant 0 : index
    %763 = vector.load %arg10[%c0_692, %c0_693] : memref<128x128xbf16, #tpu.memory_space<vmem>>, vector<128x128xbf16>
    %cst_694 = arith.constant dense<0.000000e+00> : vector<1x128xf32>
    %764 = tpu.matmul %762, %763, %cst_694 {dimension_numbers = #tpu.dot_dimension_numbers<[1], [0], [0], [1], [0, 0, 1, 1], [], []>} : vector<1x128xbf16>, vector<128x128xbf16>, vector<1x128xf32> -> vector<1x128xf32>
    %c0_695 = arith.constant 0 : index
    %c0_696 = arith.constant 0 : index
    %765 = vector.load %arg11[%c0_695, %c0_696] : memref<1x128xf32, #tpu.memory_space<vmem>>, vector<1x128xf32>
    %766 = arith.addf %764, %765 : vector<1x128xf32>
    %767 = vector.shape_cast %766 : vector<1x128xf32> to vector<1x128xf32>
    %768 = vector.broadcast %767 : vector<1x128xf32> to vector<8x128xf32>
    %c0_697 = arith.constant 0 : index
    %c0_698 = arith.constant 0 : index
    %c0_699 = arith.constant 0 : index
    %769 = vector.load %arg12[%c0_697, %c0_698, %c0_699] : memref<1x8x128xf32, #tpu.memory_space<vmem>>, vector<1x8x128xf32>
    %770 = vector.shape_cast %769 : vector<1x8x128xf32> to vector<8x128xf32>
    %771 = vector.shape_cast %768 : vector<8x128xf32> to vector<1x8x128xf32>
    tpu.vector_store %arg12[%c0_697, %c0_698, %c0_699], %771 {strides = array<i32>} : memref<1x8x128xf32, #tpu.memory_space<vmem>>, vector<1x8x128xf32>,
    return
  }
  func.func @transform_0(%arg0: i32) -> (i32, i32, i32) {
    %c0_i32 = arith.constant 0 : i32
    %c0_i32_0 = arith.constant 0 : i32
    %c0_i32_1 = arith.constant 0 : i32
    return %arg0, %c0_i32, %c0_i32_0 : i32, i32, i32
  }
  func.func @transform_1(%arg0: i32) -> (i32, i32) {
    %c0_i32 = arith.constant 0 : i32
    %c0_i32_0 = arith.constant 0 : i32
    %c0_i32_1 = arith.constant 0 : i32
    return %c0_i32, %c0_i32_0 : i32, i32
  }
  func.func @transform_2(%arg0: i32) -> (i32, i32, i32, i32) {
    %c0_i32 = arith.constant 0 : i32
    %c0_i32_0 = arith.constant 0 : i32
    %c0_i32_1 = arith.constant 0 : i32
    %c0_i32_2 = arith.constant 0 : i32
    %c0_i32_3 = arith.constant 0 : i32
    return %c0_i32, %c0_i32_0, %c0_i32_1, %c0_i32_2 : i32, i32, i32, i32
  }
  func.func @transform_3(%arg0: i32) -> (i32, i32, i32) {
    %c0_i32 = arith.constant 0 : i32
    %c0_i32_0 = arith.constant 0 : i32
    %c0_i32_1 = arith.constant 0 : i32
    %c0_i32_2 = arith.constant 0 : i32
    return %c0_i32, %c0_i32_0, %c0_i32_1 : i32, i32, i32
  }
  func.func @transform_4(%arg0: i32) -> (i32, i32) {
    %c0_i32 = arith.constant 0 : i32
    %c0_i32_0 = arith.constant 0 : i32
    %c0_i32_1 = arith.constant 0 : i32
    return %c0_i32, %c0_i32_0 : i32, i32
  }
  func.func @transform_5(%arg0: i32) -> (i32, i32) {
    %c0_i32 = arith.constant 0 : i32
    %c0_i32_0 = arith.constant 0 : i32
    %c0_i32_1 = arith.constant 0 : i32
    return %c0_i32, %c0_i32_0 : i32, i32
  }
  func.func @transform_6(%arg0: i32) -> (i32, i32) {
    %c0_i32 = arith.constant 0 : i32
    %c0_i32_0 = arith.constant 0 : i32
    %c0_i32_1 = arith.constant 0 : i32
    return %c0_i32, %c0_i32_0 : i32, i32
  }
  func.func @transform_7(%arg0: i32) -> (i32, i32) {
    %c0_i32 = arith.constant 0 : i32
    %c0_i32_0 = arith.constant 0 : i32
    %c0_i32_1 = arith.constant 0 : i32
    return %c0_i32, %c0_i32_0 : i32, i32
  }
  func.func @transform_8(%arg0: i32) -> (i32, i32) {
    %c0_i32 = arith.constant 0 : i32
    %c0_i32_0 = arith.constant 0 : i32
    %c0_i32_1 = arith.constant 0 : i32
    return %c0_i32, %c0_i32_0 : i32, i32
  }
  func.func @transform_9(%arg0: i32) -> (i32, i32) {
    %c0_i32 = arith.constant 0 : i32
    %c0_i32_0 = arith.constant 0 : i32
    %c0_i32_1 = arith.constant 0 : i32
    return %c0_i32, %c0_i32_0 : i32, i32
  }
  func.func @transform_10(%arg0: i32) -> (i32, i32) {
    %c0_i32 = arith.constant 0 : i32
    %c0_i32_0 = arith.constant 0 : i32
    %c0_i32_1 = arith.constant 0 : i32
    return %c0_i32, %c0_i32_0 : i32, i32
  }
  func.func @transform_11(%arg0: i32) -> (i32, i32, i32) {
    %c0_i32 = arith.constant 0 : i32
    %c0_i32_0 = arith.constant 0 : i32
    %c0_i32_1 = arith.constant 0 : i32
    return %arg0, %c0_i32, %c0_i32_0 : i32, i32, i32
  }
}

</mosaic_0001>

<llo_original>
// kernel: forward.1
$region0: #{forward.1}
  #allocation0 [shape = 'u32[]', space=smem, size = 0x4, offset = 0x4, fixed_abs, tag = 'smem constant byte address 0x4 - core index']
  #allocation1 [shape = 'u32[144,128]{1,0:T(1,128)}', space=vmem, size = 0x12000, scoped, tag = 'internal scratch']
  #allocation2 [shape = 'f32[328,128]{1,0:T(8,128)}', space=vmem, size = 0x29000, scoped, tag = 'scratch operand']
  #allocation3 [shape = 'f32[104,128]{1,0:T(8,128)}', space=vmem, size = 0xd000, scoped, tag = 'scratch operand']
  #allocation4 [shape = 'f32[104,128]{1,0:T(8,128)}', space=vmem, size = 0xd000, scoped, tag = 'scratch operand']
  #allocation5 [shape = 'f32[40,128]{1,0:T(8,128)}', space=vmem, size = 0x5000, scoped, tag = 'scratch operand']
  #allocation6 [shape = 'f32[16,128]{1,0:T(8,128)}', space=vmem, size = 0x2000, scoped, tag = 'scratch operand']
  #allocation7 [shape = 'f32[4,104,128]{2,1,0:T(8,128)}', space=vmem, size = 0x34000, scoped, tag = 'scratch operand']
  #allocation8 [shape = 'f32[4,40,128]{2,1,0:T(8,128)}', space=vmem, size = 0x14000, scoped, tag = 'scratch operand']
  #allocation9 [shape = 'f32[4,16,128]{2,1,0:T(8,128)}', space=vmem, size = 0x8000, scoped, tag = 'scratch operand']
  #allocation10 [shape = 'f32[4,16,128]{2,1,0:T(8,128)}', space=vmem, size = 0x8000, scoped, tag = 'scratch operand']
  %s0 = inlined_call_operand.vmem [shape: bf16[2,288,128], index: 0, kind: input, shape index: {}]
  %s1 = inlined_call_operand.vmem [shape: bf16[128,128], index: 1, kind: input, shape index: {}]
  %s2 = inlined_call_operand.vmem [shape: bf16[5,9,128,128], index: 2, kind: input, shape index: {}]
  %s3 = inlined_call_operand.vmem [shape: f32[6,1,128], index: 3, kind: input, shape index: {}]
  %s4 = inlined_call_operand.vmem [shape: bf16[472,128], index: 4, kind: input, shape index: {}]
  %s5 = inlined_call_operand.vmem [shape: bf16[64,36], index: 5, kind: input, shape index: {}]
  %s6 = inlined_call_operand.vmem [shape: bf16[32,20], index: 6, kind: input, shape index: {}]
  %s7 = inlined_call_operand.vmem [shape: bf16[32,12], index: 7, kind: input, shape index: {}]
  %s8 = inlined_call_operand.vmem [shape: bf16[32,8], index: 8, kind: input, shape index: {}]
  %s9 = inlined_call_operand.vmem [shape: bf16[128,128], index: 9, kind: input, shape index: {}]
  %s10 = inlined_call_operand.vmem [shape: f32[1,128], index: 10, kind: input, shape index: {}]
  %s11 = inlined_call_operand.vmem [shape: f32[2,8,128], index: 11, kind: output, shape index: {}]
  %s12 = sld [smem:[#allocation0]]
  $region77: #{forward.1} parent=0
    _
  %s14 = ssub.s32 1, %s12
  %s15 = scalar_select 0, %s14, %s12
  loop: start=0, step=1, limit=4
  $region2: #{forward.1} parent=0 // loop_pre_header
    _
  $region3: #{forward.1} parent=0 // loop_header
    %s17 = sphi 0, %s21
    %p18 = scmp.ge.s32.totalorder %s17, 4
    %s27 = sphi 0, %s29
    %s30 = sphi 0, %s27
    %s31 = sphi 0, %s30
    %s47 = sphi 0, %s31
    %s51 = sphi 0, %s51
    %s53 = sphi 0, %s51
    %s54 = sphi 0, %s53
    %s68 = sphi 0, %s54
    %s72 = sphi 0, %s72
    %s74 = sphi 0, %s72
    %s75 = sphi 0, %s74
    %s89 = sphi 0, %s75
    %s93 = sphi 0, %s93
    %s95 = sphi 0, %s93
    %s96 = sphi 0, %s95
    %s110 = sphi 0, %s96
    %s114 = sphi 0, %s114
    %s116 = sphi 0, %s114
    %s117 = sphi 0, %s116
    %s131 = sphi 0, %s117
    %s135 = sphi 0, %s135
    %s137 = sphi 0, %s135
    %s138 = sphi 0, %s137
    %s152 = sphi 0, %s138
    %s156 = sphi 0, %s156
    %s158 = sphi 0, %s156
    %s159 = sphi 0, %s158
    %s173 = sphi 0, %s159
    %s177 = sphi 0, %s177
    %s179 = sphi 0, %s177
    %s180 = sphi 0, %s179
    %s194 = sphi 0, %s180
    %s198 = sphi 0, %s198
    %s200 = sphi 0, %s198
    %s201 = sphi 0, %s200
    %s215 = sphi 0, %s201
    %s219 = sphi 0, %s219
    %s221 = sphi 0, %s219
    %s222 = sphi 0, %s221
    %s236 = sphi 0, %s222
    %s240 = sphi 0, %s240
    %s242 = sphi 0, %s240
    %s243 = sphi 0, %s242
    %s257 = sphi 0, %s243
    %s263 = sphi 0, %s265
    %s266 = sphi 0, %s263
    %s267 = sphi 0, %s266
    %s283 = sphi 0, %s267
  $region4: #{forward.1} parent=0 // loop_header_branch
    %20 = sbr.rel (%p18) target = $region8
  $region5: #{forward.1} parent=0 // loop_body
    %s22 = ssub.s32 %s17, 1
    %s23 = ssub.s32 %s17, 2
    %s24 = sadd.s32 %s17, 1
    %s25 = ssub.s32 %s17, %s24
    %p26 = scmp.eq.s32.totalorder %s25, 0
    %s28 = sadd.s32 %s27, 1
    %s29 = scalar_select %p26, %s27, %s28
    %p32 = pneg %p26
    %p33 = scmp.eq.s32.totalorder %s17, 1
    %p34 = por %p32, %p33
    %p35 = scmp.ne.s32.totalorder %s27, %s30
    %p36 = scmp.eq.s32.totalorder %s17, 0
    %p37 = por %p35, %p36
    %p38 = scmp.ne.s32.totalorder %s27, %s30
    %p39 = scmp.eq.s32.totalorder %s22, 1
    %p40 = por %p38, %p39
    %p41 = scmp.ne.s32.totalorder %s30, %s31
    %p42 = scmp.eq.s32.totalorder %s22, 0
    %p43 = por %p41, %p42
    %p44 = scmp.ne.s32.totalorder %s30, %s31
    %p45 = scmp.eq.s32.totalorder %s23, 1
    %p46 = por %p44, %p45
    %p48 = scmp.ne.s32.totalorder %s31, %s47
    %p49 = scmp.eq.s32.totalorder %s23, 0
    %p50 = por %p48, %p49
    %s52 = sadd.s32 %s51, 1
    %p55 = scmp.eq.s32.totalorder %s17, 1
    %p56 = scmp.ne.s32.totalorder %s51, %s53
    %p57 = scmp.eq.s32.totalorder %s17, 0
    %p58 = por %p56, %p57
    %p59 = scmp.ne.s32.totalorder %s51, %s53
    %p60 = scmp.eq.s32.totalorder %s22, 1
    %p61 = por %p59, %p60
    %p62 = scmp.ne.s32.totalorder %s53, %s54
    %p63 = scmp.eq.s32.totalorder %s22, 0
    %p64 = por %p62, %p63
    %p65 = scmp.ne.s32.totalorder %s53, %s54
    %p66 = scmp.eq.s32.totalorder %s23, 1
    %p67 = por %p65, %p66
    %p69 = scmp.ne.s32.totalorder %s54, %s68
    %p70 = scmp.eq.s32.totalorder %s23, 0
    %p71 = por %p69, %p70
    %s73 = sadd.s32 %s72, 1
    %p76 = scmp.eq.s32.totalorder %s17, 1
    %p77 = scmp.ne.s32.totalorder %s72, %s74
    %p78 = scmp.eq.s32.totalorder %s17, 0
    %p79 = por %p77, %p78
    %p80 = scmp.ne.s32.totalorder %s72, %s74
    %p81 = scmp.eq.s32.totalorder %s22, 1
    %p82 = por %p80, %p81
    %p83 = scmp.ne.s32.totalorder %s74, %s75
    %p84 = scmp.eq.s32.totalorder %s22, 0
    %p85 = por %p83, %p84
    %p86 = scmp.ne.s32.totalorder %s74, %s75
    %p87 = scmp.eq.s32.totalorder %s23, 1
    %p88 = por %p86, %p87
    %p90 = scmp.ne.s32.totalorder %s75, %s89
    %p91 = scmp.eq.s32.totalorder %s23, 0
    %p92 = por %p90, %p91
    %s94 = sadd.s32 %s93, 1
    %p97 = scmp.eq.s32.totalorder %s17, 1
    %p98 = scmp.ne.s32.totalorder %s93, %s95
    %p99 = scmp.eq.s32.totalorder %s17, 0
    %p100 = por %p98, %p99
    %p101 = scmp.ne.s32.totalorder %s93, %s95
    %p102 = scmp.eq.s32.totalorder %s22, 1
    %p103 = por %p101, %p102
    %p104 = scmp.ne.s32.totalorder %s95, %s96
    %p105 = scmp.eq.s32.totalorder %s22, 0
    %p106 = por %p104, %p105
    %p107 = scmp.ne.s32.totalorder %s95, %s96
    %p108 = scmp.eq.s32.totalorder %s23, 1
    %p109 = por %p107, %p108
    %p111 = scmp.ne.s32.totalorder %s96, %s110
    %p112 = scmp.eq.s32.totalorder %s23, 0
    %p113 = por %p111, %p112
    %s115 = sadd.s32 %s114, 1
    %p118 = scmp.eq.s32.totalorder %s17, 1
    %p119 = scmp.ne.s32.totalorder %s114, %s116
    %p120 = scmp.eq.s32.totalorder %s17, 0
    %p121 = por %p119, %p120
    %p122 = scmp.ne.s32.totalorder %s114, %s116
    %p123 = scmp.eq.s32.totalorder %s22, 1
    %p124 = por %p122, %p123
    %p125 = scmp.ne.s32.totalorder %s116, %s117
    %p126 = scmp.eq.s32.totalorder %s22, 0
    %p127 = por %p125, %p126
    %p128 = scmp.ne.s32.totalorder %s116, %s117
    %p129 = scmp.eq.s32.totalorder %s23, 1
    %p130 = por %p128, %p129
    %p132 = scmp.ne.s32.totalorder %s117, %s131
    %p133 = scmp.eq.s32.totalorder %s23, 0
    %p134 = por %p132, %p133
    %s136 = sadd.s32 %s135, 1
    %p139 = scmp.eq.s32.totalorder %s17, 1
    %p140 = scmp.ne.s32.totalorder %s135, %s137
    %p141 = scmp.eq.s32.totalorder %s17, 0
    %p142 = por %p140, %p141
    %p143 = scmp.ne.s32.totalorder %s135, %s137
    %p144 = scmp.eq.s32.totalorder %s22, 1
    %p145 = por %p143, %p144
    %p146 = scmp.ne.s32.totalorder %s137, %s138
    %p147 = scmp.eq.s32.totalorder %s22, 0
    %p148 = por %p146, %p147
    %p149 = scmp.ne.s32.totalorder %s137, %s138
    %p150 = scmp.eq.s32.totalorder %s23, 1
    %p151 = por %p149, %p150
    %p153 = scmp.ne.s32.totalorder %s138, %s152
    %p154 = scmp.eq.s32.totalorder %s23, 0
    %p155 = por %p153, %p154
    %s157 = sadd.s32 %s156, 1
    %p160 = scmp.eq.s32.totalorder %s17, 1
    %p161 = scmp.ne.s32.totalorder %s156, %s158
    %p162 = scmp.eq.s32.totalorder %s17, 0
    %p163 = por %p161, %p162
    %p164 = scmp.ne.s32.totalorder %s156, %s158
    %p165 = scmp.eq.s32.totalorder %s22, 1
    %p166 = por %p164, %p165
    %p167 = scmp.ne.s32.totalorder %s158, %s159
    %p168 = scmp.eq.s32.totalorder %s22, 0
    %p169 = por %p167, %p168
    %p170 = scmp.ne.s32.totalorder %s158, %s159
    %p171 = scmp.eq.s32.totalorder %s23, 1
    %p172 = por %p170, %p171
    %p174 = scmp.ne.s32.totalorder %s159, %s173
    %p175 = scmp.eq.s32.totalorder %s23, 0
    %p176 = por %p174, %p175
    %s178 = sadd.s32 %s177, 1
    %p181 = scmp.eq.s32.totalorder %s17, 1
    %p182 = scmp.ne.s32.totalorder %s177, %s179
    %p183 = scmp.eq.s32.totalorder %s17, 0
    %p184 = por %p182, %p183
    %p185 = scmp.ne.s32.totalorder %s177, %s179
    %p186 = scmp.eq.s32.totalorder %s22, 1
    %p187 = por %p185, %p186
    %p188 = scmp.ne.s32.totalorder %s179, %s180
    %p189 = scmp.eq.s32.totalorder %s22, 0
    %p190 = por %p188, %p189
    %p191 = scmp.ne.s32.totalorder %s179, %s180
    %p192 = scmp.eq.s32.totalorder %s23, 1
    %p193 = por %p191, %p192
    %p195 = scmp.ne.s32.totalorder %s180, %s194
    %p196 = scmp.eq.s32.totalorder %s23, 0
    %p197 = por %p195, %p196
    %s199 = sadd.s32 %s198, 1
    %p202 = scmp.eq.s32.totalorder %s17, 1
    %p203 = scmp.ne.s32.totalorder %s198, %s200
    %p204 = scmp.eq.s32.totalorder %s17, 0
    %p205 = por %p203, %p204
    %p206 = scmp.ne.s32.totalorder %s198, %s200
    %p207 = scmp.eq.s32.totalorder %s22, 1
    %p208 = por %p206, %p207
    %p209 = scmp.ne.s32.totalorder %s200, %s201
    %p210 = scmp.eq.s32.totalorder %s22, 0
    %p211 = por %p209, %p210
    %p212 = scmp.ne.s32.totalorder %s200, %s201
    %p213 = scmp.eq.s32.totalorder %s23, 1
    %p214 = por %p212, %p213
    %p216 = scmp.ne.s32.totalorder %s201, %s215
    %p217 = scmp.eq.s32.totalorder %s23, 0
    %p218 = por %p216, %p217
    %s220 = sadd.s32 %s219, 1
    %p223 = scmp.eq.s32.totalorder %s17, 1
    %p224 = scmp.ne.s32.totalorder %s219, %s221
    %p225 = scmp.eq.s32.totalorder %s17, 0
    %p226 = por %p224, %p225
    %p227 = scmp.ne.s32.totalorder %s219, %s221
    %p228 = scmp.eq.s32.totalorder %s22, 1
    %p229 = por %p227, %p228
    %p230 = scmp.ne.s32.totalorder %s221, %s222
    %p231 = scmp.eq.s32.totalorder %s22, 0
    %p232 = por %p230, %p231
    %p233 = scmp.ne.s32.totalorder %s221, %s222
    %p234 = scmp.eq.s32.totalorder %s23, 1
    %p235 = por %p233, %p234
    %p237 = scmp.ne.s32.totalorder %s222, %s236
    %p238 = scmp.eq.s32.totalorder %s23, 0
    %p239 = por %p237, %p238
    %s241 = sadd.s32 %s240, 1
    %p244 = scmp.eq.s32.totalorder %s17, 1
    %p245 = scmp.ne.s32.totalorder %s240, %s242
    %p246 = scmp.eq.s32.totalorder %s17, 0
    %p247 = por %p245, %p246
    %p248 = scmp.ne.s32.totalorder %s240, %s242
    %p249 = scmp.eq.s32.totalorder %s22, 1
    %p250 = por %p248, %p249
    %p251 = scmp.ne.s32.totalorder %s242, %s243
    %p252 = scmp.eq.s32.totalorder %s22, 0
    %p253 = por %p251, %p252
    %p254 = scmp.ne.s32.totalorder %s242, %s243
    %p255 = scmp.eq.s32.totalorder %s23, 1
    %p256 = por %p254, %p255
    %p258 = scmp.ne.s32.totalorder %s243, %s257
    %p259 = scmp.eq.s32.totalorder %s23, 0
    %p260 = por %p258, %p259
    %s261 = ssub.s32 %s17, %s24
    %p262 = scmp.eq.s32.totalorder %s261, 0
    %s264 = sadd.s32 %s263, 1
    %s265 = scalar_select %p262, %s263, %s264
    %p268 = pneg %p262
    %p269 = scmp.eq.s32.totalorder %s17, 1
    %p270 = por %p268, %p269
    %p271 = scmp.ne.s32.totalorder %s263, %s266
    %p272 = scmp.eq.s32.totalorder %s17, 0
    %p273 = por %p271, %p272
    %p274 = scmp.ne.s32.totalorder %s263, %s266
    %p275 = scmp.eq.s32.totalorder %s22, 1
    %p276 = por %p274, %p275
    %p277 = scmp.ne.s32.totalorder %s266, %s267
    %p278 = scmp.eq.s32.totalorder %s22, 0
    %p279 = por %p277, %p278
    %p280 = scmp.ne.s32.totalorder %s266, %s267
    %p281 = scmp.eq.s32.totalorder %s23, 1
    %p282 = por %p280, %p281
    %p284 = scmp.ne.s32.totalorder %s267, %s283
    %p285 = scmp.eq.s32.totalorder %s23, 0
    %p286 = por %p284, %p285
    %p287 = scmp.le.s32.totalorder 1, %s17
    %p288 = scmp.lt.s32.totalorder %s17, 3
    %p289 = pnand %p287, %p288
    %p290 = pneg %p289
    // Predicated region
    $region9: #{forward.1} parent=5 // pred_check
      _
    $region10: #{forward.1} parent=5 // pred_check_branch
      %292 = sbr.rel (%p289) target = $region12
    $region11: #{forward.1} parent=5 // pred_region
      %s293 = ssub.s32 %s17, 1
      // Predicated region
      $region13: #{forward.1} parent=11 // pred_check
        %p294 = pneg %p64
      $region14: #{forward.1} parent=11 // pred_check_branch
        %296 = sbr.rel (%p294) target = $region16
      $region15: #{forward.1} parent=11 // pred_region
        _
      $region16: #{forward.1} parent=11 // pred_fallthru
        _
      // Predicated region
      $region17: #{forward.1} parent=11 // pred_check
        %p297 = pneg %p85
      $region18: #{forward.1} parent=11 // pred_check_branch
        %299 = sbr.rel (%p297) target = $region20
      $region19: #{forward.1} parent=11 // pred_region
        _
      $region20: #{forward.1} parent=11 // pred_fallthru
        _
      // Predicated region
      $region21: #{forward.1} parent=11 // pred_check
        %p300 = pneg %p106
      $region22: #{forward.1} parent=11 // pred_check_branch
        %302 = sbr.rel (%p300) target = $region24
      $region23: #{forward.1} parent=11 // pred_region
        _
      $region24: #{forward.1} parent=11 // pred_fallthru
        _
      // Predicated region
      $region25: #{forward.1} parent=11 // pred_check
        %p303 = pneg %p127
      $region26: #{forward.1} parent=11 // pred_check_branch
        %305 = sbr.rel (%p303) target = $region28
      $region27: #{forward.1} parent=11 // pred_region
        _
      $region28: #{forward.1} parent=11 // pred_fallthru
        _
      // Predicated region
      $region29: #{forward.1} parent=11 // pred_check
        %p306 = pneg %p148
      $region30: #{forward.1} parent=11 // pred_check_branch
        %308 = sbr.rel (%p306) target = $region32
      $region31: #{forward.1} parent=11 // pred_region
        _
      $region32: #{forward.1} parent=11 // pred_fallthru
        _
      // Predicated region
      $region33: #{forward.1} parent=11 // pred_check
        %p309 = pneg %p169
      $region34: #{forward.1} parent=11 // pred_check_branch
        %311 = sbr.rel (%p309) target = $region36
      $region35: #{forward.1} parent=11 // pred_region
        _
      $region36: #{forward.1} parent=11 // pred_fallthru
        _
      // Predicated region
      $region37: #{forward.1} parent=11 // pred_check
        %p312 = pneg %p190
      $region38: #{forward.1} parent=11 // pred_check_branch
        %314 = sbr.rel (%p312) target = $region40
      $region39: #{forward.1} parent=11 // pred_region
        _
      $region40: #{forward.1} parent=11 // pred_fallthru
        _
      // Predicated region
      $region41: #{forward.1} parent=11 // pred_check
        %p315 = pneg %p211
      $region42: #{forward.1} parent=11 // pred_check_branch
        %317 = sbr.rel (%p315) target = $region44
      $region43: #{forward.1} parent=11 // pred_region
        _
      $region44: #{forward.1} parent=11 // pred_fallthru
        _
      // Predicated region
      $region45: #{forward.1} parent=11 // pred_check
        %p318 = pneg %p232
      $region46: #{forward.1} parent=11 // pred_check_branch
        %320 = sbr.rel (%p318) target = $region48
      $region47: #{forward.1} parent=11 // pred_region
        _
      $region48: #{forward.1} parent=11 // pred_fallthru
        _
      // Predicated region
      $region49: #{forward.1} parent=11 // pred_check
        %p321 = pneg %p253
      $region50: #{forward.1} parent=11 // pred_check_branch
        %323 = sbr.rel (%p321) target = $region52
      $region51: #{forward.1} parent=11 // pred_region
        _
      $region52: #{forward.1} parent=11 // pred_fallthru
        _
    $region12: #{forward.1} parent=5 // pred_fallthru
      _
    %p324 = scmp.lt.s32.totalorder %s17, 2
    // Predicated region
    $region53: #{forward.1} parent=5 // pred_check
      %p325 = pneg %p324
    $region54: #{forward.1} parent=5 // pred_check_branch
      %327 = sbr.rel (%p325) target = $region56
    $region55: #{forward.1} parent=5 // pred_region
      // Predicated region
      $region57: #{forward.1} parent=55 // pred_check
        %p328 = pneg %p37
      $region58: #{forward.1} parent=55 // pred_check_branch
        %330 = sbr.rel (%p328) target = $region60
      $region59: #{forward.1} parent=55 // pred_region
        %p331 = scmp.lt.s32.totalorder %s17, 1
        %s332 = scalar_select %p331, %s17, 1
        %s333 = smul.addr %s332, 36
        %s334 = smul.addr %s333, 4
        %s335 = scalar_lea.vmem %s0, %s334
      $region60: #{forward.1} parent=55 // pred_fallthru
        _
    $region56: #{forward.1} parent=5 // pred_fallthru
      _
    %p336 = scmp.le.s32.totalorder 1, %s17
    %p337 = scmp.lt.s32.totalorder %s17, 3
    %p338 = pnand %p336, %p337
    %p339 = pneg %p338
    // Predicated region
    $region61: #{forward.1} parent=5 // pred_check
      _
    $region62: #{forward.1} parent=5 // pred_check_branch
      %341 = sbr.rel (%p338) target = $region64
    $region63: #{forward.1} parent=5 // pred_region
      %s342 = ssub.s32 %s17, 1
      %p343 = scmp.lt.s32.totalorder %s22, 1
      %s344 = scalar_select %p343, %s22, 1
      %s345 = smul.addr %s344, 36
      %s346 = smul.addr %s345, 4
      %s347 = scalar_lea.vmem %s0, %s346
      %p348 = pneg %p43
      %p349 = pneg %p40
      %p350 = pneg %p64
      %p351 = pneg %p61
      %p352 = pneg %p85
      %p353 = pneg %p82
      %p354 = pneg %p106
      %p355 = pneg %p103
      %p356 = pneg %p127
      %p357 = pneg %p124
      %p358 = pneg %p148
      %p359 = pneg %p145
      %p360 = pneg %p169
      %p361 = pneg %p166
      %p362 = pneg %p190
      %p363 = pneg %p187
      %p364 = pneg %p211
      %p365 = pneg %p208
      %p366 = pneg %p232
      %p367 = pneg %p229
      %p368 = pneg %p253
      %p369 = pneg %p250
      %p370 = pneg %p279
      %p371 = pneg %p276
      %p372 = scmp.lt.s32.totalorder %s22, 1
      %s373 = scalar_select %p372, %s22, 1
      %s374 = smul.addr %s373, 8
      %s375 = scalar_lea.vmem %s11, %s374
      %p376 = scmp.lt.s32.totalorder %s22, 1
      %s377 = scalar_select %p376, %s22, 1
      %s378 = smul.addr %s377, 36
      %s379 = smul.addr %s378, 4
      %s380 = scalar_lea.vmem %s0, %s379
      %p381 = scmp.lt.s32.totalorder %s22, 1
      %s382 = scalar_select %p381, %s22, 1
      %s383 = smul.addr %s382, 8
      %s384 = scalar_lea.vmem %s11, %s383
      %v386 = vld [vmem:[%s380] sm:$0xf]
      %v387 = vld [vmem:[%s380 + $0x4] sm:$0xf]
      %v388 = vld [vmem:[%s380 + $0x8] sm:$0xf]
      %v389 = vld [vmem:[%s380 + $0xc] sm:$0xf]
      %v390 = vld [vmem:[%s380 + $0x10] sm:$0xf]
      %v391 = vld [vmem:[%s380 + $0x14] sm:$0xf]
      %v392 = vld [vmem:[%s380 + $0x18] sm:$0xf]
      %v393 = vld [vmem:[%s380 + $0x1c] sm:$0xf]
      %v394 = vld [vmem:[%s380 + $0x20] sm:$0xf]
      %v395 = vld [vmem:[%s380 + $0x24] sm:$0xf]
      %v396 = vld [vmem:[%s380 + $0x28] sm:$0xf]
      %v397 = vld [vmem:[%s380 + $0x2c] sm:$0xf]
      %v398 = vld [vmem:[%s380 + $0x30] sm:$0xf]
      %v399 = vld [vmem:[%s380 + $0x34] sm:$0xf]
      %v400 = vld [vmem:[%s380 + $0x38] sm:$0xf]
      %v401 = vld [vmem:[%s380 + $0x3c] sm:$0xf]
      %v402 = vld [vmem:[%s380 + $0x40] sm:$0xf]
      %v403 = vld [vmem:[%s380 + $0x44] sm:$0xf]
      %v404 = vld [vmem:[%s380 + $0x48] sm:$0xf]
      %v405 = vld [vmem:[%s380 + $0x4c] sm:$0xf]
      %v406 = vld [vmem:[%s380 + $0x50] sm:$0xf]
      %v407 = vld [vmem:[%s380 + $0x54] sm:$0xf]
      %v408 = vld [vmem:[%s380 + $0x58] sm:$0xf]
      %v409 = vld [vmem:[%s380 + $0x5c] sm:$0xf]
      %v410 = vld [vmem:[%s380 + $0x60] sm:$0xf]
      %v411 = vld [vmem:[%s380 + $0x64] sm:$0xf]
      %v412 = vld [vmem:[%s380 + $0x68] sm:$0xf]
      %v413 = vld [vmem:[%s380 + $0x6c] sm:$0xf]
      %v414 = vld [vmem:[%s380 + $0x70] sm:$0xf]
      %v415 = vld [vmem:[%s380 + $0x74] sm:$0xf]
      %v416 = vld [vmem:[%s380 + $0x78] sm:$0xf]
      %v417 = vld [vmem:[%s380 + $0x7c] sm:$0xf]
      %v418 = vld [vmem:[%s380 + $0x80] sm:$0xf]
      %v419 = vld [vmem:[%s380 + $0x84] sm:$0xf]
      %v420 = vld [vmem:[%s380 + $0x88] sm:$0xf]
      %v421 = vld [vmem:[%s380 + $0x8c] sm:$0x7]
      %v422 = vld [vmem:[%s1] sm:$0xf]
      %v423 = vld [vmem:[%s1 + $0x4] sm:$0xf]
      %v424 = vld [vmem:[%s1 + $0x8] sm:$0xf]
      %v425 = vld [vmem:[%s1 + $0xc] sm:$0xf]
      %v426 = vld [vmem:[%s1 + $0x10] sm:$0xf]
      %v427 = vld [vmem:[%s1 + $0x14] sm:$0xf]
      %v428 = vld [vmem:[%s1 + $0x18] sm:$0xf]
      %v429 = vld [vmem:[%s1 + $0x1c] sm:$0xf]
      %v430 = vld [vmem:[%s1 + $0x20] sm:$0xf]
      %v431 = vld [vmem:[%s1 + $0x24] sm:$0xf]
      %v432 = vld [vmem:[%s1 + $0x28] sm:$0xf]
      %v433 = vld [vmem:[%s1 + $0x2c] sm:$0xf]
      %v434 = vld [vmem:[%s1 + $0x30] sm:$0xf]
      %v435 = vld [vmem:[%s1 + $0x34] sm:$0xf]
      %v436 = vld [vmem:[%s1 + $0x38] sm:$0xf]
      %v437 = vld [vmem:[%s1 + $0x3c] sm:$0xf]
      %v438 = vld [vmem:[%s3] sm:$0x1]
      %v440 = vlaneseq
      %v441 = vshrl.u32 %v440, 7
      %v442 = vsub.s32 0, %v441
      %v443 = vrot.slane %v438, %v442
      %v481 = vunpack.c.l.b16 %v386
      %v482 = vunpack.c.l.b16 %v387
      %v483 = vunpack.c.l.b16 %v388
      %v484 = vunpack.c.l.b16 %v389
      %v485 = vunpack.c.l.b16 %v390
      %v486 = vunpack.c.l.b16 %v391
      %v487 = vunpack.c.l.b16 %v392
      %v488 = vunpack.c.l.b16 %v393
      %v489 = vunpack.c.l.b16 %v394
      %v490 = vunpack.c.l.b16 %v395
      %v491 = vunpack.c.l.b16 %v396
      %v492 = vunpack.c.l.b16 %v397
      %v493 = vunpack.c.l.b16 %v398
      %v494 = vunpack.c.l.b16 %v399
      %v495 = vunpack.c.l.b16 %v400
      %v496 = vunpack.c.l.b16 %v401
      %v497 = vunpack.c.l.b16 %v402
      %v498 = vunpack.c.l.b16 %v403
      %v499 = vunpack.c.l.b16 %v404
      %v500 = vunpack.c.l.b16 %v405
      %v501 = vunpack.c.l.b16 %v406
      %v502 = vunpack.c.l.b16 %v407
      %v503 = vunpack.c.l.b16 %v408
      %v504 = vunpack.c.l.b16 %v409
      %v505 = vunpack.c.l.b16 %v410
      %v506 = vunpack.c.l.b16 %v411
      %v507 = vunpack.c.l.b16 %v412
      %v508 = vunpack.c.l.b16 %v413
      %v509 = vunpack.c.l.b16 %v414
      %v510 = vunpack.c.l.b16 %v415
      %v511 = vunpack.c.l.b16 %v416
      %v512 = vunpack.c.l.b16 %v417
      %v513 = vunpack.c.l.b16 %v418
      %v514 = vunpack.c.l.b16 %v419
      %v515 = vunpack.c.l.b16 %v420
      %v516 = vunpack.c.l.b16 %v421
      %v517 = vpack.c.b16 %v482, %v481
      %v518 = vpack.c.b16 %v484, %v483
      %v519 = vpack.c.b16 %v486, %v485
      %v520 = vpack.c.b16 %v488, %v487
      %v521 = vpack.c.b16 %v490, %v489
      %v522 = vpack.c.b16 %v492, %v491
      %v523 = vpack.c.b16 %v494, %v493
      %v524 = vpack.c.b16 %v496, %v495
      %v525 = vpack.c.b16 %v498, %v497
      %v526 = vpack.c.b16 %v500, %v499
      %v527 = vpack.c.b16 %v502, %v501
      %v528 = vpack.c.b16 %v504, %v503
      %v529 = vpack.c.b16 %v506, %v505
      %v530 = vpack.c.b16 %v508, %v507
      %v531 = vpack.c.b16 %v510, %v509
      %v532 = vpack.c.b16 %v512, %v511
      %v533 = vpack.c.b16 %v514, %v513
      %v534 = vpack.c.b16 %v516, %v515
      %v569 = vunpack.c.l.b16 %v422
      %v570 = vunpack.c.l.b16 %v423
      %v571 = vunpack.c.l.b16 %v424
      %v572 = vunpack.c.l.b16 %v425
      %v573 = vunpack.c.l.b16 %v426
      %v574 = vunpack.c.l.b16 %v427
      %v575 = vunpack.c.l.b16 %v428
      %v576 = vunpack.c.l.b16 %v429
      %v577 = vunpack.c.l.b16 %v430
      %v578 = vunpack.c.l.b16 %v431
      %v579 = vunpack.c.l.b16 %v432
      %v580 = vunpack.c.l.b16 %v433
      %v581 = vunpack.c.l.b16 %v434
      %v582 = vunpack.c.l.b16 %v435
      %v583 = vunpack.c.l.b16 %v436
      %v584 = vunpack.c.l.b16 %v437
      %v585 = vpack.c.b16 %v570, %v569
      %v586 = vpack.c.b16 %v572, %v571
      %v587 = vpack.c.b16 %v574, %v573
      %v588 = vpack.c.b16 %v576, %v575
      %v589 = vpack.c.b16 %v578, %v577
      %v590 = vpack.c.b16 %v580, %v579
      %v591 = vpack.c.b16 %v582, %v581
      %v592 = vpack.c.b16 %v584, %v583
      %601 = vmatprep.subr.bf16.mxu0 0
      %602 = vmatpush1.bf16.msra.mxu0 %v592
      %603 = vmatprep.subr.bf16.mxu0 0
      %604 = vmatpush1.bf16.msra.mxu0 %v591
      %605 = vmatprep.subr.bf16.mxu0 0
      %606 = vmatpush1.bf16.msra.mxu0 %v590
      %607 = vmatprep.subr.bf16.mxu0 0
      %608 = vmatpush1.bf16.msra.mxu0 %v589
      %609 = vmatprep.subr.bf16.mxu0 0
      %610 = vmatpush1.bf16.msra.mxu0 %v588
      %611 = vmatprep.subr.bf16.mxu0 0
      %612 = vmatpush1.bf16.msra.mxu0 %v587
      %613 = vmatprep.subr.bf16.mxu0 0
      %614 = vmatpush1.bf16.msra.mxu0 %v586
      %615 = vmatprep.subr.bf16.mxu0 0
      %616 = vmatpush1.bf16.msra.mxu0 %v585
      %617 = vmatprep.subr.bf16.mxu0 0
      %618 = vmatpush2.bf16.msra.mxu0 0
      %619 = vmatprep.subr.bf16.mxu0 0
      %620 = vmatpush2.bf16.msra.mxu0 0
      %621 = vmatprep.subr.bf16.mxu0 0
      %622 = vmatpush2.bf16.msra.mxu0 0
      %623 = vmatprep.subr.bf16.mxu0 0
      %624 = vmatpush2.bf16.msra.mxu0 0
      %625 = vmatprep.subr.bf16.mxu0 0
      %626 = vmatpush2.bf16.msra.mxu0 0
      %627 = vmatprep.subr.bf16.mxu0 0
      %628 = vmatpush2.bf16.msra.mxu0 0
      %629 = vmatprep.subr.bf16.mxu0 0
      %630 = vmatpush2.bf16.msra.mxu0 0
      %631 = vmatprep.subr.bf16.mxu0 0
      %632 = vmatpush2.bf16.msra.mxu0 0
      %633 = vmatprep.mubr.bf16.mxu0 0
      %634 = vmatmul.mubr.bf16.gmra.mxu0 %v517
      %v635 = vpop.f32.mrf.mxu0
      %v636 = vadd.f32 %v443, %v635
      %v637 = vpop.f32.mrf.mxu0
      %v638 = vpop.f32.mrf.mxu0
      %v639 = vadd.f32 %v443, %v638
      %v640 = vpop.f32.mrf.mxu0
      %641 = vmatprep.mubr.bf16.mxu0 0
      %642 = vmatmul.mubr.bf16.gmra.mxu0 %v518
      %v643 = vpop.f32.mrf.mxu0
      %v644 = vadd.f32 %v443, %v643
      %v645 = vpop.f32.mrf.mxu0
      %v646 = vpop.f32.mrf.mxu0
      %v647 = vadd.f32 %v443, %v646
      %v648 = vpop.f32.mrf.mxu0
      %649 = vmatprep.mubr.bf16.mxu0 0
      %650 = vmatmul.mubr.bf16.gmra.mxu0 %v519
      %v651 = vpop.f32.mrf.mxu0
      %v652 = vadd.f32 %v443, %v651
      %v653 = vpop.f32.mrf.mxu0
      %v654 = vpop.f32.mrf.mxu0
      %v655 = vadd.f32 %v443, %v654
      %v656 = vpop.f32.mrf.mxu0
      %657 = vmatprep.mubr.bf16.mxu0 0
      %658 = vmatmul.mubr.bf16.gmra.mxu0 %v520
      %v659 = vpop.f32.mrf.mxu0
      %v660 = vadd.f32 %v443, %v659
      %v661 = vpop.f32.mrf.mxu0
      %v662 = vpop.f32.mrf.mxu0
      %v663 = vadd.f32 %v443, %v662
      %v664 = vpop.f32.mrf.mxu0
      %665 = vmatprep.mubr.bf16.mxu0 0
      %666 = vmatmul.mubr.bf16.gmra.mxu0 %v521
      %v667 = vpop.f32.mrf.mxu0
      %v668 = vadd.f32 %v443, %v667
      %v669 = vpop.f32.mrf.mxu0
      %v670 = vpop.f32.mrf.mxu0
      %v671 = vadd.f32 %v443, %v670
      %v672 = vpop.f32.mrf.mxu0
      %673 = vmatprep.mubr.bf16.mxu0 0
      %674 = vmatmul.mubr.bf16.gmra.mxu0 %v522
      %v675 = vpop.f32.mrf.mxu0
      %v676 = vadd.f32 %v443, %v675
      %v677 = vpop.f32.mrf.mxu0
      %v678 = vpop.f32.mrf.mxu0
      %v679 = vadd.f32 %v443, %v678
      %v680 = vpop.f32.mrf.mxu0
      %681 = vmatprep.mubr.bf16.mxu0 0
      %682 = vmatmul.mubr.bf16.gmra.mxu0 %v523
      %v683 = vpop.f32.mrf.mxu0
      %v684 = vadd.f32 %v443, %v683
      %v685 = vpop.f32.mrf.mxu0
      %v686 = vpop.f32.mrf.mxu0
      %v687 = vadd.f32 %v443, %v686
      %v688 = vpop.f32.mrf.mxu0
      %689 = vmatprep.mubr.bf16.mxu0 0
      %690 = vmatmul.mubr.bf16.gmra.mxu0 %v524
      %v691 = vpop.f32.mrf.mxu0
      %v692 = vadd.f32 %v443, %v691
      %v693 = vpop.f32.mrf.mxu0
      %v694 = vpop.f32.mrf.mxu0
      %v695 = vadd.f32 %v443, %v694
      %v696 = vpop.f32.mrf.mxu0
      %697 = vmatprep.mubr.bf16.mxu0 0
      %698 = vmatmul.mubr.bf16.gmra.mxu0 %v525
      %v699 = vpop.f32.mrf.mxu0
      %v700 = vadd.f32 %v443, %v699
      %v701 = vpop.f32.mrf.mxu0
      %v702 = vpop.f32.mrf.mxu0
      %v703 = vadd.f32 %v443, %v702
      %v704 = vpop.f32.mrf.mxu0
      %705 = vmatprep.mubr.bf16.mxu0 0
      %706 = vmatmul.mubr.bf16.gmra.mxu0 %v526
      %v707 = vpop.f32.mrf.mxu0
      %v708 = vadd.f32 %v443, %v707
      %v709 = vpop.f32.mrf.mxu0
      %v710 = vpop.f32.mrf.mxu0
      %v711 = vadd.f32 %v443, %v710
      %v712 = vpop.f32.mrf.mxu0
      %713 = vmatprep.mubr.bf16.mxu0 0
      %714 = vmatmul.mubr.bf16.gmra.mxu0 %v527
      %v715 = vpop.f32.mrf.mxu0
      %v716 = vadd.f32 %v443, %v715
      %v717 = vpop.f32.mrf.mxu0
      %v718 = vpop.f32.mrf.mxu0
      %v719 = vadd.f32 %v443, %v718
      %v720 = vpop.f32.mrf.mxu0
      %721 = vmatprep.mubr.bf16.mxu0 0
      %722 = vmatmul.mubr.bf16.gmra.mxu0 %v528
      %v723 = vpop.f32.mrf.mxu0
      %v724 = vadd.f32 %v443, %v723
      %v725 = vpop.f32.mrf.mxu0
      %v726 = vpop.f32.mrf.mxu0
      %v727 = vadd.f32 %v443, %v726
      %v728 = vpop.f32.mrf.mxu0
      %729 = vmatprep.mubr.bf16.mxu0 0
      %730 = vmatmul.mubr.bf16.gmra.mxu0 %v529
      %v731 = vpop.f32.mrf.mxu0
      %v732 = vadd.f32 %v443, %v731
      %v733 = vpop.f32.mrf.mxu0
      %v734 = vpop.f32.mrf.mxu0
      %v735 = vadd.f32 %v443, %v734
      %v736 = vpop.f32.mrf.mxu0
      %737 = vmatprep.mubr.bf16.mxu0 0
      %738 = vmatmul.mubr.bf16.gmra.mxu0 %v530
      %v739 = vpop.f32.mrf.mxu0
      %v740 = vadd.f32 %v443, %v739
      %v741 = vpop.f32.mrf.mxu0
      %v742 = vpop.f32.mrf.mxu0
      %v743 = vadd.f32 %v443, %v742
      %v744 = vpop.f32.mrf.mxu0
      %745 = vmatprep.mubr.bf16.mxu0 0
      %746 = vmatmul.mubr.bf16.gmra.mxu0 %v531
      %v747 = vpop.f32.mrf.mxu0
      %v748 = vadd.f32 %v443, %v747
      %v749 = vpop.f32.mrf.mxu0
      %v750 = vpop.f32.mrf.mxu0
      %v751 = vadd.f32 %v443, %v750
      %v752 = vpop.f32.mrf.mxu0
      %753 = vmatprep.mubr.bf16.mxu0 0
      %754 = vmatmul.mubr.bf16.gmra.mxu0 %v532
      %v755 = vpop.f32.mrf.mxu0
      %v756 = vadd.f32 %v443, %v755
      %v757 = vpop.f32.mrf.mxu0
      %v758 = vpop.f32.mrf.mxu0
      %v759 = vadd.f32 %v443, %v758
      %v760 = vpop.f32.mrf.mxu0
      %761 = vmatprep.mubr.bf16.mxu0 0
      %762 = vmatmul.mubr.bf16.gmra.mxu0 %v533
      %v763 = vpop.f32.mrf.mxu0
      %v764 = vadd.f32 %v443, %v763
      %v765 = vpop.f32.mrf.mxu0
      %v766 = vpop.f32.mrf.mxu0
      %v767 = vadd.f32 %v443, %v766
      %v768 = vpop.f32.mrf.mxu0
      %769 = vmatprep.mubr.bf16.mxu0 0
      %770 = vmatmul.mubr.bf16.gmra.mxu0 %v534
      %v771 = vpop.f32.mrf.mxu0
      %v772 = vadd.f32 %v443, %v771
      %v773 = vpop.f32.mrf.mxu0
      %v774 = vpop.f32.mrf.mxu0
      %v775 = vadd.f32 %v443, %v774
      %v776 = vpop.f32.mrf.mxu0
      %777 = vdwg.mxu0
      %v778 = vmax.f32 %v636, 0.0
      %v779 = vmax.f32 %v639, 0.0
      %v780 = vmax.f32 %v644, 0.0
      %v781 = vmax.f32 %v647, 0.0
      %v782 = vmax.f32 %v652, 0.0
      %v783 = vmax.f32 %v655, 0.0
      %v784 = vmax.f32 %v660, 0.0
      %v785 = vmax.f32 %v663, 0.0
      %v786 = vmax.f32 %v668, 0.0
      %v787 = vmax.f32 %v671, 0.0
      %v788 = vmax.f32 %v676, 0.0
      %v789 = vmax.f32 %v679, 0.0
      %v790 = vmax.f32 %v684, 0.0
      %v791 = vmax.f32 %v687, 0.0
      %v792 = vmax.f32 %v692, 0.0
      %v793 = vmax.f32 %v695, 0.0
      %v794 = vmax.f32 %v700, 0.0
      %v795 = vmax.f32 %v703, 0.0
      %v796 = vmax.f32 %v708, 0.0
      %v797 = vmax.f32 %v711, 0.0
      %v798 = vmax.f32 %v716, 0.0
      %v799 = vmax.f32 %v719, 0.0
      %v800 = vmax.f32 %v724, 0.0
      %v801 = vmax.f32 %v727, 0.0
      %v802 = vmax.f32 %v732, 0.0
      %v803 = vmax.f32 %v735, 0.0
      %v804 = vmax.f32 %v740, 0.0
      %v805 = vmax.f32 %v743, 0.0
      %v806 = vmax.f32 %v748, 0.0
      %v807 = vmax.f32 %v751, 0.0
      %v808 = vmax.f32 %v756, 0.0
      %v809 = vmax.f32 %v759, 0.0
      %v810 = vmax.f32 %v764, 0.0
      %v811 = vmax.f32 %v767, 0.0
      %v812 = vmax.f32 %v772, 0.0
      %v813 = vmax.f32 %v775, 0.0
      %v814 = vld [vmem:[%s4] sm:$0xf]
      %v815 = vld [vmem:[%s4 + $0x4] sm:$0xf]
      %v816 = vld [vmem:[%s4 + $0x8] sm:$0xf]
      %v817 = vld [vmem:[%s4 + $0xc] sm:$0xf]
      %v818 = vld [vmem:[%s4 + $0x10] sm:$0xf]
      %v819 = vld [vmem:[%s4 + $0x14] sm:$0xf]
      %v820 = vld [vmem:[%s4 + $0x18] sm:$0xf]
      %v821 = vld [vmem:[%s4 + $0x1c] sm:$0xf]
      %v822 = vld [vmem:[%s4 + $0x20] sm:$0xf]
      %v823 = vld [vmem:[%s4 + $0x24] sm:$0xf]
      %v824 = vld [vmem:[%s4 + $0x28] sm:$0xf]
      %v825 = vld [vmem:[%s4 + $0x2c] sm:$0xf]
      %v826 = vld [vmem:[%s4 + $0x30] sm:$0xf]
      %v827 = vld [vmem:[%s4 + $0x34] sm:$0xf]
      %v828 = vld [vmem:[%s4 + $0x38] sm:$0xf]
      %v829 = vld [vmem:[%s4 + $0x3c] sm:$0xf]
      %v830 = vld [vmem:[%s4 + $0x40] sm:$0xf]
      %v831 = vld [vmem:[%s4 + $0x44] sm:$0xf]
      %v832 = vld [vmem:[%s4 + $0x48] sm:$0xf]
      %v833 = vld [vmem:[%s4 + $0x4c] sm:$0xf]
      %v834 = vld [vmem:[%s4 + $0x50] sm:$0xf]
      %v835 = vld [vmem:[%s4 + $0x54] sm:$0xf]
      %v836 = vld [vmem:[%s4 + $0x58] sm:$0xf]
      %v837 = vld [vmem:[%s4 + $0x5c] sm:$0xf]
      %v838 = vld [vmem:[%s4 + $0x60] sm:$0xf]
      %v839 = vld [vmem:[%s4 + $0x64] sm:$0xf]
      %v840 = vld [vmem:[%s4 + $0x68] sm:$0xf]
      %v841 = vld [vmem:[%s4 + $0x6c] sm:$0xf]
      %v842 = vld [vmem:[%s4 + $0x70] sm:$0xf]
      %v843 = vld [vmem:[%s4 + $0x74] sm:$0xf]
      %v844 = vld [vmem:[%s4 + $0x78] sm:$0xf]
      %v845 = vld [vmem:[%s4 + $0x7c] sm:$0xf]
      %v846 = vld [vmem:[%s4 + $0x80] sm:$0xf]
      %v847 = vld [vmem:[%s4 + $0x84] sm:$0xf]
      %v848 = vld [vmem:[%s4 + $0x88] sm:$0xf]
      %v849 = vld [vmem:[%s4 + $0x8c] sm:$0x7]
      %v850 = vunpack.c.l.bf16 %v814
      %v851 = vunpack.c.l.bf16 %v815
      %v852 = vunpack.c.l.bf16 %v816
      %v853 = vunpack.c.l.bf16 %v817
      %v854 = vunpack.c.l.bf16 %v818
      %v855 = vunpack.c.l.bf16 %v819
      %v856 = vunpack.c.l.bf16 %v820
      %v857 = vunpack.c.l.bf16 %v821
      %v858 = vunpack.c.l.bf16 %v822
      %v859 = vunpack.c.l.bf16 %v823
      %v860 = vunpack.c.l.bf16 %v824
      %v861 = vunpack.c.l.bf16 %v825
      %v862 = vunpack.c.l.bf16 %v826
      %v863 = vunpack.c.l.bf16 %v827
      %v864 = vunpack.c.l.bf16 %v828
      %v865 = vunpack.c.l.bf16 %v829
      %v866 = vunpack.c.l.bf16 %v830
      %v867 = vunpack.c.l.bf16 %v831
      %v868 = vunpack.c.l.bf16 %v832
      %v869 = vunpack.c.l.bf16 %v833
      %v870 = vunpack.c.l.bf16 %v834
      %v871 = vunpack.c.l.bf16 %v835
      %v872 = vunpack.c.l.bf16 %v836
      %v873 = vunpack.c.l.bf16 %v837
      %v874 = vunpack.c.l.bf16 %v838
      %v875 = vunpack.c.l.bf16 %v839
      %v876 = vunpack.c.l.bf16 %v840
      %v877 = vunpack.c.l.bf16 %v841
      %v878 = vunpack.c.l.bf16 %v842
      %v879 = vunpack.c.l.bf16 %v843
      %v880 = vunpack.c.l.bf16 %v844
      %v881 = vunpack.c.l.bf16 %v845
      %v882 = vunpack.c.l.bf16 %v846
      %v883 = vunpack.c.l.bf16 %v847
      %v884 = vunpack.c.l.bf16 %v848
      %v885 = vunpack.c.l.bf16 %v849
      %v886 = vmul.f32 %v778, %v850
      %v887 = vmul.f32 %v779, %v851
      %v888 = vmul.f32 %v780, %v852
      %v889 = vmul.f32 %v781, %v853
      %v890 = vmul.f32 %v782, %v854
      %v891 = vmul.f32 %v783, %v855
      %v892 = vmul.f32 %v784, %v856
      %v893 = vmul.f32 %v785, %v857
      %v894 = vmul.f32 %v786, %v858
      %v895 = vmul.f32 %v787, %v859
      %v896 = vmul.f32 %v788, %v860
      %v897 = vmul.f32 %v789, %v861
      %v898 = vmul.f32 %v790, %v862
      %v899 = vmul.f32 %v791, %v863
      %v900 = vmul.f32 %v792, %v864
      %v901 = vmul.f32 %v793, %v865
      %v902 = vmul.f32 %v794, %v866
      %v903 = vmul.f32 %v795, %v867
      %v904 = vmul.f32 %v796, %v868
      %v905 = vmul.f32 %v797, %v869
      %v906 = vmul.f32 %v798, %v870
      %v907 = vmul.f32 %v799, %v871
      %v908 = vmul.f32 %v800, %v872
      %v909 = vmul.f32 %v801, %v873
      %v910 = vmul.f32 %v802, %v874
      %v911 = vmul.f32 %v803, %v875
      %v912 = vmul.f32 %v804, %v876
      %v913 = vmul.f32 %v805, %v877
      %v914 = vmul.f32 %v806, %v878
      %v915 = vmul.f32 %v807, %v879
      %v916 = vmul.f32 %v808, %v880
      %v917 = vmul.f32 %v809, %v881
      %v918 = vmul.f32 %v810, %v882
      %v919 = vmul.f32 %v811, %v883
      %v920 = vmul.f32 %v812, %v884
      %v921 = vmul.f32 %v813, %v885
      %922 = vst [vmem:[#allocation2] sm:$0xff] 0.0
      %923 = vst [vmem:[#allocation2 + $0x8] sm:$0xff] 0.0
      %924 = vst [vmem:[#allocation2 + $0x10] sm:$0x7] 0.0
      %925 = vst [vmem:[#allocation2 + $0x13] sm:$0xff] %v886
      %926 = vst [vmem:[#allocation2 + $0x1b] sm:$0xff] %v887
      %927 = vst [vmem:[#allocation2 + $0x23] sm:$0xff] %v888
      %928 = vst [vmem:[#allocation2 + $0x2b] sm:$0xff] %v889
      %929 = vst [vmem:[#allocation2 + $0x33] sm:$0xff] %v890
      %930 = vst [vmem:[#allocation2 + $0x3b] sm:$0xff] %v891
      %931 = vst [vmem:[#allocation2 + $0x43] sm:$0xff] %v892
      %932 = vst [vmem:[#allocation2 + $0x4b] sm:$0xff] %v893
      %933 = vst [vmem:[#allocation2 + $0x53] sm:$0xff] %v894
      %934 = vst [vmem:[#allocation2 + $0x5b] sm:$0xff] %v895
      %935 = vst [vmem:[#allocation2 + $0x63] sm:$0xff] %v896
      %936 = vst [vmem:[#allocation2 + $0x6b] sm:$0xff] %v897
      %937 = vst [vmem:[#allocation2 + $0x73] sm:$0xff] %v898
      %938 = vst [vmem:[#allocation2 + $0x7b] sm:$0xff] %v899
      %939 = vst [vmem:[#allocation2 + $0x83] sm:$0xff] %v900
      %940 = vst [vmem:[#allocation2 + $0x8b] sm:$0xff] %v901
      %941 = vst [vmem:[#allocation2 + $0x93] sm:$0xff] %v902
      %942 = vst [vmem:[#allocation2 + $0x9b] sm:$0xff] %v903
      %943 = vst [vmem:[#allocation2 + $0xa3] sm:$0xff] %v904
      %944 = vst [vmem:[#allocation2 + $0xab] sm:$0xff] %v905
      %945 = vst [vmem:[#allocation2 + $0xb3] sm:$0xff] %v906
      %946 = vst [vmem:[#allocation2 + $0xbb] sm:$0xff] %v907
      %947 = vst [vmem:[#allocation2 + $0xc3] sm:$0xff] %v908
      %948 = vst [vmem:[#allocation2 + $0xcb] sm:$0xff] %v909
      %949 = vst [vmem:[#allocation2 + $0xd3] sm:$0xff] %v910
      %950 = vst [vmem:[#allocation2 + $0xdb] sm:$0xff] %v911
      %951 = vst [vmem:[#allocation2 + $0xe3] sm:$0xff] %v912
      %952 = vst [vmem:[#allocation2 + $0xeb] sm:$0xff] %v913
      %953 = vst [vmem:[#allocation2 + $0xf3] sm:$0xff] %v914
      %954 = vst [vmem:[#allocation2 + $0xfb] sm:$0xff] %v915
      %955 = vst [vmem:[#allocation2 + $0x103] sm:$0xff] %v916
      %956 = vst [vmem:[#allocation2 + $0x10b] sm:$0xff] %v917
      %957 = vst [vmem:[#allocation2 + $0x113] sm:$0xff] %v918
      %958 = vst [vmem:[#allocation2 + $0x11b] sm:$0xff] %v919
      %959 = vst [vmem:[#allocation2 + $0x123] sm:$0xff] %v920
      %960 = vst [vmem:[#allocation2 + $0x12b] sm:$0x3f] %v921
      %961 = vst [vmem:[#allocation2 + $0x131] sm:$0xff] 0.0
      %962 = vst [vmem:[#allocation2 + $0x139] sm:$0xff] 0.0
      %963 = vst [vmem:[#allocation2 + $0x141] sm:$0x7] 0.0
      %v964 = vld [vmem:[%s5] sm:$0xf]
      %v965 = vld [vmem:[%s5 + $0x4] sm:$0xf]
      %v966 = vld [vmem:[%s5 + $0x8] sm:$0xf]
      %v967 = vld [vmem:[%s5 + $0xc] sm:$0xf]
      %v968 = vld [vmem:[%s5 + $0x10] sm:$0xf]
      %v969 = vld [vmem:[%s5 + $0x14] sm:$0xf]
      %v970 = vld [vmem:[%s5 + $0x18] sm:$0xf]
      %v971 = vld [vmem:[%s5 + $0x1c] sm:$0xf]
      %v972 = vld [vmem:[#allocation2] sm:$0xff]
      %v973 = vld [vmem:[#allocation2 + $0x8] sm:$0xff]
      %v974 = vld [vmem:[#allocation2 + $0x10] sm:$0xff]
      %v975 = vld [vmem:[#allocation2 + $0x18] sm:$0xff]
      %v976 = vld [vmem:[#allocation2 + $0x20] sm:$0xf]
      %v977 = vpack.c.bf16 %v973, %v972
      %v978 = vpack.c.bf16 %v975, %v974
      %v979 = vpack.c.bf16 %v976, %v976
      %v988 = vunpack.c.l.b16 %v964
      %v989 = vunpack.c.l.b16 %v965
      %v990 = vunpack.c.l.b16 %v966
      %v991 = vunpack.c.l.b16 %v967
      %v992 = vunpack.c.l.b16 %v968
      %v993 = vunpack.c.l.b16 %v969
      %v994 = vunpack.c.l.b16 %v970
      %v995 = vunpack.c.l.b16 %v971
      %v996 = vpack.c.b16 %v989, %v988
      %v997 = vpack.c.b16 %v991, %v990
      %v998 = vpack.c.b16 %v993, %v992
      %v999 = vpack.c.b16 %v995, %v994
      %vm1000 = vcmask 293888
      %v1002 = vsel %vm1000, %v996, 0
      %v1005 = vsel %vm1000, %v997, 0
      %v1008 = vsel %vm1000, %v998, 0
      %v1011 = vsel %vm1000, %v999, 0
      %vm1013 = vcmask 1041408
      %v1015 = vsel %vm1013, %v979, 0
      %1017 = vmatprep.subr.bf16.mxu0 0
      %1018 = vmatpush1.bf16.msra.mxu0 0
      %1019 = vmatprep.subr.bf16.mxu0 0
      %1020 = vmatpush1.bf16.msra.mxu0 0
      %1021 = vmatprep.subr.bf16.mxu0 0
      %1022 = vmatpush1.bf16.msra.mxu0 0
      %1023 = vmatprep.subr.bf16.mxu0 0
      %1024 = vmatpush1.bf16.msra.mxu0 0
      %1025 = vmatprep.subr.bf16.mxu0 0
      %1026 = vmatpush1.bf16.msra.mxu0 0
      %1027 = vmatprep.subr.bf16.mxu0 0
      %1028 = vmatpush1.bf16.msra.mxu0 %v1015
      %1029 = vmatprep.subr.bf16.mxu0 0
      %1030 = vmatpush1.bf16.msra.mxu0 %v978
      %1031 = vmatprep.subr.bf16.mxu0 0
      %1032 = vmatpush1.bf16.msra.mxu0 %v977
      %1033 = vmatprep.subr.bf16.mxu0 0
      %1034 = vmatpush2.bf16.msra.mxu0 0
      %1035 = vmatprep.subr.bf16.mxu0 0
      %1036 = vmatpush2.bf16.msra.mxu0 0
      %1037 = vmatprep.subr.bf16.mxu0 0
      %1038 = vmatpush2.bf16.msra.mxu0 0
      %1039 = vmatprep.subr.bf16.mxu0 0
      %1040 = vmatpush2.bf16.msra.mxu0 0
      %1041 = vmatprep.subr.bf16.mxu0 0
      %1042 = vmatpush2.bf16.msra.mxu0 0
      %1043 = vmatprep.subr.bf16.mxu0 0
      %1044 = vmatpush2.bf16.msra.mxu0 0
      %1045 = vmatprep.subr.bf16.mxu0 0
      %1046 = vmatpush2.bf16.msra.mxu0 0
      %1047 = vmatprep.subr.bf16.mxu0 0
      %1048 = vmatpush2.bf16.msra.mxu0 0
      %1049 = vmatprep.mubr.bf16.mxu0 0
      %1050 = vmatmul.mubr.bf16.gmra.mxu0 %v1002
      %v1051 = vpop.f32.mrf.mxu0
      %v1052 = vadd.f32 0.0, %v1051
      %v1053 = vpop.f32.mrf.mxu0
      %v1054 = vpop.f32.mrf.mxu0
      %v1055 = vadd.f32 0.0, %v1054
      %v1056 = vpop.f32.mrf.mxu0
      %1057 = vmatprep.mubr.bf16.mxu0 0
      %1058 = vmatmul.mubr.bf16.gmra.mxu0 %v1005
      %v1059 = vpop.f32.mrf.mxu0
      %v1060 = vadd.f32 0.0, %v1059
      %v1061 = vpop.f32.mrf.mxu0
      %v1062 = vpop.f32.mrf.mxu0
      %v1063 = vadd.f32 0.0, %v1062
      %v1064 = vpop.f32.mrf.mxu0
      %1065 = vmatprep.mubr.bf16.mxu0 0
      %1066 = vmatmul.mubr.bf16.gmra.mxu0 %v1008
      %v1067 = vpop.f32.mrf.mxu0
      %v1068 = vadd.f32 0.0, %v1067
      %v1069 = vpop.f32.mrf.mxu0
      %v1070 = vpop.f32.mrf.mxu0
      %v1071 = vadd.f32 0.0, %v1070
      %v1072 = vpop.f32.mrf.mxu0
      %1073 = vmatprep.mubr.bf16.mxu0 0
      %1074 = vmatmul.mubr.bf16.gmra.mxu0 %v1011
      %v1075 = vpop.f32.mrf.mxu0
      %v1076 = vadd.f32 0.0, %v1075
      %v1077 = vpop.f32.mrf.mxu0
      %v1078 = vpop.f32.mrf.mxu0
      %v1079 = vadd.f32 0.0, %v1078
      %v1080 = vpop.f32.mrf.mxu0
      %1081 = vdwg.mxu0
      %1082 = vst [vmem:[#allocation7] sm:$0xff] %v1052
      %1083 = vst [vmem:[#allocation7 + $0x8] sm:$0x3] %v1055
      %s1084 = scalar_lea.vmem [#allocation7], 104
      %1085 = vst [vmem:[%s1084] sm:$0xff] %v1060
      %1086 = vst [vmem:[%s1084 + $0x8] sm:$0x3] %v1063
      %s1087 = scalar_lea.vmem [#allocation7], 208
      %1088 = vst [vmem:[%s1087] sm:$0xff] %v1068
      %1089 = vst [vmem:[%s1087 + $0x8] sm:$0x3] %v1071
      %s1090 = scalar_lea.vmem [#allocation7], 312
      %1091 = vst [vmem:[%s1090] sm:$0xff] %v1076
      %1092 = vst [vmem:[%s1090 + $0x8] sm:$0x3] %v1079
      %v1093 = vld [vmem:[#allocation2 + $0x24] sm:$0xff]
      %v1094 = vld [vmem:[#allocation2 + $0x2c] sm:$0xff]
      %v1095 = vld [vmem:[#allocation2 + $0x34] sm:$0xff]
      %v1096 = vld [vmem:[#allocation2 + $0x3c] sm:$0xff]
      %v1097 = vld [vmem:[#allocation2 + $0x44] sm:$0xf]
      %v1098 = vpack.c.bf16 %v1094, %v1093
      %v1099 = vpack.c.bf16 %v1096, %v1095
      %v1100 = vpack.c.bf16 %v1097, %v1097
      %v1102 = vsel %vm1013, %v1100, 0
      %1104 = vmatprep.subr.bf16.mxu0 0
      %1105 = vmatpush1.bf16.msra.mxu0 0
      %1106 = vmatprep.subr.bf16.mxu0 0
      %1107 = vmatpush1.bf16.msra.mxu0 0
      %1108 = vmatprep.subr.bf16.mxu0 0
      %1109 = vmatpush1.bf16.msra.mxu0 0
      %1110 = vmatprep.subr.bf16.mxu0 0
      %1111 = vmatpush1.bf16.msra.mxu0 0
      %1112 = vmatprep.subr.bf16.mxu0 0
      %1113 = vmatpush1.bf16.msra.mxu0 0
      %1114 = vmatprep.subr.bf16.mxu0 0
      %1115 = vmatpush1.bf16.msra.mxu0 %v1102
      %1116 = vmatprep.subr.bf16.mxu0 0
      %1117 = vmatpush1.bf16.msra.mxu0 %v1099
      %1118 = vmatprep.subr.bf16.mxu0 0
      %1119 = vmatpush1.bf16.msra.mxu0 %v1098
      %1120 = vmatprep.subr.bf16.mxu0 0
      %1121 = vmatpush2.bf16.msra.mxu0 0
      %1122 = vmatprep.subr.bf16.mxu0 0
      %1123 = vmatpush2.bf16.msra.mxu0 0
      %1124 = vmatprep.subr.bf16.mxu0 0
      %1125 = vmatpush2.bf16.msra.mxu0 0
      %1126 = vmatprep.subr.bf16.mxu0 0
      %1127 = vmatpush2.bf16.msra.mxu0 0
      %1128 = vmatprep.subr.bf16.mxu0 0
      %1129 = vmatpush2.bf16.msra.mxu0 0
      %1130 = vmatprep.subr.bf16.mxu0 0
      %1131 = vmatpush2.bf16.msra.mxu0 0
      %1132 = vmatprep.subr.bf16.mxu0 0
      %1133 = vmatpush2.bf16.msra.mxu0 0
      %1134 = vmatprep.subr.bf16.mxu0 0
      %1135 = vmatpush2.bf16.msra.mxu0 0
      %1136 = vmatprep.mubr.bf16.mxu0 0
      %1137 = vmatmul.mubr.bf16.gmra.mxu0 %v1002
      %v1138 = vpop.f32.mrf.mxu0
      %v1139 = vadd.f32 0.0, %v1138
      %v1140 = vpop.f32.mrf.mxu0
      %v1141 = vpop.f32.mrf.mxu0
      %v1142 = vadd.f32 0.0, %v1141
      %v1143 = vpop.f32.mrf.mxu0
      %1144 = vmatprep.mubr.bf16.mxu0 0
      %1145 = vmatmul.mubr.bf16.gmra.mxu0 %v1005
      %v1146 = vpop.f32.mrf.mxu0
      %v1147 = vadd.f32 0.0, %v1146
      %v1148 = vpop.f32.mrf.mxu0
      %v1149 = vpop.f32.mrf.mxu0
      %v1150 = vadd.f32 0.0, %v1149
      %v1151 = vpop.f32.mrf.mxu0
      %1152 = vmatprep.mubr.bf16.mxu0 0
      %1153 = vmatmul.mubr.bf16.gmra.mxu0 %v1008
      %v1154 = vpop.f32.mrf.mxu0
      %v1155 = vadd.f32 0.0, %v1154
      %v1156 = vpop.f32.mrf.mxu0
      %v1157 = vpop.f32.mrf.mxu0
      %v1158 = vadd.f32 0.0, %v1157
      %v1159 = vpop.f32.mrf.mxu0
      %1160 = vmatprep.mubr.bf16.mxu0 0
      %1161 = vmatmul.mubr.bf16.gmra.mxu0 %v1011
      %v1162 = vpop.f32.mrf.mxu0
      %v1163 = vadd.f32 0.0, %v1162
      %v1164 = vpop.f32.mrf.mxu0
      %v1165 = vpop.f32.mrf.mxu0
      %v1166 = vadd.f32 0.0, %v1165
      %v1167 = vpop.f32.mrf.mxu0
      %1168 = vdwg.mxu0
      %1169 = vst [vmem:[#allocation7 + $0xa] sm:$0xff] %v1139
      %1170 = vst [vmem:[#allocation7 + $0x12] sm:$0x3] %v1142
      %1171 = vst [vmem:[%s1084 + $0xa] sm:$0xff] %v1147
      %1172 = vst [vmem:[%s1084 + $0x12] sm:$0x3] %v1150
      %1173 = vst [vmem:[%s1087 + $0xa] sm:$0xff] %v1155
      %1174 = vst [vmem:[%s1087 + $0x12] sm:$0x3] %v1158
      %1175 = vst [vmem:[%s1090 + $0xa] sm:$0xff] %v1163
      %1176 = vst [vmem:[%s1090 + $0x12] sm:$0x3] %v1166
      %v1177 = vld [vmem:[#allocation2 + $0x48] sm:$0xff]
      %v1178 = vld [vmem:[#allocation2 + $0x50] sm:$0xff]
      %v1179 = vld [vmem:[#allocation2 + $0x58] sm:$0xff]
      %v1180 = vld [vmem:[#allocation2 + $0x60] sm:$0xff]
      %v1181 = vld [vmem:[#allocation2 + $0x68] sm:$0xf]
      %v1182 = vpack.c.bf16 %v1178, %v1177
      %v1183 = vpack.c.bf16 %v1180, %v1179
      %v1184 = vpack.c.bf16 %v1181, %v1181
      %v1186 = vsel %vm1013, %v1184, 0
      %1188 = vmatprep.subr.bf16.mxu0 0
      %1189 = vmatpush1.bf16.msra.mxu0 0
      %1190 = vmatprep.subr.bf16.mxu0 0
      %1191 = vmatpush1.bf16.msra.mxu0 0
      %1192 = vmatprep.subr.bf16.mxu0 0
      %1193 = vmatpush1.bf16.msra.mxu0 0
      %1194 = vmatprep.subr.bf16.mxu0 0
      %1195 = vmatpush1.bf16.msra.mxu0 0
      %1196 = vmatprep.subr.bf16.mxu0 0
      %1197 = vmatpush1.bf16.msra.mxu0 0
      %1198 = vmatprep.subr.bf16.mxu0 0
      %1199 = vmatpush1.bf16.msra.mxu0 %v1186
      %1200 = vmatprep.subr.bf16.mxu0 0
      %1201 = vmatpush1.bf16.msra.mxu0 %v1183
      %1202 = vmatprep.subr.bf16.mxu0 0
      %1203 = vmatpush1.bf16.msra.mxu0 %v1182
      %1204 = vmatprep.subr.bf16.mxu0 0
      %1205 = vmatpush2.bf16.msra.mxu0 0
      %1206 = vmatprep.subr.bf16.mxu0 0
      %1207 = vmatpush2.bf16.msra.mxu0 0
      %1208 = vmatprep.subr.bf16.mxu0 0
      %1209 = vmatpush2.bf16.msra.mxu0 0
      %1210 = vmatprep.subr.bf16.mxu0 0
      %1211 = vmatpush2.bf16.msra.mxu0 0
      %1212 = vmatprep.subr.bf16.mxu0 0
      %1213 = vmatpush2.bf16.msra.mxu0 0
      %1214 = vmatprep.subr.bf16.mxu0 0
      %1215 = vmatpush2.bf16.msra.mxu0 0
      %1216 = vmatprep.subr.bf16.mxu0 0
      %1217 = vmatpush2.bf16.msra.mxu0 0
      %1218 = vmatprep.subr.bf16.mxu0 0
      %1219 = vmatpush2.bf16.msra.mxu0 0
      %1220 = vmatprep.mubr.bf16.mxu0 0
      %1221 = vmatmul.mubr.bf16.gmra.mxu0 %v1002
      %v1222 = vpop.f32.mrf.mxu0
      %v1223 = vadd.f32 0.0, %v1222
      %v1224 = vpop.f32.mrf.mxu0
      %v1225 = vpop.f32.mrf.mxu0
      %v1226 = vadd.f32 0.0, %v1225
      %v1227 = vpop.f32.mrf.mxu0
      %1228 = vmatprep.mubr.bf16.mxu0 0
      %1229 = vmatmul.mubr.bf16.gmra.mxu0 %v1005
      %v1230 = vpop.f32.mrf.mxu0
      %v1231 = vadd.f32 0.0, %v1230
      %v1232 = vpop.f32.mrf.mxu0
      %v1233 = vpop.f32.mrf.mxu0
      %v1234 = vadd.f32 0.0, %v1233
      %v1235 = vpop.f32.mrf.mxu0
      %1236 = vmatprep.mubr.bf16.mxu0 0
      %1237 = vmatmul.mubr.bf16.gmra.mxu0 %v1008
      %v1238 = vpop.f32.mrf.mxu0
      %v1239 = vadd.f32 0.0, %v1238
      %v1240 = vpop.f32.mrf.mxu0
      %v1241 = vpop.f32.mrf.mxu0
      %v1242 = vadd.f32 0.0, %v1241
      %v1243 = vpop.f32.mrf.mxu0
      %1244 = vmatprep.mubr.bf16.mxu0 0
      %1245 = vmatmul.mubr.bf16.gmra.mxu0 %v1011
      %v1246 = vpop.f32.mrf.mxu0
      %v1247 = vadd.f32 0.0, %v1246
      %v1248 = vpop.f32.mrf.mxu0
      %v1249 = vpop.f32.mrf.mxu0
      %v1250 = vadd.f32 0.0, %v1249
      %v1251 = vpop.f32.mrf.mxu0
      %1252 = vdwg.mxu0
      %1253 = vst [vmem:[#allocation7 + $0x14] sm:$0xff] %v1223
      %1254 = vst [vmem:[#allocation7 + $0x1c] sm:$0x3] %v1226
      %1255 = vst [vmem:[%s1084 + $0x14] sm:$0xff] %v1231
      %1256 = vst [vmem:[%s1084 + $0x1c] sm:$0x3] %v1234
      %1257 = vst [vmem:[%s1087 + $0x14] sm:$0xff] %v1239
      %1258 = vst [vmem:[%s1087 + $0x1c] sm:$0x3] %v1242
      %1259 = vst [vmem:[%s1090 + $0x14] sm:$0xff] %v1247
      %1260 = vst [vmem:[%s1090 + $0x1c] sm:$0x3] %v1250
      %v1261 = vld [vmem:[#allocation2 + $0x6c] sm:$0xff]
      %v1262 = vld [vmem:[#allocation2 + $0x74] sm:$0xff]
      %v1263 = vld [vmem:[#allocation2 + $0x7c] sm:$0xff]
      %v1264 = vld [vmem:[#allocation2 + $0x84] sm:$0xff]
      %v1265 = vld [vmem:[#allocation2 + $0x8c] sm:$0xf]
      %v1266 = vpack.c.bf16 %v1262, %v1261
      %v1267 = vpack.c.bf16 %v1264, %v1263
      %v1268 = vpack.c.bf16 %v1265, %v1265
      %v1270 = vsel %vm1013, %v1268, 0
      %1272 = vmatprep.subr.bf16.mxu0 0
      %1273 = vmatpush1.bf16.msra.mxu0 0
      %1274 = vmatprep.subr.bf16.mxu0 0
      %1275 = vmatpush1.bf16.msra.mxu0 0
      %1276 = vmatprep.subr.bf16.mxu0 0
      %1277 = vmatpush1.bf16.msra.mxu0 0
      %1278 = vmatprep.subr.bf16.mxu0 0
      %1279 = vmatpush1.bf16.msra.mxu0 0
      %1280 = vmatprep.subr.bf16.mxu0 0
      %1281 = vmatpush1.bf16.msra.mxu0 0
      %1282 = vmatprep.subr.bf16.mxu0 0
      %1283 = vmatpush1.bf16.msra.mxu0 %v1270
      %1284 = vmatprep.subr.bf16.mxu0 0
      %1285 = vmatpush1.bf16.msra.mxu0 %v1267
      %1286 = vmatprep.subr.bf16.mxu0 0
      %1287 = vmatpush1.bf16.msra.mxu0 %v1266
      %1288 = vmatprep.subr.bf16.mxu0 0
      %1289 = vmatpush2.bf16.msra.mxu0 0
      %1290 = vmatprep.subr.bf16.mxu0 0
      %1291 = vmatpush2.bf16.msra.mxu0 0
      %1292 = vmatprep.subr.bf16.mxu0 0
      %1293 = vmatpush2.bf16.msra.mxu0 0
      %1294 = vmatprep.subr.bf16.mxu0 0
      %1295 = vmatpush2.bf16.msra.mxu0 0
      %1296 = vmatprep.subr.bf16.mxu0 0
      %1297 = vmatpush2.bf16.msra.mxu0 0
      %1298 = vmatprep.subr.bf16.mxu0 0
      %1299 = vmatpush2.bf16.msra.mxu0 0
      %1300 = vmatprep.subr.bf16.mxu0 0
      %1301 = vmatpush2.bf16.msra.mxu0 0
      %1302 = vmatprep.subr.bf16.mxu0 0
      %1303 = vmatpush2.bf16.msra.mxu0 0
      %1304 = vmatprep.mubr.bf16.mxu0 0
      %1305 = vmatmul.mubr.bf16.gmra.mxu0 %v1002
      %v1306 = vpop.f32.mrf.mxu0
      %v1307 = vadd.f32 0.0, %v1306
      %v1308 = vpop.f32.mrf.mxu0
      %v1309 = vpop.f32.mrf.mxu0
      %v1310 = vadd.f32 0.0, %v1309
      %v1311 = vpop.f32.mrf.mxu0
      %1312 = vmatprep.mubr.bf16.mxu0 0
      %1313 = vmatmul.mubr.bf16.gmra.mxu0 %v1005
      %v1314 = vpop.f32.mrf.mxu0
      %v1315 = vadd.f32 0.0, %v1314
      %v1316 = vpop.f32.mrf.mxu0
      %v1317 = vpop.f32.mrf.mxu0
      %v1318 = vadd.f32 0.0, %v1317
      %v1319 = vpop.f32.mrf.mxu0
      %1320 = vmatprep.mubr.bf16.mxu0 0
      %1321 = vmatmul.mubr.bf16.gmra.mxu0 %v1008
      %v1322 = vpop.f32.mrf.mxu0
      %v1323 = vadd.f32 0.0, %v1322
      %v1324 = vpop.f32.mrf.mxu0
      %v1325 = vpop.f32.mrf.mxu0
      %v1326 = vadd.f32 0.0, %v1325
      %v1327 = vpop.f32.mrf.mxu0
      %1328 = vmatprep.mubr.bf16.mxu0 0
      %1329 = vmatmul.mubr.bf16.gmra.mxu0 %v1011
      %v1330 = vpop.f32.mrf.mxu0
      %v1331 = vadd.f32 0.0, %v1330
      %v1332 = vpop.f32.mrf.mxu0
      %v1333 = vpop.f32.mrf.mxu0
      %v1334 = vadd.f32 0.0, %v1333
      %v1335 = vpop.f32.mrf.mxu0
      %1336 = vdwg.mxu0
      %1337 = vst [vmem:[#allocation7 + $0x1e] sm:$0xff] %v1307
      %1338 = vst [vmem:[#allocation7 + $0x26] sm:$0x3] %v1310
      %1339 = vst [vmem:[%s1084 + $0x1e] sm:$0xff] %v1315
      %1340 = vst [vmem:[%s1084 + $0x26] sm:$0x3] %v1318
      %1341 = vst [vmem:[%s1087 + $0x1e] sm:$0xff] %v1323
      %1342 = vst [vmem:[%s1087 + $0x26] sm:$0x3] %v1326
      %1343 = vst [vmem:[%s1090 + $0x1e] sm:$0xff] %v1331
      %1344 = vst [vmem:[%s1090 + $0x26] sm:$0x3] %v1334
      %v1345 = vld [vmem:[#allocation2 + $0x90] sm:$0xff]
      %v1346 = vld [vmem:[#allocation2 + $0x98] sm:$0xff]
      %v1347 = vld [vmem:[#allocation2 + $0xa0] sm:$0xff]
      %v1348 = vld [vmem:[#allocation2 + $0xa8] sm:$0xff]
      %v1349 = vld [vmem:[#allocation2 + $0xb0] sm:$0xf]
      %v1350 = vpack.c.bf16 %v1346, %v1345
      %v1351 = vpack.c.bf16 %v1348, %v1347
      %v1352 = vpack.c.bf16 %v1349, %v1349
      %v1354 = vsel %vm1013, %v1352, 0
      %1356 = vmatprep.subr.bf16.mxu0 0
      %1357 = vmatpush1.bf16.msra.mxu0 0
      %1358 = vmatprep.subr.bf16.mxu0 0
      %1359 = vmatpush1.bf16.msra.mxu0 0
      %1360 = vmatprep.subr.bf16.mxu0 0
      %1361 = vmatpush1.bf16.msra.mxu0 0
      %1362 = vmatprep.subr.bf16.mxu0 0
      %1363 = vmatpush1.bf16.msra.mxu0 0
      %1364 = vmatprep.subr.bf16.mxu0 0
      %1365 = vmatpush1.bf16.msra.mxu0 0
      %1366 = vmatprep.subr.bf16.mxu0 0
      %1367 = vmatpush1.bf16.msra.mxu0 %v1354
      %1368 = vmatprep.subr.bf16.mxu0 0
      %1369 = vmatpush1.bf16.msra.mxu0 %v1351
      %1370 = vmatprep.subr.bf16.mxu0 0
      %1371 = vmatpush1.bf16.msra.mxu0 %v1350
      %1372 = vmatprep.subr.bf16.mxu0 0
      %1373 = vmatpush2.bf16.msra.mxu0 0
      %1374 = vmatprep.subr.bf16.mxu0 0
      %1375 = vmatpush2.bf16.msra.mxu0 0
      %1376 = vmatprep.subr.bf16.mxu0 0
      %1377 = vmatpush2.bf16.msra.mxu0 0
      %1378 = vmatprep.subr.bf16.mxu0 0
      %1379 = vmatpush2.bf16.msra.mxu0 0
      %1380 = vmatprep.subr.bf16.mxu0 0
      %1381 = vmatpush2.bf16.msra.mxu0 0
      %1382 = vmatprep.subr.bf16.mxu0 0
      %1383 = vmatpush2.bf16.msra.mxu0 0
      %1384 = vmatprep.subr.bf16.mxu0 0
      %1385 = vmatpush2.bf16.msra.mxu0 0
      %1386 = vmatprep.subr.bf16.mxu0 0
      %1387 = vmatpush2.bf16.msra.mxu0 0
      %1388 = vmatprep.mubr.bf16.mxu0 0
      %1389 = vmatmul.mubr.bf16.gmra.mxu0 %v1002
      %v1390 = vpop.f32.mrf.mxu0
      %v1391 = vadd.f32 0.0, %v1390
      %v1392 = vpop.f32.mrf.mxu0
      %v1393 = vpop.f32.mrf.mxu0
      %v1394 = vadd.f32 0.0, %v1393
      %v1395 = vpop.f32.mrf.mxu0
      %1396 = vmatprep.mubr.bf16.mxu0 0
      %1397 = vmatmul.mubr.bf16.gmra.mxu0 %v1005
      %v1398 = vpop.f32.mrf.mxu0
      %v1399 = vadd.f32 0.0, %v1398
      %v1400 = vpop.f32.mrf.mxu0
      %v1401 = vpop.f32.mrf.mxu0
      %v1402 = vadd.f32 0.0, %v1401
      %v1403 = vpop.f32.mrf.mxu0
      %1404 = vmatprep.mubr.bf16.mxu0 0
      %1405 = vmatmul.mubr.bf16.gmra.mxu0 %v1008
      %v1406 = vpop.f32.mrf.mxu0
      %v1407 = vadd.f32 0.0, %v1406
      %v1408 = vpop.f32.mrf.mxu0
      %v1409 = vpop.f32.mrf.mxu0
      %v1410 = vadd.f32 0.0, %v1409
      %v1411 = vpop.f32.mrf.mxu0
      %1412 = vmatprep.mubr.bf16.mxu0 0
      %1413 = vmatmul.mubr.bf16.gmra.mxu0 %v1011
      %v1414 = vpop.f32.mrf.mxu0
      %v1415 = vadd.f32 0.0, %v1414
      %v1416 = vpop.f32.mrf.mxu0
      %v1417 = vpop.f32.mrf.mxu0
      %v1418 = vadd.f32 0.0, %v1417
      %v1419 = vpop.f32.mrf.mxu0
      %1420 = vdwg.mxu0
      %1421 = vst [vmem:[#allocation7 + $0x28] sm:$0xff] %v1391
      %1422 = vst [vmem:[#allocation7 + $0x30] sm:$0x3] %v1394
      %1423 = vst [vmem:[%s1084 + $0x28] sm:$0xff] %v1399
      %1424 = vst [vmem:[%s1084 + $0x30] sm:$0x3] %v1402
      %1425 = vst [vmem:[%s1087 + $0x28] sm:$0xff] %v1407
      %1426 = vst [vmem:[%s1087 + $0x30] sm:$0x3] %v1410
      %1427 = vst [vmem:[%s1090 + $0x28] sm:$0xff] %v1415
      %1428 = vst [vmem:[%s1090 + $0x30] sm:$0x3] %v1418
      %v1429 = vld [vmem:[#allocation2 + $0xb4] sm:$0xff]
      %v1430 = vld [vmem:[#allocation2 + $0xbc] sm:$0xff]
      %v1431 = vld [vmem:[#allocation2 + $0xc4] sm:$0xff]
      %v1432 = vld [vmem:[#allocation2 + $0xcc] sm:$0xff]
      %v1433 = vld [vmem:[#allocation2 + $0xd4] sm:$0xf]
      %v1434 = vpack.c.bf16 %v1430, %v1429
      %v1435 = vpack.c.bf16 %v1432, %v1431
      %v1436 = vpack.c.bf16 %v1433, %v1433
      %v1438 = vsel %vm1013, %v1436, 0
      %1440 = vmatprep.subr.bf16.mxu0 0
      %1441 = vmatpush1.bf16.msra.mxu0 0
      %1442 = vmatprep.subr.bf16.mxu0 0
      %1443 = vmatpush1.bf16.msra.mxu0 0
      %1444 = vmatprep.subr.bf16.mxu0 0
      %1445 = vmatpush1.bf16.msra.mxu0 0
      %1446 = vmatprep.subr.bf16.mxu0 0
      %1447 = vmatpush1.bf16.msra.mxu0 0
      %1448 = vmatprep.subr.bf16.mxu0 0
      %1449 = vmatpush1.bf16.msra.mxu0 0
      %1450 = vmatprep.subr.bf16.mxu0 0
      %1451 = vmatpush1.bf16.msra.mxu0 %v1438
      %1452 = vmatprep.subr.bf16.mxu0 0
      %1453 = vmatpush1.bf16.msra.mxu0 %v1435
      %1454 = vmatprep.subr.bf16.mxu0 0
      %1455 = vmatpush1.bf16.msra.mxu0 %v1434
      %1456 = vmatprep.subr.bf16.mxu0 0
      %1457 = vmatpush2.bf16.msra.mxu0 0
      %1458 = vmatprep.subr.bf16.mxu0 0
      %1459 = vmatpush2.bf16.msra.mxu0 0
      %1460 = vmatprep.subr.bf16.mxu0 0
      %1461 = vmatpush2.bf16.msra.mxu0 0
      %1462 = vmatprep.subr.bf16.mxu0 0
      %1463 = vmatpush2.bf16.msra.mxu0 0
      %1464 = vmatprep.subr.bf16.mxu0 0
      %1465 = vmatpush2.bf16.msra.mxu0 0
      %1466 = vmatprep.subr.bf16.mxu0 0
      %1467 = vmatpush2.bf16.msra.mxu0 0
      %1468 = vmatprep.subr.bf16.mxu0 0
      %1469 = vmatpush2.bf16.msra.mxu0 0
      %1470 = vmatprep.subr.bf16.mxu0 0
      %1471 = vmatpush2.bf16.msra.mxu0 0
      %1472 = vmatprep.mubr.bf16.mxu0 0
      %1473 = vmatmul.mubr.bf16.gmra.mxu0 %v1002
      %v1474 = vpop.f32.mrf.mxu0
      %v1475 = vadd.f32 0.0, %v1474
      %v1476 = vpop.f32.mrf.mxu0
      %v1477 = vpop.f32.mrf.mxu0
      %v1478 = vadd.f32 0.0, %v1477
      %v1479 = vpop.f32.mrf.mxu0
      %1480 = vmatprep.mubr.bf16.mxu0 0
      %1481 = vmatmul.mubr.bf16.gmra.mxu0 %v1005
      %v1482 = vpop.f32.mrf.mxu0
      %v1483 = vadd.f32 0.0, %v1482
      %v1484 = vpop.f32.mrf.mxu0
      %v1485 = vpop.f32.mrf.mxu0
      %v1486 = vadd.f32 0.0, %v1485
      %v1487 = vpop.f32.mrf.mxu0
      %1488 = vmatprep.mubr.bf16.mxu0 0
      %1489 = vmatmul.mubr.bf16.gmra.mxu0 %v1008
      %v1490 = vpop.f32.mrf.mxu0
      %v1491 = vadd.f32 0.0, %v1490
      %v1492 = vpop.f32.mrf.mxu0
      %v1493 = vpop.f32.mrf.mxu0
      %v1494 = vadd.f32 0.0, %v1493
      %v1495 = vpop.f32.mrf.mxu0
      %1496 = vmatprep.mubr.bf16.mxu0 0
      %1497 = vmatmul.mubr.bf16.gmra.mxu0 %v1011
      %v1498 = vpop.f32.mrf.mxu0
      %v1499 = vadd.f32 0.0, %v1498
      %v1500 = vpop.f32.mrf.mxu0
      %v1501 = vpop.f32.mrf.mxu0
      %v1502 = vadd.f32 0.0, %v1501
      %v1503 = vpop.f32.mrf.mxu0
      %1504 = vdwg.mxu0
      %1505 = vst [vmem:[#allocation7 + $0x32] sm:$0xff] %v1475
      %1506 = vst [vmem:[#allocation7 + $0x3a] sm:$0x3] %v1478
      %1507 = vst [vmem:[%s1084 + $0x32] sm:$0xff] %v1483
      %1508 = vst [vmem:[%s1084 + $0x3a] sm:$0x3] %v1486
      %1509 = vst [vmem:[%s1087 + $0x32] sm:$0xff] %v1491
      %1510 = vst [vmem:[%s1087 + $0x3a] sm:$0x3] %v1494
      %1511 = vst [vmem:[%s1090 + $0x32] sm:$0xff] %v1499
      %1512 = vst [vmem:[%s1090 + $0x3a] sm:$0x3] %v1502
      %v1513 = vld [vmem:[#allocation2 + $0xd8] sm:$0xff]
      %v1514 = vld [vmem:[#allocation2 + $0xe0] sm:$0xff]
      %v1515 = vld [vmem:[#allocation2 + $0xe8] sm:$0xff]
      %v1516 = vld [vmem:[#allocation2 + $0xf0] sm:$0xff]
      %v1517 = vld [vmem:[#allocation2 + $0xf8] sm:$0xf]
      %v1518 = vpack.c.bf16 %v1514, %v1513
      %v1519 = vpack.c.bf16 %v1516, %v1515
      %v1520 = vpack.c.bf16 %v1517, %v1517
      %v1522 = vsel %vm1013, %v1520, 0
      %1524 = vmatprep.subr.bf16.mxu0 0
      %1525 = vmatpush1.bf16.msra.mxu0 0
      %1526 = vmatprep.subr.bf16.mxu0 0
      %1527 = vmatpush1.bf16.msra.mxu0 0
      %1528 = vmatprep.subr.bf16.mxu0 0
      %1529 = vmatpush1.bf16.msra.mxu0 0
      %1530 = vmatprep.subr.bf16.mxu0 0
      %1531 = vmatpush1.bf16.msra.mxu0 0
      %1532 = vmatprep.subr.bf16.mxu0 0
      %1533 = vmatpush1.bf16.msra.mxu0 0
      %1534 = vmatprep.subr.bf16.mxu0 0
      %1535 = vmatpush1.bf16.msra.mxu0 %v1522
      %1536 = vmatprep.subr.bf16.mxu0 0
      %1537 = vmatpush1.bf16.msra.mxu0 %v1519
      %1538 = vmatprep.subr.bf16.mxu0 0
      %1539 = vmatpush1.bf16.msra.mxu0 %v1518
      %1540 = vmatprep.subr.bf16.mxu0 0
      %1541 = vmatpush2.bf16.msra.mxu0 0
      %1542 = vmatprep.subr.bf16.mxu0 0
      %1543 = vmatpush2.bf16.msra.mxu0 0
      %1544 = vmatprep.subr.bf16.mxu0 0
      %1545 = vmatpush2.bf16.msra.mxu0 0
      %1546 = vmatprep.subr.bf16.mxu0 0
      %1547 = vmatpush2.bf16.msra.mxu0 0
      %1548 = vmatprep.subr.bf16.mxu0 0
      %1549 = vmatpush2.bf16.msra.mxu0 0
      %1550 = vmatprep.subr.bf16.mxu0 0
      %1551 = vmatpush2.bf16.msra.mxu0 0
      %1552 = vmatprep.subr.bf16.mxu0 0
      %1553 = vmatpush2.bf16.msra.mxu0 0
      %1554 = vmatprep.subr.bf16.mxu0 0
      %1555 = vmatpush2.bf16.msra.mxu0 0
      %1556 = vmatprep.mubr.bf16.mxu0 0
      %1557 = vmatmul.mubr.bf16.gmra.mxu0 %v1002
      %v1558 = vpop.f32.mrf.mxu0
      %v1559 = vadd.f32 0.0, %v1558
      %v1560 = vpop.f32.mrf.mxu0
      %v1561 = vpop.f32.mrf.mxu0
      %v1562 = vadd.f32 0.0, %v1561
      %v1563 = vpop.f32.mrf.mxu0
      %1564 = vmatprep.mubr.bf16.mxu0 0
      %1565 = vmatmul.mubr.bf16.gmra.mxu0 %v1005
      %v1566 = vpop.f32.mrf.mxu0
      %v1567 = vadd.f32 0.0, %v1566
      %v1568 = vpop.f32.mrf.mxu0
      %v1569 = vpop.f32.mrf.mxu0
      %v1570 = vadd.f32 0.0, %v1569
      %v1571 = vpop.f32.mrf.mxu0
      %1572 = vmatprep.mubr.bf16.mxu0 0
      %1573 = vmatmul.mubr.bf16.gmra.mxu0 %v1008
      %v1574 = vpop.f32.mrf.mxu0
      %v1575 = vadd.f32 0.0, %v1574
      %v1576 = vpop.f32.mrf.mxu0
      %v1577 = vpop.f32.mrf.mxu0
      %v1578 = vadd.f32 0.0, %v1577
      %v1579 = vpop.f32.mrf.mxu0
      %1580 = vmatprep.mubr.bf16.mxu0 0
      %1581 = vmatmul.mubr.bf16.gmra.mxu0 %v1011
      %v1582 = vpop.f32.mrf.mxu0
      %v1583 = vadd.f32 0.0, %v1582
      %v1584 = vpop.f32.mrf.mxu0
      %v1585 = vpop.f32.mrf.mxu0
      %v1586 = vadd.f32 0.0, %v1585
      %v1587 = vpop.f32.mrf.mxu0
      %1588 = vdwg.mxu0
      %1589 = vst [vmem:[#allocation7 + $0x3c] sm:$0xff] %v1559
      %1590 = vst [vmem:[#allocation7 + $0x44] sm:$0x3] %v1562
      %1591 = vst [vmem:[%s1084 + $0x3c] sm:$0xff] %v1567
      %1592 = vst [vmem:[%s1084 + $0x44] sm:$0x3] %v1570
      %1593 = vst [vmem:[%s1087 + $0x3c] sm:$0xff] %v1575
      %1594 = vst [vmem:[%s1087 + $0x44] sm:$0x3] %v1578
      %1595 = vst [vmem:[%s1090 + $0x3c] sm:$0xff] %v1583
      %1596 = vst [vmem:[%s1090 + $0x44] sm:$0x3] %v1586
      %v1597 = vld [vmem:[#allocation2 + $0xfc] sm:$0xff]
      %v1598 = vld [vmem:[#allocation2 + $0x104] sm:$0xff]
      %v1599 = vld [vmem:[#allocation2 + $0x10c] sm:$0xff]
      %v1600 = vld [vmem:[#allocation2 + $0x114] sm:$0xff]
      %v1601 = vld [vmem:[#allocation2 + $0x11c] sm:$0xf]
      %v1602 = vpack.c.bf16 %v1598, %v1597
      %v1603 = vpack.c.bf16 %v1600, %v1599
      %v1604 = vpack.c.bf16 %v1601, %v1601
      %v1606 = vsel %vm1013, %v1604, 0
      %1608 = vmatprep.subr.bf16.mxu0 0
      %1609 = vmatpush1.bf16.msra.mxu0 0
      %1610 = vmatprep.subr.bf16.mxu0 0
      %1611 = vmatpush1.bf16.msra.mxu0 0
      %1612 = vmatprep.subr.bf16.mxu0 0
      %1613 = vmatpush1.bf16.msra.mxu0 0
      %1614 = vmatprep.subr.bf16.mxu0 0
      %1615 = vmatpush1.bf16.msra.mxu0 0
      %1616 = vmatprep.subr.bf16.mxu0 0
      %1617 = vmatpush1.bf16.msra.mxu0 0
      %1618 = vmatprep.subr.bf16.mxu0 0
      %1619 = vmatpush1.bf16.msra.mxu0 %v1606
      %1620 = vmatprep.subr.bf16.mxu0 0
      %1621 = vmatpush1.bf16.msra.mxu0 %v1603
      %1622 = vmatprep.subr.bf16.mxu0 0
      %1623 = vmatpush1.bf16.msra.mxu0 %v1602
      %1624 = vmatprep.subr.bf16.mxu0 0
      %1625 = vmatpush2.bf16.msra.mxu0 0
      %1626 = vmatprep.subr.bf16.mxu0 0
      %1627 = vmatpush2.bf16.msra.mxu0 0
      %1628 = vmatprep.subr.bf16.mxu0 0
      %1629 = vmatpush2.bf16.msra.mxu0 0
      %1630 = vmatprep.subr.bf16.mxu0 0
      %1631 = vmatpush2.bf16.msra.mxu0 0
      %1632 = vmatprep.subr.bf16.mxu0 0
      %1633 = vmatpush2.bf16.msra.mxu0 0
      %1634 = vmatprep.subr.bf16.mxu0 0
      %1635 = vmatpush2.bf16.msra.mxu0 0
      %1636 = vmatprep.subr.bf16.mxu0 0
      %1637 = vmatpush2.bf16.msra.mxu0 0
      %1638 = vmatprep.subr.bf16.mxu0 0
      %1639 = vmatpush2.bf16.msra.mxu0 0
      %1640 = vmatprep.mubr.bf16.mxu0 0
      %1641 = vmatmul.mubr.bf16.gmra.mxu0 %v1002
      %v1642 = vpop.f32.mrf.mxu0
      %v1643 = vadd.f32 0.0, %v1642
      %v1644 = vpop.f32.mrf.mxu0
      %v1645 = vpop.f32.mrf.mxu0
      %v1646 = vadd.f32 0.0, %v1645
      %v1647 = vpop.f32.mrf.mxu0
      %1648 = vmatprep.mubr.bf16.mxu0 0
      %1649 = vmatmul.mubr.bf16.gmra.mxu0 %v1005
      %v1650 = vpop.f32.mrf.mxu0
      %v1651 = vadd.f32 0.0, %v1650
      %v1652 = vpop.f32.mrf.mxu0
      %v1653 = vpop.f32.mrf.mxu0
      %v1654 = vadd.f32 0.0, %v1653
      %v1655 = vpop.f32.mrf.mxu0
      %1656 = vmatprep.mubr.bf16.mxu0 0
      %1657 = vmatmul.mubr.bf16.gmra.mxu0 %v1008
      %v1658 = vpop.f32.mrf.mxu0
      %v1659 = vadd.f32 0.0, %v1658
      %v1660 = vpop.f32.mrf.mxu0
      %v1661 = vpop.f32.mrf.mxu0
      %v1662 = vadd.f32 0.0, %v1661
      %v1663 = vpop.f32.mrf.mxu0
      %1664 = vmatprep.mubr.bf16.mxu0 0
      %1665 = vmatmul.mubr.bf16.gmra.mxu0 %v1011
      %v1666 = vpop.f32.mrf.mxu0
      %v1667 = vadd.f32 0.0, %v1666
      %v1668 = vpop.f32.mrf.mxu0
      %v1669 = vpop.f32.mrf.mxu0
      %v1670 = vadd.f32 0.0, %v1669
      %v1671 = vpop.f32.mrf.mxu0
      %1672 = vdwg.mxu0
      %1673 = vst [vmem:[#allocation7 + $0x46] sm:$0xff] %v1643
      %1674 = vst [vmem:[#allocation7 + $0x4e] sm:$0x3] %v1646
      %1675 = vst [vmem:[%s1084 + $0x46] sm:$0xff] %v1651
      %1676 = vst [vmem:[%s1084 + $0x4e] sm:$0x3] %v1654
      %1677 = vst [vmem:[%s1087 + $0x46] sm:$0xff] %v1659
      %1678 = vst [vmem:[%s1087 + $0x4e] sm:$0x3] %v1662
      %1679 = vst [vmem:[%s1090 + $0x46] sm:$0xff] %v1667
      %1680 = vst [vmem:[%s1090 + $0x4e] sm:$0x3] %v1670
      %v1681 = vld [vmem:[#allocation2 + $0x120] sm:$0xff]
      %v1682 = vld [vmem:[#allocation2 + $0x128] sm:$0xff]
      %v1683 = vld [vmem:[#allocation2 + $0x130] sm:$0xff]
      %v1684 = vld [vmem:[#allocation2 + $0x138] sm:$0xff]
      %v1685 = vld [vmem:[#allocation2 + $0x140] sm:$0xf]
      %v1686 = vpack.c.bf16 %v1682, %v1681
      %v1687 = vpack.c.bf16 %v1684, %v1683
      %v1688 = vpack.c.bf16 %v1685, %v1685
      %v1690 = vsel %vm1013, %v1688, 0
      %1692 = vmatprep.subr.bf16.mxu0 0
      %1693 = vmatpush1.bf16.msra.mxu0 0
      %1694 = vmatprep.subr.bf16.mxu0 0
      %1695 = vmatpush1.bf16.msra.mxu0 0
      %1696 = vmatprep.subr.bf16.mxu0 0
      %1697 = vmatpush1.bf16.msra.mxu0 0
      %1698 = vmatprep.subr.bf16.mxu0 0
      %1699 = vmatpush1.bf16.msra.mxu0 0
      %1700 = vmatprep.subr.bf16.mxu0 0
      %1701 = vmatpush1.bf16.msra.mxu0 0
      %1702 = vmatprep.subr.bf16.mxu0 0
      %1703 = vmatpush1.bf16.msra.mxu0 %v1690
      %1704 = vmatprep.subr.bf16.mxu0 0
      %1705 = vmatpush1.bf16.msra.mxu0 %v1687
      %1706 = vmatprep.subr.bf16.mxu0 0
      %1707 = vmatpush1.bf16.msra.mxu0 %v1686
      %1708 = vmatprep.subr.bf16.mxu0 0
      %1709 = vmatpush2.bf16.msra.mxu0 0
      %1710 = vmatprep.subr.bf16.mxu0 0
      %1711 = vmatpush2.bf16.msra.mxu0 0
      %1712 = vmatprep.subr.bf16.mxu0 0
      %1713 = vmatpush2.bf16.msra.mxu0 0
      %1714 = vmatprep.subr.bf16.mxu0 0
      %1715 = vmatpush2.bf16.msra.mxu0 0
      %1716 = vmatprep.subr.bf16.mxu0 0
      %1717 = vmatpush2.bf16.msra.mxu0 0
      %1718 = vmatprep.subr.bf16.mxu0 0
      %1719 = vmatpush2.bf16.msra.mxu0 0
      %1720 = vmatprep.subr.bf16.mxu0 0
      %1721 = vmatpush2.bf16.msra.mxu0 0
      %1722 = vmatprep.subr.bf16.mxu0 0
      %1723 = vmatpush2.bf16.msra.mxu0 0
      %1724 = vmatprep.mubr.bf16.mxu0 0
      %1725 = vmatmul.mubr.bf16.gmra.mxu0 %v1002
      %v1726 = vpop.f32.mrf.mxu0
      %v1727 = vadd.f32 0.0, %v1726
      %v1728 = vpop.f32.mrf.mxu0
      %v1729 = vpop.f32.mrf.mxu0
      %v1730 = vadd.f32 0.0, %v1729
      %v1731 = vpop.f32.mrf.mxu0
      %1732 = vmatprep.mubr.bf16.mxu0 0
      %1733 = vmatmul.mubr.bf16.gmra.mxu0 %v1005
      %v1734 = vpop.f32.mrf.mxu0
      %v1735 = vadd.f32 0.0, %v1734
      %v1736 = vpop.f32.mrf.mxu0
      %v1737 = vpop.f32.mrf.mxu0
      %v1738 = vadd.f32 0.0, %v1737
      %v1739 = vpop.f32.mrf.mxu0
      %1740 = vmatprep.mubr.bf16.mxu0 0
      %1741 = vmatmul.mubr.bf16.gmra.mxu0 %v1008
      %v1742 = vpop.f32.mrf.mxu0
      %v1743 = vadd.f32 0.0, %v1742
      %v1744 = vpop.f32.mrf.mxu0
      %v1745 = vpop.f32.mrf.mxu0
      %v1746 = vadd.f32 0.0, %v1745
      %v1747 = vpop.f32.mrf.mxu0
      %1748 = vmatprep.mubr.bf16.mxu0 0
      %1749 = vmatmul.mubr.bf16.gmra.mxu0 %v1011
      %v1750 = vpop.f32.mrf.mxu0
      %v1751 = vadd.f32 0.0, %v1750
      %v1752 = vpop.f32.mrf.mxu0
      %v1753 = vpop.f32.mrf.mxu0
      %v1754 = vadd.f32 0.0, %v1753
      %v1755 = vpop.f32.mrf.mxu0
      %1756 = vdwg.mxu0
      %1757 = vst [vmem:[#allocation7 + $0x50] sm:$0xff] %v1727
      %1758 = vst [vmem:[#allocation7 + $0x58] sm:$0x3] %v1730
      %1759 = vst [vmem:[%s1084 + $0x50] sm:$0xff] %v1735
      %1760 = vst [vmem:[%s1084 + $0x58] sm:$0x3] %v1738
      %1761 = vst [vmem:[%s1087 + $0x50] sm:$0xff] %v1743
      %1762 = vst [vmem:[%s1087 + $0x58] sm:$0x3] %v1746
      %1763 = vst [vmem:[%s1090 + $0x50] sm:$0xff] %v1751
      %1764 = vst [vmem:[%s1090 + $0x58] sm:$0x3] %v1754
      %v1765 = vld [vmem:[#allocation7] sm:$0xff]
      %v1766 = vld [vmem:[#allocation7 + $0x8] sm:$0xff]
      %v1767 = vld [vmem:[#allocation7 + $0x10] sm:$0xff]
      %v1768 = vld [vmem:[#allocation7 + $0x18] sm:$0xff]
      %v1769 = vld [vmem:[#allocation7 + $0x20] sm:$0xff]
      %v1770 = vld [vmem:[#allocation7 + $0x28] sm:$0xff]
      %v1771 = vld [vmem:[#allocation7 + $0x30] sm:$0xff]
      %v1772 = vld [vmem:[#allocation7 + $0x38] sm:$0xff]
      %v1773 = vld [vmem:[#allocation7 + $0x40] sm:$0xff]
      %v1774 = vld [vmem:[#allocation7 + $0x48] sm:$0x3f]
      %v1775 = vpack.c.bf16 %v1766, %v1765
      %v1776 = vpack.c.bf16 %v1768, %v1767
      %v1777 = vpack.c.bf16 %v1770, %v1769
      %v1778 = vpack.c.bf16 %v1772, %v1771
      %v1779 = vpack.c.bf16 %v1774, %v1773
      %v1780 = vld [vmem:[%s2] sm:$0xf]
      %v1781 = vld [vmem:[%s2 + $0x4] sm:$0xf]
      %v1782 = vld [vmem:[%s2 + $0x8] sm:$0xf]
      %v1783 = vld [vmem:[%s2 + $0xc] sm:$0xf]
      %v1784 = vld [vmem:[%s2 + $0x10] sm:$0xf]
      %v1785 = vld [vmem:[%s2 + $0x14] sm:$0xf]
      %v1786 = vld [vmem:[%s2 + $0x18] sm:$0xf]
      %v1787 = vld [vmem:[%s2 + $0x1c] sm:$0xf]
      %v1788 = vld [vmem:[%s2 + $0x20] sm:$0xf]
      %v1789 = vld [vmem:[%s2 + $0x24] sm:$0xf]
      %v1790 = vld [vmem:[%s2 + $0x28] sm:$0xf]
      %v1791 = vld [vmem:[%s2 + $0x2c] sm:$0xf]
      %v1792 = vld [vmem:[%s2 + $0x30] sm:$0xf]
      %v1793 = vld [vmem:[%s2 + $0x34] sm:$0xf]
      %v1794 = vld [vmem:[%s2 + $0x38] sm:$0xf]
      %v1795 = vld [vmem:[%s2 + $0x3c] sm:$0xf]
      %v1796 = vld [vmem:[%s1084] sm:$0xff]
      %v1797 = vld [vmem:[%s1084 + $0x8] sm:$0xff]
      %v1798 = vld [vmem:[%s1084 + $0x10] sm:$0xff]
      %v1799 = vld [vmem:[%s1084 + $0x18] sm:$0xff]
      %v1800 = vld [vmem:[%s1084 + $0x20] sm:$0xff]
      %v1801 = vld [vmem:[%s1084 + $0x28] sm:$0xff]
      %v1802 = vld [vmem:[%s1084 + $0x30] sm:$0xff]
      %v1803 = vld [vmem:[%s1084 + $0x38] sm:$0xff]
      %v1804 = vld [vmem:[%s1084 + $0x40] sm:$0xff]
      %v1805 = vld [vmem:[%s1084 + $0x48] sm:$0x3f]
      %v1806 = vpack.c.bf16 %v1797, %v1796
      %v1807 = vpack.c.bf16 %v1799, %v1798
      %v1808 = vpack.c.bf16 %v1801, %v1800
      %v1809 = vpack.c.bf16 %v1803, %v1802
      %v1810 = vpack.c.bf16 %v1805, %v1804
      %s1811 = scalar_lea.vmem %s2, 64
      %v1812 = vld [vmem:[%s1811] sm:$0xf]
      %v1813 = vld [vmem:[%s1811 + $0x4] sm:$0xf]
      %v1814 = vld [vmem:[%s1811 + $0x8] sm:$0xf]
      %v1815 = vld [vmem:[%s1811 + $0xc] sm:$0xf]
      %v1816 = vld [vmem:[%s1811 + $0x10] sm:$0xf]
      %v1817 = vld [vmem:[%s1811 + $0x14] sm:$0xf]
      %v1818 = vld [vmem:[%s1811 + $0x18] sm:$0xf]
      %v1819 = vld [vmem:[%s1811 + $0x1c] sm:$0xf]
      %v1820 = vld [vmem:[%s1811 + $0x20] sm:$0xf]
      %v1821 = vld [vmem:[%s1811 + $0x24] sm:$0xf]
      %v1822 = vld [vmem:[%s1811 + $0x28] sm:$0xf]
      %v1823 = vld [vmem:[%s1811 + $0x2c] sm:$0xf]
      %v1824 = vld [vmem:[%s1811 + $0x30] sm:$0xf]
      %v1825 = vld [vmem:[%s1811 + $0x34] sm:$0xf]
      %v1826 = vld [vmem:[%s1811 + $0x38] sm:$0xf]
      %v1827 = vld [vmem:[%s1811 + $0x3c] sm:$0xf]
      %v1844 = vunpack.c.l.b16 %v1812
      %v1845 = vunpack.c.l.b16 %v1813
      %v1846 = vunpack.c.l.b16 %v1814
      %v1847 = vunpack.c.l.b16 %v1815
      %v1848 = vunpack.c.l.b16 %v1816
      %v1849 = vunpack.c.l.b16 %v1817
      %v1850 = vunpack.c.l.b16 %v1818
      %v1851 = vunpack.c.l.b16 %v1819
      %v1852 = vunpack.c.l.b16 %v1820
      %v1853 = vunpack.c.l.b16 %v1821
      %v1854 = vunpack.c.l.b16 %v1822
      %v1855 = vunpack.c.l.b16 %v1823
      %v1856 = vunpack.c.l.b16 %v1824
      %v1857 = vunpack.c.l.b16 %v1825
      %v1858 = vunpack.c.l.b16 %v1826
      %v1859 = vunpack.c.l.b16 %v1827
      %v1860 = vpack.c.b16 %v1845, %v1844
      %v1861 = vpack.c.b16 %v1847, %v1846
      %v1862 = vpack.c.b16 %v1849, %v1848
      %v1863 = vpack.c.b16 %v1851, %v1850
      %v1864 = vpack.c.b16 %v1853, %v1852
      %v1865 = vpack.c.b16 %v1855, %v1854
      %v1866 = vpack.c.b16 %v1857, %v1856
      %v1867 = vpack.c.b16 %v1859, %v1858
      %1876 = vmatprep.subr.bf16.mxu0 0
      %1877 = vmatpush1.bf16.msra.mxu0 %v1867
      %1878 = vmatprep.subr.bf16.mxu0 0
      %1879 = vmatpush1.bf16.msra.mxu0 %v1866
      %1880 = vmatprep.subr.bf16.mxu0 0
      %1881 = vmatpush1.bf16.msra.mxu0 %v1865
      %1882 = vmatprep.subr.bf16.mxu0 0
      %1883 = vmatpush1.bf16.msra.mxu0 %v1864
      %1884 = vmatprep.subr.bf16.mxu0 0
      %1885 = vmatpush1.bf16.msra.mxu0 %v1863
      %1886 = vmatprep.subr.bf16.mxu0 0
      %1887 = vmatpush1.bf16.msra.mxu0 %v1862
      %1888 = vmatprep.subr.bf16.mxu0 0
      %1889 = vmatpush1.bf16.msra.mxu0 %v1861
      %1890 = vmatprep.subr.bf16.mxu0 0
      %1891 = vmatpush1.bf16.msra.mxu0 %v1860
      %1892 = vmatprep.subr.bf16.mxu0 0
      %1893 = vmatpush2.bf16.msra.mxu0 0
      %1894 = vmatprep.subr.bf16.mxu0 0
      %1895 = vmatpush2.bf16.msra.mxu0 0
      %1896 = vmatprep.subr.bf16.mxu0 0
      %1897 = vmatpush2.bf16.msra.mxu0 0
      %1898 = vmatprep.subr.bf16.mxu0 0
      %1899 = vmatpush2.bf16.msra.mxu0 0
      %1900 = vmatprep.subr.bf16.mxu0 0
      %1901 = vmatpush2.bf16.msra.mxu0 0
      %1902 = vmatprep.subr.bf16.mxu0 0
      %1903 = vmatpush2.bf16.msra.mxu0 0
      %1904 = vmatprep.subr.bf16.mxu0 0
      %1905 = vmatpush2.bf16.msra.mxu0 0
      %1906 = vmatprep.subr.bf16.mxu0 0
      %1907 = vmatpush2.bf16.msra.mxu0 0
      %1908 = vmatprep.mubr.bf16.mxu0 0
      %1909 = vmatmul.mubr.bf16.gmra.mxu0 %v1806
      %v1910 = vpop.f32.mrf.mxu0
      %v1911 = vadd.f32 0.0, %v1910
      %v1912 = vpop.f32.mrf.mxu0
      %v1913 = vpop.f32.mrf.mxu0
      %v1914 = vadd.f32 0.0, %v1913
      %v1915 = vpop.f32.mrf.mxu0
      %1916 = vmatprep.mubr.bf16.mxu0 0
      %1917 = vmatmul.mubr.bf16.gmra.mxu0 %v1807
      %v1918 = vpop.f32.mrf.mxu0
      %v1919 = vadd.f32 0.0, %v1918
      %v1920 = vpop.f32.mrf.mxu0
      %v1921 = vpop.f32.mrf.mxu0
      %v1922 = vadd.f32 0.0, %v1921
      %v1923 = vpop.f32.mrf.mxu0
      %1924 = vmatprep.mubr.bf16.mxu0 0
      %1925 = vmatmul.mubr.bf16.gmra.mxu0 %v1808
      %v1926 = vpop.f32.mrf.mxu0
      %v1927 = vadd.f32 0.0, %v1926
      %v1928 = vpop.f32.mrf.mxu0
      %v1929 = vpop.f32.mrf.mxu0
      %v1930 = vadd.f32 0.0, %v1929
      %v1931 = vpop.f32.mrf.mxu0
      %1932 = vmatprep.mubr.bf16.mxu0 0
      %1933 = vmatmul.mubr.bf16.gmra.mxu0 %v1809
      %v1934 = vpop.f32.mrf.mxu0
      %v1935 = vadd.f32 0.0, %v1934
      %v1936 = vpop.f32.mrf.mxu0
      %v1937 = vpop.f32.mrf.mxu0
      %v1938 = vadd.f32 0.0, %v1937
      %v1939 = vpop.f32.mrf.mxu0
      %1940 = vmatprep.mubr.bf16.mxu0 0
      %1941 = vmatmul.mubr.bf16.gmra.mxu0 %v1810
      %v1942 = vpop.f32.mrf.mxu0
      %v1943 = vadd.f32 0.0, %v1942
      %v1944 = vpop.f32.mrf.mxu0
      %v1945 = vpop.f32.mrf.mxu0
      %v1946 = vadd.f32 0.0, %v1945
      %v1947 = vpop.f32.mrf.mxu0
      %1948 = vdwg.mxu0
      %v1965 = vunpack.c.l.b16 %v1780
      %v1966 = vunpack.c.l.b16 %v1781
      %v1967 = vunpack.c.l.b16 %v1782
      %v1968 = vunpack.c.l.b16 %v1783
      %v1969 = vunpack.c.l.b16 %v1784
      %v1970 = vunpack.c.l.b16 %v1785
      %v1971 = vunpack.c.l.b16 %v1786
      %v1972 = vunpack.c.l.b16 %v1787
      %v1973 = vunpack.c.l.b16 %v1788
      %v1974 = vunpack.c.l.b16 %v1789
      %v1975 = vunpack.c.l.b16 %v1790
      %v1976 = vunpack.c.l.b16 %v1791
      %v1977 = vunpack.c.l.b16 %v1792
      %v1978 = vunpack.c.l.b16 %v1793
      %v1979 = vunpack.c.l.b16 %v1794
      %v1980 = vunpack.c.l.b16 %v1795
      %v1981 = vpack.c.b16 %v1966, %v1965
      %v1982 = vpack.c.b16 %v1968, %v1967
      %v1983 = vpack.c.b16 %v1970, %v1969
      %v1984 = vpack.c.b16 %v1972, %v1971
      %v1985 = vpack.c.b16 %v1974, %v1973
      %v1986 = vpack.c.b16 %v1976, %v1975
      %v1987 = vpack.c.b16 %v1978, %v1977
      %v1988 = vpack.c.b16 %v1980, %v1979
      %1997 = vmatprep.subr.bf16.mxu0 0
      %1998 = vmatpush1.bf16.msra.mxu0 %v1988
      %1999 = vmatprep.subr.bf16.mxu0 0
      %2000 = vmatpush1.bf16.msra.mxu0 %v1987
      %2001 = vmatprep.subr.bf16.mxu0 0
      %2002 = vmatpush1.bf16.msra.mxu0 %v1986
      %2003 = vmatprep.subr.bf16.mxu0 0
      %2004 = vmatpush1.bf16.msra.mxu0 %v1985
      %2005 = vmatprep.subr.bf16.mxu0 0
      %2006 = vmatpush1.bf16.msra.mxu0 %v1984
      %2007 = vmatprep.subr.bf16.mxu0 0
      %2008 = vmatpush1.bf16.msra.mxu0 %v1983
      %2009 = vmatprep.subr.bf16.mxu0 0
      %2010 = vmatpush1.bf16.msra.mxu0 %v1982
      %2011 = vmatprep.subr.bf16.mxu0 0
      %2012 = vmatpush1.bf16.msra.mxu0 %v1981
      %2013 = vmatprep.subr.bf16.mxu0 0
      %2014 = vmatpush2.bf16.msra.mxu0 0
      %2015 = vmatprep.subr.bf16.mxu0 0
      %2016 = vmatpush2.bf16.msra.mxu0 0
      %2017 = vmatprep.subr.bf16.mxu0 0
      %2018 = vmatpush2.bf16.msra.mxu0 0
      %2019 = vmatprep.subr.bf16.mxu0 0
      %2020 = vmatpush2.bf16.msra.mxu0 0
      %2021 = vmatprep.subr.bf16.mxu0 0
      %2022 = vmatpush2.bf16.msra.mxu0 0
      %2023 = vmatprep.subr.bf16.mxu0 0
      %2024 = vmatpush2.bf16.msra.mxu0 0
      %2025 = vmatprep.subr.bf16.mxu0 0
      %2026 = vmatpush2.bf16.msra.mxu0 0
      %2027 = vmatprep.subr.bf16.mxu0 0
      %2028 = vmatpush2.bf16.msra.mxu0 0
      %2029 = vmatprep.mubr.bf16.mxu0 0
      %2030 = vmatmul.mubr.bf16.gmra.mxu0 %v1775
      %v2031 = vpop.f32.mrf.mxu0
      %v2032 = vadd.f32 %v1911, %v2031
      %v2033 = vpop.f32.mrf.mxu0
      %v2034 = vpop.f32.mrf.mxu0
      %v2035 = vadd.f32 %v1914, %v2034
      %v2036 = vpop.f32.mrf.mxu0
      %2037 = vmatprep.mubr.bf16.mxu0 0
      %2038 = vmatmul.mubr.bf16.gmra.mxu0 %v1776
      %v2039 = vpop.f32.mrf.mxu0
      %v2040 = vadd.f32 %v1919, %v2039
      %v2041 = vpop.f32.mrf.mxu0
      %v2042 = vpop.f32.mrf.mxu0
      %v2043 = vadd.f32 %v1922, %v2042
      %v2044 = vpop.f32.mrf.mxu0
      %2045 = vmatprep.mubr.bf16.mxu0 0
      %2046 = vmatmul.mubr.bf16.gmra.mxu0 %v1777
      %v2047 = vpop.f32.mrf.mxu0
      %v2048 = vadd.f32 %v1927, %v2047
      %v2049 = vpop.f32.mrf.mxu0
      %v2050 = vpop.f32.mrf.mxu0
      %v2051 = vadd.f32 %v1930, %v2050
      %v2052 = vpop.f32.mrf.mxu0
      %2053 = vmatprep.mubr.bf16.mxu0 0
      %2054 = vmatmul.mubr.bf16.gmra.mxu0 %v1778
      %v2055 = vpop.f32.mrf.mxu0
      %v2056 = vadd.f32 %v1935, %v2055
      %v2057 = vpop.f32.mrf.mxu0
      %v2058 = vpop.f32.mrf.mxu0
      %v2059 = vadd.f32 %v1938, %v2058
      %v2060 = vpop.f32.mrf.mxu0
      %2061 = vmatprep.mubr.bf16.mxu0 0
      %2062 = vmatmul.mubr.bf16.gmra.mxu0 %v1779
      %v2063 = vpop.f32.mrf.mxu0
      %v2064 = vadd.f32 %v1943, %v2063
      %v2065 = vpop.f32.mrf.mxu0
      %v2066 = vpop.f32.mrf.mxu0
      %v2067 = vadd.f32 %v1946, %v2066
      %v2068 = vpop.f32.mrf.mxu0
      %2069 = vdwg.mxu0
      %v2070 = vld [vmem:[#allocation7 + $0x1] sm:$0xff]
      %v2071 = vld [vmem:[#allocation7 + $0x9] sm:$0xff]
      %v2072 = vld [vmem:[#allocation7 + $0x11] sm:$0xff]
      %v2073 = vld [vmem:[#allocation7 + $0x19] sm:$0xff]
      %v2074 = vld [vmem:[#allocation7 + $0x21] sm:$0xff]
      %v2075 = vld [vmem:[#allocation7 + $0x29] sm:$0xff]
      %v2076 = vld [vmem:[#allocation7 + $0x31] sm:$0xff]
      %v2077 = vld [vmem:[#allocation7 + $0x39] sm:$0xff]
      %v2078 = vld [vmem:[#allocation7 + $0x41] sm:$0xff]
      %v2079 = vld [vmem:[#allocation7 + $0x49] sm:$0x3f]
      %v2080 = vpack.c.bf16 %v2071, %v2070
      %v2081 = vpack.c.bf16 %v2073, %v2072
      %v2082 = vpack.c.bf16 %v2075, %v2074
      %v2083 = vpack.c.bf16 %v2077, %v2076
      %v2084 = vpack.c.bf16 %v2079, %v2078
      %s2085 = scalar_lea.vmem %s2, 128
      %v2086 = vld [vmem:[%s2085] sm:$0xf]
      %v2087 = vld [vmem:[%s2085 + $0x4] sm:$0xf]
      %v2088 = vld [vmem:[%s2085 + $0x8] sm:$0xf]
      %v2089 = vld [vmem:[%s2085 + $0xc] sm:$0xf]
      %v2090 = vld [vmem:[%s2085 + $0x10] sm:$0xf]
      %v2091 = vld [vmem:[%s2085 + $0x14] sm:$0xf]
      %v2092 = vld [vmem:[%s2085 + $0x18] sm:$0xf]
      %v2093 = vld [vmem:[%s2085 + $0x1c] sm:$0xf]
      %v2094 = vld [vmem:[%s2085 + $0x20] sm:$0xf]
      %v2095 = vld [vmem:[%s2085 + $0x24] sm:$0xf]
      %v2096 = vld [vmem:[%s2085 + $0x28] sm:$0xf]
      %v2097 = vld [vmem:[%s2085 + $0x2c] sm:$0xf]
      %v2098 = vld [vmem:[%s2085 + $0x30] sm:$0xf]
      %v2099 = vld [vmem:[%s2085 + $0x34] sm:$0xf]
      %v2100 = vld [vmem:[%s2085 + $0x38] sm:$0xf]
      %v2101 = vld [vmem:[%s2085 + $0x3c] sm:$0xf]
      %v2118 = vunpack.c.l.b16 %v2086
      %v2119 = vunpack.c.l.b16 %v2087
      %v2120 = vunpack.c.l.b16 %v2088
      %v2121 = vunpack.c.l.b16 %v2089
      %v2122 = vunpack.c.l.b16 %v2090
      %v2123 = vunpack.c.l.b16 %v2091
      %v2124 = vunpack.c.l.b16 %v2092
      %v2125 = vunpack.c.l.b16 %v2093
      %v2126 = vunpack.c.l.b16 %v2094
      %v2127 = vunpack.c.l.b16 %v2095
      %v2128 = vunpack.c.l.b16 %v2096
      %v2129 = vunpack.c.l.b16 %v2097
      %v2130 = vunpack.c.l.b16 %v2098
      %v2131 = vunpack.c.l.b16 %v2099
      %v2132 = vunpack.c.l.b16 %v2100
      %v2133 = vunpack.c.l.b16 %v2101
      %v2134 = vpack.c.b16 %v2119, %v2118
      %v2135 = vpack.c.b16 %v2121, %v2120
      %v2136 = vpack.c.b16 %v2123, %v2122
      %v2137 = vpack.c.b16 %v2125, %v2124
      %v2138 = vpack.c.b16 %v2127, %v2126
      %v2139 = vpack.c.b16 %v2129, %v2128
      %v2140 = vpack.c.b16 %v2131, %v2130
      %v2141 = vpack.c.b16 %v2133, %v2132
      %2150 = vmatprep.subr.bf16.mxu0 0
      %2151 = vmatpush1.bf16.msra.mxu0 %v2141
      %2152 = vmatprep.subr.bf16.mxu0 0
      %2153 = vmatpush1.bf16.msra.mxu0 %v2140
      %2154 = vmatprep.subr.bf16.mxu0 0
      %2155 = vmatpush1.bf16.msra.mxu0 %v2139
      %2156 = vmatprep.subr.bf16.mxu0 0
      %2157 = vmatpush1.bf16.msra.mxu0 %v2138
      %2158 = vmatprep.subr.bf16.mxu0 0
      %2159 = vmatpush1.bf16.msra.mxu0 %v2137
      %2160 = vmatprep.subr.bf16.mxu0 0
      %2161 = vmatpush1.bf16.msra.mxu0 %v2136
      %2162 = vmatprep.subr.bf16.mxu0 0
      %2163 = vmatpush1.bf16.msra.mxu0 %v2135
      %2164 = vmatprep.subr.bf16.mxu0 0
      %2165 = vmatpush1.bf16.msra.mxu0 %v2134
      %2166 = vmatprep.subr.bf16.mxu0 0
      %2167 = vmatpush2.bf16.msra.mxu0 0
      %2168 = vmatprep.subr.bf16.mxu0 0
      %2169 = vmatpush2.bf16.msra.mxu0 0
      %2170 = vmatprep.subr.bf16.mxu0 0
      %2171 = vmatpush2.bf16.msra.mxu0 0
      %2172 = vmatprep.subr.bf16.mxu0 0
      %2173 = vmatpush2.bf16.msra.mxu0 0
      %2174 = vmatprep.subr.bf16.mxu0 0
      %2175 = vmatpush2.bf16.msra.mxu0 0
      %2176 = vmatprep.subr.bf16.mxu0 0
      %2177 = vmatpush2.bf16.msra.mxu0 0
      %2178 = vmatprep.subr.bf16.mxu0 0
      %2179 = vmatpush2.bf16.msra.mxu0 0
      %2180 = vmatprep.subr.bf16.mxu0 0
      %2181 = vmatpush2.bf16.msra.mxu0 0
      %2182 = vmatprep.mubr.bf16.mxu0 0
      %2183 = vmatmul.mubr.bf16.gmra.mxu0 %v2080
      %v2184 = vpop.f32.mrf.mxu0
      %v2185 = vadd.f32 0.0, %v2184
      %v2186 = vpop.f32.mrf.mxu0
      %v2187 = vpop.f32.mrf.mxu0
      %v2188 = vadd.f32 0.0, %v2187
      %v2189 = vpop.f32.mrf.mxu0
      %2190 = vmatprep.mubr.bf16.mxu0 0
      %2191 = vmatmul.mubr.bf16.gmra.mxu0 %v2081
      %v2192 = vpop.f32.mrf.mxu0
      %v2193 = vadd.f32 0.0, %v2192
      %v2194 = vpop.f32.mrf.mxu0
      %v2195 = vpop.f32.mrf.mxu0
      %v2196 = vadd.f32 0.0, %v2195
      %v2197 = vpop.f32.mrf.mxu0
      %2198 = vmatprep.mubr.bf16.mxu0 0
      %2199 = vmatmul.mubr.bf16.gmra.mxu0 %v2082
      %v2200 = vpop.f32.mrf.mxu0
      %v2201 = vadd.f32 0.0, %v2200
      %v2202 = vpop.f32.mrf.mxu0
      %v2203 = vpop.f32.mrf.mxu0
      %v2204 = vadd.f32 0.0, %v2203
      %v2205 = vpop.f32.mrf.mxu0
      %2206 = vmatprep.mubr.bf16.mxu0 0
      %2207 = vmatmul.mubr.bf16.gmra.mxu0 %v2083
      %v2208 = vpop.f32.mrf.mxu0
      %v2209 = vadd.f32 0.0, %v2208
      %v2210 = vpop.f32.mrf.mxu0
      %v2211 = vpop.f32.mrf.mxu0
      %v2212 = vadd.f32 0.0, %v2211
      %v2213 = vpop.f32.mrf.mxu0
      %2214 = vmatprep.mubr.bf16.mxu0 0
      %2215 = vmatmul.mubr.bf16.gmra.mxu0 %v2084
      %v2216 = vpop.f32.mrf.mxu0
      %v2217 = vadd.f32 0.0, %v2216
      %v2218 = vpop.f32.mrf.mxu0
      %v2219 = vpop.f32.mrf.mxu0
      %v2220 = vadd.f32 0.0, %v2219
      %v2221 = vpop.f32.mrf.mxu0
      %2222 = vdwg.mxu0
      %v2223 = vadd.f32 %v2032, %v2185
      %v2224 = vadd.f32 %v2035, %v2188
      %v2225 = vadd.f32 %v2040, %v2193
      %v2226 = vadd.f32 %v2043, %v2196
      %v2227 = vadd.f32 %v2048, %v2201
      %v2228 = vadd.f32 %v2051, %v2204
      %v2229 = vadd.f32 %v2056, %v2209
      %v2230 = vadd.f32 %v2059, %v2212
      %v2231 = vadd.f32 %v2064, %v2217
      %v2232 = vadd.f32 %v2067, %v2220
      %v2233 = vld [vmem:[%s1087] sm:$0xff]
      %v2234 = vld [vmem:[%s1087 + $0x8] sm:$0xff]
      %v2235 = vld [vmem:[%s1087 + $0x10] sm:$0xff]
      %v2236 = vld [vmem:[%s1087 + $0x18] sm:$0xff]
      %v2237 = vld [vmem:[%s1087 + $0x20] sm:$0xff]
      %v2238 = vld [vmem:[%s1087 + $0x28] sm:$0xff]
      %v2239 = vld [vmem:[%s1087 + $0x30] sm:$0xff]
      %v2240 = vld [vmem:[%s1087 + $0x38] sm:$0xff]
      %v2241 = vld [vmem:[%s1087 + $0x40] sm:$0xff]
      %v2242 = vld [vmem:[%s1087 + $0x48] sm:$0x3f]
      %v2243 = vpack.c.bf16 %v2234, %v2233
      %v2244 = vpack.c.bf16 %v2236, %v2235
      %v2245 = vpack.c.bf16 %v2238, %v2237
      %v2246 = vpack.c.bf16 %v2240, %v2239
      %v2247 = vpack.c.bf16 %v2242, %v2241
      %s2248 = scalar_lea.vmem %s2, 192
      %v2249 = vld [vmem:[%s2248] sm:$0xf]
      %v2250 = vld [vmem:[%s2248 + $0x4] sm:$0xf]
      %v2251 = vld [vmem:[%s2248 + $0x8] sm:$0xf]
      %v2252 = vld [vmem:[%s2248 + $0xc] sm:$0xf]
      %v2253 = vld [vmem:[%s2248 + $0x10] sm:$0xf]
      %v2254 = vld [vmem:[%s2248 + $0x14] sm:$0xf]
      %v2255 = vld [vmem:[%s2248 + $0x18] sm:$0xf]
      %v2256 = vld [vmem:[%s2248 + $0x1c] sm:$0xf]
      %v2257 = vld [vmem:[%s2248 + $0x20] sm:$0xf]
      %v2258 = vld [vmem:[%s2248 + $0x24] sm:$0xf]
      %v2259 = vld [vmem:[%s2248 + $0x28] sm:$0xf]
      %v2260 = vld [vmem:[%s2248 + $0x2c] sm:$0xf]
      %v2261 = vld [vmem:[%s2248 + $0x30] sm:$0xf]
      %v2262 = vld [vmem:[%s2248 + $0x34] sm:$0xf]
      %v2263 = vld [vmem:[%s2248 + $0x38] sm:$0xf]
      %v2264 = vld [vmem:[%s2248 + $0x3c] sm:$0xf]
      %v2281 = vunpack.c.l.b16 %v2249
      %v2282 = vunpack.c.l.b16 %v2250
      %v2283 = vunpack.c.l.b16 %v2251
      %v2284 = vunpack.c.l.b16 %v2252
      %v2285 = vunpack.c.l.b16 %v2253
      %v2286 = vunpack.c.l.b16 %v2254
      %v2287 = vunpack.c.l.b16 %v2255
      %v2288 = vunpack.c.l.b16 %v2256
      %v2289 = vunpack.c.l.b16 %v2257
      %v2290 = vunpack.c.l.b16 %v2258
      %v2291 = vunpack.c.l.b16 %v2259
      %v2292 = vunpack.c.l.b16 %v2260
      %v2293 = vunpack.c.l.b16 %v2261
      %v2294 = vunpack.c.l.b16 %v2262
      %v2295 = vunpack.c.l.b16 %v2263
      %v2296 = vunpack.c.l.b16 %v2264
      %v2297 = vpack.c.b16 %v2282, %v2281
      %v2298 = vpack.c.b16 %v2284, %v2283
      %v2299 = vpack.c.b16 %v2286, %v2285
      %v2300 = vpack.c.b16 %v2288, %v2287
      %v2301 = vpack.c.b16 %v2290, %v2289
      %v2302 = vpack.c.b16 %v2292, %v2291
      %v2303 = vpack.c.b16 %v2294, %v2293
      %v2304 = vpack.c.b16 %v2296, %v2295
      %2313 = vmatprep.subr.bf16.mxu0 0
      %2314 = vmatpush1.bf16.msra.mxu0 %v2304
      %2315 = vmatprep.subr.bf16.mxu0 0
      %2316 = vmatpush1.bf16.msra.mxu0 %v2303
      %2317 = vmatprep.subr.bf16.mxu0 0
      %2318 = vmatpush1.bf16.msra.mxu0 %v2302
      %2319 = vmatprep.subr.bf16.mxu0 0
      %2320 = vmatpush1.bf16.msra.mxu0 %v2301
      %2321 = vmatprep.subr.bf16.mxu0 0
      %2322 = vmatpush1.bf16.msra.mxu0 %v2300
      %2323 = vmatprep.subr.bf16.mxu0 0
      %2324 = vmatpush1.bf16.msra.mxu0 %v2299
      %2325 = vmatprep.subr.bf16.mxu0 0
      %2326 = vmatpush1.bf16.msra.mxu0 %v2298
      %2327 = vmatprep.subr.bf16.mxu0 0
      %2328 = vmatpush1.bf16.msra.mxu0 %v2297
      %2329 = vmatprep.subr.bf16.mxu0 0
      %2330 = vmatpush2.bf16.msra.mxu0 0
      %2331 = vmatprep.subr.bf16.mxu0 0
      %2332 = vmatpush2.bf16.msra.mxu0 0
      %2333 = vmatprep.subr.bf16.mxu0 0
      %2334 = vmatpush2.bf16.msra.mxu0 0
      %2335 = vmatprep.subr.bf16.mxu0 0
      %2336 = vmatpush2.bf16.msra.mxu0 0
      %2337 = vmatprep.subr.bf16.mxu0 0
      %2338 = vmatpush2.bf16.msra.mxu0 0
      %2339 = vmatprep.subr.bf16.mxu0 0
      %2340 = vmatpush2.bf16.msra.mxu0 0
      %2341 = vmatprep.subr.bf16.mxu0 0
      %2342 = vmatpush2.bf16.msra.mxu0 0
      %2343 = vmatprep.subr.bf16.mxu0 0
      %2344 = vmatpush2.bf16.msra.mxu0 0
      %2345 = vmatprep.mubr.bf16.mxu0 0
      %2346 = vmatmul.mubr.bf16.gmra.mxu0 %v2243
      %v2347 = vpop.f32.mrf.mxu0
      %v2348 = vadd.f32 0.0, %v2347
      %v2349 = vpop.f32.mrf.mxu0
      %v2350 = vpop.f32.mrf.mxu0
      %v2351 = vadd.f32 0.0, %v2350
      %v2352 = vpop.f32.mrf.mxu0
      %2353 = vmatprep.mubr.bf16.mxu0 0
      %2354 = vmatmul.mubr.bf16.gmra.mxu0 %v2244
      %v2355 = vpop.f32.mrf.mxu0
      %v2356 = vadd.f32 0.0, %v2355
      %v2357 = vpop.f32.mrf.mxu0
      %v2358 = vpop.f32.mrf.mxu0
      %v2359 = vadd.f32 0.0, %v2358
      %v2360 = vpop.f32.mrf.mxu0
      %2361 = vmatprep.mubr.bf16.mxu0 0
      %2362 = vmatmul.mubr.bf16.gmra.mxu0 %v2245
      %v2363 = vpop.f32.mrf.mxu0
      %v2364 = vadd.f32 0.0, %v2363
      %v2365 = vpop.f32.mrf.mxu0
      %v2366 = vpop.f32.mrf.mxu0
      %v2367 = vadd.f32 0.0, %v2366
      %v2368 = vpop.f32.mrf.mxu0
      %2369 = vmatprep.mubr.bf16.mxu0 0
      %2370 = vmatmul.mubr.bf16.gmra.mxu0 %v2246
      %v2371 = vpop.f32.mrf.mxu0
      %v2372 = vadd.f32 0.0, %v2371
      %v2373 = vpop.f32.mrf.mxu0
      %v2374 = vpop.f32.mrf.mxu0
      %v2375 = vadd.f32 0.0, %v2374
      %v2376 = vpop.f32.mrf.mxu0
      %2377 = vmatprep.mubr.bf16.mxu0 0
      %2378 = vmatmul.mubr.bf16.gmra.mxu0 %v2247
      %v2379 = vpop.f32.mrf.mxu0
      %v2380 = vadd.f32 0.0, %v2379
      %v2381 = vpop.f32.mrf.mxu0
      %v2382 = vpop.f32.mrf.mxu0
      %v2383 = vadd.f32 0.0, %v2382
      %v2384 = vpop.f32.mrf.mxu0
      %2385 = vdwg.mxu0
      %v2386 = vadd.f32 %v2223, %v2348
      %v2387 = vadd.f32 %v2224, %v2351
      %v2388 = vadd.f32 %v2225, %v2356
      %v2389 = vadd.f32 %v2226, %v2359
      %v2390 = vadd.f32 %v2227, %v2364
      %v2391 = vadd.f32 %v2228, %v2367
      %v2392 = vadd.f32 %v2229, %v2372
      %v2393 = vadd.f32 %v2230, %v2375
      %v2394 = vadd.f32 %v2231, %v2380
      %v2395 = vadd.f32 %v2232, %v2383
      %v2396 = vld [vmem:[%s1090] sm:$0xff]
      %v2397 = vld [vmem:[%s1090 + $0x8] sm:$0xff]
      %v2398 = vld [vmem:[%s1090 + $0x10] sm:$0xff]
      %v2399 = vld [vmem:[%s1090 + $0x18] sm:$0xff]
      %v2400 = vld [vmem:[%s1090 + $0x20] sm:$0xff]
      %v2401 = vld [vmem:[%s1090 + $0x28] sm:$0xff]
      %v2402 = vld [vmem:[%s1090 + $0x30] sm:$0xff]
      %v2403 = vld [vmem:[%s1090 + $0x38] sm:$0xff]
      %v2404 = vld [vmem:[%s1090 + $0x40] sm:$0xff]
      %v2405 = vld [vmem:[%s1090 + $0x48] sm:$0x3f]
      %v2406 = vpack.c.bf16 %v2397, %v2396
      %v2407 = vpack.c.bf16 %v2399, %v2398
      %v2408 = vpack.c.bf16 %v2401, %v2400
      %v2409 = vpack.c.bf16 %v2403, %v2402
      %v2410 = vpack.c.bf16 %v2405, %v2404
      %s2411 = scalar_lea.vmem %s2, 256
      %v2412 = vld [vmem:[%s2411] sm:$0xf]
      %v2413 = vld [vmem:[%s2411 + $0x4] sm:$0xf]
      %v2414 = vld [vmem:[%s2411 + $0x8] sm:$0xf]
      %v2415 = vld [vmem:[%s2411 + $0xc] sm:$0xf]
      %v2416 = vld [vmem:[%s2411 + $0x10] sm:$0xf]
      %v2417 = vld [vmem:[%s2411 + $0x14] sm:$0xf]
      %v2418 = vld [vmem:[%s2411 + $0x18] sm:$0xf]
      %v2419 = vld [vmem:[%s2411 + $0x1c] sm:$0xf]
      %v2420 = vld [vmem:[%s2411 + $0x20] sm:$0xf]
      %v2421 = vld [vmem:[%s2411 + $0x24] sm:$0xf]
      %v2422 = vld [vmem:[%s2411 + $0x28] sm:$0xf]
      %v2423 = vld [vmem:[%s2411 + $0x2c] sm:$0xf]
      %v2424 = vld [vmem:[%s2411 + $0x30] sm:$0xf]
      %v2425 = vld [vmem:[%s2411 + $0x34] sm:$0xf]
      %v2426 = vld [vmem:[%s2411 + $0x38] sm:$0xf]
      %v2427 = vld [vmem:[%s2411 + $0x3c] sm:$0xf]
      %v2444 = vunpack.c.l.b16 %v2412
      %v2445 = vunpack.c.l.b16 %v2413
      %v2446 = vunpack.c.l.b16 %v2414
      %v2447 = vunpack.c.l.b16 %v2415
      %v2448 = vunpack.c.l.b16 %v2416
      %v2449 = vunpack.c.l.b16 %v2417
      %v2450 = vunpack.c.l.b16 %v2418
      %v2451 = vunpack.c.l.b16 %v2419
      %v2452 = vunpack.c.l.b16 %v2420
      %v2453 = vunpack.c.l.b16 %v2421
      %v2454 = vunpack.c.l.b16 %v2422
      %v2455 = vunpack.c.l.b16 %v2423
      %v2456 = vunpack.c.l.b16 %v2424
      %v2457 = vunpack.c.l.b16 %v2425
      %v2458 = vunpack.c.l.b16 %v2426
      %v2459 = vunpack.c.l.b16 %v2427
      %v2460 = vpack.c.b16 %v2445, %v2444
      %v2461 = vpack.c.b16 %v2447, %v2446
      %v2462 = vpack.c.b16 %v2449, %v2448
      %v2463 = vpack.c.b16 %v2451, %v2450
      %v2464 = vpack.c.b16 %v2453, %v2452
      %v2465 = vpack.c.b16 %v2455, %v2454
      %v2466 = vpack.c.b16 %v2457, %v2456
      %v2467 = vpack.c.b16 %v2459, %v2458
      %2476 = vmatprep.subr.bf16.mxu0 0
      %2477 = vmatpush1.bf16.msra.mxu0 %v2467
      %2478 = vmatprep.subr.bf16.mxu0 0
      %2479 = vmatpush1.bf16.msra.mxu0 %v2466
      %2480 = vmatprep.subr.bf16.mxu0 0
      %2481 = vmatpush1.bf16.msra.mxu0 %v2465
      %2482 = vmatprep.subr.bf16.mxu0 0
      %2483 = vmatpush1.bf16.msra.mxu0 %v2464
      %2484 = vmatprep.subr.bf16.mxu0 0
      %2485 = vmatpush1.bf16.msra.mxu0 %v2463
      %2486 = vmatprep.subr.bf16.mxu0 0
      %2487 = vmatpush1.bf16.msra.mxu0 %v2462
      %2488 = vmatprep.subr.bf16.mxu0 0
      %2489 = vmatpush1.bf16.msra.mxu0 %v2461
      %2490 = vmatprep.subr.bf16.mxu0 0
      %2491 = vmatpush1.bf16.msra.mxu0 %v2460
      %2492 = vmatprep.subr.bf16.mxu0 0
      %2493 = vmatpush2.bf16.msra.mxu0 0
      %2494 = vmatprep.subr.bf16.mxu0 0
      %2495 = vmatpush2.bf16.msra.mxu0 0
      %2496 = vmatprep.subr.bf16.mxu0 0
      %2497 = vmatpush2.bf16.msra.mxu0 0
      %2498 = vmatprep.subr.bf16.mxu0 0
      %2499 = vmatpush2.bf16.msra.mxu0 0
      %2500 = vmatprep.subr.bf16.mxu0 0
      %2501 = vmatpush2.bf16.msra.mxu0 0
      %2502 = vmatprep.subr.bf16.mxu0 0
      %2503 = vmatpush2.bf16.msra.mxu0 0
      %2504 = vmatprep.subr.bf16.mxu0 0
      %2505 = vmatpush2.bf16.msra.mxu0 0
      %2506 = vmatprep.subr.bf16.mxu0 0
      %2507 = vmatpush2.bf16.msra.mxu0 0
      %2508 = vmatprep.mubr.bf16.mxu0 0
      %2509 = vmatmul.mubr.bf16.gmra.mxu0 %v2406
      %v2510 = vpop.f32.mrf.mxu0
      %v2511 = vadd.f32 0.0, %v2510
      %v2512 = vpop.f32.mrf.mxu0
      %v2513 = vpop.f32.mrf.mxu0
      %v2514 = vadd.f32 0.0, %v2513
      %v2515 = vpop.f32.mrf.mxu0
      %2516 = vmatprep.mubr.bf16.mxu0 0
      %2517 = vmatmul.mubr.bf16.gmra.mxu0 %v2407
      %v2518 = vpop.f32.mrf.mxu0
      %v2519 = vadd.f32 0.0, %v2518
      %v2520 = vpop.f32.mrf.mxu0
      %v2521 = vpop.f32.mrf.mxu0
      %v2522 = vadd.f32 0.0, %v2521
      %v2523 = vpop.f32.mrf.mxu0
      %2524 = vmatprep.mubr.bf16.mxu0 0
      %2525 = vmatmul.mubr.bf16.gmra.mxu0 %v2408
      %v2526 = vpop.f32.mrf.mxu0
      %v2527 = vadd.f32 0.0, %v2526
      %v2528 = vpop.f32.mrf.mxu0
      %v2529 = vpop.f32.mrf.mxu0
      %v2530 = vadd.f32 0.0, %v2529
      %v2531 = vpop.f32.mrf.mxu0
      %2532 = vmatprep.mubr.bf16.mxu0 0
      %2533 = vmatmul.mubr.bf16.gmra.mxu0 %v2409
      %v2534 = vpop.f32.mrf.mxu0
      %v2535 = vadd.f32 0.0, %v2534
      %v2536 = vpop.f32.mrf.mxu0
      %v2537 = vpop.f32.mrf.mxu0
      %v2538 = vadd.f32 0.0, %v2537
      %v2539 = vpop.f32.mrf.mxu0
      %2540 = vmatprep.mubr.bf16.mxu0 0
      %2541 = vmatmul.mubr.bf16.gmra.mxu0 %v2410
      %v2542 = vpop.f32.mrf.mxu0
      %v2543 = vadd.f32 0.0, %v2542
      %v2544 = vpop.f32.mrf.mxu0
      %v2545 = vpop.f32.mrf.mxu0
      %v2546 = vadd.f32 0.0, %v2545
      %v2547 = vpop.f32.mrf.mxu0
      %2548 = vdwg.mxu0
      %v2549 = vadd.f32 %v2386, %v2511
      %v2550 = vadd.f32 %v2387, %v2514
      %v2551 = vadd.f32 %v2388, %v2519
      %v2552 = vadd.f32 %v2389, %v2522
      %v2553 = vadd.f32 %v2390, %v2527
      %v2554 = vadd.f32 %v2391, %v2530
      %v2555 = vadd.f32 %v2392, %v2535
      %v2556 = vadd.f32 %v2393, %v2538
      %v2557 = vadd.f32 %v2394, %v2543
      %v2558 = vadd.f32 %v2395, %v2546
      %v2559 = vld [vmem:[%s1087 + $0x1] sm:$0xff]
      %v2560 = vld [vmem:[%s1087 + $0x9] sm:$0xff]
      %v2561 = vld [vmem:[%s1087 + $0x11] sm:$0xff]
      %v2562 = vld [vmem:[%s1087 + $0x19] sm:$0xff]
      %v2563 = vld [vmem:[%s1087 + $0x21] sm:$0xff]
      %v2564 = vld [vmem:[%s1087 + $0x29] sm:$0xff]
      %v2565 = vld [vmem:[%s1087 + $0x31] sm:$0xff]
      %v2566 = vld [vmem:[%s1087 + $0x39] sm:$0xff]
      %v2567 = vld [vmem:[%s1087 + $0x41] sm:$0xff]
      %v2568 = vld [vmem:[%s1087 + $0x49] sm:$0x3f]
      %v2569 = vpack.c.bf16 %v2560, %v2559
      %v2570 = vpack.c.bf16 %v2562, %v2561
      %v2571 = vpack.c.bf16 %v2564, %v2563
      %v2572 = vpack.c.bf16 %v2566, %v2565
      %v2573 = vpack.c.bf16 %v2568, %v2567
      %s2574 = scalar_lea.vmem %s2, 320
      %v2575 = vld [vmem:[%s2574] sm:$0xf]
      %v2576 = vld [vmem:[%s2574 + $0x4] sm:$0xf]
      %v2577 = vld [vmem:[%s2574 + $0x8] sm:$0xf]
      %v2578 = vld [vmem:[%s2574 + $0xc] sm:$0xf]
      %v2579 = vld [vmem:[%s2574 + $0x10] sm:$0xf]
      %v2580 = vld [vmem:[%s2574 + $0x14] sm:$0xf]
      %v2581 = vld [vmem:[%s2574 + $0x18] sm:$0xf]
      %v2582 = vld [vmem:[%s2574 + $0x1c] sm:$0xf]
      %v2583 = vld [vmem:[%s2574 + $0x20] sm:$0xf]
      %v2584 = vld [vmem:[%s2574 + $0x24] sm:$0xf]
      %v2585 = vld [vmem:[%s2574 + $0x28] sm:$0xf]
      %v2586 = vld [vmem:[%s2574 + $0x2c] sm:$0xf]
      %v2587 = vld [vmem:[%s2574 + $0x30] sm:$0xf]
      %v2588 = vld [vmem:[%s2574 + $0x34] sm:$0xf]
      %v2589 = vld [vmem:[%s2574 + $0x38] sm:$0xf]
      %v2590 = vld [vmem:[%s2574 + $0x3c] sm:$0xf]
      %v2607 = vunpack.c.l.b16 %v2575
      %v2608 = vunpack.c.l.b16 %v2576
      %v2609 = vunpack.c.l.b16 %v2577
      %v2610 = vunpack.c.l.b16 %v2578
      %v2611 = vunpack.c.l.b16 %v2579
      %v2612 = vunpack.c.l.b16 %v2580
      %v2613 = vunpack.c.l.b16 %v2581
      %v2614 = vunpack.c.l.b16 %v2582
      %v2615 = vunpack.c.l.b16 %v2583
      %v2616 = vunpack.c.l.b16 %v2584
      %v2617 = vunpack.c.l.b16 %v2585
      %v2618 = vunpack.c.l.b16 %v2586
      %v2619 = vunpack.c.l.b16 %v2587
      %v2620 = vunpack.c.l.b16 %v2588
      %v2621 = vunpack.c.l.b16 %v2589
      %v2622 = vunpack.c.l.b16 %v2590
      %v2623 = vpack.c.b16 %v2608, %v2607
      %v2624 = vpack.c.b16 %v2610, %v2609
      %v2625 = vpack.c.b16 %v2612, %v2611
      %v2626 = vpack.c.b16 %v2614, %v2613
      %v2627 = vpack.c.b16 %v2616, %v2615
      %v2628 = vpack.c.b16 %v2618, %v2617
      %v2629 = vpack.c.b16 %v2620, %v2619
      %v2630 = vpack.c.b16 %v2622, %v2621
      %2639 = vmatprep.subr.bf16.mxu0 0
      %2640 = vmatpush1.bf16.msra.mxu0 %v2630
      %2641 = vmatprep.subr.bf16.mxu0 0
      %2642 = vmatpush1.bf16.msra.mxu0 %v2629
      %2643 = vmatprep.subr.bf16.mxu0 0
      %2644 = vmatpush1.bf16.msra.mxu0 %v2628
      %2645 = vmatprep.subr.bf16.mxu0 0
      %2646 = vmatpush1.bf16.msra.mxu0 %v2627
      %2647 = vmatprep.subr.bf16.mxu0 0
      %2648 = vmatpush1.bf16.msra.mxu0 %v2626
      %2649 = vmatprep.subr.bf16.mxu0 0
      %2650 = vmatpush1.bf16.msra.mxu0 %v2625
      %2651 = vmatprep.subr.bf16.mxu0 0
      %2652 = vmatpush1.bf16.msra.mxu0 %v2624
      %2653 = vmatprep.subr.bf16.mxu0 0
      %2654 = vmatpush1.bf16.msra.mxu0 %v2623
      %2655 = vmatprep.subr.bf16.mxu0 0
      %2656 = vmatpush2.bf16.msra.mxu0 0
      %2657 = vmatprep.subr.bf16.mxu0 0
      %2658 = vmatpush2.bf16.msra.mxu0 0
      %2659 = vmatprep.subr.bf16.mxu0 0
      %2660 = vmatpush2.bf16.msra.mxu0 0
      %2661 = vmatprep.subr.bf16.mxu0 0
      %2662 = vmatpush2.bf16.msra.mxu0 0
      %2663 = vmatprep.subr.bf16.mxu0 0
      %2664 = vmatpush2.bf16.msra.mxu0 0
      %2665 = vmatprep.subr.bf16.mxu0 0
      %2666 = vmatpush2.bf16.msra.mxu0 0
      %2667 = vmatprep.subr.bf16.mxu0 0
      %2668 = vmatpush2.bf16.msra.mxu0 0
      %2669 = vmatprep.subr.bf16.mxu0 0
      %2670 = vmatpush2.bf16.msra.mxu0 0
      %2671 = vmatprep.mubr.bf16.mxu0 0
      %2672 = vmatmul.mubr.bf16.gmra.mxu0 %v2569
      %v2673 = vpop.f32.mrf.mxu0
      %v2674 = vadd.f32 0.0, %v2673
      %v2675 = vpop.f32.mrf.mxu0
      %v2676 = vpop.f32.mrf.mxu0
      %v2677 = vadd.f32 0.0, %v2676
      %v2678 = vpop.f32.mrf.mxu0
      %2679 = vmatprep.mubr.bf16.mxu0 0
      %2680 = vmatmul.mubr.bf16.gmra.mxu0 %v2570
      %v2681 = vpop.f32.mrf.mxu0
      %v2682 = vadd.f32 0.0, %v2681
      %v2683 = vpop.f32.mrf.mxu0
      %v2684 = vpop.f32.mrf.mxu0
      %v2685 = vadd.f32 0.0, %v2684
      %v2686 = vpop.f32.mrf.mxu0
      %2687 = vmatprep.mubr.bf16.mxu0 0
      %2688 = vmatmul.mubr.bf16.gmra.mxu0 %v2571
      %v2689 = vpop.f32.mrf.mxu0
      %v2690 = vadd.f32 0.0, %v2689
      %v2691 = vpop.f32.mrf.mxu0
      %v2692 = vpop.f32.mrf.mxu0
      %v2693 = vadd.f32 0.0, %v2692
      %v2694 = vpop.f32.mrf.mxu0
      %2695 = vmatprep.mubr.bf16.mxu0 0
      %2696 = vmatmul.mubr.bf16.gmra.mxu0 %v2572
      %v2697 = vpop.f32.mrf.mxu0
      %v2698 = vadd.f32 0.0, %v2697
      %v2699 = vpop.f32.mrf.mxu0
      %v2700 = vpop.f32.mrf.mxu0
      %v2701 = vadd.f32 0.0, %v2700
      %v2702 = vpop.f32.mrf.mxu0
      %2703 = vmatprep.mubr.bf16.mxu0 0
      %2704 = vmatmul.mubr.bf16.gmra.mxu0 %v2573
      %v2705 = vpop.f32.mrf.mxu0
      %v2706 = vadd.f32 0.0, %v2705
      %v2707 = vpop.f32.mrf.mxu0
      %v2708 = vpop.f32.mrf.mxu0
      %v2709 = vadd.f32 0.0, %v2708
      %v2710 = vpop.f32.mrf.mxu0
      %2711 = vdwg.mxu0
      %v2712 = vadd.f32 %v2549, %v2674
      %v2713 = vadd.f32 %v2550, %v2677
      %v2714 = vadd.f32 %v2551, %v2682
      %v2715 = vadd.f32 %v2552, %v2685
      %v2716 = vadd.f32 %v2553, %v2690
      %v2717 = vadd.f32 %v2554, %v2693
      %v2718 = vadd.f32 %v2555, %v2698
      %v2719 = vadd.f32 %v2556, %v2701
      %v2720 = vadd.f32 %v2557, %v2706
      %v2721 = vadd.f32 %v2558, %v2709
      %v2722 = vld [vmem:[#allocation7 + $0xa] sm:$0xff]
      %v2723 = vld [vmem:[#allocation7 + $0x12] sm:$0xff]
      %v2724 = vld [vmem:[#allocation7 + $0x1a] sm:$0xff]
      %v2725 = vld [vmem:[#allocation7 + $0x22] sm:$0xff]
      %v2726 = vld [vmem:[#allocation7 + $0x2a] sm:$0xff]
      %v2727 = vld [vmem:[#allocation7 + $0x32] sm:$0xff]
      %v2728 = vld [vmem:[#allocation7 + $0x3a] sm:$0xff]
      %v2729 = vld [vmem:[#allocation7 + $0x42] sm:$0xff]
      %v2730 = vld [vmem:[#allocation7 + $0x4a] sm:$0xff]
      %v2731 = vld [vmem:[#allocation7 + $0x52] sm:$0x3f]
      %v2732 = vpack.c.bf16 %v2723, %v2722
      %v2733 = vpack.c.bf16 %v2725, %v2724
      %v2734 = vpack.c.bf16 %v2727, %v2726
      %v2735 = vpack.c.bf16 %v2729, %v2728
      %v2736 = vpack.c.bf16 %v2731, %v2730
      %s2737 = scalar_lea.vmem %s2, 384
      %v2738 = vld [vmem:[%s2737] sm:$0xf]
      %v2739 = vld [vmem:[%s2737 + $0x4] sm:$0xf]
      %v2740 = vld [vmem:[%s2737 + $0x8] sm:$0xf]
      %v2741 = vld [vmem:[%s2737 + $0xc] sm:$0xf]
      %v2742 = vld [vmem:[%s2737 + $0x10] sm:$0xf]
      %v2743 = vld [vmem:[%s2737 + $0x14] sm:$0xf]
      %v2744 = vld [vmem:[%s2737 + $0x18] sm:$0xf]
      %v2745 = vld [vmem:[%s2737 + $0x1c] sm:$0xf]
      %v2746 = vld [vmem:[%s2737 + $0x20] sm:$0xf]
      %v2747 = vld [vmem:[%s2737 + $0x24] sm:$0xf]
      %v2748 = vld [vmem:[%s2737 + $0x28] sm:$0xf]
      %v2749 = vld [vmem:[%s2737 + $0x2c] sm:$0xf]
      %v2750 = vld [vmem:[%s2737 + $0x30] sm:$0xf]
      %v2751 = vld [vmem:[%s2737 + $0x34] sm:$0xf]
      %v2752 = vld [vmem:[%s2737 + $0x38] sm:$0xf]
      %v2753 = vld [vmem:[%s2737 + $0x3c] sm:$0xf]
      %v2770 = vunpack.c.l.b16 %v2738
      %v2771 = vunpack.c.l.b16 %v2739
      %v2772 = vunpack.c.l.b16 %v2740
      %v2773 = vunpack.c.l.b16 %v2741
      %v2774 = vunpack.c.l.b16 %v2742
      %v2775 = vunpack.c.l.b16 %v2743
      %v2776 = vunpack.c.l.b16 %v2744
      %v2777 = vunpack.c.l.b16 %v2745
      %v2778 = vunpack.c.l.b16 %v2746
      %v2779 = vunpack.c.l.b16 %v2747
      %v2780 = vunpack.c.l.b16 %v2748
      %v2781 = vunpack.c.l.b16 %v2749
      %v2782 = vunpack.c.l.b16 %v2750
      %v2783 = vunpack.c.l.b16 %v2751
      %v2784 = vunpack.c.l.b16 %v2752
      %v2785 = vunpack.c.l.b16 %v2753
      %v2786 = vpack.c.b16 %v2771, %v2770
      %v2787 = vpack.c.b16 %v2773, %v2772
      %v2788 = vpack.c.b16 %v2775, %v2774
      %v2789 = vpack.c.b16 %v2777, %v2776
      %v2790 = vpack.c.b16 %v2779, %v2778
      %v2791 = vpack.c.b16 %v2781, %v2780
      %v2792 = vpack.c.b16 %v2783, %v2782
      %v2793 = vpack.c.b16 %v2785, %v2784
      %2802 = vmatprep.subr.bf16.mxu0 0
      %2803 = vmatpush1.bf16.msra.mxu0 %v2793
      %2804 = vmatprep.subr.bf16.mxu0 0
      %2805 = vmatpush1.bf16.msra.mxu0 %v2792
      %2806 = vmatprep.subr.bf16.mxu0 0
      %2807 = vmatpush1.bf16.msra.mxu0 %v2791
      %2808 = vmatprep.subr.bf16.mxu0 0
      %2809 = vmatpush1.bf16.msra.mxu0 %v2790
      %2810 = vmatprep.subr.bf16.mxu0 0
      %2811 = vmatpush1.bf16.msra.mxu0 %v2789
      %2812 = vmatprep.subr.bf16.mxu0 0
      %2813 = vmatpush1.bf16.msra.mxu0 %v2788
      %2814 = vmatprep.subr.bf16.mxu0 0
      %2815 = vmatpush1.bf16.msra.mxu0 %v2787
      %2816 = vmatprep.subr.bf16.mxu0 0
      %2817 = vmatpush1.bf16.msra.mxu0 %v2786
      %2818 = vmatprep.subr.bf16.mxu0 0
      %2819 = vmatpush2.bf16.msra.mxu0 0
      %2820 = vmatprep.subr.bf16.mxu0 0
      %2821 = vmatpush2.bf16.msra.mxu0 0
      %2822 = vmatprep.subr.bf16.mxu0 0
      %2823 = vmatpush2.bf16.msra.mxu0 0
      %2824 = vmatprep.subr.bf16.mxu0 0
      %2825 = vmatpush2.bf16.msra.mxu0 0
      %2826 = vmatprep.subr.bf16.mxu0 0
      %2827 = vmatpush2.bf16.msra.mxu0 0
      %2828 = vmatprep.subr.bf16.mxu0 0
      %2829 = vmatpush2.bf16.msra.mxu0 0
      %2830 = vmatprep.subr.bf16.mxu0 0
      %2831 = vmatpush2.bf16.msra.mxu0 0
      %2832 = vmatprep.subr.bf16.mxu0 0
      %2833 = vmatpush2.bf16.msra.mxu0 0
      %2834 = vmatprep.mubr.bf16.mxu0 0
      %2835 = vmatmul.mubr.bf16.gmra.mxu0 %v2732
      %v2836 = vpop.f32.mrf.mxu0
      %v2837 = vadd.f32 0.0, %v2836
      %v2838 = vpop.f32.mrf.mxu0
      %v2839 = vpop.f32.mrf.mxu0
      %v2840 = vadd.f32 0.0, %v2839
      %v2841 = vpop.f32.mrf.mxu0
      %2842 = vmatprep.mubr.bf16.mxu0 0
      %2843 = vmatmul.mubr.bf16.gmra.mxu0 %v2733
      %v2844 = vpop.f32.mrf.mxu0
      %v2845 = vadd.f32 0.0, %v2844
      %v2846 = vpop.f32.mrf.mxu0
      %v2847 = vpop.f32.mrf.mxu0
      %v2848 = vadd.f32 0.0, %v2847
      %v2849 = vpop.f32.mrf.mxu0
      %2850 = vmatprep.mubr.bf16.mxu0 0
      %2851 = vmatmul.mubr.bf16.gmra.mxu0 %v2734
      %v2852 = vpop.f32.mrf.mxu0
      %v2853 = vadd.f32 0.0, %v2852
      %v2854 = vpop.f32.mrf.mxu0
      %v2855 = vpop.f32.mrf.mxu0
      %v2856 = vadd.f32 0.0, %v2855
      %v2857 = vpop.f32.mrf.mxu0
      %2858 = vmatprep.mubr.bf16.mxu0 0
      %2859 = vmatmul.mubr.bf16.gmra.mxu0 %v2735
      %v2860 = vpop.f32.mrf.mxu0
      %v2861 = vadd.f32 0.0, %v2860
      %v2862 = vpop.f32.mrf.mxu0
      %v2863 = vpop.f32.mrf.mxu0
      %v2864 = vadd.f32 0.0, %v2863
      %v2865 = vpop.f32.mrf.mxu0
      %2866 = vmatprep.mubr.bf16.mxu0 0
      %2867 = vmatmul.mubr.bf16.gmra.mxu0 %v2736
      %v2868 = vpop.f32.mrf.mxu0
      %v2869 = vadd.f32 0.0, %v2868
      %v2870 = vpop.f32.mrf.mxu0
      %v2871 = vpop.f32.mrf.mxu0
      %v2872 = vadd.f32 0.0, %v2871
      %v2873 = vpop.f32.mrf.mxu0
      %2874 = vdwg.mxu0
      %v2875 = vadd.f32 %v2712, %v2837
      %v2876 = vadd.f32 %v2713, %v2840
      %v2877 = vadd.f32 %v2714, %v2845
      %v2878 = vadd.f32 %v2715, %v2848
      %v2879 = vadd.f32 %v2716, %v2853
      %v2880 = vadd.f32 %v2717, %v2856
      %v2881 = vadd.f32 %v2718, %v2861
      %v2882 = vadd.f32 %v2719, %v2864
      %v2883 = vadd.f32 %v2720, %v2869
      %v2884 = vadd.f32 %v2721, %v2872
      %v2885 = vld [vmem:[%s1084 + $0xa] sm:$0xff]
      %v2886 = vld [vmem:[%s1084 + $0x12] sm:$0xff]
      %v2887 = vld [vmem:[%s1084 + $0x1a] sm:$0xff]
      %v2888 = vld [vmem:[%s1084 + $0x22] sm:$0xff]
      %v2889 = vld [vmem:[%s1084 + $0x2a] sm:$0xff]
      %v2890 = vld [vmem:[%s1084 + $0x32] sm:$0xff]
      %v2891 = vld [vmem:[%s1084 + $0x3a] sm:$0xff]
      %v2892 = vld [vmem:[%s1084 + $0x42] sm:$0xff]
      %v2893 = vld [vmem:[%s1084 + $0x4a] sm:$0xff]
      %v2894 = vld [vmem:[%s1084 + $0x52] sm:$0x3f]
      %v2895 = vpack.c.bf16 %v2886, %v2885
      %v2896 = vpack.c.bf16 %v2888, %v2887
      %v2897 = vpack.c.bf16 %v2890, %v2889
      %v2898 = vpack.c.bf16 %v2892, %v2891
      %v2899 = vpack.c.bf16 %v2894, %v2893
      %s2900 = scalar_lea.vmem %s2, 448
      %v2901 = vld [vmem:[%s2900] sm:$0xf]
      %v2902 = vld [vmem:[%s2900 + $0x4] sm:$0xf]
      %v2903 = vld [vmem:[%s2900 + $0x8] sm:$0xf]
      %v2904 = vld [vmem:[%s2900 + $0xc] sm:$0xf]
      %v2905 = vld [vmem:[%s2900 + $0x10] sm:$0xf]
      %v2906 = vld [vmem:[%s2900 + $0x14] sm:$0xf]
      %v2907 = vld [vmem:[%s2900 + $0x18] sm:$0xf]
      %v2908 = vld [vmem:[%s2900 + $0x1c] sm:$0xf]
      %v2909 = vld [vmem:[%s2900 + $0x20] sm:$0xf]
      %v2910 = vld [vmem:[%s2900 + $0x24] sm:$0xf]
      %v2911 = vld [vmem:[%s2900 + $0x28] sm:$0xf]
      %v2912 = vld [vmem:[%s2900 + $0x2c] sm:$0xf]
      %v2913 = vld [vmem:[%s2900 + $0x30] sm:$0xf]
      %v2914 = vld [vmem:[%s2900 + $0x34] sm:$0xf]
      %v2915 = vld [vmem:[%s2900 + $0x38] sm:$0xf]
      %v2916 = vld [vmem:[%s2900 + $0x3c] sm:$0xf]
      %v2933 = vunpack.c.l.b16 %v2901
      %v2934 = vunpack.c.l.b16 %v2902
      %v2935 = vunpack.c.l.b16 %v2903
      %v2936 = vunpack.c.l.b16 %v2904
      %v2937 = vunpack.c.l.b16 %v2905
      %v2938 = vunpack.c.l.b16 %v2906
      %v2939 = vunpack.c.l.b16 %v2907
      %v2940 = vunpack.c.l.b16 %v2908
      %v2941 = vunpack.c.l.b16 %v2909
      %v2942 = vunpack.c.l.b16 %v2910
      %v2943 = vunpack.c.l.b16 %v2911
      %v2944 = vunpack.c.l.b16 %v2912
      %v2945 = vunpack.c.l.b16 %v2913
      %v2946 = vunpack.c.l.b16 %v2914
      %v2947 = vunpack.c.l.b16 %v2915
      %v2948 = vunpack.c.l.b16 %v2916
      %v2949 = vpack.c.b16 %v2934, %v2933
      %v2950 = vpack.c.b16 %v2936, %v2935
      %v2951 = vpack.c.b16 %v2938, %v2937
      %v2952 = vpack.c.b16 %v2940, %v2939
      %v2953 = vpack.c.b16 %v2942, %v2941
      %v2954 = vpack.c.b16 %v2944, %v2943
      %v2955 = vpack.c.b16 %v2946, %v2945
      %v2956 = vpack.c.b16 %v2948, %v2947
      %2965 = vmatprep.subr.bf16.mxu0 0
      %2966 = vmatpush1.bf16.msra.mxu0 %v2956
      %2967 = vmatprep.subr.bf16.mxu0 0
      %2968 = vmatpush1.bf16.msra.mxu0 %v2955
      %2969 = vmatprep.subr.bf16.mxu0 0
      %2970 = vmatpush1.bf16.msra.mxu0 %v2954
      %2971 = vmatprep.subr.bf16.mxu0 0
      %2972 = vmatpush1.bf16.msra.mxu0 %v2953
      %2973 = vmatprep.subr.bf16.mxu0 0
      %2974 = vmatpush1.bf16.msra.mxu0 %v2952
      %2975 = vmatprep.subr.bf16.mxu0 0
      %2976 = vmatpush1.bf16.msra.mxu0 %v2951
      %2977 = vmatprep.subr.bf16.mxu0 0
      %2978 = vmatpush1.bf16.msra.mxu0 %v2950
      %2979 = vmatprep.subr.bf16.mxu0 0
      %2980 = vmatpush1.bf16.msra.mxu0 %v2949
      %2981 = vmatprep.subr.bf16.mxu0 0
      %2982 = vmatpush2.bf16.msra.mxu0 0
      %2983 = vmatprep.subr.bf16.mxu0 0
      %2984 = vmatpush2.bf16.msra.mxu0 0
      %2985 = vmatprep.subr.bf16.mxu0 0
      %2986 = vmatpush2.bf16.msra.mxu0 0
      %2987 = vmatprep.subr.bf16.mxu0 0
      %2988 = vmatpush2.bf16.msra.mxu0 0
      %2989 = vmatprep.subr.bf16.mxu0 0
      %2990 = vmatpush2.bf16.msra.mxu0 0
      %2991 = vmatprep.subr.bf16.mxu0 0
      %2992 = vmatpush2.bf16.msra.mxu0 0
      %2993 = vmatprep.subr.bf16.mxu0 0
      %2994 = vmatpush2.bf16.msra.mxu0 0
      %2995 = vmatprep.subr.bf16.mxu0 0
      %2996 = vmatpush2.bf16.msra.mxu0 0
      %2997 = vmatprep.mubr.bf16.mxu0 0
      %2998 = vmatmul.mubr.bf16.gmra.mxu0 %v2895
      %v2999 = vpop.f32.mrf.mxu0
      %v3000 = vadd.f32 0.0, %v2999
      %v3001 = vpop.f32.mrf.mxu0
      %v3002 = vpop.f32.mrf.mxu0
      %v3003 = vadd.f32 0.0, %v3002
      %v3004 = vpop.f32.mrf.mxu0
      %3005 = vmatprep.mubr.bf16.mxu0 0
      %3006 = vmatmul.mubr.bf16.gmra.mxu0 %v2896
      %v3007 = vpop.f32.mrf.mxu0
      %v3008 = vadd.f32 0.0, %v3007
      %v3009 = vpop.f32.mrf.mxu0
      %v3010 = vpop.f32.mrf.mxu0
      %v3011 = vadd.f32 0.0, %v3010
      %v3012 = vpop.f32.mrf.mxu0
      %3013 = vmatprep.mubr.bf16.mxu0 0
      %3014 = vmatmul.mubr.bf16.gmra.mxu0 %v2897
      %v3015 = vpop.f32.mrf.mxu0
      %v3016 = vadd.f32 0.0, %v3015
      %v3017 = vpop.f32.mrf.mxu0
      %v3018 = vpop.f32.mrf.mxu0
      %v3019 = vadd.f32 0.0, %v3018
      %v3020 = vpop.f32.mrf.mxu0
      %3021 = vmatprep.mubr.bf16.mxu0 0
      %3022 = vmatmul.mubr.bf16.gmra.mxu0 %v2898
      %v3023 = vpop.f32.mrf.mxu0
      %v3024 = vadd.f32 0.0, %v3023
      %v3025 = vpop.f32.mrf.mxu0
      %v3026 = vpop.f32.mrf.mxu0
      %v3027 = vadd.f32 0.0, %v3026
      %v3028 = vpop.f32.mrf.mxu0
      %3029 = vmatprep.mubr.bf16.mxu0 0
      %3030 = vmatmul.mubr.bf16.gmra.mxu0 %v2899
      %v3031 = vpop.f32.mrf.mxu0
      %v3032 = vadd.f32 0.0, %v3031
      %v3033 = vpop.f32.mrf.mxu0
      %v3034 = vpop.f32.mrf.mxu0
      %v3035 = vadd.f32 0.0, %v3034
      %v3036 = vpop.f32.mrf.mxu0
      %3037 = vdwg.mxu0
      %v3038 = vadd.f32 %v2875, %v3000
      %v3039 = vadd.f32 %v2876, %v3003
      %v3040 = vadd.f32 %v2877, %v3008
      %v3041 = vadd.f32 %v2878, %v3011
      %v3042 = vadd.f32 %v2879, %v3016
      %v3043 = vadd.f32 %v2880, %v3019
      %v3044 = vadd.f32 %v2881, %v3024
      %v3045 = vadd.f32 %v2882, %v3027
      %v3046 = vadd.f32 %v2883, %v3032
      %v3047 = vadd.f32 %v2884, %v3035
      %v3048 = vld [vmem:[#allocation7 + $0xb] sm:$0xff]
      %v3049 = vld [vmem:[#allocation7 + $0x13] sm:$0xff]
      %v3050 = vld [vmem:[#allocation7 + $0x1b] sm:$0xff]
      %v3051 = vld [vmem:[#allocation7 + $0x23] sm:$0xff]
      %v3052 = vld [vmem:[#allocation7 + $0x2b] sm:$0xff]
      %v3053 = vld [vmem:[#allocation7 + $0x33] sm:$0xff]
      %v3054 = vld [vmem:[#allocation7 + $0x3b] sm:$0xff]
      %v3055 = vld [vmem:[#allocation7 + $0x43] sm:$0xff]
      %v3056 = vld [vmem:[#allocation7 + $0x4b] sm:$0xff]
      %v3057 = vld [vmem:[#allocation7 + $0x53] sm:$0x3f]
      %v3058 = vpack.c.bf16 %v3049, %v3048
      %v3059 = vpack.c.bf16 %v3051, %v3050
      %v3060 = vpack.c.bf16 %v3053, %v3052
      %v3061 = vpack.c.bf16 %v3055, %v3054
      %v3062 = vpack.c.bf16 %v3057, %v3056
      %s3063 = scalar_lea.vmem %s2, 512
      %v3064 = vld [vmem:[%s3063] sm:$0xf]
      %v3065 = vld [vmem:[%s3063 + $0x4] sm:$0xf]
      %v3066 = vld [vmem:[%s3063 + $0x8] sm:$0xf]
      %v3067 = vld [vmem:[%s3063 + $0xc] sm:$0xf]
      %v3068 = vld [vmem:[%s3063 + $0x10] sm:$0xf]
      %v3069 = vld [vmem:[%s3063 + $0x14] sm:$0xf]
      %v3070 = vld [vmem:[%s3063 + $0x18] sm:$0xf]
      %v3071 = vld [vmem:[%s3063 + $0x1c] sm:$0xf]
      %v3072 = vld [vmem:[%s3063 + $0x20] sm:$0xf]
      %v3073 = vld [vmem:[%s3063 + $0x24] sm:$0xf]
      %v3074 = vld [vmem:[%s3063 + $0x28] sm:$0xf]
      %v3075 = vld [vmem:[%s3063 + $0x2c] sm:$0xf]
      %v3076 = vld [vmem:[%s3063 + $0x30] sm:$0xf]
      %v3077 = vld [vmem:[%s3063 + $0x34] sm:$0xf]
      %v3078 = vld [vmem:[%s3063 + $0x38] sm:$0xf]
      %v3079 = vld [vmem:[%s3063 + $0x3c] sm:$0xf]
      %v3096 = vunpack.c.l.b16 %v3064
      %v3097 = vunpack.c.l.b16 %v3065
      %v3098 = vunpack.c.l.b16 %v3066
      %v3099 = vunpack.c.l.b16 %v3067
      %v3100 = vunpack.c.l.b16 %v3068
      %v3101 = vunpack.c.l.b16 %v3069
      %v3102 = vunpack.c.l.b16 %v3070
      %v3103 = vunpack.c.l.b16 %v3071
      %v3104 = vunpack.c.l.b16 %v3072
      %v3105 = vunpack.c.l.b16 %v3073
      %v3106 = vunpack.c.l.b16 %v3074
      %v3107 = vunpack.c.l.b16 %v3075
      %v3108 = vunpack.c.l.b16 %v3076
      %v3109 = vunpack.c.l.b16 %v3077
      %v3110 = vunpack.c.l.b16 %v3078
      %v3111 = vunpack.c.l.b16 %v3079
      %v3112 = vpack.c.b16 %v3097, %v3096
      %v3113 = vpack.c.b16 %v3099, %v3098
      %v3114 = vpack.c.b16 %v3101, %v3100
      %v3115 = vpack.c.b16 %v3103, %v3102
      %v3116 = vpack.c.b16 %v3105, %v3104
      %v3117 = vpack.c.b16 %v3107, %v3106
      %v3118 = vpack.c.b16 %v3109, %v3108
      %v3119 = vpack.c.b16 %v3111, %v3110
      %3128 = vmatprep.subr.bf16.mxu0 0
      %3129 = vmatpush1.bf16.msra.mxu0 %v3119
      %3130 = vmatprep.subr.bf16.mxu0 0
      %3131 = vmatpush1.bf16.msra.mxu0 %v3118
      %3132 = vmatprep.subr.bf16.mxu0 0
      %3133 = vmatpush1.bf16.msra.mxu0 %v3117
      %3134 = vmatprep.subr.bf16.mxu0 0
      %3135 = vmatpush1.bf16.msra.mxu0 %v3116
      %3136 = vmatprep.subr.bf16.mxu0 0
      %3137 = vmatpush1.bf16.msra.mxu0 %v3115
      %3138 = vmatprep.subr.bf16.mxu0 0
      %3139 = vmatpush1.bf16.msra.mxu0 %v3114
      %3140 = vmatprep.subr.bf16.mxu0 0
      %3141 = vmatpush1.bf16.msra.mxu0 %v3113
      %3142 = vmatprep.subr.bf16.mxu0 0
      %3143 = vmatpush1.bf16.msra.mxu0 %v3112
      %3144 = vmatprep.subr.bf16.mxu0 0
      %3145 = vmatpush2.bf16.msra.mxu0 0
      %3146 = vmatprep.subr.bf16.mxu0 0
      %3147 = vmatpush2.bf16.msra.mxu0 0
      %3148 = vmatprep.subr.bf16.mxu0 0
      %3149 = vmatpush2.bf16.msra.mxu0 0
      %3150 = vmatprep.subr.bf16.mxu0 0
      %3151 = vmatpush2.bf16.msra.mxu0 0
      %3152 = vmatprep.subr.bf16.mxu0 0
      %3153 = vmatpush2.bf16.msra.mxu0 0
      %3154 = vmatprep.subr.bf16.mxu0 0
      %3155 = vmatpush2.bf16.msra.mxu0 0
      %3156 = vmatprep.subr.bf16.mxu0 0
      %3157 = vmatpush2.bf16.msra.mxu0 0
      %3158 = vmatprep.subr.bf16.mxu0 0
      %3159 = vmatpush2.bf16.msra.mxu0 0
      %3160 = vmatprep.mubr.bf16.mxu0 0
      %3161 = vmatmul.mubr.bf16.gmra.mxu0 %v3058
      %v3162 = vpop.f32.mrf.mxu0
      %v3163 = vadd.f32 0.0, %v3162
      %v3164 = vpop.f32.mrf.mxu0
      %v3165 = vpop.f32.mrf.mxu0
      %v3166 = vadd.f32 0.0, %v3165
      %v3167 = vpop.f32.mrf.mxu0
      %3168 = vmatprep.mubr.bf16.mxu0 0
      %3169 = vmatmul.mubr.bf16.gmra.mxu0 %v3059
      %v3170 = vpop.f32.mrf.mxu0
      %v3171 = vadd.f32 0.0, %v3170
      %v3172 = vpop.f32.mrf.mxu0
      %v3173 = vpop.f32.mrf.mxu0
      %v3174 = vadd.f32 0.0, %v3173
      %v3175 = vpop.f32.mrf.mxu0
      %3176 = vmatprep.mubr.bf16.mxu0 0
      %3177 = vmatmul.mubr.bf16.gmra.mxu0 %v3060
      %v3178 = vpop.f32.mrf.mxu0
      %v3179 = vadd.f32 0.0, %v3178
      %v3180 = vpop.f32.mrf.mxu0
      %v3181 = vpop.f32.mrf.mxu0
      %v3182 = vadd.f32 0.0, %v3181
      %v3183 = vpop.f32.mrf.mxu0
      %3184 = vmatprep.mubr.bf16.mxu0 0
      %3185 = vmatmul.mubr.bf16.gmra.mxu0 %v3061
      %v3186 = vpop.f32.mrf.mxu0
      %v3187 = vadd.f32 0.0, %v3186
      %v3188 = vpop.f32.mrf.mxu0
      %v3189 = vpop.f32.mrf.mxu0
      %v3190 = vadd.f32 0.0, %v3189
      %v3191 = vpop.f32.mrf.mxu0
      %3192 = vmatprep.mubr.bf16.mxu0 0
      %3193 = vmatmul.mubr.bf16.gmra.mxu0 %v3062
      %v3194 = vpop.f32.mrf.mxu0
      %v3195 = vadd.f32 0.0, %v3194
      %v3196 = vpop.f32.mrf.mxu0
      %v3197 = vpop.f32.mrf.mxu0
      %v3198 = vadd.f32 0.0, %v3197
      %v3199 = vpop.f32.mrf.mxu0
      %3200 = vdwg.mxu0
      %v3201 = vadd.f32 %v3038, %v3163
      %v3202 = vadd.f32 %v3039, %v3166
      %v3203 = vadd.f32 %v3040, %v3171
      %v3204 = vadd.f32 %v3041, %v3174
      %v3205 = vadd.f32 %v3042, %v3179
      %v3206 = vadd.f32 %v3043, %v3182
      %v3207 = vadd.f32 %v3044, %v3187
      %v3208 = vadd.f32 %v3045, %v3190
      %v3209 = vadd.f32 %v3046, %v3195
      %v3210 = vadd.f32 %v3047, %v3198
      %s3211 = scalar_lea.vmem %s3, 1
      %v3212 = vld [vmem:[%s3211] sm:$0x1]
      %v3214 = vlaneseq
      %v3215 = vshrl.u32 %v3214, 7
      %v3216 = vsub.s32 0, %v3215
      %v3217 = vrot.slane %v3212, %v3216
      %v3219 = vadd.f32 %v3201, %v3217
      %v3220 = vadd.f32 %v3202, %v3217
      %v3221 = vadd.f32 %v3203, %v3217
      %v3222 = vadd.f32 %v3204, %v3217
      %v3223 = vadd.f32 %v3205, %v3217
      %v3224 = vadd.f32 %v3206, %v3217
      %v3225 = vadd.f32 %v3207, %v3217
      %v3226 = vadd.f32 %v3208, %v3217
      %v3227 = vadd.f32 %v3209, %v3217
      %v3228 = vadd.f32 %v3210, %v3217
      %v3229 = vmax.f32 %v3219, 0.0
      %v3230 = vmax.f32 %v3220, 0.0
      %v3231 = vmax.f32 %v3221, 0.0
      %v3232 = vmax.f32 %v3222, 0.0
      %v3233 = vmax.f32 %v3223, 0.0
      %v3234 = vmax.f32 %v3224, 0.0
      %v3235 = vmax.f32 %v3225, 0.0
      %v3236 = vmax.f32 %v3226, 0.0
      %v3237 = vmax.f32 %v3227, 0.0
      %v3238 = vmax.f32 %v3228, 0.0
      %v3239 = vld [vmem:[%s4 + $0x8c] sm:$0x8]
      %v3240 = vld [vmem:[%s4 + $0x90] sm:$0xf]
      %v3241 = vld [vmem:[%s4 + $0x94] sm:$0xf]
      %v3242 = vld [vmem:[%s4 + $0x98] sm:$0xf]
      %v3243 = vld [vmem:[%s4 + $0x9c] sm:$0xf]
      %v3244 = vld [vmem:[%s4 + $0xa0] sm:$0xf]
      %v3245 = vld [vmem:[%s4 + $0xa4] sm:$0xf]
      %v3246 = vld [vmem:[%s4 + $0xa8] sm:$0xf]
      %v3247 = vld [vmem:[%s4 + $0xac] sm:$0xf]
      %v3248 = vld [vmem:[%s4 + $0xb0] sm:$0xf]
      %v3249 = vld [vmem:[%s4 + $0xb4] sm:$0x3]
      %v3250 = vunpack.c.l.bf16 %v3239
      %v3251 = vunpack.c.l.bf16 %v3240
      %v3252 = vunpack.c.l.bf16 %v3241
      %v3253 = vunpack.c.l.bf16 %v3242
      %v3254 = vunpack.c.l.bf16 %v3243
      %v3255 = vunpack.c.l.bf16 %v3244
      %v3256 = vunpack.c.l.bf16 %v3245
      %v3257 = vunpack.c.l.bf16 %v3246
      %v3258 = vunpack.c.l.bf16 %v3247
      %v3259 = vunpack.c.l.bf16 %v3248
      %v3260 = vunpack.c.l.bf16 %v3249
      %v3272 = vrot.slane %v3250, 6
      %v3273 = vrot.slane %v3251, 6
      %v3274 = vsel %vm1013, %v3272, %v3273
      %v3275 = vrot.slane %v3252, 6
      %v3276 = vsel %vm1013, %v3273, %v3275
      %v3277 = vrot.slane %v3253, 6
      %v3278 = vsel %vm1013, %v3275, %v3277
      %v3279 = vrot.slane %v3254, 6
      %v3280 = vsel %vm1013, %v3277, %v3279
      %v3281 = vrot.slane %v3255, 6
      %v3282 = vsel %vm1013, %v3279, %v3281
      %v3283 = vrot.slane %v3256, 6
      %v3284 = vsel %vm1013, %v3281, %v3283
      %v3285 = vrot.slane %v3257, 6
      %v3286 = vsel %vm1013, %v3283, %v3285
      %v3287 = vrot.slane %v3258, 6
      %v3288 = vsel %vm1013, %v3285, %v3287
      %v3289 = vrot.slane %v3259, 6
      %v3290 = vsel %vm1013, %v3287, %v3289
      %v3291 = vrot.slane %v3260, 6
      %v3292 = vsel %vm1013, %v3289, %v3291
      %v3303 = vmul.f32 %v3229, %v3274
      %v3304 = vmul.f32 %v3230, %v3276
      %v3305 = vmul.f32 %v3231, %v3278
      %v3306 = vmul.f32 %v3232, %v3280
      %v3307 = vmul.f32 %v3233, %v3282
      %v3308 = vmul.f32 %v3234, %v3284
      %v3309 = vmul.f32 %v3235, %v3286
      %v3310 = vmul.f32 %v3236, %v3288
      %v3311 = vmul.f32 %v3237, %v3290
      %v3312 = vmul.f32 %v3238, %v3292
      %3313 = vst [vmem:[#allocation3] sm:$0xff] 0.0
      %3314 = vst [vmem:[#allocation3 + $0x8] sm:$0x7] 0.0
      %3315 = vst [vmem:[#allocation3 + $0xb] sm:$0xff] %v3303
      %3316 = vst [vmem:[#allocation3 + $0x13] sm:$0xff] %v3304
      %3317 = vst [vmem:[#allocation3 + $0x1b] sm:$0xff] %v3305
      %3318 = vst [vmem:[#allocation3 + $0x23] sm:$0xff] %v3306
      %3319 = vst [vmem:[#allocation3 + $0x2b] sm:$0xff] %v3307
      %3320 = vst [vmem:[#allocation3 + $0x33] sm:$0xff] %v3308
      %3321 = vst [vmem:[#allocation3 + $0x3b] sm:$0xff] %v3309
      %3322 = vst [vmem:[#allocation3 + $0x43] sm:$0xff] %v3310
      %3323 = vst [vmem:[#allocation3 + $0x4b] sm:$0xff] %v3311
      %3324 = vst [vmem:[#allocation3 + $0x53] sm:$0x3f] %v3312
      %3325 = vst [vmem:[#allocation3 + $0x59] sm:$0xff] 0.0
      %3326 = vst [vmem:[#allocation3 + $0x61] sm:$0x7] 0.0
      %v3327 = vld [vmem:[#allocation3] sm:$0xff]
      %v3328 = vld [vmem:[#allocation3 + $0x8] sm:$0xff]
      %v3329 = vld [vmem:[#allocation3 + $0x10] sm:$0xff]
      %v3330 = vld [vmem:[#allocation3 + $0x18] sm:$0xff]
      %v3331 = vld [vmem:[#allocation3 + $0x20] sm:$0xff]
      %v3332 = vld [vmem:[#allocation3 + $0x28] sm:$0xff]
      %v3333 = vld [vmem:[#allocation3 + $0x30] sm:$0xff]
      %v3334 = vld [vmem:[#allocation3 + $0x38] sm:$0xff]
      %v3335 = vld [vmem:[#allocation3 + $0x40] sm:$0xff]
      %v3336 = vld [vmem:[#allocation3 + $0x48] sm:$0x3f]
      %v3337 = vpack.c.bf16 %v3328, %v3327
      %v3338 = vpack.c.bf16 %v3330, %v3329
      %v3339 = vpack.c.bf16 %v3332, %v3331
      %v3340 = vpack.c.bf16 %v3334, %v3333
      %v3341 = vpack.c.bf16 %v3336, %v3335
      %s3342 = scalar_lea.vmem %s2, 576
      %v3343 = vld [vmem:[%s3342] sm:$0xf]
      %v3344 = vld [vmem:[%s3342 + $0x4] sm:$0xf]
      %v3345 = vld [vmem:[%s3342 + $0x8] sm:$0xf]
      %v3346 = vld [vmem:[%s3342 + $0xc] sm:$0xf]
      %v3347 = vld [vmem:[%s3342 + $0x10] sm:$0xf]
      %v3348 = vld [vmem:[%s3342 + $0x14] sm:$0xf]
      %v3349 = vld [vmem:[%s3342 + $0x18] sm:$0xf]
      %v3350 = vld [vmem:[%s3342 + $0x1c] sm:$0xf]
      %v3351 = vld [vmem:[%s3342 + $0x20] sm:$0xf]
      %v3352 = vld [vmem:[%s3342 + $0x24] sm:$0xf]
      %v3353 = vld [vmem:[%s3342 + $0x28] sm:$0xf]
      %v3354 = vld [vmem:[%s3342 + $0x2c] sm:$0xf]
      %v3355 = vld [vmem:[%s3342 + $0x30] sm:$0xf]
      %v3356 = vld [vmem:[%s3342 + $0x34] sm:$0xf]
      %v3357 = vld [vmem:[%s3342 + $0x38] sm:$0xf]
      %v3358 = vld [vmem:[%s3342 + $0x3c] sm:$0xf]
      %v3359 = vld [vmem:[#allocation3 + $0x1] sm:$0xff]
      %v3360 = vld [vmem:[#allocation3 + $0x9] sm:$0xff]
      %v3361 = vld [vmem:[#allocation3 + $0x11] sm:$0xff]
      %v3362 = vld [vmem:[#allocation3 + $0x19] sm:$0xff]
      %v3363 = vld [vmem:[#allocation3 + $0x21] sm:$0xff]
      %v3364 = vld [vmem:[#allocation3 + $0x29] sm:$0xff]
      %v3365 = vld [vmem:[#allocation3 + $0x31] sm:$0xff]
      %v3366 = vld [vmem:[#allocation3 + $0x39] sm:$0xff]
      %v3367 = vld [vmem:[#allocation3 + $0x41] sm:$0xff]
      %v3368 = vld [vmem:[#allocation3 + $0x49] sm:$0x3f]
      %v3369 = vpack.c.bf16 %v3360, %v3359
      %v3370 = vpack.c.bf16 %v3362, %v3361
      %v3371 = vpack.c.bf16 %v3364, %v3363
      %v3372 = vpack.c.bf16 %v3366, %v3365
      %v3373 = vpack.c.bf16 %v3368, %v3367
      %s3374 = scalar_lea.vmem %s2, 640
      %v3375 = vld [vmem:[%s3374] sm:$0xf]
      %v3376 = vld [vmem:[%s3374 + $0x4] sm:$0xf]
      %v3377 = vld [vmem:[%s3374 + $0x8] sm:$0xf]
      %v3378 = vld [vmem:[%s3374 + $0xc] sm:$0xf]
      %v3379 = vld [vmem:[%s3374 + $0x10] sm:$0xf]
      %v3380 = vld [vmem:[%s3374 + $0x14] sm:$0xf]
      %v3381 = vld [vmem:[%s3374 + $0x18] sm:$0xf]
      %v3382 = vld [vmem:[%s3374 + $0x1c] sm:$0xf]
      %v3383 = vld [vmem:[%s3374 + $0x20] sm:$0xf]
      %v3384 = vld [vmem:[%s3374 + $0x24] sm:$0xf]
      %v3385 = vld [vmem:[%s3374 + $0x28] sm:$0xf]
      %v3386 = vld [vmem:[%s3374 + $0x2c] sm:$0xf]
      %v3387 = vld [vmem:[%s3374 + $0x30] sm:$0xf]
      %v3388 = vld [vmem:[%s3374 + $0x34] sm:$0xf]
      %v3389 = vld [vmem:[%s3374 + $0x38] sm:$0xf]
      %v3390 = vld [vmem:[%s3374 + $0x3c] sm:$0xf]
      %v3407 = vunpack.c.l.b16 %v3375
      %v3408 = vunpack.c.l.b16 %v3376
      %v3409 = vunpack.c.l.b16 %v3377
      %v3410 = vunpack.c.l.b16 %v3378
      %v3411 = vunpack.c.l.b16 %v3379
      %v3412 = vunpack.c.l.b16 %v3380
      %v3413 = vunpack.c.l.b16 %v3381
      %v3414 = vunpack.c.l.b16 %v3382
      %v3415 = vunpack.c.l.b16 %v3383
      %v3416 = vunpack.c.l.b16 %v3384
      %v3417 = vunpack.c.l.b16 %v3385
      %v3418 = vunpack.c.l.b16 %v3386
      %v3419 = vunpack.c.l.b16 %v3387
      %v3420 = vunpack.c.l.b16 %v3388
      %v3421 = vunpack.c.l.b16 %v3389
      %v3422 = vunpack.c.l.b16 %v3390
      %v3423 = vpack.c.b16 %v3408, %v3407
      %v3424 = vpack.c.b16 %v3410, %v3409
      %v3425 = vpack.c.b16 %v3412, %v3411
      %v3426 = vpack.c.b16 %v3414, %v3413
      %v3427 = vpack.c.b16 %v3416, %v3415
      %v3428 = vpack.c.b16 %v3418, %v3417
      %v3429 = vpack.c.b16 %v3420, %v3419
      %v3430 = vpack.c.b16 %v3422, %v3421
      %3439 = vmatprep.subr.bf16.mxu0 0
      %3440 = vmatpush1.bf16.msra.mxu0 %v3430
      %3441 = vmatprep.subr.bf16.mxu0 0
      %3442 = vmatpush1.bf16.msra.mxu0 %v3429
      %3443 = vmatprep.subr.bf16.mxu0 0
      %3444 = vmatpush1.bf16.msra.mxu0 %v3428
      %3445 = vmatprep.subr.bf16.mxu0 0
      %3446 = vmatpush1.bf16.msra.mxu0 %v3427
      %3447 = vmatprep.subr.bf16.mxu0 0
      %3448 = vmatpush1.bf16.msra.mxu0 %v3426
      %3449 = vmatprep.subr.bf16.mxu0 0
      %3450 = vmatpush1.bf16.msra.mxu0 %v3425
      %3451 = vmatprep.subr.bf16.mxu0 0
      %3452 = vmatpush1.bf16.msra.mxu0 %v3424
      %3453 = vmatprep.subr.bf16.mxu0 0
      %3454 = vmatpush1.bf16.msra.mxu0 %v3423
      %3455 = vmatprep.subr.bf16.mxu0 0
      %3456 = vmatpush2.bf16.msra.mxu0 0
      %3457 = vmatprep.subr.bf16.mxu0 0
      %3458 = vmatpush2.bf16.msra.mxu0 0
      %3459 = vmatprep.subr.bf16.mxu0 0
      %3460 = vmatpush2.bf16.msra.mxu0 0
      %3461 = vmatprep.subr.bf16.mxu0 0
      %3462 = vmatpush2.bf16.msra.mxu0 0
      %3463 = vmatprep.subr.bf16.mxu0 0
      %3464 = vmatpush2.bf16.msra.mxu0 0
      %3465 = vmatprep.subr.bf16.mxu0 0
      %3466 = vmatpush2.bf16.msra.mxu0 0
      %3467 = vmatprep.subr.bf16.mxu0 0
      %3468 = vmatpush2.bf16.msra.mxu0 0
      %3469 = vmatprep.subr.bf16.mxu0 0
      %3470 = vmatpush2.bf16.msra.mxu0 0
      %3471 = vmatprep.mubr.bf16.mxu0 0
      %3472 = vmatmul.mubr.bf16.gmra.mxu0 %v3369
      %v3473 = vpop.f32.mrf.mxu0
      %v3474 = vadd.f32 0.0, %v3473
      %v3475 = vpop.f32.mrf.mxu0
      %v3476 = vpop.f32.mrf.mxu0
      %v3477 = vadd.f32 0.0, %v3476
      %v3478 = vpop.f32.mrf.mxu0
      %3479 = vmatprep.mubr.bf16.mxu0 0
      %3480 = vmatmul.mubr.bf16.gmra.mxu0 %v3370
      %v3481 = vpop.f32.mrf.mxu0
      %v3482 = vadd.f32 0.0, %v3481
      %v3483 = vpop.f32.mrf.mxu0
      %v3484 = vpop.f32.mrf.mxu0
      %v3485 = vadd.f32 0.0, %v3484
      %v3486 = vpop.f32.mrf.mxu0
      %3487 = vmatprep.mubr.bf16.mxu0 0
      %3488 = vmatmul.mubr.bf16.gmra.mxu0 %v3371
      %v3489 = vpop.f32.mrf.mxu0
      %v3490 = vadd.f32 0.0, %v3489
      %v3491 = vpop.f32.mrf.mxu0
      %v3492 = vpop.f32.mrf.mxu0
      %v3493 = vadd.f32 0.0, %v3492
      %v3494 = vpop.f32.mrf.mxu0
      %3495 = vmatprep.mubr.bf16.mxu0 0
      %3496 = vmatmul.mubr.bf16.gmra.mxu0 %v3372
      %v3497 = vpop.f32.mrf.mxu0
      %v3498 = vadd.f32 0.0, %v3497
      %v3499 = vpop.f32.mrf.mxu0
      %v3500 = vpop.f32.mrf.mxu0
      %v3501 = vadd.f32 0.0, %v3500
      %v3502 = vpop.f32.mrf.mxu0
      %3503 = vmatprep.mubr.bf16.mxu0 0
      %3504 = vmatmul.mubr.bf16.gmra.mxu0 %v3373
      %v3505 = vpop.f32.mrf.mxu0
      %v3506 = vadd.f32 0.0, %v3505
      %v3507 = vpop.f32.mrf.mxu0
      %v3508 = vpop.f32.mrf.mxu0
      %v3509 = vadd.f32 0.0, %v3508
      %v3510 = vpop.f32.mrf.mxu0
      %3511 = vdwg.mxu0
      %v3528 = vunpack.c.l.b16 %v3343
      %v3529 = vunpack.c.l.b16 %v3344
      %v3530 = vunpack.c.l.b16 %v3345
      %v3531 = vunpack.c.l.b16 %v3346
      %v3532 = vunpack.c.l.b16 %v3347
      %v3533 = vunpack.c.l.b16 %v3348
      %v3534 = vunpack.c.l.b16 %v3349
      %v3535 = vunpack.c.l.b16 %v3350
      %v3536 = vunpack.c.l.b16 %v3351
      %v3537 = vunpack.c.l.b16 %v3352
      %v3538 = vunpack.c.l.b16 %v3353
      %v3539 = vunpack.c.l.b16 %v3354
      %v3540 = vunpack.c.l.b16 %v3355
      %v3541 = vunpack.c.l.b16 %v3356
      %v3542 = vunpack.c.l.b16 %v3357
      %v3543 = vunpack.c.l.b16 %v3358
      %v3544 = vpack.c.b16 %v3529, %v3528
      %v3545 = vpack.c.b16 %v3531, %v3530
      %v3546 = vpack.c.b16 %v3533, %v3532
      %v3547 = vpack.c.b16 %v3535, %v3534
      %v3548 = vpack.c.b16 %v3537, %v3536
      %v3549 = vpack.c.b16 %v3539, %v3538
      %v3550 = vpack.c.b16 %v3541, %v3540
      %v3551 = vpack.c.b16 %v3543, %v3542
      %3560 = vmatprep.subr.bf16.mxu0 0
      %3561 = vmatpush1.bf16.msra.mxu0 %v3551
      %3562 = vmatprep.subr.bf16.mxu0 0
      %3563 = vmatpush1.bf16.msra.mxu0 %v3550
      %3564 = vmatprep.subr.bf16.mxu0 0
      %3565 = vmatpush1.bf16.msra.mxu0 %v3549
      %3566 = vmatprep.subr.bf16.mxu0 0
      %3567 = vmatpush1.bf16.msra.mxu0 %v3548
      %3568 = vmatprep.subr.bf16.mxu0 0
      %3569 = vmatpush1.bf16.msra.mxu0 %v3547
      %3570 = vmatprep.subr.bf16.mxu0 0
      %3571 = vmatpush1.bf16.msra.mxu0 %v3546
      %3572 = vmatprep.subr.bf16.mxu0 0
      %3573 = vmatpush1.bf16.msra.mxu0 %v3545
      %3574 = vmatprep.subr.bf16.mxu0 0
      %3575 = vmatpush1.bf16.msra.mxu0 %v3544
      %3576 = vmatprep.subr.bf16.mxu0 0
      %3577 = vmatpush2.bf16.msra.mxu0 0
      %3578 = vmatprep.subr.bf16.mxu0 0
      %3579 = vmatpush2.bf16.msra.mxu0 0
      %3580 = vmatprep.subr.bf16.mxu0 0
      %3581 = vmatpush2.bf16.msra.mxu0 0
      %3582 = vmatprep.subr.bf16.mxu0 0
      %3583 = vmatpush2.bf16.msra.mxu0 0
      %3584 = vmatprep.subr.bf16.mxu0 0
      %3585 = vmatpush2.bf16.msra.mxu0 0
      %3586 = vmatprep.subr.bf16.mxu0 0
      %3587 = vmatpush2.bf16.msra.mxu0 0
      %3588 = vmatprep.subr.bf16.mxu0 0
      %3589 = vmatpush2.bf16.msra.mxu0 0
      %3590 = vmatprep.subr.bf16.mxu0 0
      %3591 = vmatpush2.bf16.msra.mxu0 0
      %3592 = vmatprep.mubr.bf16.mxu0 0
      %3593 = vmatmul.mubr.bf16.gmra.mxu0 %v3337
      %v3594 = vpop.f32.mrf.mxu0
      %v3595 = vadd.f32 %v3474, %v3594
      %v3596 = vpop.f32.mrf.mxu0
      %v3597 = vpop.f32.mrf.mxu0
      %v3598 = vadd.f32 %v3477, %v3597
      %v3599 = vpop.f32.mrf.mxu0
      %3600 = vmatprep.mubr.bf16.mxu0 0
      %3601 = vmatmul.mubr.bf16.gmra.mxu0 %v3338
      %v3602 = vpop.f32.mrf.mxu0
      %v3603 = vadd.f32 %v3482, %v3602
      %v3604 = vpop.f32.mrf.mxu0
      %v3605 = vpop.f32.mrf.mxu0
      %v3606 = vadd.f32 %v3485, %v3605
      %v3607 = vpop.f32.mrf.mxu0
      %3608 = vmatprep.mubr.bf16.mxu0 0
      %3609 = vmatmul.mubr.bf16.gmra.mxu0 %v3339
      %v3610 = vpop.f32.mrf.mxu0
      %v3611 = vadd.f32 %v3490, %v3610
      %v3612 = vpop.f32.mrf.mxu0
      %v3613 = vpop.f32.mrf.mxu0
      %v3614 = vadd.f32 %v3493, %v3613
      %v3615 = vpop.f32.mrf.mxu0
      %3616 = vmatprep.mubr.bf16.mxu0 0
      %3617 = vmatmul.mubr.bf16.gmra.mxu0 %v3340
      %v3618 = vpop.f32.mrf.mxu0
      %v3619 = vadd.f32 %v3498, %v3618
      %v3620 = vpop.f32.mrf.mxu0
      %v3621 = vpop.f32.mrf.mxu0
      %v3622 = vadd.f32 %v3501, %v3621
      %v3623 = vpop.f32.mrf.mxu0
      %3624 = vmatprep.mubr.bf16.mxu0 0
      %3625 = vmatmul.mubr.bf16.gmra.mxu0 %v3341
      %v3626 = vpop.f32.mrf.mxu0
      %v3627 = vadd.f32 %v3506, %v3626
      %v3628 = vpop.f32.mrf.mxu0
      %v3629 = vpop.f32.mrf.mxu0
      %v3630 = vadd.f32 %v3509, %v3629
      %v3631 = vpop.f32.mrf.mxu0
      %3632 = vdwg.mxu0
      %v3633 = vld [vmem:[#allocation3 + $0x2] sm:$0xff]
      %v3634 = vld [vmem:[#allocation3 + $0xa] sm:$0xff]
      %v3635 = vld [vmem:[#allocation3 + $0x12] sm:$0xff]
      %v3636 = vld [vmem:[#allocation3 + $0x1a] sm:$0xff]
      %v3637 = vld [vmem:[#allocation3 + $0x22] sm:$0xff]
      %v3638 = vld [vmem:[#allocation3 + $0x2a] sm:$0xff]
      %v3639 = vld [vmem:[#allocation3 + $0x32] sm:$0xff]
      %v3640 = vld [vmem:[#allocation3 + $0x3a] sm:$0xff]
      %v3641 = vld [vmem:[#allocation3 + $0x42] sm:$0xff]
      %v3642 = vld [vmem:[#allocation3 + $0x4a] sm:$0x3f]
      %v3643 = vpack.c.bf16 %v3634, %v3633
      %v3644 = vpack.c.bf16 %v3636, %v3635
      %v3645 = vpack.c.bf16 %v3638, %v3637
      %v3646 = vpack.c.bf16 %v3640, %v3639
      %v3647 = vpack.c.bf16 %v3642, %v3641
      %s3648 = scalar_lea.vmem %s2, 704
      %v3649 = vld [vmem:[%s3648] sm:$0xf]
      %v3650 = vld [vmem:[%s3648 + $0x4] sm:$0xf]
      %v3651 = vld [vmem:[%s3648 + $0x8] sm:$0xf]
      %v3652 = vld [vmem:[%s3648 + $0xc] sm:$0xf]
      %v3653 = vld [vmem:[%s3648 + $0x10] sm:$0xf]
      %v3654 = vld [vmem:[%s3648 + $0x14] sm:$0xf]
      %v3655 = vld [vmem:[%s3648 + $0x18] sm:$0xf]
      %v3656 = vld [vmem:[%s3648 + $0x1c] sm:$0xf]
      %v3657 = vld [vmem:[%s3648 + $0x20] sm:$0xf]
      %v3658 = vld [vmem:[%s3648 + $0x24] sm:$0xf]
      %v3659 = vld [vmem:[%s3648 + $0x28] sm:$0xf]
      %v3660 = vld [vmem:[%s3648 + $0x2c] sm:$0xf]
      %v3661 = vld [vmem:[%s3648 + $0x30] sm:$0xf]
      %v3662 = vld [vmem:[%s3648 + $0x34] sm:$0xf]
      %v3663 = vld [vmem:[%s3648 + $0x38] sm:$0xf]
      %v3664 = vld [vmem:[%s3648 + $0x3c] sm:$0xf]
      %v3681 = vunpack.c.l.b16 %v3649
      %v3682 = vunpack.c.l.b16 %v3650
      %v3683 = vunpack.c.l.b16 %v3651
      %v3684 = vunpack.c.l.b16 %v3652
      %v3685 = vunpack.c.l.b16 %v3653
      %v3686 = vunpack.c.l.b16 %v3654
      %v3687 = vunpack.c.l.b16 %v3655
      %v3688 = vunpack.c.l.b16 %v3656
      %v3689 = vunpack.c.l.b16 %v3657
      %v3690 = vunpack.c.l.b16 %v3658
      %v3691 = vunpack.c.l.b16 %v3659
      %v3692 = vunpack.c.l.b16 %v3660
      %v3693 = vunpack.c.l.b16 %v3661
      %v3694 = vunpack.c.l.b16 %v3662
      %v3695 = vunpack.c.l.b16 %v3663
      %v3696 = vunpack.c.l.b16 %v3664
      %v3697 = vpack.c.b16 %v3682, %v3681
      %v3698 = vpack.c.b16 %v3684, %v3683
      %v3699 = vpack.c.b16 %v3686, %v3685
      %v3700 = vpack.c.b16 %v3688, %v3687
      %v3701 = vpack.c.b16 %v3690, %v3689
      %v3702 = vpack.c.b16 %v3692, %v3691
      %v3703 = vpack.c.b16 %v3694, %v3693
      %v3704 = vpack.c.b16 %v3696, %v3695
      %3713 = vmatprep.subr.bf16.mxu0 0
      %3714 = vmatpush1.bf16.msra.mxu0 %v3704
      %3715 = vmatprep.subr.bf16.mxu0 0
      %3716 = vmatpush1.bf16.msra.mxu0 %v3703
      %3717 = vmatprep.subr.bf16.mxu0 0
      %3718 = vmatpush1.bf16.msra.mxu0 %v3702
      %3719 = vmatprep.subr.bf16.mxu0 0
      %3720 = vmatpush1.bf16.msra.mxu0 %v3701
      %3721 = vmatprep.subr.bf16.mxu0 0
      %3722 = vmatpush1.bf16.msra.mxu0 %v3700
      %3723 = vmatprep.subr.bf16.mxu0 0
      %3724 = vmatpush1.bf16.msra.mxu0 %v3699
      %3725 = vmatprep.subr.bf16.mxu0 0
      %3726 = vmatpush1.bf16.msra.mxu0 %v3698
      %3727 = vmatprep.subr.bf16.mxu0 0
      %3728 = vmatpush1.bf16.msra.mxu0 %v3697
      %3729 = vmatprep.subr.bf16.mxu0 0
      %3730 = vmatpush2.bf16.msra.mxu0 0
      %3731 = vmatprep.subr.bf16.mxu0 0
      %3732 = vmatpush2.bf16.msra.mxu0 0
      %3733 = vmatprep.subr.bf16.mxu0 0
      %3734 = vmatpush2.bf16.msra.mxu0 0
      %3735 = vmatprep.subr.bf16.mxu0 0
      %3736 = vmatpush2.bf16.msra.mxu0 0
      %3737 = vmatprep.subr.bf16.mxu0 0
      %3738 = vmatpush2.bf16.msra.mxu0 0
      %3739 = vmatprep.subr.bf16.mxu0 0
      %3740 = vmatpush2.bf16.msra.mxu0 0
      %3741 = vmatprep.subr.bf16.mxu0 0
      %3742 = vmatpush2.bf16.msra.mxu0 0
      %3743 = vmatprep.subr.bf16.mxu0 0
      %3744 = vmatpush2.bf16.msra.mxu0 0
      %3745 = vmatprep.mubr.bf16.mxu0 0
      %3746 = vmatmul.mubr.bf16.gmra.mxu0 %v3643
      %v3747 = vpop.f32.mrf.mxu0
      %v3748 = vadd.f32 0.0, %v3747
      %v3749 = vpop.f32.mrf.mxu0
      %v3750 = vpop.f32.mrf.mxu0
      %v3751 = vadd.f32 0.0, %v3750
      %v3752 = vpop.f32.mrf.mxu0
      %3753 = vmatprep.mubr.bf16.mxu0 0
      %3754 = vmatmul.mubr.bf16.gmra.mxu0 %v3644
      %v3755 = vpop.f32.mrf.mxu0
      %v3756 = vadd.f32 0.0, %v3755
      %v3757 = vpop.f32.mrf.mxu0
      %v3758 = vpop.f32.mrf.mxu0
      %v3759 = vadd.f32 0.0, %v3758
      %v3760 = vpop.f32.mrf.mxu0
      %3761 = vmatprep.mubr.bf16.mxu0 0
      %3762 = vmatmul.mubr.bf16.gmra.mxu0 %v3645
      %v3763 = vpop.f32.mrf.mxu0
      %v3764 = vadd.f32 0.0, %v3763
      %v3765 = vpop.f32.mrf.mxu0
      %v3766 = vpop.f32.mrf.mxu0
      %v3767 = vadd.f32 0.0, %v3766
      %v3768 = vpop.f32.mrf.mxu0
      %3769 = vmatprep.mubr.bf16.mxu0 0
      %3770 = vmatmul.mubr.bf16.gmra.mxu0 %v3646
      %v3771 = vpop.f32.mrf.mxu0
      %v3772 = vadd.f32 0.0, %v3771
      %v3773 = vpop.f32.mrf.mxu0
      %v3774 = vpop.f32.mrf.mxu0
      %v3775 = vadd.f32 0.0, %v3774
      %v3776 = vpop.f32.mrf.mxu0
      %3777 = vmatprep.mubr.bf16.mxu0 0
      %3778 = vmatmul.mubr.bf16.gmra.mxu0 %v3647
      %v3779 = vpop.f32.mrf.mxu0
      %v3780 = vadd.f32 0.0, %v3779
      %v3781 = vpop.f32.mrf.mxu0
      %v3782 = vpop.f32.mrf.mxu0
      %v3783 = vadd.f32 0.0, %v3782
      %v3784 = vpop.f32.mrf.mxu0
      %3785 = vdwg.mxu0
      %v3786 = vadd.f32 %v3595, %v3748
      %v3787 = vadd.f32 %v3598, %v3751
      %v3788 = vadd.f32 %v3603, %v3756
      %v3789 = vadd.f32 %v3606, %v3759
      %v3790 = vadd.f32 %v3611, %v3764
      %v3791 = vadd.f32 %v3614, %v3767
      %v3792 = vadd.f32 %v3619, %v3772
      %v3793 = vadd.f32 %v3622, %v3775
      %v3794 = vadd.f32 %v3627, %v3780
      %v3795 = vadd.f32 %v3630, %v3783
      %v3796 = vld [vmem:[#allocation3 + $0xa] sm:$0xff]
      %v3797 = vld [vmem:[#allocation3 + $0x12] sm:$0xff]
      %v3798 = vld [vmem:[#allocation3 + $0x1a] sm:$0xff]
      %v3799 = vld [vmem:[#allocation3 + $0x22] sm:$0xff]
      %v3800 = vld [vmem:[#allocation3 + $0x2a] sm:$0xff]
      %v3801 = vld [vmem:[#allocation3 + $0x32] sm:$0xff]
      %v3802 = vld [vmem:[#allocation3 + $0x3a] sm:$0xff]
      %v3803 = vld [vmem:[#allocation3 + $0x42] sm:$0xff]
      %v3804 = vld [vmem:[#allocation3 + $0x4a] sm:$0xff]
      %v3805 = vld [vmem:[#allocation3 + $0x52] sm:$0x3f]
      %v3806 = vpack.c.bf16 %v3797, %v3796
      %v3807 = vpack.c.bf16 %v3799, %v3798
      %v3808 = vpack.c.bf16 %v3801, %v3800
      %v3809 = vpack.c.bf16 %v3803, %v3802
      %v3810 = vpack.c.bf16 %v3805, %v3804
      %s3811 = scalar_lea.vmem %s2, 768
      %v3812 = vld [vmem:[%s3811] sm:$0xf]
      %v3813 = vld [vmem:[%s3811 + $0x4] sm:$0xf]
      %v3814 = vld [vmem:[%s3811 + $0x8] sm:$0xf]
      %v3815 = vld [vmem:[%s3811 + $0xc] sm:$0xf]
      %v3816 = vld [vmem:[%s3811 + $0x10] sm:$0xf]
      %v3817 = vld [vmem:[%s3811 + $0x14] sm:$0xf]
      %v3818 = vld [vmem:[%s3811 + $0x18] sm:$0xf]
      %v3819 = vld [vmem:[%s3811 + $0x1c] sm:$0xf]
      %v3820 = vld [vmem:[%s3811 + $0x20] sm:$0xf]
      %v3821 = vld [vmem:[%s3811 + $0x24] sm:$0xf]
      %v3822 = vld [vmem:[%s3811 + $0x28] sm:$0xf]
      %v3823 = vld [vmem:[%s3811 + $0x2c] sm:$0xf]
      %v3824 = vld [vmem:[%s3811 + $0x30] sm:$0xf]
      %v3825 = vld [vmem:[%s3811 + $0x34] sm:$0xf]
      %v3826 = vld [vmem:[%s3811 + $0x38] sm:$0xf]
      %v3827 = vld [vmem:[%s3811 + $0x3c] sm:$0xf]
      %v3844 = vunpack.c.l.b16 %v3812
      %v3845 = vunpack.c.l.b16 %v3813
      %v3846 = vunpack.c.l.b16 %v3814
      %v3847 = vunpack.c.l.b16 %v3815
      %v3848 = vunpack.c.l.b16 %v3816
      %v3849 = vunpack.c.l.b16 %v3817
      %v3850 = vunpack.c.l.b16 %v3818
      %v3851 = vunpack.c.l.b16 %v3819
      %v3852 = vunpack.c.l.b16 %v3820
      %v3853 = vunpack.c.l.b16 %v3821
      %v3854 = vunpack.c.l.b16 %v3822
      %v3855 = vunpack.c.l.b16 %v3823
      %v3856 = vunpack.c.l.b16 %v3824
      %v3857 = vunpack.c.l.b16 %v3825
      %v3858 = vunpack.c.l.b16 %v3826
      %v3859 = vunpack.c.l.b16 %v3827
      %v3860 = vpack.c.b16 %v3845, %v3844
      %v3861 = vpack.c.b16 %v3847, %v3846
      %v3862 = vpack.c.b16 %v3849, %v3848
      %v3863 = vpack.c.b16 %v3851, %v3850
      %v3864 = vpack.c.b16 %v3853, %v3852
      %v3865 = vpack.c.b16 %v3855, %v3854
      %v3866 = vpack.c.b16 %v3857, %v3856
      %v3867 = vpack.c.b16 %v3859, %v3858
      %3876 = vmatprep.subr.bf16.mxu0 0
      %3877 = vmatpush1.bf16.msra.mxu0 %v3867
      %3878 = vmatprep.subr.bf16.mxu0 0
      %3879 = vmatpush1.bf16.msra.mxu0 %v3866
      %3880 = vmatprep.subr.bf16.mxu0 0
      %3881 = vmatpush1.bf16.msra.mxu0 %v3865
      %3882 = vmatprep.subr.bf16.mxu0 0
      %3883 = vmatpush1.bf16.msra.mxu0 %v3864
      %3884 = vmatprep.subr.bf16.mxu0 0
      %3885 = vmatpush1.bf16.msra.mxu0 %v3863
      %3886 = vmatprep.subr.bf16.mxu0 0
      %3887 = vmatpush1.bf16.msra.mxu0 %v3862
      %3888 = vmatprep.subr.bf16.mxu0 0
      %3889 = vmatpush1.bf16.msra.mxu0 %v3861
      %3890 = vmatprep.subr.bf16.mxu0 0
      %3891 = vmatpush1.bf16.msra.mxu0 %v3860
      %3892 = vmatprep.subr.bf16.mxu0 0
      %3893 = vmatpush2.bf16.msra.mxu0 0
      %3894 = vmatprep.subr.bf16.mxu0 0
      %3895 = vmatpush2.bf16.msra.mxu0 0
      %3896 = vmatprep.subr.bf16.mxu0 0
      %3897 = vmatpush2.bf16.msra.mxu0 0
      %3898 = vmatprep.subr.bf16.mxu0 0
      %3899 = vmatpush2.bf16.msra.mxu0 0
      %3900 = vmatprep.subr.bf16.mxu0 0
      %3901 = vmatpush2.bf16.msra.mxu0 0
      %3902 = vmatprep.subr.bf16.mxu0 0
      %3903 = vmatpush2.bf16.msra.mxu0 0
      %3904 = vmatprep.subr.bf16.mxu0 0
      %3905 = vmatpush2.bf16.msra.mxu0 0
      %3906 = vmatprep.subr.bf16.mxu0 0
      %3907 = vmatpush2.bf16.msra.mxu0 0
      %3908 = vmatprep.mubr.bf16.mxu0 0
      %3909 = vmatmul.mubr.bf16.gmra.mxu0 %v3806
      %v3910 = vpop.f32.mrf.mxu0
      %v3911 = vadd.f32 0.0, %v3910
      %v3912 = vpop.f32.mrf.mxu0
      %v3913 = vpop.f32.mrf.mxu0
      %v3914 = vadd.f32 0.0, %v3913
      %v3915 = vpop.f32.mrf.mxu0
      %3916 = vmatprep.mubr.bf16.mxu0 0
      %3917 = vmatmul.mubr.bf16.gmra.mxu0 %v3807
      %v3918 = vpop.f32.mrf.mxu0
      %v3919 = vadd.f32 0.0, %v3918
      %v3920 = vpop.f32.mrf.mxu0
      %v3921 = vpop.f32.mrf.mxu0
      %v3922 = vadd.f32 0.0, %v3921
      %v3923 = vpop.f32.mrf.mxu0
      %3924 = vmatprep.mubr.bf16.mxu0 0
      %3925 = vmatmul.mubr.bf16.gmra.mxu0 %v3808
      %v3926 = vpop.f32.mrf.mxu0
      %v3927 = vadd.f32 0.0, %v3926
      %v3928 = vpop.f32.mrf.mxu0
      %v3929 = vpop.f32.mrf.mxu0
      %v3930 = vadd.f32 0.0, %v3929
      %v3931 = vpop.f32.mrf.mxu0
      %3932 = vmatprep.mubr.bf16.mxu0 0
      %3933 = vmatmul.mubr.bf16.gmra.mxu0 %v3809
      %v3934 = vpop.f32.mrf.mxu0
      %v3935 = vadd.f32 0.0, %v3934
      %v3936 = vpop.f32.mrf.mxu0
      %v3937 = vpop.f32.mrf.mxu0
      %v3938 = vadd.f32 0.0, %v3937
      %v3939 = vpop.f32.mrf.mxu0
      %3940 = vmatprep.mubr.bf16.mxu0 0
      %3941 = vmatmul.mubr.bf16.gmra.mxu0 %v3810
      %v3942 = vpop.f32.mrf.mxu0
      %v3943 = vadd.f32 0.0, %v3942
      %v3944 = vpop.f32.mrf.mxu0
      %v3945 = vpop.f32.mrf.mxu0
      %v3946 = vadd.f32 0.0, %v3945
      %v3947 = vpop.f32.mrf.mxu0
      %3948 = vdwg.mxu0
      %v3949 = vadd.f32 %v3786, %v3911
      %v3950 = vadd.f32 %v3787, %v3914
      %v3951 = vadd.f32 %v3788, %v3919
      %v3952 = vadd.f32 %v3789, %v3922
      %v3953 = vadd.f32 %v3790, %v3927
      %v3954 = vadd.f32 %v3791, %v3930
      %v3955 = vadd.f32 %v3792, %v3935
      %v3956 = vadd.f32 %v3793, %v3938
      %v3957 = vadd.f32 %v3794, %v3943
      %v3958 = vadd.f32 %v3795, %v3946
      %v3959 = vld [vmem:[#allocation3 + $0xb] sm:$0xff]
      %v3960 = vld [vmem:[#allocation3 + $0x13] sm:$0xff]
      %v3961 = vld [vmem:[#allocation3 + $0x1b] sm:$0xff]
      %v3962 = vld [vmem:[#allocation3 + $0x23] sm:$0xff]
      %v3963 = vld [vmem:[#allocation3 + $0x2b] sm:$0xff]
      %v3964 = vld [vmem:[#allocation3 + $0x33] sm:$0xff]
      %v3965 = vld [vmem:[#allocation3 + $0x3b] sm:$0xff]
      %v3966 = vld [vmem:[#allocation3 + $0x43] sm:$0xff]
      %v3967 = vld [vmem:[#allocation3 + $0x4b] sm:$0xff]
      %v3968 = vld [vmem:[#allocation3 + $0x53] sm:$0x3f]
      %v3969 = vpack.c.bf16 %v3960, %v3959
      %v3970 = vpack.c.bf16 %v3962, %v3961
      %v3971 = vpack.c.bf16 %v3964, %v3963
      %v3972 = vpack.c.bf16 %v3966, %v3965
      %v3973 = vpack.c.bf16 %v3968, %v3967
      %s3974 = scalar_lea.vmem %s2, 832
      %v3975 = vld [vmem:[%s3974] sm:$0xf]
      %v3976 = vld [vmem:[%s3974 + $0x4] sm:$0xf]
      %v3977 = vld [vmem:[%s3974 + $0x8] sm:$0xf]
      %v3978 = vld [vmem:[%s3974 + $0xc] sm:$0xf]
      %v3979 = vld [vmem:[%s3974 + $0x10] sm:$0xf]
      %v3980 = vld [vmem:[%s3974 + $0x14] sm:$0xf]
      %v3981 = vld [vmem:[%s3974 + $0x18] sm:$0xf]
      %v3982 = vld [vmem:[%s3974 + $0x1c] sm:$0xf]
      %v3983 = vld [vmem:[%s3974 + $0x20] sm:$0xf]
      %v3984 = vld [vmem:[%s3974 + $0x24] sm:$0xf]
      %v3985 = vld [vmem:[%s3974 + $0x28] sm:$0xf]
      %v3986 = vld [vmem:[%s3974 + $0x2c] sm:$0xf]
      %v3987 = vld [vmem:[%s3974 + $0x30] sm:$0xf]
      %v3988 = vld [vmem:[%s3974 + $0x34] sm:$0xf]
      %v3989 = vld [vmem:[%s3974 + $0x38] sm:$0xf]
      %v3990 = vld [vmem:[%s3974 + $0x3c] sm:$0xf]
      %v4007 = vunpack.c.l.b16 %v3975
      %v4008 = vunpack.c.l.b16 %v3976
      %v4009 = vunpack.c.l.b16 %v3977
      %v4010 = vunpack.c.l.b16 %v3978
      %v4011 = vunpack.c.l.b16 %v3979
      %v4012 = vunpack.c.l.b16 %v3980
      %v4013 = vunpack.c.l.b16 %v3981
      %v4014 = vunpack.c.l.b16 %v3982
      %v4015 = vunpack.c.l.b16 %v3983
      %v4016 = vunpack.c.l.b16 %v3984
      %v4017 = vunpack.c.l.b16 %v3985
      %v4018 = vunpack.c.l.b16 %v3986
      %v4019 = vunpack.c.l.b16 %v3987
      %v4020 = vunpack.c.l.b16 %v3988
      %v4021 = vunpack.c.l.b16 %v3989
      %v4022 = vunpack.c.l.b16 %v3990
      %v4023 = vpack.c.b16 %v4008, %v4007
      %v4024 = vpack.c.b16 %v4010, %v4009
      %v4025 = vpack.c.b16 %v4012, %v4011
      %v4026 = vpack.c.b16 %v4014, %v4013
      %v4027 = vpack.c.b16 %v4016, %v4015
      %v4028 = vpack.c.b16 %v4018, %v4017
      %v4029 = vpack.c.b16 %v4020, %v4019
      %v4030 = vpack.c.b16 %v4022, %v4021
      %4039 = vmatprep.subr.bf16.mxu0 0
      %4040 = vmatpush1.bf16.msra.mxu0 %v4030
      %4041 = vmatprep.subr.bf16.mxu0 0
      %4042 = vmatpush1.bf16.msra.mxu0 %v4029
      %4043 = vmatprep.subr.bf16.mxu0 0
      %4044 = vmatpush1.bf16.msra.mxu0 %v4028
      %4045 = vmatprep.subr.bf16.mxu0 0
      %4046 = vmatpush1.bf16.msra.mxu0 %v4027
      %4047 = vmatprep.subr.bf16.mxu0 0
      %4048 = vmatpush1.bf16.msra.mxu0 %v4026
      %4049 = vmatprep.subr.bf16.mxu0 0
      %4050 = vmatpush1.bf16.msra.mxu0 %v4025
      %4051 = vmatprep.subr.bf16.mxu0 0
      %4052 = vmatpush1.bf16.msra.mxu0 %v4024
      %4053 = vmatprep.subr.bf16.mxu0 0
      %4054 = vmatpush1.bf16.msra.mxu0 %v4023
      %4055 = vmatprep.subr.bf16.mxu0 0
      %4056 = vmatpush2.bf16.msra.mxu0 0
      %4057 = vmatprep.subr.bf16.mxu0 0
      %4058 = vmatpush2.bf16.msra.mxu0 0
      %4059 = vmatprep.subr.bf16.mxu0 0
      %4060 = vmatpush2.bf16.msra.mxu0 0
      %4061 = vmatprep.subr.bf16.mxu0 0
      %4062 = vmatpush2.bf16.msra.mxu0 0
      %4063 = vmatprep.subr.bf16.mxu0 0
      %4064 = vmatpush2.bf16.msra.mxu0 0
      %4065 = vmatprep.subr.bf16.mxu0 0
      %4066 = vmatpush2.bf16.msra.mxu0 0
      %4067 = vmatprep.subr.bf16.mxu0 0
      %4068 = vmatpush2.bf16.msra.mxu0 0
      %4069 = vmatprep.subr.bf16.mxu0 0
      %4070 = vmatpush2.bf16.msra.mxu0 0
      %4071 = vmatprep.mubr.bf16.mxu0 0
      %4072 = vmatmul.mubr.bf16.gmra.mxu0 %v3969
      %v4073 = vpop.f32.mrf.mxu0
      %v4074 = vadd.f32 0.0, %v4073
      %v4075 = vpop.f32.mrf.mxu0
      %v4076 = vpop.f32.mrf.mxu0
      %v4077 = vadd.f32 0.0, %v4076
      %v4078 = vpop.f32.mrf.mxu0
      %4079 = vmatprep.mubr.bf16.mxu0 0
      %4080 = vmatmul.mubr.bf16.gmra.mxu0 %v3970
      %v4081 = vpop.f32.mrf.mxu0
      %v4082 = vadd.f32 0.0, %v4081
      %v4083 = vpop.f32.mrf.mxu0
      %v4084 = vpop.f32.mrf.mxu0
      %v4085 = vadd.f32 0.0, %v4084
      %v4086 = vpop.f32.mrf.mxu0
      %4087 = vmatprep.mubr.bf16.mxu0 0
      %4088 = vmatmul.mubr.bf16.gmra.mxu0 %v3971
      %v4089 = vpop.f32.mrf.mxu0
      %v4090 = vadd.f32 0.0, %v4089
      %v4091 = vpop.f32.mrf.mxu0
      %v4092 = vpop.f32.mrf.mxu0
      %v4093 = vadd.f32 0.0, %v4092
      %v4094 = vpop.f32.mrf.mxu0
      %4095 = vmatprep.mubr.bf16.mxu0 0
      %4096 = vmatmul.mubr.bf16.gmra.mxu0 %v3972
      %v4097 = vpop.f32.mrf.mxu0
      %v4098 = vadd.f32 0.0, %v4097
      %v4099 = vpop.f32.mrf.mxu0
      %v4100 = vpop.f32.mrf.mxu0
      %v4101 = vadd.f32 0.0, %v4100
      %v4102 = vpop.f32.mrf.mxu0
      %4103 = vmatprep.mubr.bf16.mxu0 0
      %4104 = vmatmul.mubr.bf16.gmra.mxu0 %v3973
      %v4105 = vpop.f32.mrf.mxu0
      %v4106 = vadd.f32 0.0, %v4105
      %v4107 = vpop.f32.mrf.mxu0
      %v4108 = vpop.f32.mrf.mxu0
      %v4109 = vadd.f32 0.0, %v4108
      %v4110 = vpop.f32.mrf.mxu0
      %4111 = vdwg.mxu0
      %v4112 = vadd.f32 %v3949, %v4074
      %v4113 = vadd.f32 %v3950, %v4077
      %v4114 = vadd.f32 %v3951, %v4082
      %v4115 = vadd.f32 %v3952, %v4085
      %v4116 = vadd.f32 %v3953, %v4090
      %v4117 = vadd.f32 %v3954, %v4093
      %v4118 = vadd.f32 %v3955, %v4098
      %v4119 = vadd.f32 %v3956, %v4101
      %v4120 = vadd.f32 %v3957, %v4106
      %v4121 = vadd.f32 %v3958, %v4109
      %v4122 = vld [vmem:[#allocation3 + $0xc] sm:$0xff]
      %v4123 = vld [vmem:[#allocation3 + $0x14] sm:$0xff]
      %v4124 = vld [vmem:[#allocation3 + $0x1c] sm:$0xff]
      %v4125 = vld [vmem:[#allocation3 + $0x24] sm:$0xff]
      %v4126 = vld [vmem:[#allocation3 + $0x2c] sm:$0xff]
      %v4127 = vld [vmem:[#allocation3 + $0x34] sm:$0xff]
      %v4128 = vld [vmem:[#allocation3 + $0x3c] sm:$0xff]
      %v4129 = vld [vmem:[#allocation3 + $0x44] sm:$0xff]
      %v4130 = vld [vmem:[#allocation3 + $0x4c] sm:$0xff]
      %v4131 = vld [vmem:[#allocation3 + $0x54] sm:$0x3f]
      %v4132 = vpack.c.bf16 %v4123, %v4122
      %v4133 = vpack.c.bf16 %v4125, %v4124
      %v4134 = vpack.c.bf16 %v4127, %v4126
      %v4135 = vpack.c.bf16 %v4129, %v4128
      %v4136 = vpack.c.bf16 %v4131, %v4130
      %s4137 = scalar_lea.vmem %s2, 896
      %v4138 = vld [vmem:[%s4137] sm:$0xf]
      %v4139 = vld [vmem:[%s4137 + $0x4] sm:$0xf]
      %v4140 = vld [vmem:[%s4137 + $0x8] sm:$0xf]
      %v4141 = vld [vmem:[%s4137 + $0xc] sm:$0xf]
      %v4142 = vld [vmem:[%s4137 + $0x10] sm:$0xf]
      %v4143 = vld [vmem:[%s4137 + $0x14] sm:$0xf]
      %v4144 = vld [vmem:[%s4137 + $0x18] sm:$0xf]
      %v4145 = vld [vmem:[%s4137 + $0x1c] sm:$0xf]
      %v4146 = vld [vmem:[%s4137 + $0x20] sm:$0xf]
      %v4147 = vld [vmem:[%s4137 + $0x24] sm:$0xf]
      %v4148 = vld [vmem:[%s4137 + $0x28] sm:$0xf]
      %v4149 = vld [vmem:[%s4137 + $0x2c] sm:$0xf]
      %v4150 = vld [vmem:[%s4137 + $0x30] sm:$0xf]
      %v4151 = vld [vmem:[%s4137 + $0x34] sm:$0xf]
      %v4152 = vld [vmem:[%s4137 + $0x38] sm:$0xf]
      %v4153 = vld [vmem:[%s4137 + $0x3c] sm:$0xf]
      %v4170 = vunpack.c.l.b16 %v4138
      %v4171 = vunpack.c.l.b16 %v4139
      %v4172 = vunpack.c.l.b16 %v4140
      %v4173 = vunpack.c.l.b16 %v4141
      %v4174 = vunpack.c.l.b16 %v4142
      %v4175 = vunpack.c.l.b16 %v4143
      %v4176 = vunpack.c.l.b16 %v4144
      %v4177 = vunpack.c.l.b16 %v4145
      %v4178 = vunpack.c.l.b16 %v4146
      %v4179 = vunpack.c.l.b16 %v4147
      %v4180 = vunpack.c.l.b16 %v4148
      %v4181 = vunpack.c.l.b16 %v4149
      %v4182 = vunpack.c.l.b16 %v4150
      %v4183 = vunpack.c.l.b16 %v4151
      %v4184 = vunpack.c.l.b16 %v4152
      %v4185 = vunpack.c.l.b16 %v4153
      %v4186 = vpack.c.b16 %v4171, %v4170
      %v4187 = vpack.c.b16 %v4173, %v4172
      %v4188 = vpack.c.b16 %v4175, %v4174
      %v4189 = vpack.c.b16 %v4177, %v4176
      %v4190 = vpack.c.b16 %v4179, %v4178
      %v4191 = vpack.c.b16 %v4181, %v4180
      %v4192 = vpack.c.b16 %v4183, %v4182
      %v4193 = vpack.c.b16 %v4185, %v4184
      %4202 = vmatprep.subr.bf16.mxu0 0
      %4203 = vmatpush1.bf16.msra.mxu0 %v4193
      %4204 = vmatprep.subr.bf16.mxu0 0
      %4205 = vmatpush1.bf16.msra.mxu0 %v4192
      %4206 = vmatprep.subr.bf16.mxu0 0
      %4207 = vmatpush1.bf16.msra.mxu0 %v4191
      %4208 = vmatprep.subr.bf16.mxu0 0
      %4209 = vmatpush1.bf16.msra.mxu0 %v4190
      %4210 = vmatprep.subr.bf16.mxu0 0
      %4211 = vmatpush1.bf16.msra.mxu0 %v4189
      %4212 = vmatprep.subr.bf16.mxu0 0
      %4213 = vmatpush1.bf16.msra.mxu0 %v4188
      %4214 = vmatprep.subr.bf16.mxu0 0
      %4215 = vmatpush1.bf16.msra.mxu0 %v4187
      %4216 = vmatprep.subr.bf16.mxu0 0
      %4217 = vmatpush1.bf16.msra.mxu0 %v4186
      %4218 = vmatprep.subr.bf16.mxu0 0
      %4219 = vmatpush2.bf16.msra.mxu0 0
      %4220 = vmatprep.subr.bf16.mxu0 0
      %4221 = vmatpush2.bf16.msra.mxu0 0
      %4222 = vmatprep.subr.bf16.mxu0 0
      %4223 = vmatpush2.bf16.msra.mxu0 0
      %4224 = vmatprep.subr.bf16.mxu0 0
      %4225 = vmatpush2.bf16.msra.mxu0 0
      %4226 = vmatprep.subr.bf16.mxu0 0
      %4227 = vmatpush2.bf16.msra.mxu0 0
      %4228 = vmatprep.subr.bf16.mxu0 0
      %4229 = vmatpush2.bf16.msra.mxu0 0
      %4230 = vmatprep.subr.bf16.mxu0 0
      %4231 = vmatpush2.bf16.msra.mxu0 0
      %4232 = vmatprep.subr.bf16.mxu0 0
      %4233 = vmatpush2.bf16.msra.mxu0 0
      %4234 = vmatprep.mubr.bf16.mxu0 0
      %4235 = vmatmul.mubr.bf16.gmra.mxu0 %v4132
      %v4236 = vpop.f32.mrf.mxu0
      %v4237 = vadd.f32 0.0, %v4236
      %v4238 = vpop.f32.mrf.mxu0
      %v4239 = vpop.f32.mrf.mxu0
      %v4240 = vadd.f32 0.0, %v4239
      %v4241 = vpop.f32.mrf.mxu0
      %4242 = vmatprep.mubr.bf16.mxu0 0
      %4243 = vmatmul.mubr.bf16.gmra.mxu0 %v4133
      %v4244 = vpop.f32.mrf.mxu0
      %v4245 = vadd.f32 0.0, %v4244
      %v4246 = vpop.f32.mrf.mxu0
      %v4247 = vpop.f32.mrf.mxu0
      %v4248 = vadd.f32 0.0, %v4247
      %v4249 = vpop.f32.mrf.mxu0
      %4250 = vmatprep.mubr.bf16.mxu0 0
      %4251 = vmatmul.mubr.bf16.gmra.mxu0 %v4134
      %v4252 = vpop.f32.mrf.mxu0
      %v4253 = vadd.f32 0.0, %v4252
      %v4254 = vpop.f32.mrf.mxu0
      %v4255 = vpop.f32.mrf.mxu0
      %v4256 = vadd.f32 0.0, %v4255
      %v4257 = vpop.f32.mrf.mxu0
      %4258 = vmatprep.mubr.bf16.mxu0 0
      %4259 = vmatmul.mubr.bf16.gmra.mxu0 %v4135
      %v4260 = vpop.f32.mrf.mxu0
      %v4261 = vadd.f32 0.0, %v4260
      %v4262 = vpop.f32.mrf.mxu0
      %v4263 = vpop.f32.mrf.mxu0
      %v4264 = vadd.f32 0.0, %v4263
      %v4265 = vpop.f32.mrf.mxu0
      %4266 = vmatprep.mubr.bf16.mxu0 0
      %4267 = vmatmul.mubr.bf16.gmra.mxu0 %v4136
      %v4268 = vpop.f32.mrf.mxu0
      %v4269 = vadd.f32 0.0, %v4268
      %v4270 = vpop.f32.mrf.mxu0
      %v4271 = vpop.f32.mrf.mxu0
      %v4272 = vadd.f32 0.0, %v4271
      %v4273 = vpop.f32.mrf.mxu0
      %4274 = vdwg.mxu0
      %v4275 = vadd.f32 %v4112, %v4237
      %v4276 = vadd.f32 %v4113, %v4240
      %v4277 = vadd.f32 %v4114, %v4245
      %v4278 = vadd.f32 %v4115, %v4248
      %v4279 = vadd.f32 %v4116, %v4253
      %v4280 = vadd.f32 %v4117, %v4256
      %v4281 = vadd.f32 %v4118, %v4261
      %v4282 = vadd.f32 %v4119, %v4264
      %v4283 = vadd.f32 %v4120, %v4269
      %v4284 = vadd.f32 %v4121, %v4272
      %v4285 = vld [vmem:[#allocation3 + $0x14] sm:$0xff]
      %v4286 = vld [vmem:[#allocation3 + $0x1c] sm:$0xff]
      %v4287 = vld [vmem:[#allocation3 + $0x24] sm:$0xff]
      %v4288 = vld [vmem:[#allocation3 + $0x2c] sm:$0xff]
      %v4289 = vld [vmem:[#allocation3 + $0x34] sm:$0xff]
      %v4290 = vld [vmem:[#allocation3 + $0x3c] sm:$0xff]
      %v4291 = vld [vmem:[#allocation3 + $0x44] sm:$0xff]
      %v4292 = vld [vmem:[#allocation3 + $0x4c] sm:$0xff]
      %v4293 = vld [vmem:[#allocation3 + $0x54] sm:$0xff]
      %v4294 = vld [vmem:[#allocation3 + $0x5c] sm:$0x3f]
      %v4295 = vpack.c.bf16 %v4286, %v4285
      %v4296 = vpack.c.bf16 %v4288, %v4287
      %v4297 = vpack.c.bf16 %v4290, %v4289
      %v4298 = vpack.c.bf16 %v4292, %v4291
      %v4299 = vpack.c.bf16 %v4294, %v4293
      %s4300 = scalar_lea.vmem %s2, 960
      %v4301 = vld [vmem:[%s4300] sm:$0xf]
      %v4302 = vld [vmem:[%s4300 + $0x4] sm:$0xf]
      %v4303 = vld [vmem:[%s4300 + $0x8] sm:$0xf]
      %v4304 = vld [vmem:[%s4300 + $0xc] sm:$0xf]
      %v4305 = vld [vmem:[%s4300 + $0x10] sm:$0xf]
      %v4306 = vld [vmem:[%s4300 + $0x14] sm:$0xf]
      %v4307 = vld [vmem:[%s4300 + $0x18] sm:$0xf]
      %v4308 = vld [vmem:[%s4300 + $0x1c] sm:$0xf]
      %v4309 = vld [vmem:[%s4300 + $0x20] sm:$0xf]
      %v4310 = vld [vmem:[%s4300 + $0x24] sm:$0xf]
      %v4311 = vld [vmem:[%s4300 + $0x28] sm:$0xf]
      %v4312 = vld [vmem:[%s4300 + $0x2c] sm:$0xf]
      %v4313 = vld [vmem:[%s4300 + $0x30] sm:$0xf]
      %v4314 = vld [vmem:[%s4300 + $0x34] sm:$0xf]
      %v4315 = vld [vmem:[%s4300 + $0x38] sm:$0xf]
      %v4316 = vld [vmem:[%s4300 + $0x3c] sm:$0xf]
      %v4333 = vunpack.c.l.b16 %v4301
      %v4334 = vunpack.c.l.b16 %v4302
      %v4335 = vunpack.c.l.b16 %v4303
      %v4336 = vunpack.c.l.b16 %v4304
      %v4337 = vunpack.c.l.b16 %v4305
      %v4338 = vunpack.c.l.b16 %v4306
      %v4339 = vunpack.c.l.b16 %v4307
      %v4340 = vunpack.c.l.b16 %v4308
      %v4341 = vunpack.c.l.b16 %v4309
      %v4342 = vunpack.c.l.b16 %v4310
      %v4343 = vunpack.c.l.b16 %v4311
      %v4344 = vunpack.c.l.b16 %v4312
      %v4345 = vunpack.c.l.b16 %v4313
      %v4346 = vunpack.c.l.b16 %v4314
      %v4347 = vunpack.c.l.b16 %v4315
      %v4348 = vunpack.c.l.b16 %v4316
      %v4349 = vpack.c.b16 %v4334, %v4333
      %v4350 = vpack.c.b16 %v4336, %v4335
      %v4351 = vpack.c.b16 %v4338, %v4337
      %v4352 = vpack.c.b16 %v4340, %v4339
      %v4353 = vpack.c.b16 %v4342, %v4341
      %v4354 = vpack.c.b16 %v4344, %v4343
      %v4355 = vpack.c.b16 %v4346, %v4345
      %v4356 = vpack.c.b16 %v4348, %v4347
      %4365 = vmatprep.subr.bf16.mxu0 0
      %4366 = vmatpush1.bf16.msra.mxu0 %v4356
      %4367 = vmatprep.subr.bf16.mxu0 0
      %4368 = vmatpush1.bf16.msra.mxu0 %v4355
      %4369 = vmatprep.subr.bf16.mxu0 0
      %4370 = vmatpush1.bf16.msra.mxu0 %v4354
      %4371 = vmatprep.subr.bf16.mxu0 0
      %4372 = vmatpush1.bf16.msra.mxu0 %v4353
      %4373 = vmatprep.subr.bf16.mxu0 0
      %4374 = vmatpush1.bf16.msra.mxu0 %v4352
      %4375 = vmatprep.subr.bf16.mxu0 0
      %4376 = vmatpush1.bf16.msra.mxu0 %v4351
      %4377 = vmatprep.subr.bf16.mxu0 0
      %4378 = vmatpush1.bf16.msra.mxu0 %v4350
      %4379 = vmatprep.subr.bf16.mxu0 0
      %4380 = vmatpush1.bf16.msra.mxu0 %v4349
      %4381 = vmatprep.subr.bf16.mxu0 0
      %4382 = vmatpush2.bf16.msra.mxu0 0
      %4383 = vmatprep.subr.bf16.mxu0 0
      %4384 = vmatpush2.bf16.msra.mxu0 0
      %4385 = vmatprep.subr.bf16.mxu0 0
      %4386 = vmatpush2.bf16.msra.mxu0 0
      %4387 = vmatprep.subr.bf16.mxu0 0
      %4388 = vmatpush2.bf16.msra.mxu0 0
      %4389 = vmatprep.subr.bf16.mxu0 0
      %4390 = vmatpush2.bf16.msra.mxu0 0
      %4391 = vmatprep.subr.bf16.mxu0 0
      %4392 = vmatpush2.bf16.msra.mxu0 0
      %4393 = vmatprep.subr.bf16.mxu0 0
      %4394 = vmatpush2.bf16.msra.mxu0 0
      %4395 = vmatprep.subr.bf16.mxu0 0
      %4396 = vmatpush2.bf16.msra.mxu0 0
      %4397 = vmatprep.mubr.bf16.mxu0 0
      %4398 = vmatmul.mubr.bf16.gmra.mxu0 %v4295
      %v4399 = vpop.f32.mrf.mxu0
      %v4400 = vadd.f32 0.0, %v4399
      %v4401 = vpop.f32.mrf.mxu0
      %v4402 = vpop.f32.mrf.mxu0
      %v4403 = vadd.f32 0.0, %v4402
      %v4404 = vpop.f32.mrf.mxu0
      %4405 = vmatprep.mubr.bf16.mxu0 0
      %4406 = vmatmul.mubr.bf16.gmra.mxu0 %v4296
      %v4407 = vpop.f32.mrf.mxu0
      %v4408 = vadd.f32 0.0, %v4407
      %v4409 = vpop.f32.mrf.mxu0
      %v4410 = vpop.f32.mrf.mxu0
      %v4411 = vadd.f32 0.0, %v4410
      %v4412 = vpop.f32.mrf.mxu0
      %4413 = vmatprep.mubr.bf16.mxu0 0
      %4414 = vmatmul.mubr.bf16.gmra.mxu0 %v4297
      %v4415 = vpop.f32.mrf.mxu0
      %v4416 = vadd.f32 0.0, %v4415
      %v4417 = vpop.f32.mrf.mxu0
      %v4418 = vpop.f32.mrf.mxu0
      %v4419 = vadd.f32 0.0, %v4418
      %v4420 = vpop.f32.mrf.mxu0
      %4421 = vmatprep.mubr.bf16.mxu0 0
      %4422 = vmatmul.mubr.bf16.gmra.mxu0 %v4298
      %v4423 = vpop.f32.mrf.mxu0
      %v4424 = vadd.f32 0.0, %v4423
      %v4425 = vpop.f32.mrf.mxu0
      %v4426 = vpop.f32.mrf.mxu0
      %v4427 = vadd.f32 0.0, %v4426
      %v4428 = vpop.f32.mrf.mxu0
      %4429 = vmatprep.mubr.bf16.mxu0 0
      %4430 = vmatmul.mubr.bf16.gmra.mxu0 %v4299
      %v4431 = vpop.f32.mrf.mxu0
      %v4432 = vadd.f32 0.0, %v4431
      %v4433 = vpop.f32.mrf.mxu0
      %v4434 = vpop.f32.mrf.mxu0
      %v4435 = vadd.f32 0.0, %v4434
      %v4436 = vpop.f32.mrf.mxu0
      %4437 = vdwg.mxu0
      %v4438 = vadd.f32 %v4275, %v4400
      %v4439 = vadd.f32 %v4276, %v4403
      %v4440 = vadd.f32 %v4277, %v4408
      %v4441 = vadd.f32 %v4278, %v4411
      %v4442 = vadd.f32 %v4279, %v4416
      %v4443 = vadd.f32 %v4280, %v4419
      %v4444 = vadd.f32 %v4281, %v4424
      %v4445 = vadd.f32 %v4282, %v4427
      %v4446 = vadd.f32 %v4283, %v4432
      %v4447 = vadd.f32 %v4284, %v4435
      %v4448 = vld [vmem:[#allocation3 + $0x15] sm:$0xff]
      %v4449 = vld [vmem:[#allocation3 + $0x1d] sm:$0xff]
      %v4450 = vld [vmem:[#allocation3 + $0x25] sm:$0xff]
      %v4451 = vld [vmem:[#allocation3 + $0x2d] sm:$0xff]
      %v4452 = vld [vmem:[#allocation3 + $0x35] sm:$0xff]
      %v4453 = vld [vmem:[#allocation3 + $0x3d] sm:$0xff]
      %v4454 = vld [vmem:[#allocation3 + $0x45] sm:$0xff]
      %v4455 = vld [vmem:[#allocation3 + $0x4d] sm:$0xff]
      %v4456 = vld [vmem:[#allocation3 + $0x55] sm:$0xff]
      %v4457 = vld [vmem:[#allocation3 + $0x5d] sm:$0x3f]
      %v4458 = vpack.c.bf16 %v4449, %v4448
      %v4459 = vpack.c.bf16 %v4451, %v4450
      %v4460 = vpack.c.bf16 %v4453, %v4452
      %v4461 = vpack.c.bf16 %v4455, %v4454
      %v4462 = vpack.c.bf16 %v4457, %v4456
      %s4463 = scalar_lea.vmem %s2, 1024
      %v4464 = vld [vmem:[%s4463] sm:$0xf]
      %v4465 = vld [vmem:[%s4463 + $0x4] sm:$0xf]
      %v4466 = vld [vmem:[%s4463 + $0x8] sm:$0xf]
      %v4467 = vld [vmem:[%s4463 + $0xc] sm:$0xf]
      %v4468 = vld [vmem:[%s4463 + $0x10] sm:$0xf]
      %v4469 = vld [vmem:[%s4463 + $0x14] sm:$0xf]
      %v4470 = vld [vmem:[%s4463 + $0x18] sm:$0xf]
      %v4471 = vld [vmem:[%s4463 + $0x1c] sm:$0xf]
      %v4472 = vld [vmem:[%s4463 + $0x20] sm:$0xf]
      %v4473 = vld [vmem:[%s4463 + $0x24] sm:$0xf]
      %v4474 = vld [vmem:[%s4463 + $0x28] sm:$0xf]
      %v4475 = vld [vmem:[%s4463 + $0x2c] sm:$0xf]
      %v4476 = vld [vmem:[%s4463 + $0x30] sm:$0xf]
      %v4477 = vld [vmem:[%s4463 + $0x34] sm:$0xf]
      %v4478 = vld [vmem:[%s4463 + $0x38] sm:$0xf]
      %v4479 = vld [vmem:[%s4463 + $0x3c] sm:$0xf]
      %v4496 = vunpack.c.l.b16 %v4464
      %v4497 = vunpack.c.l.b16 %v4465
      %v4498 = vunpack.c.l.b16 %v4466
      %v4499 = vunpack.c.l.b16 %v4467
      %v4500 = vunpack.c.l.b16 %v4468
      %v4501 = vunpack.c.l.b16 %v4469
      %v4502 = vunpack.c.l.b16 %v4470
      %v4503 = vunpack.c.l.b16 %v4471
      %v4504 = vunpack.c.l.b16 %v4472
      %v4505 = vunpack.c.l.b16 %v4473
      %v4506 = vunpack.c.l.b16 %v4474
      %v4507 = vunpack.c.l.b16 %v4475
      %v4508 = vunpack.c.l.b16 %v4476
      %v4509 = vunpack.c.l.b16 %v4477
      %v4510 = vunpack.c.l.b16 %v4478
      %v4511 = vunpack.c.l.b16 %v4479
      %v4512 = vpack.c.b16 %v4497, %v4496
      %v4513 = vpack.c.b16 %v4499, %v4498
      %v4514 = vpack.c.b16 %v4501, %v4500
      %v4515 = vpack.c.b16 %v4503, %v4502
      %v4516 = vpack.c.b16 %v4505, %v4504
      %v4517 = vpack.c.b16 %v4507, %v4506
      %v4518 = vpack.c.b16 %v4509, %v4508
      %v4519 = vpack.c.b16 %v4511, %v4510
      %4528 = vmatprep.subr.bf16.mxu0 0
      %4529 = vmatpush1.bf16.msra.mxu0 %v4519
      %4530 = vmatprep.subr.bf16.mxu0 0
      %4531 = vmatpush1.bf16.msra.mxu0 %v4518
      %4532 = vmatprep.subr.bf16.mxu0 0
      %4533 = vmatpush1.bf16.msra.mxu0 %v4517
      %4534 = vmatprep.subr.bf16.mxu0 0
      %4535 = vmatpush1.bf16.msra.mxu0 %v4516
      %4536 = vmatprep.subr.bf16.mxu0 0
      %4537 = vmatpush1.bf16.msra.mxu0 %v4515
      %4538 = vmatprep.subr.bf16.mxu0 0
      %4539 = vmatpush1.bf16.msra.mxu0 %v4514
      %4540 = vmatprep.subr.bf16.mxu0 0
      %4541 = vmatpush1.bf16.msra.mxu0 %v4513
      %4542 = vmatprep.subr.bf16.mxu0 0
      %4543 = vmatpush1.bf16.msra.mxu0 %v4512
      %4544 = vmatprep.subr.bf16.mxu0 0
      %4545 = vmatpush2.bf16.msra.mxu0 0
      %4546 = vmatprep.subr.bf16.mxu0 0
      %4547 = vmatpush2.bf16.msra.mxu0 0
      %4548 = vmatprep.subr.bf16.mxu0 0
      %4549 = vmatpush2.bf16.msra.mxu0 0
      %4550 = vmatprep.subr.bf16.mxu0 0
      %4551 = vmatpush2.bf16.msra.mxu0 0
      %4552 = vmatprep.subr.bf16.mxu0 0
      %4553 = vmatpush2.bf16.msra.mxu0 0
      %4554 = vmatprep.subr.bf16.mxu0 0
      %4555 = vmatpush2.bf16.msra.mxu0 0
      %4556 = vmatprep.subr.bf16.mxu0 0
      %4557 = vmatpush2.bf16.msra.mxu0 0
      %4558 = vmatprep.subr.bf16.mxu0 0
      %4559 = vmatpush2.bf16.msra.mxu0 0
      %4560 = vmatprep.mubr.bf16.mxu0 0
      %4561 = vmatmul.mubr.bf16.gmra.mxu0 %v4458
      %v4562 = vpop.f32.mrf.mxu0
      %v4563 = vadd.f32 0.0, %v4562
      %v4564 = vpop.f32.mrf.mxu0
      %v4565 = vpop.f32.mrf.mxu0
      %v4566 = vadd.f32 0.0, %v4565
      %v4567 = vpop.f32.mrf.mxu0
      %4568 = vmatprep.mubr.bf16.mxu0 0
      %4569 = vmatmul.mubr.bf16.gmra.mxu0 %v4459
      %v4570 = vpop.f32.mrf.mxu0
      %v4571 = vadd.f32 0.0, %v4570
      %v4572 = vpop.f32.mrf.mxu0
      %v4573 = vpop.f32.mrf.mxu0
      %v4574 = vadd.f32 0.0, %v4573
      %v4575 = vpop.f32.mrf.mxu0
      %4576 = vmatprep.mubr.bf16.mxu0 0
      %4577 = vmatmul.mubr.bf16.gmra.mxu0 %v4460
      %v4578 = vpop.f32.mrf.mxu0
      %v4579 = vadd.f32 0.0, %v4578
      %v4580 = vpop.f32.mrf.mxu0
      %v4581 = vpop.f32.mrf.mxu0
      %v4582 = vadd.f32 0.0, %v4581
      %v4583 = vpop.f32.mrf.mxu0
      %4584 = vmatprep.mubr.bf16.mxu0 0
      %4585 = vmatmul.mubr.bf16.gmra.mxu0 %v4461
      %v4586 = vpop.f32.mrf.mxu0
      %v4587 = vadd.f32 0.0, %v4586
      %v4588 = vpop.f32.mrf.mxu0
      %v4589 = vpop.f32.mrf.mxu0
      %v4590 = vadd.f32 0.0, %v4589
      %v4591 = vpop.f32.mrf.mxu0
      %4592 = vmatprep.mubr.bf16.mxu0 0
      %4593 = vmatmul.mubr.bf16.gmra.mxu0 %v4462
      %v4594 = vpop.f32.mrf.mxu0
      %v4595 = vadd.f32 0.0, %v4594
      %v4596 = vpop.f32.mrf.mxu0
      %v4597 = vpop.f32.mrf.mxu0
      %v4598 = vadd.f32 0.0, %v4597
      %v4599 = vpop.f32.mrf.mxu0
      %4600 = vdwg.mxu0
      %v4601 = vadd.f32 %v4438, %v4563
      %v4602 = vadd.f32 %v4439, %v4566
      %v4603 = vadd.f32 %v4440, %v4571
      %v4604 = vadd.f32 %v4441, %v4574
      %v4605 = vadd.f32 %v4442, %v4579
      %v4606 = vadd.f32 %v4443, %v4582
      %v4607 = vadd.f32 %v4444, %v4587
      %v4608 = vadd.f32 %v4445, %v4590
      %v4609 = vadd.f32 %v4446, %v4595
      %v4610 = vadd.f32 %v4447, %v4598
      %v4611 = vld [vmem:[#allocation3 + $0x16] sm:$0xff]
      %v4612 = vld [vmem:[#allocation3 + $0x1e] sm:$0xff]
      %v4613 = vld [vmem:[#allocation3 + $0x26] sm:$0xff]
      %v4614 = vld [vmem:[#allocation3 + $0x2e] sm:$0xff]
      %v4615 = vld [vmem:[#allocation3 + $0x36] sm:$0xff]
      %v4616 = vld [vmem:[#allocation3 + $0x3e] sm:$0xff]
      %v4617 = vld [vmem:[#allocation3 + $0x46] sm:$0xff]
      %v4618 = vld [vmem:[#allocation3 + $0x4e] sm:$0xff]
      %v4619 = vld [vmem:[#allocation3 + $0x56] sm:$0xff]
      %v4620 = vld [vmem:[#allocation3 + $0x5e] sm:$0x3f]
      %v4621 = vpack.c.bf16 %v4612, %v4611
      %v4622 = vpack.c.bf16 %v4614, %v4613
      %v4623 = vpack.c.bf16 %v4616, %v4615
      %v4624 = vpack.c.bf16 %v4618, %v4617
      %v4625 = vpack.c.bf16 %v4620, %v4619
      %s4626 = scalar_lea.vmem %s2, 1088
      %v4627 = vld [vmem:[%s4626] sm:$0xf]
      %v4628 = vld [vmem:[%s4626 + $0x4] sm:$0xf]
      %v4629 = vld [vmem:[%s4626 + $0x8] sm:$0xf]
      %v4630 = vld [vmem:[%s4626 + $0xc] sm:$0xf]
      %v4631 = vld [vmem:[%s4626 + $0x10] sm:$0xf]
      %v4632 = vld [vmem:[%s4626 + $0x14] sm:$0xf]
      %v4633 = vld [vmem:[%s4626 + $0x18] sm:$0xf]
      %v4634 = vld [vmem:[%s4626 + $0x1c] sm:$0xf]
      %v4635 = vld [vmem:[%s4626 + $0x20] sm:$0xf]
      %v4636 = vld [vmem:[%s4626 + $0x24] sm:$0xf]
      %v4637 = vld [vmem:[%s4626 + $0x28] sm:$0xf]
      %v4638 = vld [vmem:[%s4626 + $0x2c] sm:$0xf]
      %v4639 = vld [vmem:[%s4626 + $0x30] sm:$0xf]
      %v4640 = vld [vmem:[%s4626 + $0x34] sm:$0xf]
      %v4641 = vld [vmem:[%s4626 + $0x38] sm:$0xf]
      %v4642 = vld [vmem:[%s4626 + $0x3c] sm:$0xf]
      %v4659 = vunpack.c.l.b16 %v4627
      %v4660 = vunpack.c.l.b16 %v4628
      %v4661 = vunpack.c.l.b16 %v4629
      %v4662 = vunpack.c.l.b16 %v4630
      %v4663 = vunpack.c.l.b16 %v4631
      %v4664 = vunpack.c.l.b16 %v4632
      %v4665 = vunpack.c.l.b16 %v4633
      %v4666 = vunpack.c.l.b16 %v4634
      %v4667 = vunpack.c.l.b16 %v4635
      %v4668 = vunpack.c.l.b16 %v4636
      %v4669 = vunpack.c.l.b16 %v4637
      %v4670 = vunpack.c.l.b16 %v4638
      %v4671 = vunpack.c.l.b16 %v4639
      %v4672 = vunpack.c.l.b16 %v4640
      %v4673 = vunpack.c.l.b16 %v4641
      %v4674 = vunpack.c.l.b16 %v4642
      %v4675 = vpack.c.b16 %v4660, %v4659
      %v4676 = vpack.c.b16 %v4662, %v4661
      %v4677 = vpack.c.b16 %v4664, %v4663
      %v4678 = vpack.c.b16 %v4666, %v4665
      %v4679 = vpack.c.b16 %v4668, %v4667
      %v4680 = vpack.c.b16 %v4670, %v4669
      %v4681 = vpack.c.b16 %v4672, %v4671
      %v4682 = vpack.c.b16 %v4674, %v4673
      %4691 = vmatprep.subr.bf16.mxu0 0
      %4692 = vmatpush1.bf16.msra.mxu0 %v4682
      %4693 = vmatprep.subr.bf16.mxu0 0
      %4694 = vmatpush1.bf16.msra.mxu0 %v4681
      %4695 = vmatprep.subr.bf16.mxu0 0
      %4696 = vmatpush1.bf16.msra.mxu0 %v4680
      %4697 = vmatprep.subr.bf16.mxu0 0
      %4698 = vmatpush1.bf16.msra.mxu0 %v4679
      %4699 = vmatprep.subr.bf16.mxu0 0
      %4700 = vmatpush1.bf16.msra.mxu0 %v4678
      %4701 = vmatprep.subr.bf16.mxu0 0
      %4702 = vmatpush1.bf16.msra.mxu0 %v4677
      %4703 = vmatprep.subr.bf16.mxu0 0
      %4704 = vmatpush1.bf16.msra.mxu0 %v4676
      %4705 = vmatprep.subr.bf16.mxu0 0
      %4706 = vmatpush1.bf16.msra.mxu0 %v4675
      %4707 = vmatprep.subr.bf16.mxu0 0
      %4708 = vmatpush2.bf16.msra.mxu0 0
      %4709 = vmatprep.subr.bf16.mxu0 0
      %4710 = vmatpush2.bf16.msra.mxu0 0
      %4711 = vmatprep.subr.bf16.mxu0 0
      %4712 = vmatpush2.bf16.msra.mxu0 0
      %4713 = vmatprep.subr.bf16.mxu0 0
      %4714 = vmatpush2.bf16.msra.mxu0 0
      %4715 = vmatprep.subr.bf16.mxu0 0
      %4716 = vmatpush2.bf16.msra.mxu0 0
      %4717 = vmatprep.subr.bf16.mxu0 0
      %4718 = vmatpush2.bf16.msra.mxu0 0
      %4719 = vmatprep.subr.bf16.mxu0 0
      %4720 = vmatpush2.bf16.msra.mxu0 0
      %4721 = vmatprep.subr.bf16.mxu0 0
      %4722 = vmatpush2.bf16.msra.mxu0 0
      %4723 = vmatprep.mubr.bf16.mxu0 0
      %4724 = vmatmul.mubr.bf16.gmra.mxu0 %v4621
      %v4725 = vpop.f32.mrf.mxu0
      %v4726 = vadd.f32 0.0, %v4725
      %v4727 = vpop.f32.mrf.mxu0
      %v4728 = vpop.f32.mrf.mxu0
      %v4729 = vadd.f32 0.0, %v4728
      %v4730 = vpop.f32.mrf.mxu0
      %4731 = vmatprep.mubr.bf16.mxu0 0
      %4732 = vmatmul.mubr.bf16.gmra.mxu0 %v4622
      %v4733 = vpop.f32.mrf.mxu0
      %v4734 = vadd.f32 0.0, %v4733
      %v4735 = vpop.f32.mrf.mxu0
      %v4736 = vpop.f32.mrf.mxu0
      %v4737 = vadd.f32 0.0, %v4736
      %v4738 = vpop.f32.mrf.mxu0
      %4739 = vmatprep.mubr.bf16.mxu0 0
      %4740 = vmatmul.mubr.bf16.gmra.mxu0 %v4623
      %v4741 = vpop.f32.mrf.mxu0
      %v4742 = vadd.f32 0.0, %v4741
      %v4743 = vpop.f32.mrf.mxu0
      %v4744 = vpop.f32.mrf.mxu0
      %v4745 = vadd.f32 0.0, %v4744
      %v4746 = vpop.f32.mrf.mxu0
      %4747 = vmatprep.mubr.bf16.mxu0 0
      %4748 = vmatmul.mubr.bf16.gmra.mxu0 %v4624
      %v4749 = vpop.f32.mrf.mxu0
      %v4750 = vadd.f32 0.0, %v4749
      %v4751 = vpop.f32.mrf.mxu0
      %v4752 = vpop.f32.mrf.mxu0
      %v4753 = vadd.f32 0.0, %v4752
      %v4754 = vpop.f32.mrf.mxu0
      %4755 = vmatprep.mubr.bf16.mxu0 0
      %4756 = vmatmul.mubr.bf16.gmra.mxu0 %v4625
      %v4757 = vpop.f32.mrf.mxu0
      %v4758 = vadd.f32 0.0, %v4757
      %v4759 = vpop.f32.mrf.mxu0
      %v4760 = vpop.f32.mrf.mxu0
      %v4761 = vadd.f32 0.0, %v4760
      %v4762 = vpop.f32.mrf.mxu0
      %4763 = vdwg.mxu0
      %v4764 = vadd.f32 %v4601, %v4726
      %v4765 = vadd.f32 %v4602, %v4729
      %v4766 = vadd.f32 %v4603, %v4734
      %v4767 = vadd.f32 %v4604, %v4737
      %v4768 = vadd.f32 %v4605, %v4742
      %v4769 = vadd.f32 %v4606, %v4745
      %v4770 = vadd.f32 %v4607, %v4750
      %v4771 = vadd.f32 %v4608, %v4753
      %v4772 = vadd.f32 %v4609, %v4758
      %v4773 = vadd.f32 %v4610, %v4761
      %s4774 = scalar_lea.vmem %s3, 2
      %v4775 = vld [vmem:[%s4774] sm:$0x1]
      %v4777 = vlaneseq
      %v4778 = vshrl.u32 %v4777, 7
      %v4779 = vsub.s32 0, %v4778
      %v4780 = vrot.slane %v4775, %v4779
      %v4782 = vadd.f32 %v4764, %v4780
      %v4783 = vadd.f32 %v4765, %v4780
      %v4784 = vadd.f32 %v4766, %v4780
      %v4785 = vadd.f32 %v4767, %v4780
      %v4786 = vadd.f32 %v4768, %v4780
      %v4787 = vadd.f32 %v4769, %v4780
      %v4788 = vadd.f32 %v4770, %v4780
      %v4789 = vadd.f32 %v4771, %v4780
      %v4790 = vadd.f32 %v4772, %v4780
      %v4791 = vadd.f32 %v4773, %v4780
      %v4792 = vmax.f32 %v4782, 0.0
      %v4793 = vmax.f32 %v4783, 0.0
      %v4794 = vmax.f32 %v4784, 0.0
      %v4795 = vmax.f32 %v4785, 0.0
      %v4796 = vmax.f32 %v4786, 0.0
      %v4797 = vmax.f32 %v4787, 0.0
      %v4798 = vmax.f32 %v4788, 0.0
      %v4799 = vmax.f32 %v4789, 0.0
      %v4800 = vmax.f32 %v4790, 0.0
      %v4801 = vmax.f32 %v4791, 0.0
      %v4802 = vld [vmem:[%s4 + $0xb4] sm:$0xc]
      %v4803 = vld [vmem:[%s4 + $0xb8] sm:$0xf]
      %v4804 = vld [vmem:[%s4 + $0xbc] sm:$0xf]
      %v4805 = vld [vmem:[%s4 + $0xc0] sm:$0xf]
      %v4806 = vld [vmem:[%s4 + $0xc4] sm:$0xf]
      %v4807 = vld [vmem:[%s4 + $0xc8] sm:$0xf]
      %v4808 = vld [vmem:[%s4 + $0xcc] sm:$0xf]
      %v4809 = vld [vmem:[%s4 + $0xd0] sm:$0xf]
      %v4810 = vld [vmem:[%s4 + $0xd4] sm:$0xf]
      %v4811 = vld [vmem:[%s4 + $0xd8] sm:$0xf]
      %v4812 = vld [vmem:[%s4 + $0xdc] sm:$0x1]
      %v4813 = vunpack.c.l.bf16 %v4802
      %v4814 = vunpack.c.l.bf16 %v4803
      %v4815 = vunpack.c.l.bf16 %v4804
      %v4816 = vunpack.c.l.bf16 %v4805
      %v4817 = vunpack.c.l.bf16 %v4806
      %v4818 = vunpack.c.l.bf16 %v4807
      %v4819 = vunpack.c.l.bf16 %v4808
      %v4820 = vunpack.c.l.bf16 %v4809
      %v4821 = vunpack.c.l.bf16 %v4810
      %v4822 = vunpack.c.l.bf16 %v4811
      %v4823 = vunpack.c.l.bf16 %v4812
      %vm4835 = vcmask 1043456
      %v4836 = vrot.slane %v4813, 4
      %v4837 = vrot.slane %v4814, 4
      %v4838 = vsel %vm4835, %v4836, %v4837
      %v4839 = vrot.slane %v4815, 4
      %v4840 = vsel %vm4835, %v4837, %v4839
      %v4841 = vrot.slane %v4816, 4
      %v4842 = vsel %vm4835, %v4839, %v4841
      %v4843 = vrot.slane %v4817, 4
      %v4844 = vsel %vm4835, %v4841, %v4843
      %v4845 = vrot.slane %v4818, 4
      %v4846 = vsel %vm4835, %v4843, %v4845
      %v4847 = vrot.slane %v4819, 4
      %v4848 = vsel %vm4835, %v4845, %v4847
      %v4849 = vrot.slane %v4820, 4
      %v4850 = vsel %vm4835, %v4847, %v4849
      %v4851 = vrot.slane %v4821, 4
      %v4852 = vsel %vm4835, %v4849, %v4851
      %v4853 = vrot.slane %v4822, 4
      %v4854 = vsel %vm4835, %v4851, %v4853
      %v4855 = vrot.slane %v4823, 4
      %v4856 = vsel %vm4835, %v4853, %v4855
      %v4867 = vmul.f32 %v4792, %v4838
      %v4868 = vmul.f32 %v4793, %v4840
      %v4869 = vmul.f32 %v4794, %v4842
      %v4870 = vmul.f32 %v4795, %v4844
      %v4871 = vmul.f32 %v4796, %v4846
      %v4872 = vmul.f32 %v4797, %v4848
      %v4873 = vmul.f32 %v4798, %v4850
      %v4874 = vmul.f32 %v4799, %v4852
      %v4875 = vmul.f32 %v4800, %v4854
      %v4876 = vmul.f32 %v4801, %v4856
      %4877 = vst [vmem:[#allocation4] sm:$0xff] 0.0
      %4878 = vst [vmem:[#allocation4 + $0x8] sm:$0x7] 0.0
      %4879 = vst [vmem:[#allocation4 + $0xb] sm:$0xff] %v4867
      %4880 = vst [vmem:[#allocation4 + $0x13] sm:$0xff] %v4868
      %4881 = vst [vmem:[#allocation4 + $0x1b] sm:$0xff] %v4869
      %4882 = vst [vmem:[#allocation4 + $0x23] sm:$0xff] %v4870
      %4883 = vst [vmem:[#allocation4 + $0x2b] sm:$0xff] %v4871
      %4884 = vst [vmem:[#allocation4 + $0x33] sm:$0xff] %v4872
      %4885 = vst [vmem:[#allocation4 + $0x3b] sm:$0xff] %v4873
      %4886 = vst [vmem:[#allocation4 + $0x43] sm:$0xff] %v4874
      %4887 = vst [vmem:[#allocation4 + $0x4b] sm:$0xff] %v4875
      %4888 = vst [vmem:[#allocation4 + $0x53] sm:$0x3f] %v4876
      %4889 = vst [vmem:[#allocation4 + $0x59] sm:$0xff] 0.0
      %4890 = vst [vmem:[#allocation4 + $0x61] sm:$0x7] 0.0
      %v4891 = vld [vmem:[%s6] sm:$0xf]
      %v4892 = vld [vmem:[%s6 + $0x4] sm:$0xf]
      %v4893 = vld [vmem:[%s6 + $0x8] sm:$0xf]
      %v4894 = vld [vmem:[%s6 + $0xc] sm:$0xf]
      %v4895 = vld [vmem:[#allocation4] sm:$0xff]
      %v4896 = vld [vmem:[#allocation4 + $0x8] sm:$0xff]
      %v4897 = vld [vmem:[#allocation4 + $0x10] sm:$0xf]
      %v4898 = vpack.c.bf16 %v4896, %v4895
      %v4899 = vpack.c.bf16 %v4897, %v4897
      %v4904 = vunpack.c.l.b16 %v4891
      %v4905 = vunpack.c.l.b16 %v4892
      %v4906 = vunpack.c.l.b16 %v4893
      %v4907 = vunpack.c.l.b16 %v4894
      %v4908 = vpack.c.b16 %v4905, %v4904
      %v4909 = vpack.c.b16 %v4907, %v4906
      %vm4910 = vcmask 162816
      %v4912 = vsel %vm4910, %v4908, 0
      %v4915 = vsel %vm4910, %v4909, 0
      %v4918 = vsel %vm1013, %v4899, 0
      %4920 = vmatprep.subr.bf16.mxu0 0
      %4921 = vmatpush1.bf16.msra.mxu0 0
      %4922 = vmatprep.subr.bf16.mxu0 0
      %4923 = vmatpush1.bf16.msra.mxu0 0
      %4924 = vmatprep.subr.bf16.mxu0 0
      %4925 = vmatpush1.bf16.msra.mxu0 0
      %4926 = vmatprep.subr.bf16.mxu0 0
      %4927 = vmatpush1.bf16.msra.mxu0 0
      %4928 = vmatprep.subr.bf16.mxu0 0
      %4929 = vmatpush1.bf16.msra.mxu0 0
      %4930 = vmatprep.subr.bf16.mxu0 0
      %4931 = vmatpush1.bf16.msra.mxu0 0
      %4932 = vmatprep.subr.bf16.mxu0 0
      %4933 = vmatpush1.bf16.msra.mxu0 %v4918
      %4934 = vmatprep.subr.bf16.mxu0 0
      %4935 = vmatpush1.bf16.msra.mxu0 %v4898
      %4936 = vmatprep.subr.bf16.mxu0 0
      %4937 = vmatpush2.bf16.msra.mxu0 0
      %4938 = vmatprep.subr.bf16.mxu0 0
      %4939 = vmatpush2.bf16.msra.mxu0 0
      %4940 = vmatprep.subr.bf16.mxu0 0
      %4941 = vmatpush2.bf16.msra.mxu0 0
      %4942 = vmatprep.subr.bf16.mxu0 0
      %4943 = vmatpush2.bf16.msra.mxu0 0
      %4944 = vmatprep.subr.bf16.mxu0 0
      %4945 = vmatpush2.bf16.msra.mxu0 0
      %4946 = vmatprep.subr.bf16.mxu0 0
      %4947 = vmatpush2.bf16.msra.mxu0 0
      %4948 = vmatprep.subr.bf16.mxu0 0
      %4949 = vmatpush2.bf16.msra.mxu0 0
      %4950 = vmatprep.subr.bf16.mxu0 0
      %4951 = vmatpush2.bf16.msra.mxu0 0
      %4952 = vmatprep.mubr.bf16.mxu0 0
      %4953 = vmatmul.mubr.bf16.gmra.mxu0 %v4912
      %v4954 = vpop.f32.mrf.mxu0
      %v4955 = vadd.f32 0.0, %v4954
      %v4956 = vpop.f32.mrf.mxu0
      %v4957 = vpop.f32.mrf.mxu0
      %v4958 = vadd.f32 0.0, %v4957
      %v4959 = vpop.f32.mrf.mxu0
      %4960 = vmatprep.mubr.bf16.mxu0 0
      %4961 = vmatmul.mubr.bf16.gmra.mxu0 %v4915
      %v4962 = vpop.f32.mrf.mxu0
      %v4963 = vadd.f32 0.0, %v4962
      %v4964 = vpop.f32.mrf.mxu0
      %v4965 = vpop.f32.mrf.mxu0
      %v4966 = vadd.f32 0.0, %v4965
      %v4967 = vpop.f32.mrf.mxu0
      %4968 = vdwg.mxu0
      %4969 = vst [vmem:[#allocation8] sm:$0x3f] %v4955
      %s4970 = scalar_lea.vmem [#allocation8], 40
      %4971 = vst [vmem:[%s4970] sm:$0x3f] %v4958
      %s4972 = scalar_lea.vmem [#allocation8], 80
      %4973 = vst [vmem:[%s4972] sm:$0x3f] %v4963
      %s4974 = scalar_lea.vmem [#allocation8], 120
      %4975 = vst [vmem:[%s4974] sm:$0x3f] %v4966
      %v4976 = vld [vmem:[#allocation4 + $0x14] sm:$0xff]
      %v4977 = vld [vmem:[#allocation4 + $0x1c] sm:$0xff]
      %v4978 = vld [vmem:[#allocation4 + $0x24] sm:$0xf]
      %v4979 = vpack.c.bf16 %v4977, %v4976
      %v4980 = vpack.c.bf16 %v4978, %v4978
      %v4982 = vsel %vm1013, %v4980, 0
      %4984 = vmatprep.subr.bf16.mxu0 0
      %4985 = vmatpush1.bf16.msra.mxu0 0
      %4986 = vmatprep.subr.bf16.mxu0 0
      %4987 = vmatpush1.bf16.msra.mxu0 0
      %4988 = vmatprep.subr.bf16.mxu0 0
      %4989 = vmatpush1.bf16.msra.mxu0 0
      %4990 = vmatprep.subr.bf16.mxu0 0
      %4991 = vmatpush1.bf16.msra.mxu0 0
      %4992 = vmatprep.subr.bf16.mxu0 0
      %4993 = vmatpush1.bf16.msra.mxu0 0
      %4994 = vmatprep.subr.bf16.mxu0 0
      %4995 = vmatpush1.bf16.msra.mxu0 0
      %4996 = vmatprep.subr.bf16.mxu0 0
      %4997 = vmatpush1.bf16.msra.mxu0 %v4982
      %4998 = vmatprep.subr.bf16.mxu0 0
      %4999 = vmatpush1.bf16.msra.mxu0 %v4979
      %5000 = vmatprep.subr.bf16.mxu0 0
      %5001 = vmatpush2.bf16.msra.mxu0 0
      %5002 = vmatprep.subr.bf16.mxu0 0
      %5003 = vmatpush2.bf16.msra.mxu0 0
      %5004 = vmatprep.subr.bf16.mxu0 0
      %5005 = vmatpush2.bf16.msra.mxu0 0
      %5006 = vmatprep.subr.bf16.mxu0 0
      %5007 = vmatpush2.bf16.msra.mxu0 0
      %5008 = vmatprep.subr.bf16.mxu0 0
      %5009 = vmatpush2.bf16.msra.mxu0 0
      %5010 = vmatprep.subr.bf16.mxu0 0
      %5011 = vmatpush2.bf16.msra.mxu0 0
      %5012 = vmatprep.subr.bf16.mxu0 0
      %5013 = vmatpush2.bf16.msra.mxu0 0
      %5014 = vmatprep.subr.bf16.mxu0 0
      %5015 = vmatpush2.bf16.msra.mxu0 0
      %5016 = vmatprep.mubr.bf16.mxu0 0
      %5017 = vmatmul.mubr.bf16.gmra.mxu0 %v4912
      %v5018 = vpop.f32.mrf.mxu0
      %v5019 = vadd.f32 0.0, %v5018
      %v5020 = vpop.f32.mrf.mxu0
      %v5021 = vpop.f32.mrf.mxu0
      %v5022 = vadd.f32 0.0, %v5021
      %v5023 = vpop.f32.mrf.mxu0
      %5024 = vmatprep.mubr.bf16.mxu0 0
      %5025 = vmatmul.mubr.bf16.gmra.mxu0 %v4915
      %v5026 = vpop.f32.mrf.mxu0
      %v5027 = vadd.f32 0.0, %v5026
      %v5028 = vpop.f32.mrf.mxu0
      %v5029 = vpop.f32.mrf.mxu0
      %v5030 = vadd.f32 0.0, %v5029
      %v5031 = vpop.f32.mrf.mxu0
      %5032 = vdwg.mxu0
      %5033 = vst [vmem:[#allocation8 + $0x6] sm:$0x3f] %v5019
      %5034 = vst [vmem:[%s4970 + $0x6] sm:$0x3f] %v5022
      %5035 = vst [vmem:[%s4972 + $0x6] sm:$0x3f] %v5027
      %5036 = vst [vmem:[%s4974 + $0x6] sm:$0x3f] %v5030
      %v5037 = vld [vmem:[#allocation4 + $0x28] sm:$0xff]
      %v5038 = vld [vmem:[#allocation4 + $0x30] sm:$0xff]
      %v5039 = vld [vmem:[#allocation4 + $0x38] sm:$0xf]
      %v5040 = vpack.c.bf16 %v5038, %v5037
      %v5041 = vpack.c.bf16 %v5039, %v5039
      %v5043 = vsel %vm1013, %v5041, 0
      %5045 = vmatprep.subr.bf16.mxu0 0
      %5046 = vmatpush1.bf16.msra.mxu0 0
      %5047 = vmatprep.subr.bf16.mxu0 0
      %5048 = vmatpush1.bf16.msra.mxu0 0
      %5049 = vmatprep.subr.bf16.mxu0 0
      %5050 = vmatpush1.bf16.msra.mxu0 0
      %5051 = vmatprep.subr.bf16.mxu0 0
      %5052 = vmatpush1.bf16.msra.mxu0 0
      %5053 = vmatprep.subr.bf16.mxu0 0
      %5054 = vmatpush1.bf16.msra.mxu0 0
      %5055 = vmatprep.subr.bf16.mxu0 0
      %5056 = vmatpush1.bf16.msra.mxu0 0
      %5057 = vmatprep.subr.bf16.mxu0 0
      %5058 = vmatpush1.bf16.msra.mxu0 %v5043
      %5059 = vmatprep.subr.bf16.mxu0 0
      %5060 = vmatpush1.bf16.msra.mxu0 %v5040
      %5061 = vmatprep.subr.bf16.mxu0 0
      %5062 = vmatpush2.bf16.msra.mxu0 0
      %5063 = vmatprep.subr.bf16.mxu0 0
      %5064 = vmatpush2.bf16.msra.mxu0 0
      %5065 = vmatprep.subr.bf16.mxu0 0
      %5066 = vmatpush2.bf16.msra.mxu0 0
      %5067 = vmatprep.subr.bf16.mxu0 0
      %5068 = vmatpush2.bf16.msra.mxu0 0
      %5069 = vmatprep.subr.bf16.mxu0 0
      %5070 = vmatpush2.bf16.msra.mxu0 0
      %5071 = vmatprep.subr.bf16.mxu0 0
      %5072 = vmatpush2.bf16.msra.mxu0 0
      %5073 = vmatprep.subr.bf16.mxu0 0
      %5074 = vmatpush2.bf16.msra.mxu0 0
      %5075 = vmatprep.subr.bf16.mxu0 0
      %5076 = vmatpush2.bf16.msra.mxu0 0
      %5077 = vmatprep.mubr.bf16.mxu0 0
      %5078 = vmatmul.mubr.bf16.gmra.mxu0 %v4912
      %v5079 = vpop.f32.mrf.mxu0
      %v5080 = vadd.f32 0.0, %v5079
      %v5081 = vpop.f32.mrf.mxu0
      %v5082 = vpop.f32.mrf.mxu0
      %v5083 = vadd.f32 0.0, %v5082
      %v5084 = vpop.f32.mrf.mxu0
      %5085 = vmatprep.mubr.bf16.mxu0 0
      %5086 = vmatmul.mubr.bf16.gmra.mxu0 %v4915
      %v5087 = vpop.f32.mrf.mxu0
      %v5088 = vadd.f32 0.0, %v5087
      %v5089 = vpop.f32.mrf.mxu0
      %v5090 = vpop.f32.mrf.mxu0
      %v5091 = vadd.f32 0.0, %v5090
      %v5092 = vpop.f32.mrf.mxu0
      %5093 = vdwg.mxu0
      %5094 = vst [vmem:[#allocation8 + $0xc] sm:$0x3f] %v5080
      %5095 = vst [vmem:[%s4970 + $0xc] sm:$0x3f] %v5083
      %5096 = vst [vmem:[%s4972 + $0xc] sm:$0x3f] %v5088
      %5097 = vst [vmem:[%s4974 + $0xc] sm:$0x3f] %v5091
      %v5098 = vld [vmem:[#allocation4 + $0x3c] sm:$0xff]
      %v5099 = vld [vmem:[#allocation4 + $0x44] sm:$0xff]
      %v5100 = vld [vmem:[#allocation4 + $0x4c] sm:$0xf]
      %v5101 = vpack.c.bf16 %v5099, %v5098
      %v5102 = vpack.c.bf16 %v5100, %v5100
      %v5104 = vsel %vm1013, %v5102, 0
      %5106 = vmatprep.subr.bf16.mxu0 0
      %5107 = vmatpush1.bf16.msra.mxu0 0
      %5108 = vmatprep.subr.bf16.mxu0 0
      %5109 = vmatpush1.bf16.msra.mxu0 0
      %5110 = vmatprep.subr.bf16.mxu0 0
      %5111 = vmatpush1.bf16.msra.mxu0 0
      %5112 = vmatprep.subr.bf16.mxu0 0
      %5113 = vmatpush1.bf16.msra.mxu0 0
      %5114 = vmatprep.subr.bf16.mxu0 0
      %5115 = vmatpush1.bf16.msra.mxu0 0
      %5116 = vmatprep.subr.bf16.mxu0 0
      %5117 = vmatpush1.bf16.msra.mxu0 0
      %5118 = vmatprep.subr.bf16.mxu0 0
      %5119 = vmatpush1.bf16.msra.mxu0 %v5104
      %5120 = vmatprep.subr.bf16.mxu0 0
      %5121 = vmatpush1.bf16.msra.mxu0 %v5101
      %5122 = vmatprep.subr.bf16.mxu0 0
      %5123 = vmatpush2.bf16.msra.mxu0 0
      %5124 = vmatprep.subr.bf16.mxu0 0
      %5125 = vmatpush2.bf16.msra.mxu0 0
      %5126 = vmatprep.subr.bf16.mxu0 0
      %5127 = vmatpush2.bf16.msra.mxu0 0
      %5128 = vmatprep.subr.bf16.mxu0 0
      %5129 = vmatpush2.bf16.msra.mxu0 0
      %5130 = vmatprep.subr.bf16.mxu0 0
      %5131 = vmatpush2.bf16.msra.mxu0 0
      %5132 = vmatprep.subr.bf16.mxu0 0
      %5133 = vmatpush2.bf16.msra.mxu0 0
      %5134 = vmatprep.subr.bf16.mxu0 0
      %5135 = vmatpush2.bf16.msra.mxu0 0
      %5136 = vmatprep.subr.bf16.mxu0 0
      %5137 = vmatpush2.bf16.msra.mxu0 0
      %5138 = vmatprep.mubr.bf16.mxu0 0
      %5139 = vmatmul.mubr.bf16.gmra.mxu0 %v4912
      %v5140 = vpop.f32.mrf.mxu0
      %v5141 = vadd.f32 0.0, %v5140
      %v5142 = vpop.f32.mrf.mxu0
      %v5143 = vpop.f32.mrf.mxu0
      %v5144 = vadd.f32 0.0, %v5143
      %v5145 = vpop.f32.mrf.mxu0
      %5146 = vmatprep.mubr.bf16.mxu0 0
      %5147 = vmatmul.mubr.bf16.gmra.mxu0 %v4915
      %v5148 = vpop.f32.mrf.mxu0
      %v5149 = vadd.f32 0.0, %v5148
      %v5150 = vpop.f32.mrf.mxu0
      %v5151 = vpop.f32.mrf.mxu0
      %v5152 = vadd.f32 0.0, %v5151
      %v5153 = vpop.f32.mrf.mxu0
      %5154 = vdwg.mxu0
      %5155 = vst [vmem:[#allocation8 + $0x12] sm:$0x3f] %v5141
      %5156 = vst [vmem:[%s4970 + $0x12] sm:$0x3f] %v5144
      %5157 = vst [vmem:[%s4972 + $0x12] sm:$0x3f] %v5149
      %5158 = vst [vmem:[%s4974 + $0x12] sm:$0x3f] %v5152
      %v5159 = vld [vmem:[#allocation4 + $0x50] sm:$0xff]
      %v5160 = vld [vmem:[#allocation4 + $0x58] sm:$0xff]
      %v5161 = vld [vmem:[#allocation4 + $0x60] sm:$0xf]
      %v5162 = vpack.c.bf16 %v5160, %v5159
      %v5163 = vpack.c.bf16 %v5161, %v5161
      %v5165 = vsel %vm1013, %v5163, 0
      %5167 = vmatprep.subr.bf16.mxu0 0
      %5168 = vmatpush1.bf16.msra.mxu0 0
      %5169 = vmatprep.subr.bf16.mxu0 0
      %5170 = vmatpush1.bf16.msra.mxu0 0
      %5171 = vmatprep.subr.bf16.mxu0 0
      %5172 = vmatpush1.bf16.msra.mxu0 0
      %5173 = vmatprep.subr.bf16.mxu0 0
      %5174 = vmatpush1.bf16.msra.mxu0 0
      %5175 = vmatprep.subr.bf16.mxu0 0
      %5176 = vmatpush1.bf16.msra.mxu0 0
      %5177 = vmatprep.subr.bf16.mxu0 0
      %5178 = vmatpush1.bf16.msra.mxu0 0
      %5179 = vmatprep.subr.bf16.mxu0 0
      %5180 = vmatpush1.bf16.msra.mxu0 %v5165
      %5181 = vmatprep.subr.bf16.mxu0 0
      %5182 = vmatpush1.bf16.msra.mxu0 %v5162
      %5183 = vmatprep.subr.bf16.mxu0 0
      %5184 = vmatpush2.bf16.msra.mxu0 0
      %5185 = vmatprep.subr.bf16.mxu0 0
      %5186 = vmatpush2.bf16.msra.mxu0 0
      %5187 = vmatprep.subr.bf16.mxu0 0
      %5188 = vmatpush2.bf16.msra.mxu0 0
      %5189 = vmatprep.subr.bf16.mxu0 0
      %5190 = vmatpush2.bf16.msra.mxu0 0
      %5191 = vmatprep.subr.bf16.mxu0 0
      %5192 = vmatpush2.bf16.msra.mxu0 0
      %5193 = vmatprep.subr.bf16.mxu0 0
      %5194 = vmatpush2.bf16.msra.mxu0 0
      %5195 = vmatprep.subr.bf16.mxu0 0
      %5196 = vmatpush2.bf16.msra.mxu0 0
      %5197 = vmatprep.subr.bf16.mxu0 0
      %5198 = vmatpush2.bf16.msra.mxu0 0
      %5199 = vmatprep.mubr.bf16.mxu0 0
      %5200 = vmatmul.mubr.bf16.gmra.mxu0 %v4912
      %v5201 = vpop.f32.mrf.mxu0
      %v5202 = vadd.f32 0.0, %v5201
      %v5203 = vpop.f32.mrf.mxu0
      %v5204 = vpop.f32.mrf.mxu0
      %v5205 = vadd.f32 0.0, %v5204
      %v5206 = vpop.f32.mrf.mxu0
      %5207 = vmatprep.mubr.bf16.mxu0 0
      %5208 = vmatmul.mubr.bf16.gmra.mxu0 %v4915
      %v5209 = vpop.f32.mrf.mxu0
      %v5210 = vadd.f32 0.0, %v5209
      %v5211 = vpop.f32.mrf.mxu0
      %v5212 = vpop.f32.mrf.mxu0
      %v5213 = vadd.f32 0.0, %v5212
      %v5214 = vpop.f32.mrf.mxu0
      %5215 = vdwg.mxu0
      %5216 = vst [vmem:[#allocation8 + $0x18] sm:$0x3f] %v5202
      %5217 = vst [vmem:[%s4970 + $0x18] sm:$0x3f] %v5205
      %5218 = vst [vmem:[%s4972 + $0x18] sm:$0x3f] %v5210
      %5219 = vst [vmem:[%s4974 + $0x18] sm:$0x3f] %v5213
      %v5220 = vld [vmem:[#allocation8] sm:$0xff]
      %v5221 = vld [vmem:[#allocation8 + $0x8] sm:$0xff]
      %v5222 = vld [vmem:[#allocation8 + $0x10] sm:$0x3f]
      %v5223 = vpack.c.bf16 %v5221, %v5220
      %v5224 = vpack.c.bf16 %v5222, %v5222
      %s5225 = scalar_lea.vmem %s2, 1152
      %v5226 = vld [vmem:[%s5225] sm:$0xf]
      %v5227 = vld [vmem:[%s5225 + $0x4] sm:$0xf]
      %v5228 = vld [vmem:[%s5225 + $0x8] sm:$0xf]
      %v5229 = vld [vmem:[%s5225 + $0xc] sm:$0xf]
      %v5230 = vld [vmem:[%s5225 + $0x10] sm:$0xf]
      %v5231 = vld [vmem:[%s5225 + $0x14] sm:$0xf]
      %v5232 = vld [vmem:[%s5225 + $0x18] sm:$0xf]
      %v5233 = vld [vmem:[%s5225 + $0x1c] sm:$0xf]
      %v5234 = vld [vmem:[%s5225 + $0x20] sm:$0xf]
      %v5235 = vld [vmem:[%s5225 + $0x24] sm:$0xf]
      %v5236 = vld [vmem:[%s5225 + $0x28] sm:$0xf]
      %v5237 = vld [vmem:[%s5225 + $0x2c] sm:$0xf]
      %v5238 = vld [vmem:[%s5225 + $0x30] sm:$0xf]
      %v5239 = vld [vmem:[%s5225 + $0x34] sm:$0xf]
      %v5240 = vld [vmem:[%s5225 + $0x38] sm:$0xf]
      %v5241 = vld [vmem:[%s5225 + $0x3c] sm:$0xf]
      %v5242 = vld [vmem:[%s4970] sm:$0xff]
      %v5243 = vld [vmem:[%s4970 + $0x8] sm:$0xff]
      %v5244 = vld [vmem:[%s4970 + $0x10] sm:$0x3f]
      %v5245 = vpack.c.bf16 %v5243, %v5242
      %v5246 = vpack.c.bf16 %v5244, %v5244
      %s5247 = scalar_lea.vmem %s2, 1216
      %v5248 = vld [vmem:[%s5247] sm:$0xf]
      %v5249 = vld [vmem:[%s5247 + $0x4] sm:$0xf]
      %v5250 = vld [vmem:[%s5247 + $0x8] sm:$0xf]
      %v5251 = vld [vmem:[%s5247 + $0xc] sm:$0xf]
      %v5252 = vld [vmem:[%s5247 + $0x10] sm:$0xf]
      %v5253 = vld [vmem:[%s5247 + $0x14] sm:$0xf]
      %v5254 = vld [vmem:[%s5247 + $0x18] sm:$0xf]
      %v5255 = vld [vmem:[%s5247 + $0x1c] sm:$0xf]
      %v5256 = vld [vmem:[%s5247 + $0x20] sm:$0xf]
      %v5257 = vld [vmem:[%s5247 + $0x24] sm:$0xf]
      %v5258 = vld [vmem:[%s5247 + $0x28] sm:$0xf]
      %v5259 = vld [vmem:[%s5247 + $0x2c] sm:$0xf]
      %v5260 = vld [vmem:[%s5247 + $0x30] sm:$0xf]
      %v5261 = vld [vmem:[%s5247 + $0x34] sm:$0xf]
      %v5262 = vld [vmem:[%s5247 + $0x38] sm:$0xf]
      %v5263 = vld [vmem:[%s5247 + $0x3c] sm:$0xf]
      %v5280 = vunpack.c.l.b16 %v5248
      %v5281 = vunpack.c.l.b16 %v5249
      %v5282 = vunpack.c.l.b16 %v5250
      %v5283 = vunpack.c.l.b16 %v5251
      %v5284 = vunpack.c.l.b16 %v5252
      %v5285 = vunpack.c.l.b16 %v5253
      %v5286 = vunpack.c.l.b16 %v5254
      %v5287 = vunpack.c.l.b16 %v5255
      %v5288 = vunpack.c.l.b16 %v5256
      %v5289 = vunpack.c.l.b16 %v5257
      %v5290 = vunpack.c.l.b16 %v5258
      %v5291 = vunpack.c.l.b16 %v5259
      %v5292 = vunpack.c.l.b16 %v5260
      %v5293 = vunpack.c.l.b16 %v5261
      %v5294 = vunpack.c.l.b16 %v5262
      %v5295 = vunpack.c.l.b16 %v5263
      %v5296 = vpack.c.b16 %v5281, %v5280
      %v5297 = vpack.c.b16 %v5283, %v5282
      %v5298 = vpack.c.b16 %v5285, %v5284
      %v5299 = vpack.c.b16 %v5287, %v5286
      %v5300 = vpack.c.b16 %v5289, %v5288
      %v5301 = vpack.c.b16 %v5291, %v5290
      %v5302 = vpack.c.b16 %v5293, %v5292
      %v5303 = vpack.c.b16 %v5295, %v5294
      %5312 = vmatprep.subr.bf16.mxu0 0
      %5313 = vmatpush1.bf16.msra.mxu0 %v5303
      %5314 = vmatprep.subr.bf16.mxu0 0
      %5315 = vmatpush1.bf16.msra.mxu0 %v5302
      %5316 = vmatprep.subr.bf16.mxu0 0
      %5317 = vmatpush1.bf16.msra.mxu0 %v5301
      %5318 = vmatprep.subr.bf16.mxu0 0
      %5319 = vmatpush1.bf16.msra.mxu0 %v5300
      %5320 = vmatprep.subr.bf16.mxu0 0
      %5321 = vmatpush1.bf16.msra.mxu0 %v5299
      %5322 = vmatprep.subr.bf16.mxu0 0
      %5323 = vmatpush1.bf16.msra.mxu0 %v5298
      %5324 = vmatprep.subr.bf16.mxu0 0
      %5325 = vmatpush1.bf16.msra.mxu0 %v5297
      %5326 = vmatprep.subr.bf16.mxu0 0
      %5327 = vmatpush1.bf16.msra.mxu0 %v5296
      %5328 = vmatprep.subr.bf16.mxu0 0
      %5329 = vmatpush2.bf16.msra.mxu0 0
      %5330 = vmatprep.subr.bf16.mxu0 0
      %5331 = vmatpush2.bf16.msra.mxu0 0
      %5332 = vmatprep.subr.bf16.mxu0 0
      %5333 = vmatpush2.bf16.msra.mxu0 0
      %5334 = vmatprep.subr.bf16.mxu0 0
      %5335 = vmatpush2.bf16.msra.mxu0 0
      %5336 = vmatprep.subr.bf16.mxu0 0
      %5337 = vmatpush2.bf16.msra.mxu0 0
      %5338 = vmatprep.subr.bf16.mxu0 0
      %5339 = vmatpush2.bf16.msra.mxu0 0
      %5340 = vmatprep.subr.bf16.mxu0 0
      %5341 = vmatpush2.bf16.msra.mxu0 0
      %5342 = vmatprep.subr.bf16.mxu0 0
      %5343 = vmatpush2.bf16.msra.mxu0 0
      %5344 = vmatprep.mubr.bf16.mxu0 0
      %5345 = vmatmul.mubr.bf16.gmra.mxu0 %v5245
      %v5346 = vpop.f32.mrf.mxu0
      %v5347 = vadd.f32 0.0, %v5346
      %v5348 = vpop.f32.mrf.mxu0
      %v5349 = vpop.f32.mrf.mxu0
      %v5350 = vadd.f32 0.0, %v5349
      %v5351 = vpop.f32.mrf.mxu0
      %5352 = vmatprep.mubr.bf16.mxu0 0
      %5353 = vmatmul.mubr.bf16.gmra.mxu0 %v5246
      %v5354 = vpop.f32.mrf.mxu0
      %v5355 = vadd.f32 0.0, %v5354
      %v5356 = vpop.f32.mrf.mxu0
      %v5357 = vpop.f32.mrf.mxu0
      %v5358 = vpop.f32.mrf.mxu0
      %5359 = vdwg.mxu0
      %v5376 = vunpack.c.l.b16 %v5226
      %v5377 = vunpack.c.l.b16 %v5227
      %v5378 = vunpack.c.l.b16 %v5228
      %v5379 = vunpack.c.l.b16 %v5229
      %v5380 = vunpack.c.l.b16 %v5230
      %v5381 = vunpack.c.l.b16 %v5231
      %v5382 = vunpack.c.l.b16 %v5232
      %v5383 = vunpack.c.l.b16 %v5233
      %v5384 = vunpack.c.l.b16 %v5234
      %v5385 = vunpack.c.l.b16 %v5235
      %v5386 = vunpack.c.l.b16 %v5236
      %v5387 = vunpack.c.l.b16 %v5237
      %v5388 = vunpack.c.l.b16 %v5238
      %v5389 = vunpack.c.l.b16 %v5239
      %v5390 = vunpack.c.l.b16 %v5240
      %v5391 = vunpack.c.l.b16 %v5241
      %v5392 = vpack.c.b16 %v5377, %v5376
      %v5393 = vpack.c.b16 %v5379, %v5378
      %v5394 = vpack.c.b16 %v5381, %v5380
      %v5395 = vpack.c.b16 %v5383, %v5382
      %v5396 = vpack.c.b16 %v5385, %v5384
      %v5397 = vpack.c.b16 %v5387, %v5386
      %v5398 = vpack.c.b16 %v5389, %v5388
      %v5399 = vpack.c.b16 %v5391, %v5390
      %5408 = vmatprep.subr.bf16.mxu0 0
      %5409 = vmatpush1.bf16.msra.mxu0 %v5399
      %5410 = vmatprep.subr.bf16.mxu0 0
      %5411 = vmatpush1.bf16.msra.mxu0 %v5398
      %5412 = vmatprep.subr.bf16.mxu0 0
      %5413 = vmatpush1.bf16.msra.mxu0 %v5397
      %5414 = vmatprep.subr.bf16.mxu0 0
      %5415 = vmatpush1.bf16.msra.mxu0 %v5396
      %5416 = vmatprep.subr.bf16.mxu0 0
      %5417 = vmatpush1.bf16.msra.mxu0 %v5395
      %5418 = vmatprep.subr.bf16.mxu0 0
      %5419 = vmatpush1.bf16.msra.mxu0 %v5394
      %5420 = vmatprep.subr.bf16.mxu0 0
      %5421 = vmatpush1.bf16.msra.mxu0 %v5393
      %5422 = vmatprep.subr.bf16.mxu0 0
      %5423 = vmatpush1.bf16.msra.mxu0 %v5392
      %5424 = vmatprep.subr.bf16.mxu0 0
      %5425 = vmatpush2.bf16.msra.mxu0 0
      %5426 = vmatprep.subr.bf16.mxu0 0
      %5427 = vmatpush2.bf16.msra.mxu0 0
      %5428 = vmatprep.subr.bf16.mxu0 0
      %5429 = vmatpush2.bf16.msra.mxu0 0
      %5430 = vmatprep.subr.bf16.mxu0 0
      %5431 = vmatpush2.bf16.msra.mxu0 0
      %5432 = vmatprep.subr.bf16.mxu0 0
      %5433 = vmatpush2.bf16.msra.mxu0 0
      %5434 = vmatprep.subr.bf16.mxu0 0
      %5435 = vmatpush2.bf16.msra.mxu0 0
      %5436 = vmatprep.subr.bf16.mxu0 0
      %5437 = vmatpush2.bf16.msra.mxu0 0
      %5438 = vmatprep.subr.bf16.mxu0 0
      %5439 = vmatpush2.bf16.msra.mxu0 0
      %5440 = vmatprep.mubr.bf16.mxu0 0
      %5441 = vmatmul.mubr.bf16.gmra.mxu0 %v5223
      %v5442 = vpop.f32.mrf.mxu0
      %v5443 = vadd.f32 %v5347, %v5442
      %v5444 = vpop.f32.mrf.mxu0
      %v5445 = vpop.f32.mrf.mxu0
      %v5446 = vadd.f32 %v5350, %v5445
      %v5447 = vpop.f32.mrf.mxu0
      %5448 = vmatprep.mubr.bf16.mxu0 0
      %5449 = vmatmul.mubr.bf16.gmra.mxu0 %v5224
      %v5450 = vpop.f32.mrf.mxu0
      %v5451 = vadd.f32 %v5355, %v5450
      %v5452 = vpop.f32.mrf.mxu0
      %v5453 = vpop.f32.mrf.mxu0
      %v5454 = vpop.f32.mrf.mxu0
      %5455 = vdwg.mxu0
      %v5456 = vld [vmem:[#allocation8 + $0x1] sm:$0xff]
      %v5457 = vld [vmem:[#allocation8 + $0x9] sm:$0xff]
      %v5458 = vld [vmem:[#allocation8 + $0x11] sm:$0x3f]
      %v5459 = vpack.c.bf16 %v5457, %v5456
      %v5460 = vpack.c.bf16 %v5458, %v5458
      %s5461 = scalar_lea.vmem %s2, 1280
      %v5462 = vld [vmem:[%s5461] sm:$0xf]
      %v5463 = vld [vmem:[%s5461 + $0x4] sm:$0xf]
      %v5464 = vld [vmem:[%s5461 + $0x8] sm:$0xf]
      %v5465 = vld [vmem:[%s5461 + $0xc] sm:$0xf]
      %v5466 = vld [vmem:[%s5461 + $0x10] sm:$0xf]
      %v5467 = vld [vmem:[%s5461 + $0x14] sm:$0xf]
      %v5468 = vld [vmem:[%s5461 + $0x18] sm:$0xf]
      %v5469 = vld [vmem:[%s5461 + $0x1c] sm:$0xf]
      %v5470 = vld [vmem:[%s5461 + $0x20] sm:$0xf]
      %v5471 = vld [vmem:[%s5461 + $0x24] sm:$0xf]
      %v5472 = vld [vmem:[%s5461 + $0x28] sm:$0xf]
      %v5473 = vld [vmem:[%s5461 + $0x2c] sm:$0xf]
      %v5474 = vld [vmem:[%s5461 + $0x30] sm:$0xf]
      %v5475 = vld [vmem:[%s5461 + $0x34] sm:$0xf]
      %v5476 = vld [vmem:[%s5461 + $0x38] sm:$0xf]
      %v5477 = vld [vmem:[%s5461 + $0x3c] sm:$0xf]
      %v5494 = vunpack.c.l.b16 %v5462
      %v5495 = vunpack.c.l.b16 %v5463
      %v5496 = vunpack.c.l.b16 %v5464
      %v5497 = vunpack.c.l.b16 %v5465
      %v5498 = vunpack.c.l.b16 %v5466
      %v5499 = vunpack.c.l.b16 %v5467
      %v5500 = vunpack.c.l.b16 %v5468
      %v5501 = vunpack.c.l.b16 %v5469
      %v5502 = vunpack.c.l.b16 %v5470
      %v5503 = vunpack.c.l.b16 %v5471
      %v5504 = vunpack.c.l.b16 %v5472
      %v5505 = vunpack.c.l.b16 %v5473
      %v5506 = vunpack.c.l.b16 %v5474
      %v5507 = vunpack.c.l.b16 %v5475
      %v5508 = vunpack.c.l.b16 %v5476
      %v5509 = vunpack.c.l.b16 %v5477
      %v5510 = vpack.c.b16 %v5495, %v5494
      %v5511 = vpack.c.b16 %v5497, %v5496
      %v5512 = vpack.c.b16 %v5499, %v5498
      %v5513 = vpack.c.b16 %v5501, %v5500
      %v5514 = vpack.c.b16 %v5503, %v5502
      %v5515 = vpack.c.b16 %v5505, %v5504
      %v5516 = vpack.c.b16 %v5507, %v5506
      %v5517 = vpack.c.b16 %v5509, %v5508
      %5526 = vmatprep.subr.bf16.mxu0 0
      %5527 = vmatpush1.bf16.msra.mxu0 %v5517
      %5528 = vmatprep.subr.bf16.mxu0 0
      %5529 = vmatpush1.bf16.msra.mxu0 %v5516
      %5530 = vmatprep.subr.bf16.mxu0 0
      %5531 = vmatpush1.bf16.msra.mxu0 %v5515
      %5532 = vmatprep.subr.bf16.mxu0 0
      %5533 = vmatpush1.bf16.msra.mxu0 %v5514
      %5534 = vmatprep.subr.bf16.mxu0 0
      %5535 = vmatpush1.bf16.msra.mxu0 %v5513
      %5536 = vmatprep.subr.bf16.mxu0 0
      %5537 = vmatpush1.bf16.msra.mxu0 %v5512
      %5538 = vmatprep.subr.bf16.mxu0 0
      %5539 = vmatpush1.bf16.msra.mxu0 %v5511
      %5540 = vmatprep.subr.bf16.mxu0 0
      %5541 = vmatpush1.bf16.msra.mxu0 %v5510
      %5542 = vmatprep.subr.bf16.mxu0 0
      %5543 = vmatpush2.bf16.msra.mxu0 0
      %5544 = vmatprep.subr.bf16.mxu0 0
      %5545 = vmatpush2.bf16.msra.mxu0 0
      %5546 = vmatprep.subr.bf16.mxu0 0
      %5547 = vmatpush2.bf16.msra.mxu0 0
      %5548 = vmatprep.subr.bf16.mxu0 0
      %5549 = vmatpush2.bf16.msra.mxu0 0
      %5550 = vmatprep.subr.bf16.mxu0 0
      %5551 = vmatpush2.bf16.msra.mxu0 0
      %5552 = vmatprep.subr.bf16.mxu0 0
      %5553 = vmatpush2.bf16.msra.mxu0 0
      %5554 = vmatprep.subr.bf16.mxu0 0
      %5555 = vmatpush2.bf16.msra.mxu0 0
      %5556 = vmatprep.subr.bf16.mxu0 0
      %5557 = vmatpush2.bf16.msra.mxu0 0
      %5558 = vmatprep.mubr.bf16.mxu0 0
      %5559 = vmatmul.mubr.bf16.gmra.mxu0 %v5459
      %v5560 = vpop.f32.mrf.mxu0
      %v5561 = vadd.f32 0.0, %v5560
      %v5562 = vpop.f32.mrf.mxu0
      %v5563 = vpop.f32.mrf.mxu0
      %v5564 = vadd.f32 0.0, %v5563
      %v5565 = vpop.f32.mrf.mxu0
      %5566 = vmatprep.mubr.bf16.mxu0 0
      %5567 = vmatmul.mubr.bf16.gmra.mxu0 %v5460
      %v5568 = vpop.f32.mrf.mxu0
      %v5569 = vadd.f32 0.0, %v5568
      %v5570 = vpop.f32.mrf.mxu0
      %v5571 = vpop.f32.mrf.mxu0
      %v5572 = vpop.f32.mrf.mxu0
      %5573 = vdwg.mxu0
      %v5574 = vadd.f32 %v5443, %v5561
      %v5575 = vadd.f32 %v5446, %v5564
      %v5576 = vadd.f32 %v5451, %v5569
      %v5577 = vld [vmem:[%s4972] sm:$0xff]
      %v5578 = vld [vmem:[%s4972 + $0x8] sm:$0xff]
      %v5579 = vld [vmem:[%s4972 + $0x10] sm:$0x3f]
      %v5580 = vpack.c.bf16 %v5578, %v5577
      %v5581 = vpack.c.bf16 %v5579, %v5579
      %s5582 = scalar_lea.vmem %s2, 1344
      %v5583 = vld [vmem:[%s5582] sm:$0xf]
      %v5584 = vld [vmem:[%s5582 + $0x4] sm:$0xf]
      %v5585 = vld [vmem:[%s5582 + $0x8] sm:$0xf]
      %v5586 = vld [vmem:[%s5582 + $0xc] sm:$0xf]
      %v5587 = vld [vmem:[%s5582 + $0x10] sm:$0xf]
      %v5588 = vld [vmem:[%s5582 + $0x14] sm:$0xf]
      %v5589 = vld [vmem:[%s5582 + $0x18] sm:$0xf]
      %v5590 = vld [vmem:[%s5582 + $0x1c] sm:$0xf]
      %v5591 = vld [vmem:[%s5582 + $0x20] sm:$0xf]
      %v5592 = vld [vmem:[%s5582 + $0x24] sm:$0xf]
      %v5593 = vld [vmem:[%s5582 + $0x28] sm:$0xf]
      %v5594 = vld [vmem:[%s5582 + $0x2c] sm:$0xf]
      %v5595 = vld [vmem:[%s5582 + $0x30] sm:$0xf]
      %v5596 = vld [vmem:[%s5582 + $0x34] sm:$0xf]
      %v5597 = vld [vmem:[%s5582 + $0x38] sm:$0xf]
      %v5598 = vld [vmem:[%s5582 + $0x3c] sm:$0xf]
      %v5615 = vunpack.c.l.b16 %v5583
      %v5616 = vunpack.c.l.b16 %v5584
      %v5617 = vunpack.c.l.b16 %v5585
      %v5618 = vunpack.c.l.b16 %v5586
      %v5619 = vunpack.c.l.b16 %v5587
      %v5620 = vunpack.c.l.b16 %v5588
      %v5621 = vunpack.c.l.b16 %v5589
      %v5622 = vunpack.c.l.b16 %v5590
      %v5623 = vunpack.c.l.b16 %v5591
      %v5624 = vunpack.c.l.b16 %v5592
      %v5625 = vunpack.c.l.b16 %v5593
      %v5626 = vunpack.c.l.b16 %v5594
      %v5627 = vunpack.c.l.b16 %v5595
      %v5628 = vunpack.c.l.b16 %v5596
      %v5629 = vunpack.c.l.b16 %v5597
      %v5630 = vunpack.c.l.b16 %v5598
      %v5631 = vpack.c.b16 %v5616, %v5615
      %v5632 = vpack.c.b16 %v5618, %v5617
      %v5633 = vpack.c.b16 %v5620, %v5619
      %v5634 = vpack.c.b16 %v5622, %v5621
      %v5635 = vpack.c.b16 %v5624, %v5623
      %v5636 = vpack.c.b16 %v5626, %v5625
      %v5637 = vpack.c.b16 %v5628, %v5627
      %v5638 = vpack.c.b16 %v5630, %v5629
      %5647 = vmatprep.subr.bf16.mxu0 0
      %5648 = vmatpush1.bf16.msra.mxu0 %v5638
      %5649 = vmatprep.subr.bf16.mxu0 0
      %5650 = vmatpush1.bf16.msra.mxu0 %v5637
      %5651 = vmatprep.subr.bf16.mxu0 0
      %5652 = vmatpush1.bf16.msra.mxu0 %v5636
      %5653 = vmatprep.subr.bf16.mxu0 0
      %5654 = vmatpush1.bf16.msra.mxu0 %v5635
      %5655 = vmatprep.subr.bf16.mxu0 0
      %5656 = vmatpush1.bf16.msra.mxu0 %v5634
      %5657 = vmatprep.subr.bf16.mxu0 0
      %5658 = vmatpush1.bf16.msra.mxu0 %v5633
      %5659 = vmatprep.subr.bf16.mxu0 0
      %5660 = vmatpush1.bf16.msra.mxu0 %v5632
      %5661 = vmatprep.subr.bf16.mxu0 0
      %5662 = vmatpush1.bf16.msra.mxu0 %v5631
      %5663 = vmatprep.subr.bf16.mxu0 0
      %5664 = vmatpush2.bf16.msra.mxu0 0
      %5665 = vmatprep.subr.bf16.mxu0 0
      %5666 = vmatpush2.bf16.msra.mxu0 0
      %5667 = vmatprep.subr.bf16.mxu0 0
      %5668 = vmatpush2.bf16.msra.mxu0 0
      %5669 = vmatprep.subr.bf16.mxu0 0
      %5670 = vmatpush2.bf16.msra.mxu0 0
      %5671 = vmatprep.subr.bf16.mxu0 0
      %5672 = vmatpush2.bf16.msra.mxu0 0
      %5673 = vmatprep.subr.bf16.mxu0 0
      %5674 = vmatpush2.bf16.msra.mxu0 0
      %5675 = vmatprep.subr.bf16.mxu0 0
      %5676 = vmatpush2.bf16.msra.mxu0 0
      %5677 = vmatprep.subr.bf16.mxu0 0
      %5678 = vmatpush2.bf16.msra.mxu0 0
      %5679 = vmatprep.mubr.bf16.mxu0 0
      %5680 = vmatmul.mubr.bf16.gmra.mxu0 %v5580
      %v5681 = vpop.f32.mrf.mxu0
      %v5682 = vadd.f32 0.0, %v5681
      %v5683 = vpop.f32.mrf.mxu0
      %v5684 = vpop.f32.mrf.mxu0
      %v5685 = vadd.f32 0.0, %v5684
      %v5686 = vpop.f32.mrf.mxu0
      %5687 = vmatprep.mubr.bf16.mxu0 0
      %5688 = vmatmul.mubr.bf16.gmra.mxu0 %v5581
      %v5689 = vpop.f32.mrf.mxu0
      %v5690 = vadd.f32 0.0, %v5689
      %v5691 = vpop.f32.mrf.mxu0
      %v5692 = vpop.f32.mrf.mxu0
      %v5693 = vpop.f32.mrf.mxu0
      %5694 = vdwg.mxu0
      %v5695 = vadd.f32 %v5574, %v5682
      %v5696 = vadd.f32 %v5575, %v5685
      %v5697 = vadd.f32 %v5576, %v5690
      %v5698 = vld [vmem:[%s4974] sm:$0xff]
      %v5699 = vld [vmem:[%s4974 + $0x8] sm:$0xff]
      %v5700 = vld [vmem:[%s4974 + $0x10] sm:$0x3f]
      %v5701 = vpack.c.bf16 %v5699, %v5698
      %v5702 = vpack.c.bf16 %v5700, %v5700
      %s5703 = scalar_lea.vmem %s2, 1408
      %v5704 = vld [vmem:[%s5703] sm:$0xf]
      %v5705 = vld [vmem:[%s5703 + $0x4] sm:$0xf]
      %v5706 = vld [vmem:[%s5703 + $0x8] sm:$0xf]
      %v5707 = vld [vmem:[%s5703 + $0xc] sm:$0xf]
      %v5708 = vld [vmem:[%s5703 + $0x10] sm:$0xf]
      %v5709 = vld [vmem:[%s5703 + $0x14] sm:$0xf]
      %v5710 = vld [vmem:[%s5703 + $0x18] sm:$0xf]
      %v5711 = vld [vmem:[%s5703 + $0x1c] sm:$0xf]
      %v5712 = vld [vmem:[%s5703 + $0x20] sm:$0xf]
      %v5713 = vld [vmem:[%s5703 + $0x24] sm:$0xf]
      %v5714 = vld [vmem:[%s5703 + $0x28] sm:$0xf]
      %v5715 = vld [vmem:[%s5703 + $0x2c] sm:$0xf]
      %v5716 = vld [vmem:[%s5703 + $0x30] sm:$0xf]
      %v5717 = vld [vmem:[%s5703 + $0x34] sm:$0xf]
      %v5718 = vld [vmem:[%s5703 + $0x38] sm:$0xf]
      %v5719 = vld [vmem:[%s5703 + $0x3c] sm:$0xf]
      %v5736 = vunpack.c.l.b16 %v5704
      %v5737 = vunpack.c.l.b16 %v5705
      %v5738 = vunpack.c.l.b16 %v5706
      %v5739 = vunpack.c.l.b16 %v5707
      %v5740 = vunpack.c.l.b16 %v5708
      %v5741 = vunpack.c.l.b16 %v5709
      %v5742 = vunpack.c.l.b16 %v5710
      %v5743 = vunpack.c.l.b16 %v5711
      %v5744 = vunpack.c.l.b16 %v5712
      %v5745 = vunpack.c.l.b16 %v5713
      %v5746 = vunpack.c.l.b16 %v5714
      %v5747 = vunpack.c.l.b16 %v5715
      %v5748 = vunpack.c.l.b16 %v5716
      %v5749 = vunpack.c.l.b16 %v5717
      %v5750 = vunpack.c.l.b16 %v5718
      %v5751 = vunpack.c.l.b16 %v5719
      %v5752 = vpack.c.b16 %v5737, %v5736
      %v5753 = vpack.c.b16 %v5739, %v5738
      %v5754 = vpack.c.b16 %v5741, %v5740
      %v5755 = vpack.c.b16 %v5743, %v5742
      %v5756 = vpack.c.b16 %v5745, %v5744
      %v5757 = vpack.c.b16 %v5747, %v5746
      %v5758 = vpack.c.b16 %v5749, %v5748
      %v5759 = vpack.c.b16 %v5751, %v5750
      %5768 = vmatprep.subr.bf16.mxu0 0
      %5769 = vmatpush1.bf16.msra.mxu0 %v5759
      %5770 = vmatprep.subr.bf16.mxu0 0
      %5771 = vmatpush1.bf16.msra.mxu0 %v5758
      %5772 = vmatprep.subr.bf16.mxu0 0
      %5773 = vmatpush1.bf16.msra.mxu0 %v5757
      %5774 = vmatprep.subr.bf16.mxu0 0
      %5775 = vmatpush1.bf16.msra.mxu0 %v5756
      %5776 = vmatprep.subr.bf16.mxu0 0
      %5777 = vmatpush1.bf16.msra.mxu0 %v5755
      %5778 = vmatprep.subr.bf16.mxu0 0
      %5779 = vmatpush1.bf16.msra.mxu0 %v5754
      %5780 = vmatprep.subr.bf16.mxu0 0
      %5781 = vmatpush1.bf16.msra.mxu0 %v5753
      %5782 = vmatprep.subr.bf16.mxu0 0
      %5783 = vmatpush1.bf16.msra.mxu0 %v5752
      %5784 = vmatprep.subr.bf16.mxu0 0
      %5785 = vmatpush2.bf16.msra.mxu0 0
      %5786 = vmatprep.subr.bf16.mxu0 0
      %5787 = vmatpush2.bf16.msra.mxu0 0
      %5788 = vmatprep.subr.bf16.mxu0 0
      %5789 = vmatpush2.bf16.msra.mxu0 0
      %5790 = vmatprep.subr.bf16.mxu0 0
      %5791 = vmatpush2.bf16.msra.mxu0 0
      %5792 = vmatprep.subr.bf16.mxu0 0
      %5793 = vmatpush2.bf16.msra.mxu0 0
      %5794 = vmatprep.subr.bf16.mxu0 0
      %5795 = vmatpush2.bf16.msra.mxu0 0
      %5796 = vmatprep.subr.bf16.mxu0 0
      %5797 = vmatpush2.bf16.msra.mxu0 0
      %5798 = vmatprep.subr.bf16.mxu0 0
      %5799 = vmatpush2.bf16.msra.mxu0 0
      %5800 = vmatprep.mubr.bf16.mxu0 0
      %5801 = vmatmul.mubr.bf16.gmra.mxu0 %v5701
      %v5802 = vpop.f32.mrf.mxu0
      %v5803 = vadd.f32 0.0, %v5802
      %v5804 = vpop.f32.mrf.mxu0
      %v5805 = vpop.f32.mrf.mxu0
      %v5806 = vadd.f32 0.0, %v5805
      %v5807 = vpop.f32.mrf.mxu0
      %5808 = vmatprep.mubr.bf16.mxu0 0
      %5809 = vmatmul.mubr.bf16.gmra.mxu0 %v5702
      %v5810 = vpop.f32.mrf.mxu0
      %v5811 = vadd.f32 0.0, %v5810
      %v5812 = vpop.f32.mrf.mxu0
      %v5813 = vpop.f32.mrf.mxu0
      %v5814 = vpop.f32.mrf.mxu0
      %5815 = vdwg.mxu0
      %v5816 = vadd.f32 %v5695, %v5803
      %v5817 = vadd.f32 %v5696, %v5806
      %v5818 = vadd.f32 %v5697, %v5811
      %v5819 = vld [vmem:[%s4972 + $0x1] sm:$0xff]
      %v5820 = vld [vmem:[%s4972 + $0x9] sm:$0xff]
      %v5821 = vld [vmem:[%s4972 + $0x11] sm:$0x3f]
      %v5822 = vpack.c.bf16 %v5820, %v5819
      %v5823 = vpack.c.bf16 %v5821, %v5821
      %s5824 = scalar_lea.vmem %s2, 1472
      %v5825 = vld [vmem:[%s5824] sm:$0xf]
      %v5826 = vld [vmem:[%s5824 + $0x4] sm:$0xf]
      %v5827 = vld [vmem:[%s5824 + $0x8] sm:$0xf]
      %v5828 = vld [vmem:[%s5824 + $0xc] sm:$0xf]
      %v5829 = vld [vmem:[%s5824 + $0x10] sm:$0xf]
      %v5830 = vld [vmem:[%s5824 + $0x14] sm:$0xf]
      %v5831 = vld [vmem:[%s5824 + $0x18] sm:$0xf]
      %v5832 = vld [vmem:[%s5824 + $0x1c] sm:$0xf]
      %v5833 = vld [vmem:[%s5824 + $0x20] sm:$0xf]
      %v5834 = vld [vmem:[%s5824 + $0x24] sm:$0xf]
      %v5835 = vld [vmem:[%s5824 + $0x28] sm:$0xf]
      %v5836 = vld [vmem:[%s5824 + $0x2c] sm:$0xf]
      %v5837 = vld [vmem:[%s5824 + $0x30] sm:$0xf]
      %v5838 = vld [vmem:[%s5824 + $0x34] sm:$0xf]
      %v5839 = vld [vmem:[%s5824 + $0x38] sm:$0xf]
      %v5840 = vld [vmem:[%s5824 + $0x3c] sm:$0xf]
      %v5857 = vunpack.c.l.b16 %v5825
      %v5858 = vunpack.c.l.b16 %v5826
      %v5859 = vunpack.c.l.b16 %v5827
      %v5860 = vunpack.c.l.b16 %v5828
      %v5861 = vunpack.c.l.b16 %v5829
      %v5862 = vunpack.c.l.b16 %v5830
      %v5863 = vunpack.c.l.b16 %v5831
      %v5864 = vunpack.c.l.b16 %v5832
      %v5865 = vunpack.c.l.b16 %v5833
      %v5866 = vunpack.c.l.b16 %v5834
      %v5867 = vunpack.c.l.b16 %v5835
      %v5868 = vunpack.c.l.b16 %v5836
      %v5869 = vunpack.c.l.b16 %v5837
      %v5870 = vunpack.c.l.b16 %v5838
      %v5871 = vunpack.c.l.b16 %v5839
      %v5872 = vunpack.c.l.b16 %v5840
      %v5873 = vpack.c.b16 %v5858, %v5857
      %v5874 = vpack.c.b16 %v5860, %v5859
      %v5875 = vpack.c.b16 %v5862, %v5861
      %v5876 = vpack.c.b16 %v5864, %v5863
      %v5877 = vpack.c.b16 %v5866, %v5865
      %v5878 = vpack.c.b16 %v5868, %v5867
      %v5879 = vpack.c.b16 %v5870, %v5869
      %v5880 = vpack.c.b16 %v5872, %v5871
      %5889 = vmatprep.subr.bf16.mxu0 0
      %5890 = vmatpush1.bf16.msra.mxu0 %v5880
      %5891 = vmatprep.subr.bf16.mxu0 0
      %5892 = vmatpush1.bf16.msra.mxu0 %v5879
      %5893 = vmatprep.subr.bf16.mxu0 0
      %5894 = vmatpush1.bf16.msra.mxu0 %v5878
      %5895 = vmatprep.subr.bf16.mxu0 0
      %5896 = vmatpush1.bf16.msra.mxu0 %v5877
      %5897 = vmatprep.subr.bf16.mxu0 0
      %5898 = vmatpush1.bf16.msra.mxu0 %v5876
      %5899 = vmatprep.subr.bf16.mxu0 0
      %5900 = vmatpush1.bf16.msra.mxu0 %v5875
      %5901 = vmatprep.subr.bf16.mxu0 0
      %5902 = vmatpush1.bf16.msra.mxu0 %v5874
      %5903 = vmatprep.subr.bf16.mxu0 0
      %5904 = vmatpush1.bf16.msra.mxu0 %v5873
      %5905 = vmatprep.subr.bf16.mxu0 0
      %5906 = vmatpush2.bf16.msra.mxu0 0
      %5907 = vmatprep.subr.bf16.mxu0 0
      %5908 = vmatpush2.bf16.msra.mxu0 0
      %5909 = vmatprep.subr.bf16.mxu0 0
      %5910 = vmatpush2.bf16.msra.mxu0 0
      %5911 = vmatprep.subr.bf16.mxu0 0
      %5912 = vmatpush2.bf16.msra.mxu0 0
      %5913 = vmatprep.subr.bf16.mxu0 0
      %5914 = vmatpush2.bf16.msra.mxu0 0
      %5915 = vmatprep.subr.bf16.mxu0 0
      %5916 = vmatpush2.bf16.msra.mxu0 0
      %5917 = vmatprep.subr.bf16.mxu0 0
      %5918 = vmatpush2.bf16.msra.mxu0 0
      %5919 = vmatprep.subr.bf16.mxu0 0
      %5920 = vmatpush2.bf16.msra.mxu0 0
      %5921 = vmatprep.mubr.bf16.mxu0 0
      %5922 = vmatmul.mubr.bf16.gmra.mxu0 %v5822
      %v5923 = vpop.f32.mrf.mxu0
      %v5924 = vadd.f32 0.0, %v5923
      %v5925 = vpop.f32.mrf.mxu0
      %v5926 = vpop.f32.mrf.mxu0
      %v5927 = vadd.f32 0.0, %v5926
      %v5928 = vpop.f32.mrf.mxu0
      %5929 = vmatprep.mubr.bf16.mxu0 0
      %5930 = vmatmul.mubr.bf16.gmra.mxu0 %v5823
      %v5931 = vpop.f32.mrf.mxu0
      %v5932 = vadd.f32 0.0, %v5931
      %v5933 = vpop.f32.mrf.mxu0
      %v5934 = vpop.f32.mrf.mxu0
      %v5935 = vpop.f32.mrf.mxu0
      %5936 = vdwg.mxu0
      %v5937 = vadd.f32 %v5816, %v5924
      %v5938 = vadd.f32 %v5817, %v5927
      %v5939 = vadd.f32 %v5818, %v5932
      %v5940 = vld [vmem:[#allocation8 + $0x6] sm:$0xff]
      %v5941 = vld [vmem:[#allocation8 + $0xe] sm:$0xff]
      %v5942 = vld [vmem:[#allocation8 + $0x16] sm:$0x3f]
      %v5943 = vpack.c.bf16 %v5941, %v5940
      %v5944 = vpack.c.bf16 %v5942, %v5942
      %s5945 = scalar_lea.vmem %s2, 1536
      %v5946 = vld [vmem:[%s5945] sm:$0xf]
      %v5947 = vld [vmem:[%s5945 + $0x4] sm:$0xf]
      %v5948 = vld [vmem:[%s5945 + $0x8] sm:$0xf]
      %v5949 = vld [vmem:[%s5945 + $0xc] sm:$0xf]
      %v5950 = vld [vmem:[%s5945 + $0x10] sm:$0xf]
      %v5951 = vld [vmem:[%s5945 + $0x14] sm:$0xf]
      %v5952 = vld [vmem:[%s5945 + $0x18] sm:$0xf]
      %v5953 = vld [vmem:[%s5945 + $0x1c] sm:$0xf]
      %v5954 = vld [vmem:[%s5945 + $0x20] sm:$0xf]
      %v5955 = vld [vmem:[%s5945 + $0x24] sm:$0xf]
      %v5956 = vld [vmem:[%s5945 + $0x28] sm:$0xf]
      %v5957 = vld [vmem:[%s5945 + $0x2c] sm:$0xf]
      %v5958 = vld [vmem:[%s5945 + $0x30] sm:$0xf]
      %v5959 = vld [vmem:[%s5945 + $0x34] sm:$0xf]
      %v5960 = vld [vmem:[%s5945 + $0x38] sm:$0xf]
      %v5961 = vld [vmem:[%s5945 + $0x3c] sm:$0xf]
      %v5978 = vunpack.c.l.b16 %v5946
      %v5979 = vunpack.c.l.b16 %v5947
      %v5980 = vunpack.c.l.b16 %v5948
      %v5981 = vunpack.c.l.b16 %v5949
      %v5982 = vunpack.c.l.b16 %v5950
      %v5983 = vunpack.c.l.b16 %v5951
      %v5984 = vunpack.c.l.b16 %v5952
      %v5985 = vunpack.c.l.b16 %v5953
      %v5986 = vunpack.c.l.b16 %v5954
      %v5987 = vunpack.c.l.b16 %v5955
      %v5988 = vunpack.c.l.b16 %v5956
      %v5989 = vunpack.c.l.b16 %v5957
      %v5990 = vunpack.c.l.b16 %v5958
      %v5991 = vunpack.c.l.b16 %v5959
      %v5992 = vunpack.c.l.b16 %v5960
      %v5993 = vunpack.c.l.b16 %v5961
      %v5994 = vpack.c.b16 %v5979, %v5978
      %v5995 = vpack.c.b16 %v5981, %v5980
      %v5996 = vpack.c.b16 %v5983, %v5982
      %v5997 = vpack.c.b16 %v5985, %v5984
      %v5998 = vpack.c.b16 %v5987, %v5986
      %v5999 = vpack.c.b16 %v5989, %v5988
      %v6000 = vpack.c.b16 %v5991, %v5990
      %v6001 = vpack.c.b16 %v5993, %v5992
      %6010 = vmatprep.subr.bf16.mxu0 0
      %6011 = vmatpush1.bf16.msra.mxu0 %v6001
      %6012 = vmatprep.subr.bf16.mxu0 0
      %6013 = vmatpush1.bf16.msra.mxu0 %v6000
      %6014 = vmatprep.subr.bf16.mxu0 0
      %6015 = vmatpush1.bf16.msra.mxu0 %v5999
      %6016 = vmatprep.subr.bf16.mxu0 0
      %6017 = vmatpush1.bf16.msra.mxu0 %v5998
      %6018 = vmatprep.subr.bf16.mxu0 0
      %6019 = vmatpush1.bf16.msra.mxu0 %v5997
      %6020 = vmatprep.subr.bf16.mxu0 0
      %6021 = vmatpush1.bf16.msra.mxu0 %v5996
      %6022 = vmatprep.subr.bf16.mxu0 0
      %6023 = vmatpush1.bf16.msra.mxu0 %v5995
      %6024 = vmatprep.subr.bf16.mxu0 0
      %6025 = vmatpush1.bf16.msra.mxu0 %v5994
      %6026 = vmatprep.subr.bf16.mxu0 0
      %6027 = vmatpush2.bf16.msra.mxu0 0
      %6028 = vmatprep.subr.bf16.mxu0 0
      %6029 = vmatpush2.bf16.msra.mxu0 0
      %6030 = vmatprep.subr.bf16.mxu0 0
      %6031 = vmatpush2.bf16.msra.mxu0 0
      %6032 = vmatprep.subr.bf16.mxu0 0
      %6033 = vmatpush2.bf16.msra.mxu0 0
      %6034 = vmatprep.subr.bf16.mxu0 0
      %6035 = vmatpush2.bf16.msra.mxu0 0
      %6036 = vmatprep.subr.bf16.mxu0 0
      %6037 = vmatpush2.bf16.msra.mxu0 0
      %6038 = vmatprep.subr.bf16.mxu0 0
      %6039 = vmatpush2.bf16.msra.mxu0 0
      %6040 = vmatprep.subr.bf16.mxu0 0
      %6041 = vmatpush2.bf16.msra.mxu0 0
      %6042 = vmatprep.mubr.bf16.mxu0 0
      %6043 = vmatmul.mubr.bf16.gmra.mxu0 %v5943
      %v6044 = vpop.f32.mrf.mxu0
      %v6045 = vadd.f32 0.0, %v6044
      %v6046 = vpop.f32.mrf.mxu0
      %v6047 = vpop.f32.mrf.mxu0
      %v6048 = vadd.f32 0.0, %v6047
      %v6049 = vpop.f32.mrf.mxu0
      %6050 = vmatprep.mubr.bf16.mxu0 0
      %6051 = vmatmul.mubr.bf16.gmra.mxu0 %v5944
      %v6052 = vpop.f32.mrf.mxu0
      %v6053 = vadd.f32 0.0, %v6052
      %v6054 = vpop.f32.mrf.mxu0
      %v6055 = vpop.f32.mrf.mxu0
      %v6056 = vpop.f32.mrf.mxu0
      %6057 = vdwg.mxu0
      %v6058 = vadd.f32 %v5937, %v6045
      %v6059 = vadd.f32 %v5938, %v6048
      %v6060 = vadd.f32 %v5939, %v6053
      %v6061 = vld [vmem:[%s4970 + $0x6] sm:$0xff]
      %v6062 = vld [vmem:[%s4970 + $0xe] sm:$0xff]
      %v6063 = vld [vmem:[%s4970 + $0x16] sm:$0x3f]
      %v6064 = vpack.c.bf16 %v6062, %v6061
      %v6065 = vpack.c.bf16 %v6063, %v6063
      %s6066 = scalar_lea.vmem %s2, 1600
      %v6067 = vld [vmem:[%s6066] sm:$0xf]
      %v6068 = vld [vmem:[%s6066 + $0x4] sm:$0xf]
      %v6069 = vld [vmem:[%s6066 + $0x8] sm:$0xf]
      %v6070 = vld [vmem:[%s6066 + $0xc] sm:$0xf]
      %v6071 = vld [vmem:[%s6066 + $0x10] sm:$0xf]
      %v6072 = vld [vmem:[%s6066 + $0x14] sm:$0xf]
      %v6073 = vld [vmem:[%s6066 + $0x18] sm:$0xf]
      %v6074 = vld [vmem:[%s6066 + $0x1c] sm:$0xf]
      %v6075 = vld [vmem:[%s6066 + $0x20] sm:$0xf]
      %v6076 = vld [vmem:[%s6066 + $0x24] sm:$0xf]
      %v6077 = vld [vmem:[%s6066 + $0x28] sm:$0xf]
      %v6078 = vld [vmem:[%s6066 + $0x2c] sm:$0xf]
      %v6079 = vld [vmem:[%s6066 + $0x30] sm:$0xf]
      %v6080 = vld [vmem:[%s6066 + $0x34] sm:$0xf]
      %v6081 = vld [vmem:[%s6066 + $0x38] sm:$0xf]
      %v6082 = vld [vmem:[%s6066 + $0x3c] sm:$0xf]
      %v6099 = vunpack.c.l.b16 %v6067
      %v6100 = vunpack.c.l.b16 %v6068
      %v6101 = vunpack.c.l.b16 %v6069
      %v6102 = vunpack.c.l.b16 %v6070
      %v6103 = vunpack.c.l.b16 %v6071
      %v6104 = vunpack.c.l.b16 %v6072
      %v6105 = vunpack.c.l.b16 %v6073
      %v6106 = vunpack.c.l.b16 %v6074
      %v6107 = vunpack.c.l.b16 %v6075
      %v6108 = vunpack.c.l.b16 %v6076
      %v6109 = vunpack.c.l.b16 %v6077
      %v6110 = vunpack.c.l.b16 %v6078
      %v6111 = vunpack.c.l.b16 %v6079
      %v6112 = vunpack.c.l.b16 %v6080
      %v6113 = vunpack.c.l.b16 %v6081
      %v6114 = vunpack.c.l.b16 %v6082
      %v6115 = vpack.c.b16 %v6100, %v6099
      %v6116 = vpack.c.b16 %v6102, %v6101
      %v6117 = vpack.c.b16 %v6104, %v6103
      %v6118 = vpack.c.b16 %v6106, %v6105
      %v6119 = vpack.c.b16 %v6108, %v6107
      %v6120 = vpack.c.b16 %v6110, %v6109
      %v6121 = vpack.c.b16 %v6112, %v6111
      %v6122 = vpack.c.b16 %v6114, %v6113
      %6131 = vmatprep.subr.bf16.mxu0 0
      %6132 = vmatpush1.bf16.msra.mxu0 %v6122
      %6133 = vmatprep.subr.bf16.mxu0 0
      %6134 = vmatpush1.bf16.msra.mxu0 %v6121
      %6135 = vmatprep.subr.bf16.mxu0 0
      %6136 = vmatpush1.bf16.msra.mxu0 %v6120
      %6137 = vmatprep.subr.bf16.mxu0 0
      %6138 = vmatpush1.bf16.msra.mxu0 %v6119
      %6139 = vmatprep.subr.bf16.mxu0 0
      %6140 = vmatpush1.bf16.msra.mxu0 %v6118
      %6141 = vmatprep.subr.bf16.mxu0 0
      %6142 = vmatpush1.bf16.msra.mxu0 %v6117
      %6143 = vmatprep.subr.bf16.mxu0 0
      %6144 = vmatpush1.bf16.msra.mxu0 %v6116
      %6145 = vmatprep.subr.bf16.mxu0 0
      %6146 = vmatpush1.bf16.msra.mxu0 %v6115
      %6147 = vmatprep.subr.bf16.mxu0 0
      %6148 = vmatpush2.bf16.msra.mxu0 0
      %6149 = vmatprep.subr.bf16.mxu0 0
      %6150 = vmatpush2.bf16.msra.mxu0 0
      %6151 = vmatprep.subr.bf16.mxu0 0
      %6152 = vmatpush2.bf16.msra.mxu0 0
      %6153 = vmatprep.subr.bf16.mxu0 0
      %6154 = vmatpush2.bf16.msra.mxu0 0
      %6155 = vmatprep.subr.bf16.mxu0 0
      %6156 = vmatpush2.bf16.msra.mxu0 0
      %6157 = vmatprep.subr.bf16.mxu0 0
      %6158 = vmatpush2.bf16.msra.mxu0 0
      %6159 = vmatprep.subr.bf16.mxu0 0
      %6160 = vmatpush2.bf16.msra.mxu0 0
      %6161 = vmatprep.subr.bf16.mxu0 0
      %6162 = vmatpush2.bf16.msra.mxu0 0
      %6163 = vmatprep.mubr.bf16.mxu0 0
      %6164 = vmatmul.mubr.bf16.gmra.mxu0 %v6064
      %v6165 = vpop.f32.mrf.mxu0
      %v6166 = vadd.f32 0.0, %v6165
      %v6167 = vpop.f32.mrf.mxu0
      %v6168 = vpop.f32.mrf.mxu0
      %v6169 = vadd.f32 0.0, %v6168
      %v6170 = vpop.f32.mrf.mxu0
      %6171 = vmatprep.mubr.bf16.mxu0 0
      %6172 = vmatmul.mubr.bf16.gmra.mxu0 %v6065
      %v6173 = vpop.f32.mrf.mxu0
      %v6174 = vadd.f32 0.0, %v6173
      %v6175 = vpop.f32.mrf.mxu0
      %v6176 = vpop.f32.mrf.mxu0
      %v6177 = vpop.f32.mrf.mxu0
      %6178 = vdwg.mxu0
      %v6179 = vadd.f32 %v6058, %v6166
      %v6180 = vadd.f32 %v6059, %v6169
      %v6181 = vadd.f32 %v6060, %v6174
      %v6182 = vld [vmem:[#allocation8 + $0x7] sm:$0xff]
      %v6183 = vld [vmem:[#allocation8 + $0xf] sm:$0xff]
      %v6184 = vld [vmem:[#allocation8 + $0x17] sm:$0x3f]
      %v6185 = vpack.c.bf16 %v6183, %v6182
      %v6186 = vpack.c.bf16 %v6184, %v6184
      %s6187 = scalar_lea.vmem %s2, 1664
      %v6188 = vld [vmem:[%s6187] sm:$0xf]
      %v6189 = vld [vmem:[%s6187 + $0x4] sm:$0xf]
      %v6190 = vld [vmem:[%s6187 + $0x8] sm:$0xf]
      %v6191 = vld [vmem:[%s6187 + $0xc] sm:$0xf]
      %v6192 = vld [vmem:[%s6187 + $0x10] sm:$0xf]
      %v6193 = vld [vmem:[%s6187 + $0x14] sm:$0xf]
      %v6194 = vld [vmem:[%s6187 + $0x18] sm:$0xf]
      %v6195 = vld [vmem:[%s6187 + $0x1c] sm:$0xf]
      %v6196 = vld [vmem:[%s6187 + $0x20] sm:$0xf]
      %v6197 = vld [vmem:[%s6187 + $0x24] sm:$0xf]
      %v6198 = vld [vmem:[%s6187 + $0x28] sm:$0xf]
      %v6199 = vld [vmem:[%s6187 + $0x2c] sm:$0xf]
      %v6200 = vld [vmem:[%s6187 + $0x30] sm:$0xf]
      %v6201 = vld [vmem:[%s6187 + $0x34] sm:$0xf]
      %v6202 = vld [vmem:[%s6187 + $0x38] sm:$0xf]
      %v6203 = vld [vmem:[%s6187 + $0x3c] sm:$0xf]
      %v6220 = vunpack.c.l.b16 %v6188
      %v6221 = vunpack.c.l.b16 %v6189
      %v6222 = vunpack.c.l.b16 %v6190
      %v6223 = vunpack.c.l.b16 %v6191
      %v6224 = vunpack.c.l.b16 %v6192
      %v6225 = vunpack.c.l.b16 %v6193
      %v6226 = vunpack.c.l.b16 %v6194
      %v6227 = vunpack.c.l.b16 %v6195
      %v6228 = vunpack.c.l.b16 %v6196
      %v6229 = vunpack.c.l.b16 %v6197
      %v6230 = vunpack.c.l.b16 %v6198
      %v6231 = vunpack.c.l.b16 %v6199
      %v6232 = vunpack.c.l.b16 %v6200
      %v6233 = vunpack.c.l.b16 %v6201
      %v6234 = vunpack.c.l.b16 %v6202
      %v6235 = vunpack.c.l.b16 %v6203
      %v6236 = vpack.c.b16 %v6221, %v6220
      %v6237 = vpack.c.b16 %v6223, %v6222
      %v6238 = vpack.c.b16 %v6225, %v6224
      %v6239 = vpack.c.b16 %v6227, %v6226
      %v6240 = vpack.c.b16 %v6229, %v6228
      %v6241 = vpack.c.b16 %v6231, %v6230
      %v6242 = vpack.c.b16 %v6233, %v6232
      %v6243 = vpack.c.b16 %v6235, %v6234
      %6252 = vmatprep.subr.bf16.mxu0 0
      %6253 = vmatpush1.bf16.msra.mxu0 %v6243
      %6254 = vmatprep.subr.bf16.mxu0 0
      %6255 = vmatpush1.bf16.msra.mxu0 %v6242
      %6256 = vmatprep.subr.bf16.mxu0 0
      %6257 = vmatpush1.bf16.msra.mxu0 %v6241
      %6258 = vmatprep.subr.bf16.mxu0 0
      %6259 = vmatpush1.bf16.msra.mxu0 %v6240
      %6260 = vmatprep.subr.bf16.mxu0 0
      %6261 = vmatpush1.bf16.msra.mxu0 %v6239
      %6262 = vmatprep.subr.bf16.mxu0 0
      %6263 = vmatpush1.bf16.msra.mxu0 %v6238
      %6264 = vmatprep.subr.bf16.mxu0 0
      %6265 = vmatpush1.bf16.msra.mxu0 %v6237
      %6266 = vmatprep.subr.bf16.mxu0 0
      %6267 = vmatpush1.bf16.msra.mxu0 %v6236
      %6268 = vmatprep.subr.bf16.mxu0 0
      %6269 = vmatpush2.bf16.msra.mxu0 0
      %6270 = vmatprep.subr.bf16.mxu0 0
      %6271 = vmatpush2.bf16.msra.mxu0 0
      %6272 = vmatprep.subr.bf16.mxu0 0
      %6273 = vmatpush2.bf16.msra.mxu0 0
      %6274 = vmatprep.subr.bf16.mxu0 0
      %6275 = vmatpush2.bf16.msra.mxu0 0
      %6276 = vmatprep.subr.bf16.mxu0 0
      %6277 = vmatpush2.bf16.msra.mxu0 0
      %6278 = vmatprep.subr.bf16.mxu0 0
      %6279 = vmatpush2.bf16.msra.mxu0 0
      %6280 = vmatprep.subr.bf16.mxu0 0
      %6281 = vmatpush2.bf16.msra.mxu0 0
      %6282 = vmatprep.subr.bf16.mxu0 0
      %6283 = vmatpush2.bf16.msra.mxu0 0
      %6284 = vmatprep.mubr.bf16.mxu0 0
      %6285 = vmatmul.mubr.bf16.gmra.mxu0 %v6185
      %v6286 = vpop.f32.mrf.mxu0
      %v6287 = vadd.f32 0.0, %v6286
      %v6288 = vpop.f32.mrf.mxu0
      %v6289 = vpop.f32.mrf.mxu0
      %v6290 = vadd.f32 0.0, %v6289
      %v6291 = vpop.f32.mrf.mxu0
      %6292 = vmatprep.mubr.bf16.mxu0 0
      %6293 = vmatmul.mubr.bf16.gmra.mxu0 %v6186
      %v6294 = vpop.f32.mrf.mxu0
      %v6295 = vadd.f32 0.0, %v6294
      %v6296 = vpop.f32.mrf.mxu0
      %v6297 = vpop.f32.mrf.mxu0
      %v6298 = vpop.f32.mrf.mxu0
      %6299 = vdwg.mxu0
      %v6300 = vadd.f32 %v6179, %v6287
      %v6301 = vadd.f32 %v6180, %v6290
      %v6302 = vadd.f32 %v6181, %v6295
      %s6303 = scalar_lea.vmem %s3, 3
      %v6304 = vld [vmem:[%s6303] sm:$0x1]
      %v6306 = vlaneseq
      %v6307 = vshrl.u32 %v6306, 7
      %v6308 = vsub.s32 0, %v6307
      %v6309 = vrot.slane %v6304, %v6308
      %v6311 = vadd.f32 %v6300, %v6309
      %v6312 = vadd.f32 %v6301, %v6309
      %v6313 = vadd.f32 %v6302, %v6309
      %v6314 = vmax.f32 %v6311, 0.0
      %v6315 = vmax.f32 %v6312, 0.0
      %v6316 = vmax.f32 %v6313, 0.0
      %v6317 = vld [vmem:[%s4 + $0xdc] sm:$0xe]
      %v6318 = vld [vmem:[%s4 + $0xe0] sm:$0xf]
      %v6319 = vld [vmem:[%s4 + $0xe4] sm:$0xf]
      %v6320 = vunpack.c.l.bf16 %v6317
      %v6321 = vunpack.c.l.bf16 %v6318
      %v6322 = vunpack.c.l.bf16 %v6319
      %vm6326 = vcmask 1045504
      %v6327 = vrot.slane %v6320, 2
      %v6328 = vrot.slane %v6321, 2
      %v6329 = vsel %vm6326, %v6327, %v6328
      %v6330 = vrot.slane %v6322, 2
      %v6331 = vsel %vm6326, %v6328, %v6330
      %v6335 = vmul.f32 %v6314, %v6329
      %v6336 = vmul.f32 %v6315, %v6331
      %v6337 = vmul.f32 %v6316, %v6330
      %6338 = vst [vmem:[#allocation5] sm:$0x7f] 0.0
      %6339 = vst [vmem:[#allocation5 + $0x7] sm:$0xff] %v6335
      %6340 = vst [vmem:[#allocation5 + $0xf] sm:$0xff] %v6336
      %6341 = vst [vmem:[#allocation5 + $0x17] sm:$0x3f] %v6337
      %6342 = vst [vmem:[#allocation5 + $0x1d] sm:$0x7f] 0.0
      %v6343 = vld [vmem:[%s7] sm:$0xf]
      %v6344 = vld [vmem:[%s7 + $0x4] sm:$0xf]
      %v6345 = vld [vmem:[%s7 + $0x8] sm:$0xf]
      %v6346 = vld [vmem:[%s7 + $0xc] sm:$0xf]
      %v6347 = vld [vmem:[#allocation5] sm:$0xff]
      %v6348 = vld [vmem:[#allocation5 + $0x8] sm:$0xf]
      %v6349 = vpack.c.bf16 %v6348, %v6347
      %v6354 = vunpack.c.l.b16 %v6343
      %v6355 = vunpack.c.l.b16 %v6344
      %v6356 = vunpack.c.l.b16 %v6345
      %v6357 = vunpack.c.l.b16 %v6346
      %v6358 = vpack.c.b16 %v6355, %v6354
      %v6359 = vpack.c.b16 %v6357, %v6356
      %vm6360 = vcmask 97280
      %v6362 = vsel %vm6360, %v6358, 0
      %v6365 = vsel %vm6360, %v6359, 0
      %v6368 = vsel %vm6326, %v6349, 0
      %6370 = vmatprep.subr.bf16.mxu0 0
      %6371 = vmatpush1.bf16.msra.mxu0 0
      %6372 = vmatprep.subr.bf16.mxu0 0
      %6373 = vmatpush1.bf16.msra.mxu0 0
      %6374 = vmatprep.subr.bf16.mxu0 0
      %6375 = vmatpush1.bf16.msra.mxu0 0
      %6376 = vmatprep.subr.bf16.mxu0 0
      %6377 = vmatpush1.bf16.msra.mxu0 0
      %6378 = vmatprep.subr.bf16.mxu0 0
      %6379 = vmatpush1.bf16.msra.mxu0 0
      %6380 = vmatprep.subr.bf16.mxu0 0
      %6381 = vmatpush1.bf16.msra.mxu0 0
      %6382 = vmatprep.subr.bf16.mxu0 0
      %6383 = vmatpush1.bf16.msra.mxu0 0
      %6384 = vmatprep.subr.bf16.mxu0 0
      %6385 = vmatpush1.bf16.msra.mxu0 %v6368
      %6386 = vmatprep.subr.bf16.mxu0 0
      %6387 = vmatpush2.bf16.msra.mxu0 0
      %6388 = vmatprep.subr.bf16.mxu0 0
      %6389 = vmatpush2.bf16.msra.mxu0 0
      %6390 = vmatprep.subr.bf16.mxu0 0
      %6391 = vmatpush2.bf16.msra.mxu0 0
      %6392 = vmatprep.subr.bf16.mxu0 0
      %6393 = vmatpush2.bf16.msra.mxu0 0
      %6394 = vmatprep.subr.bf16.mxu0 0
      %6395 = vmatpush2.bf16.msra.mxu0 0
      %6396 = vmatprep.subr.bf16.mxu0 0
      %6397 = vmatpush2.bf16.msra.mxu0 0
      %6398 = vmatprep.subr.bf16.mxu0 0
      %6399 = vmatpush2.bf16.msra.mxu0 0
      %6400 = vmatprep.subr.bf16.mxu0 0
      %6401 = vmatpush2.bf16.msra.mxu0 0
      %6402 = vmatprep.mubr.bf16.mxu0 0
      %6403 = vmatmul.mubr.bf16.gmra.mxu0 %v6362
      %v6404 = vpop.f32.mrf.mxu0
      %v6405 = vadd.f32 0.0, %v6404
      %v6406 = vpop.f32.mrf.mxu0
      %v6407 = vpop.f32.mrf.mxu0
      %v6408 = vadd.f32 0.0, %v6407
      %v6409 = vpop.f32.mrf.mxu0
      %6410 = vmatprep.mubr.bf16.mxu0 0
      %6411 = vmatmul.mubr.bf16.gmra.mxu0 %v6365
      %v6412 = vpop.f32.mrf.mxu0
      %v6413 = vadd.f32 0.0, %v6412
      %v6414 = vpop.f32.mrf.mxu0
      %v6415 = vpop.f32.mrf.mxu0
      %v6416 = vadd.f32 0.0, %v6415
      %v6417 = vpop.f32.mrf.mxu0
      %6418 = vdwg.mxu0
      %6419 = vst [vmem:[#allocation9] sm:$0xf] %v6405
      %s6420 = scalar_lea.vmem [#allocation9], 16
      %6421 = vst [vmem:[%s6420] sm:$0xf] %v6408
      %s6422 = scalar_lea.vmem [#allocation9], 32
      %6423 = vst [vmem:[%s6422] sm:$0xf] %v6413
      %s6424 = scalar_lea.vmem [#allocation9], 48
      %6425 = vst [vmem:[%s6424] sm:$0xf] %v6416
      %v6426 = vld [vmem:[#allocation5 + $0xc] sm:$0xff]
      %v6427 = vld [vmem:[#allocation5 + $0x14] sm:$0xf]
      %v6428 = vpack.c.bf16 %v6427, %v6426
      %v6430 = vsel %vm6326, %v6428, 0
      %6432 = vmatprep.subr.bf16.mxu0 0
      %6433 = vmatpush1.bf16.msra.mxu0 0
      %6434 = vmatprep.subr.bf16.mxu0 0
      %6435 = vmatpush1.bf16.msra.mxu0 0
      %6436 = vmatprep.subr.bf16.mxu0 0
      %6437 = vmatpush1.bf16.msra.mxu0 0
      %6438 = vmatprep.subr.bf16.mxu0 0
      %6439 = vmatpush1.bf16.msra.mxu0 0
      %6440 = vmatprep.subr.bf16.mxu0 0
      %6441 = vmatpush1.bf16.msra.mxu0 0
      %6442 = vmatprep.subr.bf16.mxu0 0
      %6443 = vmatpush1.bf16.msra.mxu0 0
      %6444 = vmatprep.subr.bf16.mxu0 0
      %6445 = vmatpush1.bf16.msra.mxu0 0
      %6446 = vmatprep.subr.bf16.mxu0 0
      %6447 = vmatpush1.bf16.msra.mxu0 %v6430
      %6448 = vmatprep.subr.bf16.mxu0 0
      %6449 = vmatpush2.bf16.msra.mxu0 0
      %6450 = vmatprep.subr.bf16.mxu0 0
      %6451 = vmatpush2.bf16.msra.mxu0 0
      %6452 = vmatprep.subr.bf16.mxu0 0
      %6453 = vmatpush2.bf16.msra.mxu0 0
      %6454 = vmatprep.subr.bf16.mxu0 0
      %6455 = vmatpush2.bf16.msra.mxu0 0
      %6456 = vmatprep.subr.bf16.mxu0 0
      %6457 = vmatpush2.bf16.msra.mxu0 0
      %6458 = vmatprep.subr.bf16.mxu0 0
      %6459 = vmatpush2.bf16.msra.mxu0 0
      %6460 = vmatprep.subr.bf16.mxu0 0
      %6461 = vmatpush2.bf16.msra.mxu0 0
      %6462 = vmatprep.subr.bf16.mxu0 0
      %6463 = vmatpush2.bf16.msra.mxu0 0
      %6464 = vmatprep.mubr.bf16.mxu0 0
      %6465 = vmatmul.mubr.bf16.gmra.mxu0 %v6362
      %v6466 = vpop.f32.mrf.mxu0
      %v6467 = vadd.f32 0.0, %v6466
      %v6468 = vpop.f32.mrf.mxu0
      %v6469 = vpop.f32.mrf.mxu0
      %v6470 = vadd.f32 0.0, %v6469
      %v6471 = vpop.f32.mrf.mxu0
      %6472 = vmatprep.mubr.bf16.mxu0 0
      %6473 = vmatmul.mubr.bf16.gmra.mxu0 %v6365
      %v6474 = vpop.f32.mrf.mxu0
      %v6475 = vadd.f32 0.0, %v6474
      %v6476 = vpop.f32.mrf.mxu0
      %v6477 = vpop.f32.mrf.mxu0
      %v6478 = vadd.f32 0.0, %v6477
      %v6479 = vpop.f32.mrf.mxu0
      %6480 = vdwg.mxu0
      %6481 = vst [vmem:[#allocation9 + $0x4] sm:$0xf] %v6467
      %6482 = vst [vmem:[%s6420 + $0x4] sm:$0xf] %v6470
      %6483 = vst [vmem:[%s6422 + $0x4] sm:$0xf] %v6475
      %6484 = vst [vmem:[%s6424 + $0x4] sm:$0xf] %v6478
      %v6485 = vld [vmem:[#allocation5 + $0x18] sm:$0xff]
      %v6486 = vld [vmem:[#allocation5 + $0x20] sm:$0xf]
      %v6487 = vpack.c.bf16 %v6486, %v6485
      %v6489 = vsel %vm6326, %v6487, 0
      %6491 = vmatprep.subr.bf16.mxu0 0
      %6492 = vmatpush1.bf16.msra.mxu0 0
      %6493 = vmatprep.subr.bf16.mxu0 0
      %6494 = vmatpush1.bf16.msra.mxu0 0
      %6495 = vmatprep.subr.bf16.mxu0 0
      %6496 = vmatpush1.bf16.msra.mxu0 0
      %6497 = vmatprep.subr.bf16.mxu0 0
      %6498 = vmatpush1.bf16.msra.mxu0 0
      %6499 = vmatprep.subr.bf16.mxu0 0
      %6500 = vmatpush1.bf16.msra.mxu0 0
      %6501 = vmatprep.subr.bf16.mxu0 0
      %6502 = vmatpush1.bf16.msra.mxu0 0
      %6503 = vmatprep.subr.bf16.mxu0 0
      %6504 = vmatpush1.bf16.msra.mxu0 0
      %6505 = vmatprep.subr.bf16.mxu0 0
      %6506 = vmatpush1.bf16.msra.mxu0 %v6489
      %6507 = vmatprep.subr.bf16.mxu0 0
      %6508 = vmatpush2.bf16.msra.mxu0 0
      %6509 = vmatprep.subr.bf16.mxu0 0
      %6510 = vmatpush2.bf16.msra.mxu0 0
      %6511 = vmatprep.subr.bf16.mxu0 0
      %6512 = vmatpush2.bf16.msra.mxu0 0
      %6513 = vmatprep.subr.bf16.mxu0 0
      %6514 = vmatpush2.bf16.msra.mxu0 0
      %6515 = vmatprep.subr.bf16.mxu0 0
      %6516 = vmatpush2.bf16.msra.mxu0 0
      %6517 = vmatprep.subr.bf16.mxu0 0
      %6518 = vmatpush2.bf16.msra.mxu0 0
      %6519 = vmatprep.subr.bf16.mxu0 0
      %6520 = vmatpush2.bf16.msra.mxu0 0
      %6521 = vmatprep.subr.bf16.mxu0 0
      %6522 = vmatpush2.bf16.msra.mxu0 0
      %6523 = vmatprep.mubr.bf16.mxu0 0
      %6524 = vmatmul.mubr.bf16.gmra.mxu0 %v6362
      %v6525 = vpop.f32.mrf.mxu0
      %v6526 = vadd.f32 0.0, %v6525
      %v6527 = vpop.f32.mrf.mxu0
      %v6528 = vpop.f32.mrf.mxu0
      %v6529 = vadd.f32 0.0, %v6528
      %v6530 = vpop.f32.mrf.mxu0
      %6531 = vmatprep.mubr.bf16.mxu0 0
      %6532 = vmatmul.mubr.bf16.gmra.mxu0 %v6365
      %v6533 = vpop.f32.mrf.mxu0
      %v6534 = vadd.f32 0.0, %v6533
      %v6535 = vpop.f32.mrf.mxu0
      %v6536 = vpop.f32.mrf.mxu0
      %v6537 = vadd.f32 0.0, %v6536
      %v6538 = vpop.f32.mrf.mxu0
      %6539 = vdwg.mxu0
      %6540 = vst [vmem:[#allocation9 + $0x8] sm:$0xf] %v6526
      %6541 = vst [vmem:[%s6420 + $0x8] sm:$0xf] %v6529
      %6542 = vst [vmem:[%s6422 + $0x8] sm:$0xf] %v6534
      %6543 = vst [vmem:[%s6424 + $0x8] sm:$0xf] %v6537
      %v6544 = vld [vmem:[#allocation9] sm:$0x3f]
      %v6545 = vpack.c.bf16 %v6544, %v6544
      %s6546 = scalar_lea.vmem %s2, 1728
      %v6547 = vld [vmem:[%s6546] sm:$0xf]
      %v6548 = vld [vmem:[%s6546 + $0x4] sm:$0xf]
      %v6549 = vld [vmem:[%s6546 + $0x8] sm:$0xf]
      %v6550 = vld [vmem:[%s6546 + $0xc] sm:$0xf]
      %v6551 = vld [vmem:[%s6546 + $0x10] sm:$0xf]
      %v6552 = vld [vmem:[%s6546 + $0x14] sm:$0xf]
      %v6553 = vld [vmem:[%s6546 + $0x18] sm:$0xf]
      %v6554 = vld [vmem:[%s6546 + $0x1c] sm:$0xf]
      %v6555 = vld [vmem:[%s6546 + $0x20] sm:$0xf]
      %v6556 = vld [vmem:[%s6546 + $0x24] sm:$0xf]
      %v6557 = vld [vmem:[%s6546 + $0x28] sm:$0xf]
      %v6558 = vld [vmem:[%s6546 + $0x2c] sm:$0xf]
      %v6559 = vld [vmem:[%s6546 + $0x30] sm:$0xf]
      %v6560 = vld [vmem:[%s6546 + $0x34] sm:$0xf]
      %v6561 = vld [vmem:[%s6546 + $0x38] sm:$0xf]
      %v6562 = vld [vmem:[%s6546 + $0x3c] sm:$0xf]
      %v6563 = vld [vmem:[%s6420] sm:$0x3f]
      %v6564 = vpack.c.bf16 %v6563, %v6563
      %s6565 = scalar_lea.vmem %s2, 1792
      %v6566 = vld [vmem:[%s6565] sm:$0xf]
      %v6567 = vld [vmem:[%s6565 + $0x4] sm:$0xf]
      %v6568 = vld [vmem:[%s6565 + $0x8] sm:$0xf]
      %v6569 = vld [vmem:[%s6565 + $0xc] sm:$0xf]
      %v6570 = vld [vmem:[%s6565 + $0x10] sm:$0xf]
      %v6571 = vld [vmem:[%s6565 + $0x14] sm:$0xf]
      %v6572 = vld [vmem:[%s6565 + $0x18] sm:$0xf]
      %v6573 = vld [vmem:[%s6565 + $0x1c] sm:$0xf]
      %v6574 = vld [vmem:[%s6565 + $0x20] sm:$0xf]
      %v6575 = vld [vmem:[%s6565 + $0x24] sm:$0xf]
      %v6576 = vld [vmem:[%s6565 + $0x28] sm:$0xf]
      %v6577 = vld [vmem:[%s6565 + $0x2c] sm:$0xf]
      %v6578 = vld [vmem:[%s6565 + $0x30] sm:$0xf]
      %v6579 = vld [vmem:[%s6565 + $0x34] sm:$0xf]
      %v6580 = vld [vmem:[%s6565 + $0x38] sm:$0xf]
      %v6581 = vld [vmem:[%s6565 + $0x3c] sm:$0xf]
      %v6598 = vunpack.c.l.b16 %v6566
      %v6599 = vunpack.c.l.b16 %v6567
      %v6600 = vunpack.c.l.b16 %v6568
      %v6601 = vunpack.c.l.b16 %v6569
      %v6602 = vunpack.c.l.b16 %v6570
      %v6603 = vunpack.c.l.b16 %v6571
      %v6604 = vunpack.c.l.b16 %v6572
      %v6605 = vunpack.c.l.b16 %v6573
      %v6606 = vunpack.c.l.b16 %v6574
      %v6607 = vunpack.c.l.b16 %v6575
      %v6608 = vunpack.c.l.b16 %v6576
      %v6609 = vunpack.c.l.b16 %v6577
      %v6610 = vunpack.c.l.b16 %v6578
      %v6611 = vunpack.c.l.b16 %v6579
      %v6612 = vunpack.c.l.b16 %v6580
      %v6613 = vunpack.c.l.b16 %v6581
      %v6614 = vpack.c.b16 %v6599, %v6598
      %v6615 = vpack.c.b16 %v6601, %v6600
      %v6616 = vpack.c.b16 %v6603, %v6602
      %v6617 = vpack.c.b16 %v6605, %v6604
      %v6618 = vpack.c.b16 %v6607, %v6606
      %v6619 = vpack.c.b16 %v6609, %v6608
      %v6620 = vpack.c.b16 %v6611, %v6610
      %v6621 = vpack.c.b16 %v6613, %v6612
      %6630 = vmatprep.subr.bf16.mxu0 0
      %6631 = vmatpush1.bf16.msra.mxu0 %v6621
      %6632 = vmatprep.subr.bf16.mxu0 0
      %6633 = vmatpush1.bf16.msra.mxu0 %v6620
      %6634 = vmatprep.subr.bf16.mxu0 0
      %6635 = vmatpush1.bf16.msra.mxu0 %v6619
      %6636 = vmatprep.subr.bf16.mxu0 0
      %6637 = vmatpush1.bf16.msra.mxu0 %v6618
      %6638 = vmatprep.subr.bf16.mxu0 0
      %6639 = vmatpush1.bf16.msra.mxu0 %v6617
      %6640 = vmatprep.subr.bf16.mxu0 0
      %6641 = vmatpush1.bf16.msra.mxu0 %v6616
      %6642 = vmatprep.subr.bf16.mxu0 0
      %6643 = vmatpush1.bf16.msra.mxu0 %v6615
      %6644 = vmatprep.subr.bf16.mxu0 0
      %6645 = vmatpush1.bf16.msra.mxu0 %v6614
      %6646 = vmatprep.subr.bf16.mxu0 0
      %6647 = vmatpush2.bf16.msra.mxu0 0
      %6648 = vmatprep.subr.bf16.mxu0 0
      %6649 = vmatpush2.bf16.msra.mxu0 0
      %6650 = vmatprep.subr.bf16.mxu0 0
      %6651 = vmatpush2.bf16.msra.mxu0 0
      %6652 = vmatprep.subr.bf16.mxu0 0
      %6653 = vmatpush2.bf16.msra.mxu0 0
      %6654 = vmatprep.subr.bf16.mxu0 0
      %6655 = vmatpush2.bf16.msra.mxu0 0
      %6656 = vmatprep.subr.bf16.mxu0 0
      %6657 = vmatpush2.bf16.msra.mxu0 0
      %6658 = vmatprep.subr.bf16.mxu0 0
      %6659 = vmatpush2.bf16.msra.mxu0 0
      %6660 = vmatprep.subr.bf16.mxu0 0
      %6661 = vmatpush2.bf16.msra.mxu0 0
      %6662 = vmatprep.mubr.bf16.mxu0 0
      %6663 = vmatmul.mubr.bf16.gmra.mxu0 %v6564
      %v6664 = vpop.f32.mrf.mxu0
      %v6665 = vadd.f32 0.0, %v6664
      %v6666 = vpop.f32.mrf.mxu0
      %v6667 = vpop.f32.mrf.mxu0
      %v6668 = vpop.f32.mrf.mxu0
      %6669 = vdwg.mxu0
      %v6686 = vunpack.c.l.b16 %v6547
      %v6687 = vunpack.c.l.b16 %v6548
      %v6688 = vunpack.c.l.b16 %v6549
      %v6689 = vunpack.c.l.b16 %v6550
      %v6690 = vunpack.c.l.b16 %v6551
      %v6691 = vunpack.c.l.b16 %v6552
      %v6692 = vunpack.c.l.b16 %v6553
      %v6693 = vunpack.c.l.b16 %v6554
      %v6694 = vunpack.c.l.b16 %v6555
      %v6695 = vunpack.c.l.b16 %v6556
      %v6696 = vunpack.c.l.b16 %v6557
      %v6697 = vunpack.c.l.b16 %v6558
      %v6698 = vunpack.c.l.b16 %v6559
      %v6699 = vunpack.c.l.b16 %v6560
      %v6700 = vunpack.c.l.b16 %v6561
      %v6701 = vunpack.c.l.b16 %v6562
      %v6702 = vpack.c.b16 %v6687, %v6686
      %v6703 = vpack.c.b16 %v6689, %v6688
      %v6704 = vpack.c.b16 %v6691, %v6690
      %v6705 = vpack.c.b16 %v6693, %v6692
      %v6706 = vpack.c.b16 %v6695, %v6694
      %v6707 = vpack.c.b16 %v6697, %v6696
      %v6708 = vpack.c.b16 %v6699, %v6698
      %v6709 = vpack.c.b16 %v6701, %v6700
      %6718 = vmatprep.subr.bf16.mxu0 0
      %6719 = vmatpush1.bf16.msra.mxu0 %v6709
      %6720 = vmatprep.subr.bf16.mxu0 0
      %6721 = vmatpush1.bf16.msra.mxu0 %v6708
      %6722 = vmatprep.subr.bf16.mxu0 0
      %6723 = vmatpush1.bf16.msra.mxu0 %v6707
      %6724 = vmatprep.subr.bf16.mxu0 0
      %6725 = vmatpush1.bf16.msra.mxu0 %v6706
      %6726 = vmatprep.subr.bf16.mxu0 0
      %6727 = vmatpush1.bf16.msra.mxu0 %v6705
      %6728 = vmatprep.subr.bf16.mxu0 0
      %6729 = vmatpush1.bf16.msra.mxu0 %v6704
      %6730 = vmatprep.subr.bf16.mxu0 0
      %6731 = vmatpush1.bf16.msra.mxu0 %v6703
      %6732 = vmatprep.subr.bf16.mxu0 0
      %6733 = vmatpush1.bf16.msra.mxu0 %v6702
      %6734 = vmatprep.subr.bf16.mxu0 0
      %6735 = vmatpush2.bf16.msra.mxu0 0
      %6736 = vmatprep.subr.bf16.mxu0 0
      %6737 = vmatpush2.bf16.msra.mxu0 0
      %6738 = vmatprep.subr.bf16.mxu0 0
      %6739 = vmatpush2.bf16.msra.mxu0 0
      %6740 = vmatprep.subr.bf16.mxu0 0
      %6741 = vmatpush2.bf16.msra.mxu0 0
      %6742 = vmatprep.subr.bf16.mxu0 0
      %6743 = vmatpush2.bf16.msra.mxu0 0
      %6744 = vmatprep.subr.bf16.mxu0 0
      %6745 = vmatpush2.bf16.msra.mxu0 0
      %6746 = vmatprep.subr.bf16.mxu0 0
      %6747 = vmatpush2.bf16.msra.mxu0 0
      %6748 = vmatprep.subr.bf16.mxu0 0
      %6749 = vmatpush2.bf16.msra.mxu0 0
      %6750 = vmatprep.mubr.bf16.mxu0 0
      %6751 = vmatmul.mubr.bf16.gmra.mxu0 %v6545
      %v6752 = vpop.f32.mrf.mxu0
      %v6753 = vadd.f32 %v6665, %v6752
      %v6754 = vpop.f32.mrf.mxu0
      %v6755 = vpop.f32.mrf.mxu0
      %v6756 = vpop.f32.mrf.mxu0
      %6757 = vdwg.mxu0
      %v6758 = vld [vmem:[#allocation9 + $0x1] sm:$0x3f]
      %v6759 = vpack.c.bf16 %v6758, %v6758
      %s6760 = scalar_lea.vmem %s2, 1856
      %v6761 = vld [vmem:[%s6760] sm:$0xf]
      %v6762 = vld [vmem:[%s6760 + $0x4] sm:$0xf]
      %v6763 = vld [vmem:[%s6760 + $0x8] sm:$0xf]
      %v6764 = vld [vmem:[%s6760 + $0xc] sm:$0xf]
      %v6765 = vld [vmem:[%s6760 + $0x10] sm:$0xf]
      %v6766 = vld [vmem:[%s6760 + $0x14] sm:$0xf]
      %v6767 = vld [vmem:[%s6760 + $0x18] sm:$0xf]
      %v6768 = vld [vmem:[%s6760 + $0x1c] sm:$0xf]
      %v6769 = vld [vmem:[%s6760 + $0x20] sm:$0xf]
      %v6770 = vld [vmem:[%s6760 + $0x24] sm:$0xf]
      %v6771 = vld [vmem:[%s6760 + $0x28] sm:$0xf]
      %v6772 = vld [vmem:[%s6760 + $0x2c] sm:$0xf]
      %v6773 = vld [vmem:[%s6760 + $0x30] sm:$0xf]
      %v6774 = vld [vmem:[%s6760 + $0x34] sm:$0xf]
      %v6775 = vld [vmem:[%s6760 + $0x38] sm:$0xf]
      %v6776 = vld [vmem:[%s6760 + $0x3c] sm:$0xf]
      %v6793 = vunpack.c.l.b16 %v6761
      %v6794 = vunpack.c.l.b16 %v6762
      %v6795 = vunpack.c.l.b16 %v6763
      %v6796 = vunpack.c.l.b16 %v6764
      %v6797 = vunpack.c.l.b16 %v6765
      %v6798 = vunpack.c.l.b16 %v6766
      %v6799 = vunpack.c.l.b16 %v6767
      %v6800 = vunpack.c.l.b16 %v6768
      %v6801 = vunpack.c.l.b16 %v6769
      %v6802 = vunpack.c.l.b16 %v6770
      %v6803 = vunpack.c.l.b16 %v6771
      %v6804 = vunpack.c.l.b16 %v6772
      %v6805 = vunpack.c.l.b16 %v6773
      %v6806 = vunpack.c.l.b16 %v6774
      %v6807 = vunpack.c.l.b16 %v6775
      %v6808 = vunpack.c.l.b16 %v6776
      %v6809 = vpack.c.b16 %v6794, %v6793
      %v6810 = vpack.c.b16 %v6796, %v6795
      %v6811 = vpack.c.b16 %v6798, %v6797
      %v6812 = vpack.c.b16 %v6800, %v6799
      %v6813 = vpack.c.b16 %v6802, %v6801
      %v6814 = vpack.c.b16 %v6804, %v6803
      %v6815 = vpack.c.b16 %v6806, %v6805
      %v6816 = vpack.c.b16 %v6808, %v6807
      %6825 = vmatprep.subr.bf16.mxu0 0
      %6826 = vmatpush1.bf16.msra.mxu0 %v6816
      %6827 = vmatprep.subr.bf16.mxu0 0
      %6828 = vmatpush1.bf16.msra.mxu0 %v6815
      %6829 = vmatprep.subr.bf16.mxu0 0
      %6830 = vmatpush1.bf16.msra.mxu0 %v6814
      %6831 = vmatprep.subr.bf16.mxu0 0
      %6832 = vmatpush1.bf16.msra.mxu0 %v6813
      %6833 = vmatprep.subr.bf16.mxu0 0
      %6834 = vmatpush1.bf16.msra.mxu0 %v6812
      %6835 = vmatprep.subr.bf16.mxu0 0
      %6836 = vmatpush1.bf16.msra.mxu0 %v6811
      %6837 = vmatprep.subr.bf16.mxu0 0
      %6838 = vmatpush1.bf16.msra.mxu0 %v6810
      %6839 = vmatprep.subr.bf16.mxu0 0
      %6840 = vmatpush1.bf16.msra.mxu0 %v6809
      %6841 = vmatprep.subr.bf16.mxu0 0
      %6842 = vmatpush2.bf16.msra.mxu0 0
      %6843 = vmatprep.subr.bf16.mxu0 0
      %6844 = vmatpush2.bf16.msra.mxu0 0
      %6845 = vmatprep.subr.bf16.mxu0 0
      %6846 = vmatpush2.bf16.msra.mxu0 0
      %6847 = vmatprep.subr.bf16.mxu0 0
      %6848 = vmatpush2.bf16.msra.mxu0 0
      %6849 = vmatprep.subr.bf16.mxu0 0
      %6850 = vmatpush2.bf16.msra.mxu0 0
      %6851 = vmatprep.subr.bf16.mxu0 0
      %6852 = vmatpush2.bf16.msra.mxu0 0
      %6853 = vmatprep.subr.bf16.mxu0 0
      %6854 = vmatpush2.bf16.msra.mxu0 0
      %6855 = vmatprep.subr.bf16.mxu0 0
      %6856 = vmatpush2.bf16.msra.mxu0 0
      %6857 = vmatprep.mubr.bf16.mxu0 0
      %6858 = vmatmul.mubr.bf16.gmra.mxu0 %v6759
      %v6859 = vpop.f32.mrf.mxu0
      %v6860 = vadd.f32 0.0, %v6859
      %v6861 = vpop.f32.mrf.mxu0
      %v6862 = vpop.f32.mrf.mxu0
      %v6863 = vpop.f32.mrf.mxu0
      %6864 = vdwg.mxu0
      %v6865 = vadd.f32 %v6753, %v6860
      %v6866 = vld [vmem:[%s6422] sm:$0x3f]
      %v6867 = vpack.c.bf16 %v6866, %v6866
      %s6868 = scalar_lea.vmem %s2, 1920
      %v6869 = vld [vmem:[%s6868] sm:$0xf]
      %v6870 = vld [vmem:[%s6868 + $0x4] sm:$0xf]
      %v6871 = vld [vmem:[%s6868 + $0x8] sm:$0xf]
      %v6872 = vld [vmem:[%s6868 + $0xc] sm:$0xf]
      %v6873 = vld [vmem:[%s6868 + $0x10] sm:$0xf]
      %v6874 = vld [vmem:[%s6868 + $0x14] sm:$0xf]
      %v6875 = vld [vmem:[%s6868 + $0x18] sm:$0xf]
      %v6876 = vld [vmem:[%s6868 + $0x1c] sm:$0xf]
      %v6877 = vld [vmem:[%s6868 + $0x20] sm:$0xf]
      %v6878 = vld [vmem:[%s6868 + $0x24] sm:$0xf]
      %v6879 = vld [vmem:[%s6868 + $0x28] sm:$0xf]
      %v6880 = vld [vmem:[%s6868 + $0x2c] sm:$0xf]
      %v6881 = vld [vmem:[%s6868 + $0x30] sm:$0xf]
      %v6882 = vld [vmem:[%s6868 + $0x34] sm:$0xf]
      %v6883 = vld [vmem:[%s6868 + $0x38] sm:$0xf]
      %v6884 = vld [vmem:[%s6868 + $0x3c] sm:$0xf]
      %v6901 = vunpack.c.l.b16 %v6869
      %v6902 = vunpack.c.l.b16 %v6870
      %v6903 = vunpack.c.l.b16 %v6871
      %v6904 = vunpack.c.l.b16 %v6872
      %v6905 = vunpack.c.l.b16 %v6873
      %v6906 = vunpack.c.l.b16 %v6874
      %v6907 = vunpack.c.l.b16 %v6875
      %v6908 = vunpack.c.l.b16 %v6876
      %v6909 = vunpack.c.l.b16 %v6877
      %v6910 = vunpack.c.l.b16 %v6878
      %v6911 = vunpack.c.l.b16 %v6879
      %v6912 = vunpack.c.l.b16 %v6880
      %v6913 = vunpack.c.l.b16 %v6881
      %v6914 = vunpack.c.l.b16 %v6882
      %v6915 = vunpack.c.l.b16 %v6883
      %v6916 = vunpack.c.l.b16 %v6884
      %v6917 = vpack.c.b16 %v6902, %v6901
      %v6918 = vpack.c.b16 %v6904, %v6903
      %v6919 = vpack.c.b16 %v6906, %v6905
      %v6920 = vpack.c.b16 %v6908, %v6907
      %v6921 = vpack.c.b16 %v6910, %v6909
      %v6922 = vpack.c.b16 %v6912, %v6911
      %v6923 = vpack.c.b16 %v6914, %v6913
      %v6924 = vpack.c.b16 %v6916, %v6915
      %6933 = vmatprep.subr.bf16.mxu0 0
      %6934 = vmatpush1.bf16.msra.mxu0 %v6924
      %6935 = vmatprep.subr.bf16.mxu0 0
      %6936 = vmatpush1.bf16.msra.mxu0 %v6923
      %6937 = vmatprep.subr.bf16.mxu0 0
      %6938 = vmatpush1.bf16.msra.mxu0 %v6922
      %6939 = vmatprep.subr.bf16.mxu0 0
      %6940 = vmatpush1.bf16.msra.mxu0 %v6921
      %6941 = vmatprep.subr.bf16.mxu0 0
      %6942 = vmatpush1.bf16.msra.mxu0 %v6920
      %6943 = vmatprep.subr.bf16.mxu0 0
      %6944 = vmatpush1.bf16.msra.mxu0 %v6919
      %6945 = vmatprep.subr.bf16.mxu0 0
      %6946 = vmatpush1.bf16.msra.mxu0 %v6918
      %6947 = vmatprep.subr.bf16.mxu0 0
      %6948 = vmatpush1.bf16.msra.mxu0 %v6917
      %6949 = vmatprep.subr.bf16.mxu0 0
      %6950 = vmatpush2.bf16.msra.mxu0 0
      %6951 = vmatprep.subr.bf16.mxu0 0
      %6952 = vmatpush2.bf16.msra.mxu0 0
      %6953 = vmatprep.subr.bf16.mxu0 0
      %6954 = vmatpush2.bf16.msra.mxu0 0
      %6955 = vmatprep.subr.bf16.mxu0 0
      %6956 = vmatpush2.bf16.msra.mxu0 0
      %6957 = vmatprep.subr.bf16.mxu0 0
      %6958 = vmatpush2.bf16.msra.mxu0 0
      %6959 = vmatprep.subr.bf16.mxu0 0
      %6960 = vmatpush2.bf16.msra.mxu0 0
      %6961 = vmatprep.subr.bf16.mxu0 0
      %6962 = vmatpush2.bf16.msra.mxu0 0
      %6963 = vmatprep.subr.bf16.mxu0 0
      %6964 = vmatpush2.bf16.msra.mxu0 0
      %6965 = vmatprep.mubr.bf16.mxu0 0
      %6966 = vmatmul.mubr.bf16.gmra.mxu0 %v6867
      %v6967 = vpop.f32.mrf.mxu0
      %v6968 = vadd.f32 0.0, %v6967
      %v6969 = vpop.f32.mrf.mxu0
      %v6970 = vpop.f32.mrf.mxu0
      %v6971 = vpop.f32.mrf.mxu0
      %6972 = vdwg.mxu0
      %v6973 = vadd.f32 %v6865, %v6968
      %v6974 = vld [vmem:[%s6424] sm:$0x3f]
      %v6975 = vpack.c.bf16 %v6974, %v6974
      %s6976 = scalar_lea.vmem %s2, 1984
      %v6977 = vld [vmem:[%s6976] sm:$0xf]
      %v6978 = vld [vmem:[%s6976 + $0x4] sm:$0xf]
      %v6979 = vld [vmem:[%s6976 + $0x8] sm:$0xf]
      %v6980 = vld [vmem:[%s6976 + $0xc] sm:$0xf]
      %v6981 = vld [vmem:[%s6976 + $0x10] sm:$0xf]
      %v6982 = vld [vmem:[%s6976 + $0x14] sm:$0xf]
      %v6983 = vld [vmem:[%s6976 + $0x18] sm:$0xf]
      %v6984 = vld [vmem:[%s6976 + $0x1c] sm:$0xf]
      %v6985 = vld [vmem:[%s6976 + $0x20] sm:$0xf]
      %v6986 = vld [vmem:[%s6976 + $0x24] sm:$0xf]
      %v6987 = vld [vmem:[%s6976 + $0x28] sm:$0xf]
      %v6988 = vld [vmem:[%s6976 + $0x2c] sm:$0xf]
      %v6989 = vld [vmem:[%s6976 + $0x30] sm:$0xf]
      %v6990 = vld [vmem:[%s6976 + $0x34] sm:$0xf]
      %v6991 = vld [vmem:[%s6976 + $0x38] sm:$0xf]
      %v6992 = vld [vmem:[%s6976 + $0x3c] sm:$0xf]
      %v7009 = vunpack.c.l.b16 %v6977
      %v7010 = vunpack.c.l.b16 %v6978
      %v7011 = vunpack.c.l.b16 %v6979
      %v7012 = vunpack.c.l.b16 %v6980
      %v7013 = vunpack.c.l.b16 %v6981
      %v7014 = vunpack.c.l.b16 %v6982
      %v7015 = vunpack.c.l.b16 %v6983
      %v7016 = vunpack.c.l.b16 %v6984
      %v7017 = vunpack.c.l.b16 %v6985
      %v7018 = vunpack.c.l.b16 %v6986
      %v7019 = vunpack.c.l.b16 %v6987
      %v7020 = vunpack.c.l.b16 %v6988
      %v7021 = vunpack.c.l.b16 %v6989
      %v7022 = vunpack.c.l.b16 %v6990
      %v7023 = vunpack.c.l.b16 %v6991
      %v7024 = vunpack.c.l.b16 %v6992
      %v7025 = vpack.c.b16 %v7010, %v7009
      %v7026 = vpack.c.b16 %v7012, %v7011
      %v7027 = vpack.c.b16 %v7014, %v7013
      %v7028 = vpack.c.b16 %v7016, %v7015
      %v7029 = vpack.c.b16 %v7018, %v7017
      %v7030 = vpack.c.b16 %v7020, %v7019
      %v7031 = vpack.c.b16 %v7022, %v7021
      %v7032 = vpack.c.b16 %v7024, %v7023
      %7041 = vmatprep.subr.bf16.mxu0 0
      %7042 = vmatpush1.bf16.msra.mxu0 %v7032
      %7043 = vmatprep.subr.bf16.mxu0 0
      %7044 = vmatpush1.bf16.msra.mxu0 %v7031
      %7045 = vmatprep.subr.bf16.mxu0 0
      %7046 = vmatpush1.bf16.msra.mxu0 %v7030
      %7047 = vmatprep.subr.bf16.mxu0 0
      %7048 = vmatpush1.bf16.msra.mxu0 %v7029
      %7049 = vmatprep.subr.bf16.mxu0 0
      %7050 = vmatpush1.bf16.msra.mxu0 %v7028
      %7051 = vmatprep.subr.bf16.mxu0 0
      %7052 = vmatpush1.bf16.msra.mxu0 %v7027
      %7053 = vmatprep.subr.bf16.mxu0 0
      %7054 = vmatpush1.bf16.msra.mxu0 %v7026
      %7055 = vmatprep.subr.bf16.mxu0 0
      %7056 = vmatpush1.bf16.msra.mxu0 %v7025
      %7057 = vmatprep.subr.bf16.mxu0 0
      %7058 = vmatpush2.bf16.msra.mxu0 0
      %7059 = vmatprep.subr.bf16.mxu0 0
      %7060 = vmatpush2.bf16.msra.mxu0 0
      %7061 = vmatprep.subr.bf16.mxu0 0
      %7062 = vmatpush2.bf16.msra.mxu0 0
      %7063 = vmatprep.subr.bf16.mxu0 0
      %7064 = vmatpush2.bf16.msra.mxu0 0
      %7065 = vmatprep.subr.bf16.mxu0 0
      %7066 = vmatpush2.bf16.msra.mxu0 0
      %7067 = vmatprep.subr.bf16.mxu0 0
      %7068 = vmatpush2.bf16.msra.mxu0 0
      %7069 = vmatprep.subr.bf16.mxu0 0
      %7070 = vmatpush2.bf16.msra.mxu0 0
      %7071 = vmatprep.subr.bf16.mxu0 0
      %7072 = vmatpush2.bf16.msra.mxu0 0
      %7073 = vmatprep.mubr.bf16.mxu0 0
      %7074 = vmatmul.mubr.bf16.gmra.mxu0 %v6975
      %v7075 = vpop.f32.mrf.mxu0
      %v7076 = vadd.f32 0.0, %v7075
      %v7077 = vpop.f32.mrf.mxu0
      %v7078 = vpop.f32.mrf.mxu0
      %v7079 = vpop.f32.mrf.mxu0
      %7080 = vdwg.mxu0
      %v7081 = vadd.f32 %v6973, %v7076
      %v7082 = vld [vmem:[%s6422 + $0x1] sm:$0x3f]
      %v7083 = vpack.c.bf16 %v7082, %v7082
      %s7084 = scalar_lea.vmem %s2, 2048
      %v7085 = vld [vmem:[%s7084] sm:$0xf]
      %v7086 = vld [vmem:[%s7084 + $0x4] sm:$0xf]
      %v7087 = vld [vmem:[%s7084 + $0x8] sm:$0xf]
      %v7088 = vld [vmem:[%s7084 + $0xc] sm:$0xf]
      %v7089 = vld [vmem:[%s7084 + $0x10] sm:$0xf]
      %v7090 = vld [vmem:[%s7084 + $0x14] sm:$0xf]
      %v7091 = vld [vmem:[%s7084 + $0x18] sm:$0xf]
      %v7092 = vld [vmem:[%s7084 + $0x1c] sm:$0xf]
      %v7093 = vld [vmem:[%s7084 + $0x20] sm:$0xf]
      %v7094 = vld [vmem:[%s7084 + $0x24] sm:$0xf]
      %v7095 = vld [vmem:[%s7084 + $0x28] sm:$0xf]
      %v7096 = vld [vmem:[%s7084 + $0x2c] sm:$0xf]
      %v7097 = vld [vmem:[%s7084 + $0x30] sm:$0xf]
      %v7098 = vld [vmem:[%s7084 + $0x34] sm:$0xf]
      %v7099 = vld [vmem:[%s7084 + $0x38] sm:$0xf]
      %v7100 = vld [vmem:[%s7084 + $0x3c] sm:$0xf]
      %v7117 = vunpack.c.l.b16 %v7085
      %v7118 = vunpack.c.l.b16 %v7086
      %v7119 = vunpack.c.l.b16 %v7087
      %v7120 = vunpack.c.l.b16 %v7088
      %v7121 = vunpack.c.l.b16 %v7089
      %v7122 = vunpack.c.l.b16 %v7090
      %v7123 = vunpack.c.l.b16 %v7091
      %v7124 = vunpack.c.l.b16 %v7092
      %v7125 = vunpack.c.l.b16 %v7093
      %v7126 = vunpack.c.l.b16 %v7094
      %v7127 = vunpack.c.l.b16 %v7095
      %v7128 = vunpack.c.l.b16 %v7096
      %v7129 = vunpack.c.l.b16 %v7097
      %v7130 = vunpack.c.l.b16 %v7098
      %v7131 = vunpack.c.l.b16 %v7099
      %v7132 = vunpack.c.l.b16 %v7100
      %v7133 = vpack.c.b16 %v7118, %v7117
      %v7134 = vpack.c.b16 %v7120, %v7119
      %v7135 = vpack.c.b16 %v7122, %v7121
      %v7136 = vpack.c.b16 %v7124, %v7123
      %v7137 = vpack.c.b16 %v7126, %v7125
      %v7138 = vpack.c.b16 %v7128, %v7127
      %v7139 = vpack.c.b16 %v7130, %v7129
      %v7140 = vpack.c.b16 %v7132, %v7131
      %7149 = vmatprep.subr.bf16.mxu0 0
      %7150 = vmatpush1.bf16.msra.mxu0 %v7140
      %7151 = vmatprep.subr.bf16.mxu0 0
      %7152 = vmatpush1.bf16.msra.mxu0 %v7139
      %7153 = vmatprep.subr.bf16.mxu0 0
      %7154 = vmatpush1.bf16.msra.mxu0 %v7138
      %7155 = vmatprep.subr.bf16.mxu0 0
      %7156 = vmatpush1.bf16.msra.mxu0 %v7137
      %7157 = vmatprep.subr.bf16.mxu0 0
      %7158 = vmatpush1.bf16.msra.mxu0 %v7136
      %7159 = vmatprep.subr.bf16.mxu0 0
      %7160 = vmatpush1.bf16.msra.mxu0 %v7135
      %7161 = vmatprep.subr.bf16.mxu0 0
      %7162 = vmatpush1.bf16.msra.mxu0 %v7134
      %7163 = vmatprep.subr.bf16.mxu0 0
      %7164 = vmatpush1.bf16.msra.mxu0 %v7133
      %7165 = vmatprep.subr.bf16.mxu0 0
      %7166 = vmatpush2.bf16.msra.mxu0 0
      %7167 = vmatprep.subr.bf16.mxu0 0
      %7168 = vmatpush2.bf16.msra.mxu0 0
      %7169 = vmatprep.subr.bf16.mxu0 0
      %7170 = vmatpush2.bf16.msra.mxu0 0
      %7171 = vmatprep.subr.bf16.mxu0 0
      %7172 = vmatpush2.bf16.msra.mxu0 0
      %7173 = vmatprep.subr.bf16.mxu0 0
      %7174 = vmatpush2.bf16.msra.mxu0 0
      %7175 = vmatprep.subr.bf16.mxu0 0
      %7176 = vmatpush2.bf16.msra.mxu0 0
      %7177 = vmatprep.subr.bf16.mxu0 0
      %7178 = vmatpush2.bf16.msra.mxu0 0
      %7179 = vmatprep.subr.bf16.mxu0 0
      %7180 = vmatpush2.bf16.msra.mxu0 0
      %7181 = vmatprep.mubr.bf16.mxu0 0
      %7182 = vmatmul.mubr.bf16.gmra.mxu0 %v7083
      %v7183 = vpop.f32.mrf.mxu0
      %v7184 = vadd.f32 0.0, %v7183
      %v7185 = vpop.f32.mrf.mxu0
      %v7186 = vpop.f32.mrf.mxu0
      %v7187 = vpop.f32.mrf.mxu0
      %7188 = vdwg.mxu0
      %v7189 = vadd.f32 %v7081, %v7184
      %v7190 = vld [vmem:[#allocation9 + $0x4] sm:$0x3f]
      %v7191 = vpack.c.bf16 %v7190, %v7190
      %s7192 = scalar_lea.vmem %s2, 2112
      %v7193 = vld [vmem:[%s7192] sm:$0xf]
      %v7194 = vld [vmem:[%s7192 + $0x4] sm:$0xf]
      %v7195 = vld [vmem:[%s7192 + $0x8] sm:$0xf]
      %v7196 = vld [vmem:[%s7192 + $0xc] sm:$0xf]
      %v7197 = vld [vmem:[%s7192 + $0x10] sm:$0xf]
      %v7198 = vld [vmem:[%s7192 + $0x14] sm:$0xf]
      %v7199 = vld [vmem:[%s7192 + $0x18] sm:$0xf]
      %v7200 = vld [vmem:[%s7192 + $0x1c] sm:$0xf]
      %v7201 = vld [vmem:[%s7192 + $0x20] sm:$0xf]
      %v7202 = vld [vmem:[%s7192 + $0x24] sm:$0xf]
      %v7203 = vld [vmem:[%s7192 + $0x28] sm:$0xf]
      %v7204 = vld [vmem:[%s7192 + $0x2c] sm:$0xf]
      %v7205 = vld [vmem:[%s7192 + $0x30] sm:$0xf]
      %v7206 = vld [vmem:[%s7192 + $0x34] sm:$0xf]
      %v7207 = vld [vmem:[%s7192 + $0x38] sm:$0xf]
      %v7208 = vld [vmem:[%s7192 + $0x3c] sm:$0xf]
      %v7225 = vunpack.c.l.b16 %v7193
      %v7226 = vunpack.c.l.b16 %v7194
      %v7227 = vunpack.c.l.b16 %v7195
      %v7228 = vunpack.c.l.b16 %v7196
      %v7229 = vunpack.c.l.b16 %v7197
      %v7230 = vunpack.c.l.b16 %v7198
      %v7231 = vunpack.c.l.b16 %v7199
      %v7232 = vunpack.c.l.b16 %v7200
      %v7233 = vunpack.c.l.b16 %v7201
      %v7234 = vunpack.c.l.b16 %v7202
      %v7235 = vunpack.c.l.b16 %v7203
      %v7236 = vunpack.c.l.b16 %v7204
      %v7237 = vunpack.c.l.b16 %v7205
      %v7238 = vunpack.c.l.b16 %v7206
      %v7239 = vunpack.c.l.b16 %v7207
      %v7240 = vunpack.c.l.b16 %v7208
      %v7241 = vpack.c.b16 %v7226, %v7225
      %v7242 = vpack.c.b16 %v7228, %v7227
      %v7243 = vpack.c.b16 %v7230, %v7229
      %v7244 = vpack.c.b16 %v7232, %v7231
      %v7245 = vpack.c.b16 %v7234, %v7233
      %v7246 = vpack.c.b16 %v7236, %v7235
      %v7247 = vpack.c.b16 %v7238, %v7237
      %v7248 = vpack.c.b16 %v7240, %v7239
      %7257 = vmatprep.subr.bf16.mxu0 0
      %7258 = vmatpush1.bf16.msra.mxu0 %v7248
      %7259 = vmatprep.subr.bf16.mxu0 0
      %7260 = vmatpush1.bf16.msra.mxu0 %v7247
      %7261 = vmatprep.subr.bf16.mxu0 0
      %7262 = vmatpush1.bf16.msra.mxu0 %v7246
      %7263 = vmatprep.subr.bf16.mxu0 0
      %7264 = vmatpush1.bf16.msra.mxu0 %v7245
      %7265 = vmatprep.subr.bf16.mxu0 0
      %7266 = vmatpush1.bf16.msra.mxu0 %v7244
      %7267 = vmatprep.subr.bf16.mxu0 0
      %7268 = vmatpush1.bf16.msra.mxu0 %v7243
      %7269 = vmatprep.subr.bf16.mxu0 0
      %7270 = vmatpush1.bf16.msra.mxu0 %v7242
      %7271 = vmatprep.subr.bf16.mxu0 0
      %7272 = vmatpush1.bf16.msra.mxu0 %v7241
      %7273 = vmatprep.subr.bf16.mxu0 0
      %7274 = vmatpush2.bf16.msra.mxu0 0
      %7275 = vmatprep.subr.bf16.mxu0 0
      %7276 = vmatpush2.bf16.msra.mxu0 0
      %7277 = vmatprep.subr.bf16.mxu0 0
      %7278 = vmatpush2.bf16.msra.mxu0 0
      %7279 = vmatprep.subr.bf16.mxu0 0
      %7280 = vmatpush2.bf16.msra.mxu0 0
      %7281 = vmatprep.subr.bf16.mxu0 0
      %7282 = vmatpush2.bf16.msra.mxu0 0
      %7283 = vmatprep.subr.bf16.mxu0 0
      %7284 = vmatpush2.bf16.msra.mxu0 0
      %7285 = vmatprep.subr.bf16.mxu0 0
      %7286 = vmatpush2.bf16.msra.mxu0 0
      %7287 = vmatprep.subr.bf16.mxu0 0
      %7288 = vmatpush2.bf16.msra.mxu0 0
      %7289 = vmatprep.mubr.bf16.mxu0 0
      %7290 = vmatmul.mubr.bf16.gmra.mxu0 %v7191
      %v7291 = vpop.f32.mrf.mxu0
      %v7292 = vadd.f32 0.0, %v7291
      %v7293 = vpop.f32.mrf.mxu0
      %v7294 = vpop.f32.mrf.mxu0
      %v7295 = vpop.f32.mrf.mxu0
      %7296 = vdwg.mxu0
      %v7297 = vadd.f32 %v7189, %v7292
      %v7298 = vld [vmem:[%s6420 + $0x4] sm:$0x3f]
      %v7299 = vpack.c.bf16 %v7298, %v7298
      %s7300 = scalar_lea.vmem %s2, 2176
      %v7301 = vld [vmem:[%s7300] sm:$0xf]
      %v7302 = vld [vmem:[%s7300 + $0x4] sm:$0xf]
      %v7303 = vld [vmem:[%s7300 + $0x8] sm:$0xf]
      %v7304 = vld [vmem:[%s7300 + $0xc] sm:$0xf]
      %v7305 = vld [vmem:[%s7300 + $0x10] sm:$0xf]
      %v7306 = vld [vmem:[%s7300 + $0x14] sm:$0xf]
      %v7307 = vld [vmem:[%s7300 + $0x18] sm:$0xf]
      %v7308 = vld [vmem:[%s7300 + $0x1c] sm:$0xf]
      %v7309 = vld [vmem:[%s7300 + $0x20] sm:$0xf]
      %v7310 = vld [vmem:[%s7300 + $0x24] sm:$0xf]
      %v7311 = vld [vmem:[%s7300 + $0x28] sm:$0xf]
      %v7312 = vld [vmem:[%s7300 + $0x2c] sm:$0xf]
      %v7313 = vld [vmem:[%s7300 + $0x30] sm:$0xf]
      %v7314 = vld [vmem:[%s7300 + $0x34] sm:$0xf]
      %v7315 = vld [vmem:[%s7300 + $0x38] sm:$0xf]
      %v7316 = vld [vmem:[%s7300 + $0x3c] sm:$0xf]
      %v7333 = vunpack.c.l.b16 %v7301
      %v7334 = vunpack.c.l.b16 %v7302
      %v7335 = vunpack.c.l.b16 %v7303
      %v7336 = vunpack.c.l.b16 %v7304
      %v7337 = vunpack.c.l.b16 %v7305
      %v7338 = vunpack.c.l.b16 %v7306
      %v7339 = vunpack.c.l.b16 %v7307
      %v7340 = vunpack.c.l.b16 %v7308
      %v7341 = vunpack.c.l.b16 %v7309
      %v7342 = vunpack.c.l.b16 %v7310
      %v7343 = vunpack.c.l.b16 %v7311
      %v7344 = vunpack.c.l.b16 %v7312
      %v7345 = vunpack.c.l.b16 %v7313
      %v7346 = vunpack.c.l.b16 %v7314
      %v7347 = vunpack.c.l.b16 %v7315
      %v7348 = vunpack.c.l.b16 %v7316
      %v7349 = vpack.c.b16 %v7334, %v7333
      %v7350 = vpack.c.b16 %v7336, %v7335
      %v7351 = vpack.c.b16 %v7338, %v7337
      %v7352 = vpack.c.b16 %v7340, %v7339
      %v7353 = vpack.c.b16 %v7342, %v7341
      %v7354 = vpack.c.b16 %v7344, %v7343
      %v7355 = vpack.c.b16 %v7346, %v7345
      %v7356 = vpack.c.b16 %v7348, %v7347
      %7365 = vmatprep.subr.bf16.mxu0 0
      %7366 = vmatpush1.bf16.msra.mxu0 %v7356
      %7367 = vmatprep.subr.bf16.mxu0 0
      %7368 = vmatpush1.bf16.msra.mxu0 %v7355
      %7369 = vmatprep.subr.bf16.mxu0 0
      %7370 = vmatpush1.bf16.msra.mxu0 %v7354
      %7371 = vmatprep.subr.bf16.mxu0 0
      %7372 = vmatpush1.bf16.msra.mxu0 %v7353
      %7373 = vmatprep.subr.bf16.mxu0 0
      %7374 = vmatpush1.bf16.msra.mxu0 %v7352
      %7375 = vmatprep.subr.bf16.mxu0 0
      %7376 = vmatpush1.bf16.msra.mxu0 %v7351
      %7377 = vmatprep.subr.bf16.mxu0 0
      %7378 = vmatpush1.bf16.msra.mxu0 %v7350
      %7379 = vmatprep.subr.bf16.mxu0 0
      %7380 = vmatpush1.bf16.msra.mxu0 %v7349
      %7381 = vmatprep.subr.bf16.mxu0 0
      %7382 = vmatpush2.bf16.msra.mxu0 0
      %7383 = vmatprep.subr.bf16.mxu0 0
      %7384 = vmatpush2.bf16.msra.mxu0 0
      %7385 = vmatprep.subr.bf16.mxu0 0
      %7386 = vmatpush2.bf16.msra.mxu0 0
      %7387 = vmatprep.subr.bf16.mxu0 0
      %7388 = vmatpush2.bf16.msra.mxu0 0
      %7389 = vmatprep.subr.bf16.mxu0 0
      %7390 = vmatpush2.bf16.msra.mxu0 0
      %7391 = vmatprep.subr.bf16.mxu0 0
      %7392 = vmatpush2.bf16.msra.mxu0 0
      %7393 = vmatprep.subr.bf16.mxu0 0
      %7394 = vmatpush2.bf16.msra.mxu0 0
      %7395 = vmatprep.subr.bf16.mxu0 0
      %7396 = vmatpush2.bf16.msra.mxu0 0
      %7397 = vmatprep.mubr.bf16.mxu0 0
      %7398 = vmatmul.mubr.bf16.gmra.mxu0 %v7299
      %v7399 = vpop.f32.mrf.mxu0
      %v7400 = vadd.f32 0.0, %v7399
      %v7401 = vpop.f32.mrf.mxu0
      %v7402 = vpop.f32.mrf.mxu0
      %v7403 = vpop.f32.mrf.mxu0
      %7404 = vdwg.mxu0
      %v7405 = vadd.f32 %v7297, %v7400
      %v7406 = vld [vmem:[#allocation9 + $0x5] sm:$0x3f]
      %v7407 = vpack.c.bf16 %v7406, %v7406
      %s7408 = scalar_lea.vmem %s2, 2240
      %v7409 = vld [vmem:[%s7408] sm:$0xf]
      %v7410 = vld [vmem:[%s7408 + $0x4] sm:$0xf]
      %v7411 = vld [vmem:[%s7408 + $0x8] sm:$0xf]
      %v7412 = vld [vmem:[%s7408 + $0xc] sm:$0xf]
      %v7413 = vld [vmem:[%s7408 + $0x10] sm:$0xf]
      %v7414 = vld [vmem:[%s7408 + $0x14] sm:$0xf]
      %v7415 = vld [vmem:[%s7408 + $0x18] sm:$0xf]
      %v7416 = vld [vmem:[%s7408 + $0x1c] sm:$0xf]
      %v7417 = vld [vmem:[%s7408 + $0x20] sm:$0xf]
      %v7418 = vld [vmem:[%s7408 + $0x24] sm:$0xf]
      %v7419 = vld [vmem:[%s7408 + $0x28] sm:$0xf]
      %v7420 = vld [vmem:[%s7408 + $0x2c] sm:$0xf]
      %v7421 = vld [vmem:[%s7408 + $0x30] sm:$0xf]
      %v7422 = vld [vmem:[%s7408 + $0x34] sm:$0xf]
      %v7423 = vld [vmem:[%s7408 + $0x38] sm:$0xf]
      %v7424 = vld [vmem:[%s7408 + $0x3c] sm:$0xf]
      %v7441 = vunpack.c.l.b16 %v7409
      %v7442 = vunpack.c.l.b16 %v7410
      %v7443 = vunpack.c.l.b16 %v7411
      %v7444 = vunpack.c.l.b16 %v7412
      %v7445 = vunpack.c.l.b16 %v7413
      %v7446 = vunpack.c.l.b16 %v7414
      %v7447 = vunpack.c.l.b16 %v7415
      %v7448 = vunpack.c.l.b16 %v7416
      %v7449 = vunpack.c.l.b16 %v7417
      %v7450 = vunpack.c.l.b16 %v7418
      %v7451 = vunpack.c.l.b16 %v7419
      %v7452 = vunpack.c.l.b16 %v7420
      %v7453 = vunpack.c.l.b16 %v7421
      %v7454 = vunpack.c.l.b16 %v7422
      %v7455 = vunpack.c.l.b16 %v7423
      %v7456 = vunpack.c.l.b16 %v7424
      %v7457 = vpack.c.b16 %v7442, %v7441
      %v7458 = vpack.c.b16 %v7444, %v7443
      %v7459 = vpack.c.b16 %v7446, %v7445
      %v7460 = vpack.c.b16 %v7448, %v7447
      %v7461 = vpack.c.b16 %v7450, %v7449
      %v7462 = vpack.c.b16 %v7452, %v7451
      %v7463 = vpack.c.b16 %v7454, %v7453
      %v7464 = vpack.c.b16 %v7456, %v7455
      %7473 = vmatprep.subr.bf16.mxu0 0
      %7474 = vmatpush1.bf16.msra.mxu0 %v7464
      %7475 = vmatprep.subr.bf16.mxu0 0
      %7476 = vmatpush1.bf16.msra.mxu0 %v7463
      %7477 = vmatprep.subr.bf16.mxu0 0
      %7478 = vmatpush1.bf16.msra.mxu0 %v7462
      %7479 = vmatprep.subr.bf16.mxu0 0
      %7480 = vmatpush1.bf16.msra.mxu0 %v7461
      %7481 = vmatprep.subr.bf16.mxu0 0
      %7482 = vmatpush1.bf16.msra.mxu0 %v7460
      %7483 = vmatprep.subr.bf16.mxu0 0
      %7484 = vmatpush1.bf16.msra.mxu0 %v7459
      %7485 = vmatprep.subr.bf16.mxu0 0
      %7486 = vmatpush1.bf16.msra.mxu0 %v7458
      %7487 = vmatprep.subr.bf16.mxu0 0
      %7488 = vmatpush1.bf16.msra.mxu0 %v7457
      %7489 = vmatprep.subr.bf16.mxu0 0
      %7490 = vmatpush2.bf16.msra.mxu0 0
      %7491 = vmatprep.subr.bf16.mxu0 0
      %7492 = vmatpush2.bf16.msra.mxu0 0
      %7493 = vmatprep.subr.bf16.mxu0 0
      %7494 = vmatpush2.bf16.msra.mxu0 0
      %7495 = vmatprep.subr.bf16.mxu0 0
      %7496 = vmatpush2.bf16.msra.mxu0 0
      %7497 = vmatprep.subr.bf16.mxu0 0
      %7498 = vmatpush2.bf16.msra.mxu0 0
      %7499 = vmatprep.subr.bf16.mxu0 0
      %7500 = vmatpush2.bf16.msra.mxu0 0
      %7501 = vmatprep.subr.bf16.mxu0 0
      %7502 = vmatpush2.bf16.msra.mxu0 0
      %7503 = vmatprep.subr.bf16.mxu0 0
      %7504 = vmatpush2.bf16.msra.mxu0 0
      %7505 = vmatprep.mubr.bf16.mxu0 0
      %7506 = vmatmul.mubr.bf16.gmra.mxu0 %v7407
      %v7507 = vpop.f32.mrf.mxu0
      %v7508 = vadd.f32 0.0, %v7507
      %v7509 = vpop.f32.mrf.mxu0
      %v7510 = vpop.f32.mrf.mxu0
      %v7511 = vpop.f32.mrf.mxu0
      %7512 = vdwg.mxu0
      %v7513 = vadd.f32 %v7405, %v7508
      %s7514 = scalar_lea.vmem %s3, 4
      %v7515 = vld [vmem:[%s7514] sm:$0x1]
      %v7517 = vlaneseq
      %v7518 = vshrl.u32 %v7517, 7
      %v7519 = vsub.s32 0, %v7518
      %v7520 = vrot.slane %v7515, %v7519
      %v7522 = vadd.f32 %v7513, %v7520
      %v7523 = vmax.f32 %v7522, 0.0
      %v7524 = vld [vmem:[%s4 + $0xe8] sm:$0x7]
      %v7525 = vunpack.c.l.bf16 %v7524
      %v7526 = vmul.f32 %v7523, %v7525
      %7527 = vst [vmem:[#allocation6] sm:$0x1f] 0.0
      %7528 = vst [vmem:[#allocation6 + $0x5] sm:$0x3f] %v7526
      %7529 = vst [vmem:[#allocation6 + $0xb] sm:$0x1f] 0.0
      %v7530 = vld [vmem:[%s8] sm:$0xf]
      %v7531 = vld [vmem:[%s8 + $0x4] sm:$0xf]
      %v7532 = vld [vmem:[%s8 + $0x8] sm:$0xf]
      %v7533 = vld [vmem:[%s8 + $0xc] sm:$0xf]
      %v7534 = vld [vmem:[#allocation6] sm:$0xff]
      %v7535 = vpack.c.bf16 %v7534, %v7534
      %v7540 = vunpack.c.l.b16 %v7530
      %v7541 = vunpack.c.l.b16 %v7531
      %v7542 = vunpack.c.l.b16 %v7532
      %v7543 = vunpack.c.l.b16 %v7533
      %v7544 = vpack.c.b16 %v7541, %v7540
      %v7545 = vpack.c.b16 %v7543, %v7542
      %vm7546 = vcmask 64512
      %v7548 = vsel %vm7546, %v7544, 0
      %v7551 = vsel %vm7546, %v7545, 0
      %v7554 = vsel %vm4835, %v7535, 0
      %7556 = vmatprep.subr.bf16.mxu0 0
      %7557 = vmatpush1.bf16.msra.mxu0 0
      %7558 = vmatprep.subr.bf16.mxu0 0
      %7559 = vmatpush1.bf16.msra.mxu0 0
      %7560 = vmatprep.subr.bf16.mxu0 0
      %7561 = vmatpush1.bf16.msra.mxu0 0
      %7562 = vmatprep.subr.bf16.mxu0 0
      %7563 = vmatpush1.bf16.msra.mxu0 0
      %7564 = vmatprep.subr.bf16.mxu0 0
      %7565 = vmatpush1.bf16.msra.mxu0 0
      %7566 = vmatprep.subr.bf16.mxu0 0
      %7567 = vmatpush1.bf16.msra.mxu0 0
      %7568 = vmatprep.subr.bf16.mxu0 0
      %7569 = vmatpush1.bf16.msra.mxu0 0
      %7570 = vmatprep.subr.bf16.mxu0 0
      %7571 = vmatpush1.bf16.msra.mxu0 %v7554
      %7572 = vmatprep.subr.bf16.mxu0 0
      %7573 = vmatpush2.bf16.msra.mxu0 0
      %7574 = vmatprep.subr.bf16.mxu0 0
      %7575 = vmatpush2.bf16.msra.mxu0 0
      %7576 = vmatprep.subr.bf16.mxu0 0
      %7577 = vmatpush2.bf16.msra.mxu0 0
      %7578 = vmatprep.subr.bf16.mxu0 0
      %7579 = vmatpush2.bf16.msra.mxu0 0
      %7580 = vmatprep.subr.bf16.mxu0 0
      %7581 = vmatpush2.bf16.msra.mxu0 0
      %7582 = vmatprep.subr.bf16.mxu0 0
      %7583 = vmatpush2.bf16.msra.mxu0 0
      %7584 = vmatprep.subr.bf16.mxu0 0
      %7585 = vmatpush2.bf16.msra.mxu0 0
      %7586 = vmatprep.subr.bf16.mxu0 0
      %7587 = vmatpush2.bf16.msra.mxu0 0
      %7588 = vmatprep.mubr.bf16.mxu0 0
      %7589 = vmatmul.mubr.bf16.gmra.mxu0 %v7548
      %v7590 = vpop.f32.mrf.mxu0
      %v7591 = vadd.f32 0.0, %v7590
      %v7592 = vpop.f32.mrf.mxu0
      %v7593 = vpop.f32.mrf.mxu0
      %v7594 = vadd.f32 0.0, %v7593
      %v7595 = vpop.f32.mrf.mxu0
      %7596 = vmatprep.mubr.bf16.mxu0 0
      %7597 = vmatmul.mubr.bf16.gmra.mxu0 %v7551
      %v7598 = vpop.f32.mrf.mxu0
      %v7599 = vadd.f32 0.0, %v7598
      %v7600 = vpop.f32.mrf.mxu0
      %v7601 = vpop.f32.mrf.mxu0
      %v7602 = vadd.f32 0.0, %v7601
      %v7603 = vpop.f32.mrf.mxu0
      %7604 = vdwg.mxu0
      %7605 = vst [vmem:[#allocation10] sm:$0x7] %v7591
      %s7606 = scalar_lea.vmem [#allocation10], 16
      %7607 = vst [vmem:[%s7606] sm:$0x7] %v7594
      %s7608 = scalar_lea.vmem [#allocation10], 32
      %7609 = vst [vmem:[%s7608] sm:$0x7] %v7599
      %s7610 = scalar_lea.vmem [#allocation10], 48
      %7611 = vst [vmem:[%s7610] sm:$0x7] %v7602
      %v7612 = vld [vmem:[#allocation6 + $0x8] sm:$0xff]
      %v7613 = vpack.c.bf16 %v7612, %v7612
      %v7615 = vsel %vm4835, %v7613, 0
      %7617 = vmatprep.subr.bf16.mxu0 0
      %7618 = vmatpush1.bf16.msra.mxu0 0
      %7619 = vmatprep.subr.bf16.mxu0 0
      %7620 = vmatpush1.bf16.msra.mxu0 0
      %7621 = vmatprep.subr.bf16.mxu0 0
      %7622 = vmatpush1.bf16.msra.mxu0 0
      %7623 = vmatprep.subr.bf16.mxu0 0
      %7624 = vmatpush1.bf16.msra.mxu0 0
      %7625 = vmatprep.subr.bf16.mxu0 0
      %7626 = vmatpush1.bf16.msra.mxu0 0
      %7627 = vmatprep.subr.bf16.mxu0 0
      %7628 = vmatpush1.bf16.msra.mxu0 0
      %7629 = vmatprep.subr.bf16.mxu0 0
      %7630 = vmatpush1.bf16.msra.mxu0 0
      %7631 = vmatprep.subr.bf16.mxu0 0
      %7632 = vmatpush1.bf16.msra.mxu0 %v7615
      %7633 = vmatprep.subr.bf16.mxu0 0
      %7634 = vmatpush2.bf16.msra.mxu0 0
      %7635 = vmatprep.subr.bf16.mxu0 0
      %7636 = vmatpush2.bf16.msra.mxu0 0
      %7637 = vmatprep.subr.bf16.mxu0 0
      %7638 = vmatpush2.bf16.msra.mxu0 0
      %7639 = vmatprep.subr.bf16.mxu0 0
      %7640 = vmatpush2.bf16.msra.mxu0 0
      %7641 = vmatprep.subr.bf16.mxu0 0
      %7642 = vmatpush2.bf16.msra.mxu0 0
      %7643 = vmatprep.subr.bf16.mxu0 0
      %7644 = vmatpush2.bf16.msra.mxu0 0
      %7645 = vmatprep.subr.bf16.mxu0 0
      %7646 = vmatpush2.bf16.msra.mxu0 0
      %7647 = vmatprep.subr.bf16.mxu0 0
      %7648 = vmatpush2.bf16.msra.mxu0 0
      %7649 = vmatprep.mubr.bf16.mxu0 0
      %7650 = vmatmul.mubr.bf16.gmra.mxu0 %v7548
      %v7651 = vpop.f32.mrf.mxu0
      %v7652 = vadd.f32 0.0, %v7651
      %v7653 = vpop.f32.mrf.mxu0
      %v7654 = vpop.f32.mrf.mxu0
      %v7655 = vadd.f32 0.0, %v7654
      %v7656 = vpop.f32.mrf.mxu0
      %7657 = vmatprep.mubr.bf16.mxu0 0
      %7658 = vmatmul.mubr.bf16.gmra.mxu0 %v7551
      %v7659 = vpop.f32.mrf.mxu0
      %v7660 = vadd.f32 0.0, %v7659
      %v7661 = vpop.f32.mrf.mxu0
      %v7662 = vpop.f32.mrf.mxu0
      %v7663 = vadd.f32 0.0, %v7662
      %v7664 = vpop.f32.mrf.mxu0
      %7665 = vdwg.mxu0
      %7666 = vst [vmem:[#allocation10 + $0x3] sm:$0x7] %v7652
      %7667 = vst [vmem:[%s7606 + $0x3] sm:$0x7] %v7655
      %7668 = vst [vmem:[%s7608 + $0x3] sm:$0x7] %v7660
      %7669 = vst [vmem:[%s7610 + $0x3] sm:$0x7] %v7663
      %v7670 = vld [vmem:[#allocation10] sm:$0x1]
      %v7671 = vpack.c.bf16 %v7670, %v7670
      %s7672 = scalar_lea.vmem %s2, 2304
      %v7673 = vld [vmem:[%s7672] sm:$0xf]
      %v7674 = vld [vmem:[%s7672 + $0x4] sm:$0xf]
      %v7675 = vld [vmem:[%s7672 + $0x8] sm:$0xf]
      %v7676 = vld [vmem:[%s7672 + $0xc] sm:$0xf]
      %v7677 = vld [vmem:[%s7672 + $0x10] sm:$0xf]
      %v7678 = vld [vmem:[%s7672 + $0x14] sm:$0xf]
      %v7679 = vld [vmem:[%s7672 + $0x18] sm:$0xf]
      %v7680 = vld [vmem:[%s7672 + $0x1c] sm:$0xf]
      %v7681 = vld [vmem:[%s7672 + $0x20] sm:$0xf]
      %v7682 = vld [vmem:[%s7672 + $0x24] sm:$0xf]
      %v7683 = vld [vmem:[%s7672 + $0x28] sm:$0xf]
      %v7684 = vld [vmem:[%s7672 + $0x2c] sm:$0xf]
      %v7685 = vld [vmem:[%s7672 + $0x30] sm:$0xf]
      %v7686 = vld [vmem:[%s7672 + $0x34] sm:$0xf]
      %v7687 = vld [vmem:[%s7672 + $0x38] sm:$0xf]
      %v7688 = vld [vmem:[%s7672 + $0x3c] sm:$0xf]
      %v7689 = vld [vmem:[%s7606] sm:$0x1]
      %v7690 = vpack.c.bf16 %v7689, %v7689
      %s7691 = scalar_lea.vmem %s2, 2368
      %v7692 = vld [vmem:[%s7691] sm:$0xf]
      %v7693 = vld [vmem:[%s7691 + $0x4] sm:$0xf]
      %v7694 = vld [vmem:[%s7691 + $0x8] sm:$0xf]
      %v7695 = vld [vmem:[%s7691 + $0xc] sm:$0xf]
      %v7696 = vld [vmem:[%s7691 + $0x10] sm:$0xf]
      %v7697 = vld [vmem:[%s7691 + $0x14] sm:$0xf]
      %v7698 = vld [vmem:[%s7691 + $0x18] sm:$0xf]
      %v7699 = vld [vmem:[%s7691 + $0x1c] sm:$0xf]
      %v7700 = vld [vmem:[%s7691 + $0x20] sm:$0xf]
      %v7701 = vld [vmem:[%s7691 + $0x24] sm:$0xf]
      %v7702 = vld [vmem:[%s7691 + $0x28] sm:$0xf]
      %v7703 = vld [vmem:[%s7691 + $0x2c] sm:$0xf]
      %v7704 = vld [vmem:[%s7691 + $0x30] sm:$0xf]
      %v7705 = vld [vmem:[%s7691 + $0x34] sm:$0xf]
      %v7706 = vld [vmem:[%s7691 + $0x38] sm:$0xf]
      %v7707 = vld [vmem:[%s7691 + $0x3c] sm:$0xf]
      %v7724 = vunpack.c.l.b16 %v7692
      %v7725 = vunpack.c.l.b16 %v7693
      %v7726 = vunpack.c.l.b16 %v7694
      %v7727 = vunpack.c.l.b16 %v7695
      %v7728 = vunpack.c.l.b16 %v7696
      %v7729 = vunpack.c.l.b16 %v7697
      %v7730 = vunpack.c.l.b16 %v7698
      %v7731 = vunpack.c.l.b16 %v7699
      %v7732 = vunpack.c.l.b16 %v7700
      %v7733 = vunpack.c.l.b16 %v7701
      %v7734 = vunpack.c.l.b16 %v7702
      %v7735 = vunpack.c.l.b16 %v7703
      %v7736 = vunpack.c.l.b16 %v7704
      %v7737 = vunpack.c.l.b16 %v7705
      %v7738 = vunpack.c.l.b16 %v7706
      %v7739 = vunpack.c.l.b16 %v7707
      %v7740 = vpack.c.b16 %v7725, %v7724
      %v7741 = vpack.c.b16 %v7727, %v7726
      %v7742 = vpack.c.b16 %v7729, %v7728
      %v7743 = vpack.c.b16 %v7731, %v7730
      %v7744 = vpack.c.b16 %v7733, %v7732
      %v7745 = vpack.c.b16 %v7735, %v7734
      %v7746 = vpack.c.b16 %v7737, %v7736
      %v7747 = vpack.c.b16 %v7739, %v7738
      %7756 = vmatprep.subr.bf16.mxu0 0
      %7757 = vmatpush1.bf16.msra.mxu0 %v7747
      %7758 = vmatprep.subr.bf16.mxu0 0
      %7759 = vmatpush1.bf16.msra.mxu0 %v7746
      %7760 = vmatprep.subr.bf16.mxu0 0
      %7761 = vmatpush1.bf16.msra.mxu0 %v7745
      %7762 = vmatprep.subr.bf16.mxu0 0
      %7763 = vmatpush1.bf16.msra.mxu0 %v7744
      %7764 = vmatprep.subr.bf16.mxu0 0
      %7765 = vmatpush1.bf16.msra.mxu0 %v7743
      %7766 = vmatprep.subr.bf16.mxu0 0
      %7767 = vmatpush1.bf16.msra.mxu0 %v7742
      %7768 = vmatprep.subr.bf16.mxu0 0
      %7769 = vmatpush1.bf16.msra.mxu0 %v7741
      %7770 = vmatprep.subr.bf16.mxu0 0
      %7771 = vmatpush1.bf16.msra.mxu0 %v7740
      %7772 = vmatprep.subr.bf16.mxu0 0
      %7773 = vmatpush2.bf16.msra.mxu0 0
      %7774 = vmatprep.subr.bf16.mxu0 0
      %7775 = vmatpush2.bf16.msra.mxu0 0
      %7776 = vmatprep.subr.bf16.mxu0 0
      %7777 = vmatpush2.bf16.msra.mxu0 0
      %7778 = vmatprep.subr.bf16.mxu0 0
      %7779 = vmatpush2.bf16.msra.mxu0 0
      %7780 = vmatprep.subr.bf16.mxu0 0
      %7781 = vmatpush2.bf16.msra.mxu0 0
      %7782 = vmatprep.subr.bf16.mxu0 0
      %7783 = vmatpush2.bf16.msra.mxu0 0
      %7784 = vmatprep.subr.bf16.mxu0 0
      %7785 = vmatpush2.bf16.msra.mxu0 0
      %7786 = vmatprep.subr.bf16.mxu0 0
      %7787 = vmatpush2.bf16.msra.mxu0 0
      %7788 = vmatprep.mubr.bf16.mxu0 0
      %7789 = vmatmul.mubr.bf16.gmra.mxu0 %v7690
      %v7790 = vpop.f32.mrf.mxu0
      %v7791 = vadd.f32 0.0, %v7790
      %v7792 = vpop.f32.mrf.mxu0
      %v7793 = vpop.f32.mrf.mxu0
      %v7794 = vpop.f32.mrf.mxu0
      %7795 = vdwg.mxu0
      %v7812 = vunpack.c.l.b16 %v7673
      %v7813 = vunpack.c.l.b16 %v7674
      %v7814 = vunpack.c.l.b16 %v7675
      %v7815 = vunpack.c.l.b16 %v7676
      %v7816 = vunpack.c.l.b16 %v7677
      %v7817 = vunpack.c.l.b16 %v7678
      %v7818 = vunpack.c.l.b16 %v7679
      %v7819 = vunpack.c.l.b16 %v7680
      %v7820 = vunpack.c.l.b16 %v7681
      %v7821 = vunpack.c.l.b16 %v7682
      %v7822 = vunpack.c.l.b16 %v7683
      %v7823 = vunpack.c.l.b16 %v7684
      %v7824 = vunpack.c.l.b16 %v7685
      %v7825 = vunpack.c.l.b16 %v7686
      %v7826 = vunpack.c.l.b16 %v7687
      %v7827 = vunpack.c.l.b16 %v7688
      %v7828 = vpack.c.b16 %v7813, %v7812
      %v7829 = vpack.c.b16 %v7815, %v7814
      %v7830 = vpack.c.b16 %v7817, %v7816
      %v7831 = vpack.c.b16 %v7819, %v7818
      %v7832 = vpack.c.b16 %v7821, %v7820
      %v7833 = vpack.c.b16 %v7823, %v7822
      %v7834 = vpack.c.b16 %v7825, %v7824
      %v7835 = vpack.c.b16 %v7827, %v7826
      %7844 = vmatprep.subr.bf16.mxu0 0
      %7845 = vmatpush1.bf16.msra.mxu0 %v7835
      %7846 = vmatprep.subr.bf16.mxu0 0
      %7847 = vmatpush1.bf16.msra.mxu0 %v7834
      %7848 = vmatprep.subr.bf16.mxu0 0
      %7849 = vmatpush1.bf16.msra.mxu0 %v7833
      %7850 = vmatprep.subr.bf16.mxu0 0
      %7851 = vmatpush1.bf16.msra.mxu0 %v7832
      %7852 = vmatprep.subr.bf16.mxu0 0
      %7853 = vmatpush1.bf16.msra.mxu0 %v7831
      %7854 = vmatprep.subr.bf16.mxu0 0
      %7855 = vmatpush1.bf16.msra.mxu0 %v7830
      %7856 = vmatprep.subr.bf16.mxu0 0
      %7857 = vmatpush1.bf16.msra.mxu0 %v7829
      %7858 = vmatprep.subr.bf16.mxu0 0
      %7859 = vmatpush1.bf16.msra.mxu0 %v7828
      %7860 = vmatprep.subr.bf16.mxu0 0
      %7861 = vmatpush2.bf16.msra.mxu0 0
      %7862 = vmatprep.subr.bf16.mxu0 0
      %7863 = vmatpush2.bf16.msra.mxu0 0
      %7864 = vmatprep.subr.bf16.mxu0 0
      %7865 = vmatpush2.bf16.msra.mxu0 0
      %7866 = vmatprep.subr.bf16.mxu0 0
      %7867 = vmatpush2.bf16.msra.mxu0 0
      %7868 = vmatprep.subr.bf16.mxu0 0
      %7869 = vmatpush2.bf16.msra.mxu0 0
      %7870 = vmatprep.subr.bf16.mxu0 0
      %7871 = vmatpush2.bf16.msra.mxu0 0
      %7872 = vmatprep.subr.bf16.mxu0 0
      %7873 = vmatpush2.bf16.msra.mxu0 0
      %7874 = vmatprep.subr.bf16.mxu0 0
      %7875 = vmatpush2.bf16.msra.mxu0 0
      %7876 = vmatprep.mubr.bf16.mxu0 0
      %7877 = vmatmul.mubr.bf16.gmra.mxu0 %v7671
      %v7878 = vpop.f32.mrf.mxu0
      %v7879 = vadd.f32 %v7791, %v7878
      %v7880 = vpop.f32.mrf.mxu0
      %v7881 = vpop.f32.mrf.mxu0
      %v7882 = vpop.f32.mrf.mxu0
      %7883 = vdwg.mxu0
      %v7884 = vld [vmem:[#allocation10 + $0x1] sm:$0x1]
      %v7885 = vpack.c.bf16 %v7884, %v7884
      %s7886 = scalar_lea.vmem %s2, 2432
      %v7887 = vld [vmem:[%s7886] sm:$0xf]
      %v7888 = vld [vmem:[%s7886 + $0x4] sm:$0xf]
      %v7889 = vld [vmem:[%s7886 + $0x8] sm:$0xf]
      %v7890 = vld [vmem:[%s7886 + $0xc] sm:$0xf]
      %v7891 = vld [vmem:[%s7886 + $0x10] sm:$0xf]
      %v7892 = vld [vmem:[%s7886 + $0x14] sm:$0xf]
      %v7893 = vld [vmem:[%s7886 + $0x18] sm:$0xf]
      %v7894 = vld [vmem:[%s7886 + $0x1c] sm:$0xf]
      %v7895 = vld [vmem:[%s7886 + $0x20] sm:$0xf]
      %v7896 = vld [vmem:[%s7886 + $0x24] sm:$0xf]
      %v7897 = vld [vmem:[%s7886 + $0x28] sm:$0xf]
      %v7898 = vld [vmem:[%s7886 + $0x2c] sm:$0xf]
      %v7899 = vld [vmem:[%s7886 + $0x30] sm:$0xf]
      %v7900 = vld [vmem:[%s7886 + $0x34] sm:$0xf]
      %v7901 = vld [vmem:[%s7886 + $0x38] sm:$0xf]
      %v7902 = vld [vmem:[%s7886 + $0x3c] sm:$0xf]
      %v7919 = vunpack.c.l.b16 %v7887
      %v7920 = vunpack.c.l.b16 %v7888
      %v7921 = vunpack.c.l.b16 %v7889
      %v7922 = vunpack.c.l.b16 %v7890
      %v7923 = vunpack.c.l.b16 %v7891
      %v7924 = vunpack.c.l.b16 %v7892
      %v7925 = vunpack.c.l.b16 %v7893
      %v7926 = vunpack.c.l.b16 %v7894
      %v7927 = vunpack.c.l.b16 %v7895
      %v7928 = vunpack.c.l.b16 %v7896
      %v7929 = vunpack.c.l.b16 %v7897
      %v7930 = vunpack.c.l.b16 %v7898
      %v7931 = vunpack.c.l.b16 %v7899
      %v7932 = vunpack.c.l.b16 %v7900
      %v7933 = vunpack.c.l.b16 %v7901
      %v7934 = vunpack.c.l.b16 %v7902
      %v7935 = vpack.c.b16 %v7920, %v7919
      %v7936 = vpack.c.b16 %v7922, %v7921
      %v7937 = vpack.c.b16 %v7924, %v7923
      %v7938 = vpack.c.b16 %v7926, %v7925
      %v7939 = vpack.c.b16 %v7928, %v7927
      %v7940 = vpack.c.b16 %v7930, %v7929
      %v7941 = vpack.c.b16 %v7932, %v7931
      %v7942 = vpack.c.b16 %v7934, %v7933
      %7951 = vmatprep.subr.bf16.mxu0 0
      %7952 = vmatpush1.bf16.msra.mxu0 %v7942
      %7953 = vmatprep.subr.bf16.mxu0 0
      %7954 = vmatpush1.bf16.msra.mxu0 %v7941
      %7955 = vmatprep.subr.bf16.mxu0 0
      %7956 = vmatpush1.bf16.msra.mxu0 %v7940
      %7957 = vmatprep.subr.bf16.mxu0 0
      %7958 = vmatpush1.bf16.msra.mxu0 %v7939
      %7959 = vmatprep.subr.bf16.mxu0 0
      %7960 = vmatpush1.bf16.msra.mxu0 %v7938
      %7961 = vmatprep.subr.bf16.mxu0 0
      %7962 = vmatpush1.bf16.msra.mxu0 %v7937
      %7963 = vmatprep.subr.bf16.mxu0 0
      %7964 = vmatpush1.bf16.msra.mxu0 %v7936
      %7965 = vmatprep.subr.bf16.mxu0 0
      %7966 = vmatpush1.bf16.msra.mxu0 %v7935
      %7967 = vmatprep.subr.bf16.mxu0 0
      %7968 = vmatpush2.bf16.msra.mxu0 0
      %7969 = vmatprep.subr.bf16.mxu0 0
      %7970 = vmatpush2.bf16.msra.mxu0 0
      %7971 = vmatprep.subr.bf16.mxu0 0
      %7972 = vmatpush2.bf16.msra.mxu0 0
      %7973 = vmatprep.subr.bf16.mxu0 0
      %7974 = vmatpush2.bf16.msra.mxu0 0
      %7975 = vmatprep.subr.bf16.mxu0 0
      %7976 = vmatpush2.bf16.msra.mxu0 0
      %7977 = vmatprep.subr.bf16.mxu0 0
      %7978 = vmatpush2.bf16.msra.mxu0 0
      %7979 = vmatprep.subr.bf16.mxu0 0
      %7980 = vmatpush2.bf16.msra.mxu0 0
      %7981 = vmatprep.subr.bf16.mxu0 0
      %7982 = vmatpush2.bf16.msra.mxu0 0
      %7983 = vmatprep.mubr.bf16.mxu0 0
      %7984 = vmatmul.mubr.bf16.gmra.mxu0 %v7885
      %v7985 = vpop.f32.mrf.mxu0
      %v7986 = vadd.f32 0.0, %v7985
      %v7987 = vpop.f32.mrf.mxu0
      %v7988 = vpop.f32.mrf.mxu0
      %v7989 = vpop.f32.mrf.mxu0
      %7990 = vdwg.mxu0
      %v7991 = vadd.f32 %v7879, %v7986
      %v7992 = vld [vmem:[%s7608] sm:$0x1]
      %v7993 = vpack.c.bf16 %v7992, %v7992
      %s7994 = scalar_lea.vmem %s2, 2496
      %v7995 = vld [vmem:[%s7994] sm:$0xf]
      %v7996 = vld [vmem:[%s7994 + $0x4] sm:$0xf]
      %v7997 = vld [vmem:[%s7994 + $0x8] sm:$0xf]
      %v7998 = vld [vmem:[%s7994 + $0xc] sm:$0xf]
      %v7999 = vld [vmem:[%s7994 + $0x10] sm:$0xf]
      %v8000 = vld [vmem:[%s7994 + $0x14] sm:$0xf]
      %v8001 = vld [vmem:[%s7994 + $0x18] sm:$0xf]
      %v8002 = vld [vmem:[%s7994 + $0x1c] sm:$0xf]
      %v8003 = vld [vmem:[%s7994 + $0x20] sm:$0xf]
      %v8004 = vld [vmem:[%s7994 + $0x24] sm:$0xf]
      %v8005 = vld [vmem:[%s7994 + $0x28] sm:$0xf]
      %v8006 = vld [vmem:[%s7994 + $0x2c] sm:$0xf]
      %v8007 = vld [vmem:[%s7994 + $0x30] sm:$0xf]
      %v8008 = vld [vmem:[%s7994 + $0x34] sm:$0xf]
      %v8009 = vld [vmem:[%s7994 + $0x38] sm:$0xf]
      %v8010 = vld [vmem:[%s7994 + $0x3c] sm:$0xf]
      %v8027 = vunpack.c.l.b16 %v7995
      %v8028 = vunpack.c.l.b16 %v7996
      %v8029 = vunpack.c.l.b16 %v7997
      %v8030 = vunpack.c.l.b16 %v7998
      %v8031 = vunpack.c.l.b16 %v7999
      %v8032 = vunpack.c.l.b16 %v8000
      %v8033 = vunpack.c.l.b16 %v8001
      %v8034 = vunpack.c.l.b16 %v8002
      %v8035 = vunpack.c.l.b16 %v8003
      %v8036 = vunpack.c.l.b16 %v8004
      %v8037 = vunpack.c.l.b16 %v8005
      %v8038 = vunpack.c.l.b16 %v8006
      %v8039 = vunpack.c.l.b16 %v8007
      %v8040 = vunpack.c.l.b16 %v8008
      %v8041 = vunpack.c.l.b16 %v8009
      %v8042 = vunpack.c.l.b16 %v8010
      %v8043 = vpack.c.b16 %v8028, %v8027
      %v8044 = vpack.c.b16 %v8030, %v8029
      %v8045 = vpack.c.b16 %v8032, %v8031
      %v8046 = vpack.c.b16 %v8034, %v8033
      %v8047 = vpack.c.b16 %v8036, %v8035
      %v8048 = vpack.c.b16 %v8038, %v8037
      %v8049 = vpack.c.b16 %v8040, %v8039
      %v8050 = vpack.c.b16 %v8042, %v8041
      %8059 = vmatprep.subr.bf16.mxu0 0
      %8060 = vmatpush1.bf16.msra.mxu0 %v8050
      %8061 = vmatprep.subr.bf16.mxu0 0
      %8062 = vmatpush1.bf16.msra.mxu0 %v8049
      %8063 = vmatprep.subr.bf16.mxu0 0
      %8064 = vmatpush1.bf16.msra.mxu0 %v8048
      %8065 = vmatprep.subr.bf16.mxu0 0
      %8066 = vmatpush1.bf16.msra.mxu0 %v8047
      %8067 = vmatprep.subr.bf16.mxu0 0
      %8068 = vmatpush1.bf16.msra.mxu0 %v8046
      %8069 = vmatprep.subr.bf16.mxu0 0
      %8070 = vmatpush1.bf16.msra.mxu0 %v8045
      %8071 = vmatprep.subr.bf16.mxu0 0
      %8072 = vmatpush1.bf16.msra.mxu0 %v8044
      %8073 = vmatprep.subr.bf16.mxu0 0
      %8074 = vmatpush1.bf16.msra.mxu0 %v8043
      %8075 = vmatprep.subr.bf16.mxu0 0
      %8076 = vmatpush2.bf16.msra.mxu0 0
      %8077 = vmatprep.subr.bf16.mxu0 0
      %8078 = vmatpush2.bf16.msra.mxu0 0
      %8079 = vmatprep.subr.bf16.mxu0 0
      %8080 = vmatpush2.bf16.msra.mxu0 0
      %8081 = vmatprep.subr.bf16.mxu0 0
      %8082 = vmatpush2.bf16.msra.mxu0 0
      %8083 = vmatprep.subr.bf16.mxu0 0
      %8084 = vmatpush2.bf16.msra.mxu0 0
      %8085 = vmatprep.subr.bf16.mxu0 0
      %8086 = vmatpush2.bf16.msra.mxu0 0
      %8087 = vmatprep.subr.bf16.mxu0 0
      %8088 = vmatpush2.bf16.msra.mxu0 0
      %8089 = vmatprep.subr.bf16.mxu0 0
      %8090 = vmatpush2.bf16.msra.mxu0 0
      %8091 = vmatprep.mubr.bf16.mxu0 0
      %8092 = vmatmul.mubr.bf16.gmra.mxu0 %v7993
      %v8093 = vpop.f32.mrf.mxu0
      %v8094 = vadd.f32 0.0, %v8093
      %v8095 = vpop.f32.mrf.mxu0
      %v8096 = vpop.f32.mrf.mxu0
      %v8097 = vpop.f32.mrf.mxu0
      %8098 = vdwg.mxu0
      %v8099 = vadd.f32 %v7991, %v8094
      %v8100 = vld [vmem:[%s7610] sm:$0x1]
      %v8101 = vpack.c.bf16 %v8100, %v8100
      %s8102 = scalar_lea.vmem %s2, 2560
      %v8103 = vld [vmem:[%s8102] sm:$0xf]
      %v8104 = vld [vmem:[%s8102 + $0x4] sm:$0xf]
      %v8105 = vld [vmem:[%s8102 + $0x8] sm:$0xf]
      %v8106 = vld [vmem:[%s8102 + $0xc] sm:$0xf]
      %v8107 = vld [vmem:[%s8102 + $0x10] sm:$0xf]
      %v8108 = vld [vmem:[%s8102 + $0x14] sm:$0xf]
      %v8109 = vld [vmem:[%s8102 + $0x18] sm:$0xf]
      %v8110 = vld [vmem:[%s8102 + $0x1c] sm:$0xf]
      %v8111 = vld [vmem:[%s8102 + $0x20] sm:$0xf]
      %v8112 = vld [vmem:[%s8102 + $0x24] sm:$0xf]
      %v8113 = vld [vmem:[%s8102 + $0x28] sm:$0xf]
      %v8114 = vld [vmem:[%s8102 + $0x2c] sm:$0xf]
      %v8115 = vld [vmem:[%s8102 + $0x30] sm:$0xf]
      %v8116 = vld [vmem:[%s8102 + $0x34] sm:$0xf]
      %v8117 = vld [vmem:[%s8102 + $0x38] sm:$0xf]
      %v8118 = vld [vmem:[%s8102 + $0x3c] sm:$0xf]
      %v8135 = vunpack.c.l.b16 %v8103
      %v8136 = vunpack.c.l.b16 %v8104
      %v8137 = vunpack.c.l.b16 %v8105
      %v8138 = vunpack.c.l.b16 %v8106
      %v8139 = vunpack.c.l.b16 %v8107
      %v8140 = vunpack.c.l.b16 %v8108
      %v8141 = vunpack.c.l.b16 %v8109
      %v8142 = vunpack.c.l.b16 %v8110
      %v8143 = vunpack.c.l.b16 %v8111
      %v8144 = vunpack.c.l.b16 %v8112
      %v8145 = vunpack.c.l.b16 %v8113
      %v8146 = vunpack.c.l.b16 %v8114
      %v8147 = vunpack.c.l.b16 %v8115
      %v8148 = vunpack.c.l.b16 %v8116
      %v8149 = vunpack.c.l.b16 %v8117
      %v8150 = vunpack.c.l.b16 %v8118
      %v8151 = vpack.c.b16 %v8136, %v8135
      %v8152 = vpack.c.b16 %v8138, %v8137
      %v8153 = vpack.c.b16 %v8140, %v8139
      %v8154 = vpack.c.b16 %v8142, %v8141
      %v8155 = vpack.c.b16 %v8144, %v8143
      %v8156 = vpack.c.b16 %v8146, %v8145
      %v8157 = vpack.c.b16 %v8148, %v8147
      %v8158 = vpack.c.b16 %v8150, %v8149
      %8167 = vmatprep.subr.bf16.mxu0 0
      %8168 = vmatpush1.bf16.msra.mxu0 %v8158
      %8169 = vmatprep.subr.bf16.mxu0 0
      %8170 = vmatpush1.bf16.msra.mxu0 %v8157
      %8171 = vmatprep.subr.bf16.mxu0 0
      %8172 = vmatpush1.bf16.msra.mxu0 %v8156
      %8173 = vmatprep.subr.bf16.mxu0 0
      %8174 = vmatpush1.bf16.msra.mxu0 %v8155
      %8175 = vmatprep.subr.bf16.mxu0 0
      %8176 = vmatpush1.bf16.msra.mxu0 %v8154
      %8177 = vmatprep.subr.bf16.mxu0 0
      %8178 = vmatpush1.bf16.msra.mxu0 %v8153
      %8179 = vmatprep.subr.bf16.mxu0 0
      %8180 = vmatpush1.bf16.msra.mxu0 %v8152
      %8181 = vmatprep.subr.bf16.mxu0 0
      %8182 = vmatpush1.bf16.msra.mxu0 %v8151
      %8183 = vmatprep.subr.bf16.mxu0 0
      %8184 = vmatpush2.bf16.msra.mxu0 0
      %8185 = vmatprep.subr.bf16.mxu0 0
      %8186 = vmatpush2.bf16.msra.mxu0 0
      %8187 = vmatprep.subr.bf16.mxu0 0
      %8188 = vmatpush2.bf16.msra.mxu0 0
      %8189 = vmatprep.subr.bf16.mxu0 0
      %8190 = vmatpush2.bf16.msra.mxu0 0
      %8191 = vmatprep.subr.bf16.mxu0 0
      %8192 = vmatpush2.bf16.msra.mxu0 0
      %8193 = vmatprep.subr.bf16.mxu0 0
      %8194 = vmatpush2.bf16.msra.mxu0 0
      %8195 = vmatprep.subr.bf16.mxu0 0
      %8196 = vmatpush2.bf16.msra.mxu0 0
      %8197 = vmatprep.subr.bf16.mxu0 0
      %8198 = vmatpush2.bf16.msra.mxu0 0
      %8199 = vmatprep.mubr.bf16.mxu0 0
      %8200 = vmatmul.mubr.bf16.gmra.mxu0 %v8101
      %v8201 = vpop.f32.mrf.mxu0
      %v8202 = vadd.f32 0.0, %v8201
      %v8203 = vpop.f32.mrf.mxu0
      %v8204 = vpop.f32.mrf.mxu0
      %v8205 = vpop.f32.mrf.mxu0
      %8206 = vdwg.mxu0
      %v8207 = vadd.f32 %v8099, %v8202
      %v8208 = vld [vmem:[%s7608 + $0x1] sm:$0x1]
      %v8209 = vpack.c.bf16 %v8208, %v8208
      %s8210 = scalar_lea.vmem %s2, 2624
      %v8211 = vld [vmem:[%s8210] sm:$0xf]
      %v8212 = vld [vmem:[%s8210 + $0x4] sm:$0xf]
      %v8213 = vld [vmem:[%s8210 + $0x8] sm:$0xf]
      %v8214 = vld [vmem:[%s8210 + $0xc] sm:$0xf]
      %v8215 = vld [vmem:[%s8210 + $0x10] sm:$0xf]
      %v8216 = vld [vmem:[%s8210 + $0x14] sm:$0xf]
      %v8217 = vld [vmem:[%s8210 + $0x18] sm:$0xf]
      %v8218 = vld [vmem:[%s8210 + $0x1c] sm:$0xf]
      %v8219 = vld [vmem:[%s8210 + $0x20] sm:$0xf]
      %v8220 = vld [vmem:[%s8210 + $0x24] sm:$0xf]
      %v8221 = vld [vmem:[%s8210 + $0x28] sm:$0xf]
      %v8222 = vld [vmem:[%s8210 + $0x2c] sm:$0xf]
      %v8223 = vld [vmem:[%s8210 + $0x30] sm:$0xf]
      %v8224 = vld [vmem:[%s8210 + $0x34] sm:$0xf]
      %v8225 = vld [vmem:[%s8210 + $0x38] sm:$0xf]
      %v8226 = vld [vmem:[%s8210 + $0x3c] sm:$0xf]
      %v8243 = vunpack.c.l.b16 %v8211
      %v8244 = vunpack.c.l.b16 %v8212
      %v8245 = vunpack.c.l.b16 %v8213
      %v8246 = vunpack.c.l.b16 %v8214
      %v8247 = vunpack.c.l.b16 %v8215
      %v8248 = vunpack.c.l.b16 %v8216
      %v8249 = vunpack.c.l.b16 %v8217
      %v8250 = vunpack.c.l.b16 %v8218
      %v8251 = vunpack.c.l.b16 %v8219
      %v8252 = vunpack.c.l.b16 %v8220
      %v8253 = vunpack.c.l.b16 %v8221
      %v8254 = vunpack.c.l.b16 %v8222
      %v8255 = vunpack.c.l.b16 %v8223
      %v8256 = vunpack.c.l.b16 %v8224
      %v8257 = vunpack.c.l.b16 %v8225
      %v8258 = vunpack.c.l.b16 %v8226
      %v8259 = vpack.c.b16 %v8244, %v8243
      %v8260 = vpack.c.b16 %v8246, %v8245
      %v8261 = vpack.c.b16 %v8248, %v8247
      %v8262 = vpack.c.b16 %v8250, %v8249
      %v8263 = vpack.c.b16 %v8252, %v8251
      %v8264 = vpack.c.b16 %v8254, %v8253
      %v8265 = vpack.c.b16 %v8256, %v8255
      %v8266 = vpack.c.b16 %v8258, %v8257
      %8275 = vmatprep.subr.bf16.mxu0 0
      %8276 = vmatpush1.bf16.msra.mxu0 %v8266
      %8277 = vmatprep.subr.bf16.mxu0 0
      %8278 = vmatpush1.bf16.msra.mxu0 %v8265
      %8279 = vmatprep.subr.bf16.mxu0 0
      %8280 = vmatpush1.bf16.msra.mxu0 %v8264
      %8281 = vmatprep.subr.bf16.mxu0 0
      %8282 = vmatpush1.bf16.msra.mxu0 %v8263
      %8283 = vmatprep.subr.bf16.mxu0 0
      %8284 = vmatpush1.bf16.msra.mxu0 %v8262
      %8285 = vmatprep.subr.bf16.mxu0 0
      %8286 = vmatpush1.bf16.msra.mxu0 %v8261
      %8287 = vmatprep.subr.bf16.mxu0 0
      %8288 = vmatpush1.bf16.msra.mxu0 %v8260
      %8289 = vmatprep.subr.bf16.mxu0 0
      %8290 = vmatpush1.bf16.msra.mxu0 %v8259
      %8291 = vmatprep.subr.bf16.mxu0 0
      %8292 = vmatpush2.bf16.msra.mxu0 0
      %8293 = vmatprep.subr.bf16.mxu0 0
      %8294 = vmatpush2.bf16.msra.mxu0 0
      %8295 = vmatprep.subr.bf16.mxu0 0
      %8296 = vmatpush2.bf16.msra.mxu0 0
      %8297 = vmatprep.subr.bf16.mxu0 0
      %8298 = vmatpush2.bf16.msra.mxu0 0
      %8299 = vmatprep.subr.bf16.mxu0 0
      %8300 = vmatpush2.bf16.msra.mxu0 0
      %8301 = vmatprep.subr.bf16.mxu0 0
      %8302 = vmatpush2.bf16.msra.mxu0 0
      %8303 = vmatprep.subr.bf16.mxu0 0
      %8304 = vmatpush2.bf16.msra.mxu0 0
      %8305 = vmatprep.subr.bf16.mxu0 0
      %8306 = vmatpush2.bf16.msra.mxu0 0
      %8307 = vmatprep.mubr.bf16.mxu0 0
      %8308 = vmatmul.mubr.bf16.gmra.mxu0 %v8209
      %v8309 = vpop.f32.mrf.mxu0
      %v8310 = vadd.f32 0.0, %v8309
      %v8311 = vpop.f32.mrf.mxu0
      %v8312 = vpop.f32.mrf.mxu0
      %v8313 = vpop.f32.mrf.mxu0
      %8314 = vdwg.mxu0
      %v8315 = vadd.f32 %v8207, %v8310
      %v8316 = vld [vmem:[#allocation10 + $0x3] sm:$0x1]
      %v8317 = vpack.c.bf16 %v8316, %v8316
      %s8318 = scalar_lea.vmem %s2, 2688
      %v8319 = vld [vmem:[%s8318] sm:$0xf]
      %v8320 = vld [vmem:[%s8318 + $0x4] sm:$0xf]
      %v8321 = vld [vmem:[%s8318 + $0x8] sm:$0xf]
      %v8322 = vld [vmem:[%s8318 + $0xc] sm:$0xf]
      %v8323 = vld [vmem:[%s8318 + $0x10] sm:$0xf]
      %v8324 = vld [vmem:[%s8318 + $0x14] sm:$0xf]
      %v8325 = vld [vmem:[%s8318 + $0x18] sm:$0xf]
      %v8326 = vld [vmem:[%s8318 + $0x1c] sm:$0xf]
      %v8327 = vld [vmem:[%s8318 + $0x20] sm:$0xf]
      %v8328 = vld [vmem:[%s8318 + $0x24] sm:$0xf]
      %v8329 = vld [vmem:[%s8318 + $0x28] sm:$0xf]
      %v8330 = vld [vmem:[%s8318 + $0x2c] sm:$0xf]
      %v8331 = vld [vmem:[%s8318 + $0x30] sm:$0xf]
      %v8332 = vld [vmem:[%s8318 + $0x34] sm:$0xf]
      %v8333 = vld [vmem:[%s8318 + $0x38] sm:$0xf]
      %v8334 = vld [vmem:[%s8318 + $0x3c] sm:$0xf]
      %v8351 = vunpack.c.l.b16 %v8319
      %v8352 = vunpack.c.l.b16 %v8320
      %v8353 = vunpack.c.l.b16 %v8321
      %v8354 = vunpack.c.l.b16 %v8322
      %v8355 = vunpack.c.l.b16 %v8323
      %v8356 = vunpack.c.l.b16 %v8324
      %v8357 = vunpack.c.l.b16 %v8325
      %v8358 = vunpack.c.l.b16 %v8326
      %v8359 = vunpack.c.l.b16 %v8327
      %v8360 = vunpack.c.l.b16 %v8328
      %v8361 = vunpack.c.l.b16 %v8329
      %v8362 = vunpack.c.l.b16 %v8330
      %v8363 = vunpack.c.l.b16 %v8331
      %v8364 = vunpack.c.l.b16 %v8332
      %v8365 = vunpack.c.l.b16 %v8333
      %v8366 = vunpack.c.l.b16 %v8334
      %v8367 = vpack.c.b16 %v8352, %v8351
      %v8368 = vpack.c.b16 %v8354, %v8353
      %v8369 = vpack.c.b16 %v8356, %v8355
      %v8370 = vpack.c.b16 %v8358, %v8357
      %v8371 = vpack.c.b16 %v8360, %v8359
      %v8372 = vpack.c.b16 %v8362, %v8361
      %v8373 = vpack.c.b16 %v8364, %v8363
      %v8374 = vpack.c.b16 %v8366, %v8365
      %8383 = vmatprep.subr.bf16.mxu0 0
      %8384 = vmatpush1.bf16.msra.mxu0 %v8374
      %8385 = vmatprep.subr.bf16.mxu0 0
      %8386 = vmatpush1.bf16.msra.mxu0 %v8373
      %8387 = vmatprep.subr.bf16.mxu0 0
      %8388 = vmatpush1.bf16.msra.mxu0 %v8372
      %8389 = vmatprep.subr.bf16.mxu0 0
      %8390 = vmatpush1.bf16.msra.mxu0 %v8371
      %8391 = vmatprep.subr.bf16.mxu0 0
      %8392 = vmatpush1.bf16.msra.mxu0 %v8370
      %8393 = vmatprep.subr.bf16.mxu0 0
      %8394 = vmatpush1.bf16.msra.mxu0 %v8369
      %8395 = vmatprep.subr.bf16.mxu0 0
      %8396 = vmatpush1.bf16.msra.mxu0 %v8368
      %8397 = vmatprep.subr.bf16.mxu0 0
      %8398 = vmatpush1.bf16.msra.mxu0 %v8367
      %8399 = vmatprep.subr.bf16.mxu0 0
      %8400 = vmatpush2.bf16.msra.mxu0 0
      %8401 = vmatprep.subr.bf16.mxu0 0
      %8402 = vmatpush2.bf16.msra.mxu0 0
      %8403 = vmatprep.subr.bf16.mxu0 0
      %8404 = vmatpush2.bf16.msra.mxu0 0
      %8405 = vmatprep.subr.bf16.mxu0 0
      %8406 = vmatpush2.bf16.msra.mxu0 0
      %8407 = vmatprep.subr.bf16.mxu0 0
      %8408 = vmatpush2.bf16.msra.mxu0 0
      %8409 = vmatprep.subr.bf16.mxu0 0
      %8410 = vmatpush2.bf16.msra.mxu0 0
      %8411 = vmatprep.subr.bf16.mxu0 0
      %8412 = vmatpush2.bf16.msra.mxu0 0
      %8413 = vmatprep.subr.bf16.mxu0 0
      %8414 = vmatpush2.bf16.msra.mxu0 0
      %8415 = vmatprep.mubr.bf16.mxu0 0
      %8416 = vmatmul.mubr.bf16.gmra.mxu0 %v8317
      %v8417 = vpop.f32.mrf.mxu0
      %v8418 = vadd.f32 0.0, %v8417
      %v8419 = vpop.f32.mrf.mxu0
      %v8420 = vpop.f32.mrf.mxu0
      %v8421 = vpop.f32.mrf.mxu0
      %8422 = vdwg.mxu0
      %v8423 = vadd.f32 %v8315, %v8418
      %v8424 = vld [vmem:[%s7606 + $0x3] sm:$0x1]
      %v8425 = vpack.c.bf16 %v8424, %v8424
      %s8426 = scalar_lea.vmem %s2, 2752
      %v8427 = vld [vmem:[%s8426] sm:$0xf]
      %v8428 = vld [vmem:[%s8426 + $0x4] sm:$0xf]
      %v8429 = vld [vmem:[%s8426 + $0x8] sm:$0xf]
      %v8430 = vld [vmem:[%s8426 + $0xc] sm:$0xf]
      %v8431 = vld [vmem:[%s8426 + $0x10] sm:$0xf]
      %v8432 = vld [vmem:[%s8426 + $0x14] sm:$0xf]
      %v8433 = vld [vmem:[%s8426 + $0x18] sm:$0xf]
      %v8434 = vld [vmem:[%s8426 + $0x1c] sm:$0xf]
      %v8435 = vld [vmem:[%s8426 + $0x20] sm:$0xf]
      %v8436 = vld [vmem:[%s8426 + $0x24] sm:$0xf]
      %v8437 = vld [vmem:[%s8426 + $0x28] sm:$0xf]
      %v8438 = vld [vmem:[%s8426 + $0x2c] sm:$0xf]
      %v8439 = vld [vmem:[%s8426 + $0x30] sm:$0xf]
      %v8440 = vld [vmem:[%s8426 + $0x34] sm:$0xf]
      %v8441 = vld [vmem:[%s8426 + $0x38] sm:$0xf]
      %v8442 = vld [vmem:[%s8426 + $0x3c] sm:$0xf]
      %v8459 = vunpack.c.l.b16 %v8427
      %v8460 = vunpack.c.l.b16 %v8428
      %v8461 = vunpack.c.l.b16 %v8429
      %v8462 = vunpack.c.l.b16 %v8430
      %v8463 = vunpack.c.l.b16 %v8431
      %v8464 = vunpack.c.l.b16 %v8432
      %v8465 = vunpack.c.l.b16 %v8433
      %v8466 = vunpack.c.l.b16 %v8434
      %v8467 = vunpack.c.l.b16 %v8435
      %v8468 = vunpack.c.l.b16 %v8436
      %v8469 = vunpack.c.l.b16 %v8437
      %v8470 = vunpack.c.l.b16 %v8438
      %v8471 = vunpack.c.l.b16 %v8439
      %v8472 = vunpack.c.l.b16 %v8440
      %v8473 = vunpack.c.l.b16 %v8441
      %v8474 = vunpack.c.l.b16 %v8442
      %v8475 = vpack.c.b16 %v8460, %v8459
      %v8476 = vpack.c.b16 %v8462, %v8461
      %v8477 = vpack.c.b16 %v8464, %v8463
      %v8478 = vpack.c.b16 %v8466, %v8465
      %v8479 = vpack.c.b16 %v8468, %v8467
      %v8480 = vpack.c.b16 %v8470, %v8469
      %v8481 = vpack.c.b16 %v8472, %v8471
      %v8482 = vpack.c.b16 %v8474, %v8473
      %8491 = vmatprep.subr.bf16.mxu0 0
      %8492 = vmatpush1.bf16.msra.mxu0 %v8482
      %8493 = vmatprep.subr.bf16.mxu0 0
      %8494 = vmatpush1.bf16.msra.mxu0 %v8481
      %8495 = vmatprep.subr.bf16.mxu0 0
      %8496 = vmatpush1.bf16.msra.mxu0 %v8480
      %8497 = vmatprep.subr.bf16.mxu0 0
      %8498 = vmatpush1.bf16.msra.mxu0 %v8479
      %8499 = vmatprep.subr.bf16.mxu0 0
      %8500 = vmatpush1.bf16.msra.mxu0 %v8478
      %8501 = vmatprep.subr.bf16.mxu0 0
      %8502 = vmatpush1.bf16.msra.mxu0 %v8477
      %8503 = vmatprep.subr.bf16.mxu0 0
      %8504 = vmatpush1.bf16.msra.mxu0 %v8476
      %8505 = vmatprep.subr.bf16.mxu0 0
      %8506 = vmatpush1.bf16.msra.mxu0 %v8475
      %8507 = vmatprep.subr.bf16.mxu0 0
      %8508 = vmatpush2.bf16.msra.mxu0 0
      %8509 = vmatprep.subr.bf16.mxu0 0
      %8510 = vmatpush2.bf16.msra.mxu0 0
      %8511 = vmatprep.subr.bf16.mxu0 0
      %8512 = vmatpush2.bf16.msra.mxu0 0
      %8513 = vmatprep.subr.bf16.mxu0 0
      %8514 = vmatpush2.bf16.msra.mxu0 0
      %8515 = vmatprep.subr.bf16.mxu0 0
      %8516 = vmatpush2.bf16.msra.mxu0 0
      %8517 = vmatprep.subr.bf16.mxu0 0
      %8518 = vmatpush2.bf16.msra.mxu0 0
      %8519 = vmatprep.subr.bf16.mxu0 0
      %8520 = vmatpush2.bf16.msra.mxu0 0
      %8521 = vmatprep.subr.bf16.mxu0 0
      %8522 = vmatpush2.bf16.msra.mxu0 0
      %8523 = vmatprep.mubr.bf16.mxu0 0
      %8524 = vmatmul.mubr.bf16.gmra.mxu0 %v8425
      %v8525 = vpop.f32.mrf.mxu0
      %v8526 = vadd.f32 0.0, %v8525
      %v8527 = vpop.f32.mrf.mxu0
      %v8528 = vpop.f32.mrf.mxu0
      %v8529 = vpop.f32.mrf.mxu0
      %8530 = vdwg.mxu0
      %v8531 = vadd.f32 %v8423, %v8526
      %v8532 = vld [vmem:[#allocation10 + $0x4] sm:$0x1]
      %v8533 = vpack.c.bf16 %v8532, %v8532
      %s8534 = scalar_lea.vmem %s2, 2816
      %v8535 = vld [vmem:[%s8534] sm:$0xf]
      %v8536 = vld [vmem:[%s8534 + $0x4] sm:$0xf]
      %v8537 = vld [vmem:[%s8534 + $0x8] sm:$0xf]
      %v8538 = vld [vmem:[%s8534 + $0xc] sm:$0xf]
      %v8539 = vld [vmem:[%s8534 + $0x10] sm:$0xf]
      %v8540 = vld [vmem:[%s8534 + $0x14] sm:$0xf]
      %v8541 = vld [vmem:[%s8534 + $0x18] sm:$0xf]
      %v8542 = vld [vmem:[%s8534 + $0x1c] sm:$0xf]
      %v8543 = vld [vmem:[%s8534 + $0x20] sm:$0xf]
      %v8544 = vld [vmem:[%s8534 + $0x24] sm:$0xf]
      %v8545 = vld [vmem:[%s8534 + $0x28] sm:$0xf]
      %v8546 = vld [vmem:[%s8534 + $0x2c] sm:$0xf]
      %v8547 = vld [vmem:[%s8534 + $0x30] sm:$0xf]
      %v8548 = vld [vmem:[%s8534 + $0x34] sm:$0xf]
      %v8549 = vld [vmem:[%s8534 + $0x38] sm:$0xf]
      %v8550 = vld [vmem:[%s8534 + $0x3c] sm:$0xf]
      %v8567 = vunpack.c.l.b16 %v8535
      %v8568 = vunpack.c.l.b16 %v8536
      %v8569 = vunpack.c.l.b16 %v8537
      %v8570 = vunpack.c.l.b16 %v8538
      %v8571 = vunpack.c.l.b16 %v8539
      %v8572 = vunpack.c.l.b16 %v8540
      %v8573 = vunpack.c.l.b16 %v8541
      %v8574 = vunpack.c.l.b16 %v8542
      %v8575 = vunpack.c.l.b16 %v8543
      %v8576 = vunpack.c.l.b16 %v8544
      %v8577 = vunpack.c.l.b16 %v8545
      %v8578 = vunpack.c.l.b16 %v8546
      %v8579 = vunpack.c.l.b16 %v8547
      %v8580 = vunpack.c.l.b16 %v8548
      %v8581 = vunpack.c.l.b16 %v8549
      %v8582 = vunpack.c.l.b16 %v8550
      %v8583 = vpack.c.b16 %v8568, %v8567
      %v8584 = vpack.c.b16 %v8570, %v8569
      %v8585 = vpack.c.b16 %v8572, %v8571
      %v8586 = vpack.c.b16 %v8574, %v8573
      %v8587 = vpack.c.b16 %v8576, %v8575
      %v8588 = vpack.c.b16 %v8578, %v8577
      %v8589 = vpack.c.b16 %v8580, %v8579
      %v8590 = vpack.c.b16 %v8582, %v8581
      %8599 = vmatprep.subr.bf16.mxu0 0
      %8600 = vmatpush1.bf16.msra.mxu0 %v8590
      %8601 = vmatprep.subr.bf16.mxu0 0
      %8602 = vmatpush1.bf16.msra.mxu0 %v8589
      %8603 = vmatprep.subr.bf16.mxu0 0
      %8604 = vmatpush1.bf16.msra.mxu0 %v8588
      %8605 = vmatprep.subr.bf16.mxu0 0
      %8606 = vmatpush1.bf16.msra.mxu0 %v8587
      %8607 = vmatprep.subr.bf16.mxu0 0
      %8608 = vmatpush1.bf16.msra.mxu0 %v8586
      %8609 = vmatprep.subr.bf16.mxu0 0
      %8610 = vmatpush1.bf16.msra.mxu0 %v8585
      %8611 = vmatprep.subr.bf16.mxu0 0
      %8612 = vmatpush1.bf16.msra.mxu0 %v8584
      %8613 = vmatprep.subr.bf16.mxu0 0
      %8614 = vmatpush1.bf16.msra.mxu0 %v8583
      %8615 = vmatprep.subr.bf16.mxu0 0
      %8616 = vmatpush2.bf16.msra.mxu0 0
      %8617 = vmatprep.subr.bf16.mxu0 0
      %8618 = vmatpush2.bf16.msra.mxu0 0
      %8619 = vmatprep.subr.bf16.mxu0 0
      %8620 = vmatpush2.bf16.msra.mxu0 0
      %8621 = vmatprep.subr.bf16.mxu0 0
      %8622 = vmatpush2.bf16.msra.mxu0 0
      %8623 = vmatprep.subr.bf16.mxu0 0
      %8624 = vmatpush2.bf16.msra.mxu0 0
      %8625 = vmatprep.subr.bf16.mxu0 0
      %8626 = vmatpush2.bf16.msra.mxu0 0
      %8627 = vmatprep.subr.bf16.mxu0 0
      %8628 = vmatpush2.bf16.msra.mxu0 0
      %8629 = vmatprep.subr.bf16.mxu0 0
      %8630 = vmatpush2.bf16.msra.mxu0 0
      %8631 = vmatprep.mubr.bf16.mxu0 0
      %8632 = vmatmul.mubr.bf16.gmra.mxu0 %v8533
      %v8633 = vpop.f32.mrf.mxu0
      %v8634 = vadd.f32 0.0, %v8633
      %v8635 = vpop.f32.mrf.mxu0
      %v8636 = vpop.f32.mrf.mxu0
      %v8637 = vpop.f32.mrf.mxu0
      %8638 = vdwg.mxu0
      %v8639 = vadd.f32 %v8531, %v8634
      %s8640 = scalar_lea.vmem %s3, 5
      %v8641 = vld [vmem:[%s8640] sm:$0x1]
      %v8642 = vadd.f32 %v8639, %v8641
      %v8643 = vmax.f32 %v8642, 0.0
      %v8644 = vld [vmem:[%s4 + $0xe8] sm:$0x8]
      %v8645 = vunpack.c.l.bf16 %v8644
      %v8647 = vrot.slane %v8645, 6
      %v8649 = vmul.f32 %v8643, %v8647
      %v8650 = vadd.f32 %v8649, 0.0
      %v8651 = vpack.c.bf16 %v8650, %v8650
      %v8652 = vld [vmem:[%s9] sm:$0xf]
      %v8653 = vld [vmem:[%s9 + $0x4] sm:$0xf]
      %v8654 = vld [vmem:[%s9 + $0x8] sm:$0xf]
      %v8655 = vld [vmem:[%s9 + $0xc] sm:$0xf]
      %v8656 = vld [vmem:[%s9 + $0x10] sm:$0xf]
      %v8657 = vld [vmem:[%s9 + $0x14] sm:$0xf]
      %v8658 = vld [vmem:[%s9 + $0x18] sm:$0xf]
      %v8659 = vld [vmem:[%s9 + $0x1c] sm:$0xf]
      %v8660 = vld [vmem:[%s9 + $0x20] sm:$0xf]
      %v8661 = vld [vmem:[%s9 + $0x24] sm:$0xf]
      %v8662 = vld [vmem:[%s9 + $0x28] sm:$0xf]
      %v8663 = vld [vmem:[%s9 + $0x2c] sm:$0xf]
      %v8664 = vld [vmem:[%s9 + $0x30] sm:$0xf]
      %v8665 = vld [vmem:[%s9 + $0x34] sm:$0xf]
      %v8666 = vld [vmem:[%s9 + $0x38] sm:$0xf]
      %v8667 = vld [vmem:[%s9 + $0x3c] sm:$0xf]
      %v8668 = vld [vmem:[%s10] sm:$0x1]
      %v8685 = vunpack.c.l.b16 %v8652
      %v8686 = vunpack.c.l.b16 %v8653
      %v8687 = vunpack.c.l.b16 %v8654
      %v8688 = vunpack.c.l.b16 %v8655
      %v8689 = vunpack.c.l.b16 %v8656
      %v8690 = vunpack.c.l.b16 %v8657
      %v8691 = vunpack.c.l.b16 %v8658
      %v8692 = vunpack.c.l.b16 %v8659
      %v8693 = vunpack.c.l.b16 %v8660
      %v8694 = vunpack.c.l.b16 %v8661
      %v8695 = vunpack.c.l.b16 %v8662
      %v8696 = vunpack.c.l.b16 %v8663
      %v8697 = vunpack.c.l.b16 %v8664
      %v8698 = vunpack.c.l.b16 %v8665
      %v8699 = vunpack.c.l.b16 %v8666
      %v8700 = vunpack.c.l.b16 %v8667
      %v8701 = vpack.c.b16 %v8686, %v8685
      %v8702 = vpack.c.b16 %v8688, %v8687
      %v8703 = vpack.c.b16 %v8690, %v8689
      %v8704 = vpack.c.b16 %v8692, %v8691
      %v8705 = vpack.c.b16 %v8694, %v8693
      %v8706 = vpack.c.b16 %v8696, %v8695
      %v8707 = vpack.c.b16 %v8698, %v8697
      %v8708 = vpack.c.b16 %v8700, %v8699
      %8717 = vmatprep.subr.bf16.mxu0 0
      %8718 = vmatpush1.bf16.msra.mxu0 %v8708
      %8719 = vmatprep.subr.bf16.mxu0 0
      %8720 = vmatpush1.bf16.msra.mxu0 %v8707
      %8721 = vmatprep.subr.bf16.mxu0 0
      %8722 = vmatpush1.bf16.msra.mxu0 %v8706
      %8723 = vmatprep.subr.bf16.mxu0 0
      %8724 = vmatpush1.bf16.msra.mxu0 %v8705
      %8725 = vmatprep.subr.bf16.mxu0 0
      %8726 = vmatpush1.bf16.msra.mxu0 %v8704
      %8727 = vmatprep.subr.bf16.mxu0 0
      %8728 = vmatpush1.bf16.msra.mxu0 %v8703
      %8729 = vmatprep.subr.bf16.mxu0 0
      %8730 = vmatpush1.bf16.msra.mxu0 %v8702
      %8731 = vmatprep.subr.bf16.mxu0 0
      %8732 = vmatpush1.bf16.msra.mxu0 %v8701
      %8733 = vmatprep.subr.bf16.mxu0 0
      %8734 = vmatpush2.bf16.msra.mxu0 0
      %8735 = vmatprep.subr.bf16.mxu0 0
      %8736 = vmatpush2.bf16.msra.mxu0 0
      %8737 = vmatprep.subr.bf16.mxu0 0
      %8738 = vmatpush2.bf16.msra.mxu0 0
      %8739 = vmatprep.subr.bf16.mxu0 0
      %8740 = vmatpush2.bf16.msra.mxu0 0
      %8741 = vmatprep.subr.bf16.mxu0 0
      %8742 = vmatpush2.bf16.msra.mxu0 0
      %8743 = vmatprep.subr.bf16.mxu0 0
      %8744 = vmatpush2.bf16.msra.mxu0 0
      %8745 = vmatprep.subr.bf16.mxu0 0
      %8746 = vmatpush2.bf16.msra.mxu0 0
      %8747 = vmatprep.subr.bf16.mxu0 0
      %8748 = vmatpush2.bf16.msra.mxu0 0
      %8749 = vmatprep.mubr.bf16.mxu0 0
      %8750 = vmatmul.mubr.bf16.gmra.mxu0 %v8651
      %v8751 = vpop.f32.mrf.mxu0
      %v8752 = vadd.f32 %v8668, %v8751
      %v8753 = vpop.f32.mrf.mxu0
      %v8754 = vpop.f32.mrf.mxu0
      %v8755 = vpop.f32.mrf.mxu0
      %8756 = vdwg.mxu0
      %v8757 = vlaneseq
      %v8758 = vshrl.u32 %v8757, 7
      %v8759 = vsub.s32 0, %v8758
      %v8760 = vrot.slane %v8752, %v8759
      %8761 = vst [vmem:[%s384] sm:$0xff] %v8760
      %p8762 = scmp.lt.s32.totalorder %s22, 1
      %s8763 = scalar_select %p8762, %s22, 1
      %s8764 = smul.addr %s8763, 8
      %s8765 = scalar_lea.vmem %s11, %s8764
      // Predicated region
      $region65: #{forward.1} parent=63 // pred_check
        %p8766 = pneg %p276
      $region66: #{forward.1} parent=63 // pred_check_branch
        %8768 = sbr.rel (%p8766) target = $region68
      $region67: #{forward.1} parent=63 // pred_region
        _
      $region68: #{forward.1} parent=63 // pred_fallthru
        _
    $region64: #{forward.1} parent=5 // pred_fallthru
      _
    %p8769 = scmp.le.s32.totalorder 2, %s17
    // Predicated region
    $region69: #{forward.1} parent=5 // pred_check
      %p8770 = pneg %p8769
    $region70: #{forward.1} parent=5 // pred_check_branch
      %8772 = sbr.rel (%p8770) target = $region72
    $region71: #{forward.1} parent=5 // pred_region
      %s8773 = ssub.s32 %s17, 2
      // Predicated region
      $region73: #{forward.1} parent=71 // pred_check
        %p8774 = pneg %p282
      $region74: #{forward.1} parent=71 // pred_check_branch
        %8776 = sbr.rel (%p8774) target = $region76
      $region75: #{forward.1} parent=71 // pred_region
        %p8777 = scmp.lt.s32.totalorder %s23, 1
        %s8778 = scalar_select %p8777, %s23, 1
        %s8779 = smul.addr %s8778, 8
        %s8780 = scalar_lea.vmem %s11, %s8779
      $region76: #{forward.1} parent=71 // pred_fallthru
        _
    $region72: #{forward.1} parent=5 // pred_fallthru
      _
  $region6: #{forward.1} parent=0 // loop_footer
    %s21 = sadd.s32 1, %s17
  $region7: #{forward.1} parent=0 // loop_footer_branch
    %16 = sbr.rel target = $region3
  $region8: #{forward.1} parent=0 // loop_exit
    _

</llo_original>
